<compile_context>
chip_gen: v7x
topology: tpu7x:2x2x1
jax: 0.10.0
libtpu: 0.0.40
codegen_flags: <defaults>
</compile_context>

<pallas_src>
import jax
import jax.numpy as jnp
import numpy as np
from jax.experimental import pallas as pl
from jax.experimental.pallas import tpu as pltpu


def _pick_block_batch(n, max_b):
    """Images per conv grid step: big enough to amortize the ~0.35us/step grid
    overhead, but keep the grid length >= 2 so the parallel batch axis can
    shard across v7x's two TensorCores."""
    if n >= 2 * max_b:
        return max_b
    return max(1, n // 2)


# ---------------------------------------------------------------------------
# Fused Conv2d(3x3, stride=1, pad=1) + bias + ReLU + MaxPool2d(2).
#
# Layout: each image is zero-padded to [Hp, Wp] = [H+5, W+2] (1 top/left pad,
# rest bottom/right) and flattened row-major; a block of B images is one
# contiguous [B*L, Cin] slab (L = Hp*Wp).  Conv tap (kh, kw) is the slice at
# offset kh*Wp + kw, so im2col is 9 static slices + one channel concat, and
# the whole conv is ONE [R, 9*Cin] @ [9*Cin, Cout] matmul with
# R = (B-1)*L + (H+2)*Wp rows.  Junk rows (edge columns / inter-image pad) are
# finite (pads are zeros) and are never selected by the pooling gather matrix.
# ---------------------------------------------------------------------------
def _make_conv_relu_pool_kernel(H, W, Cin, Cout, B):
    Wp = W + 2
    Hp = H + 5
    L = Hp * Wp
    R = (B - 1) * L + (H + 2) * Wp       # rows fed to the conv matmul
    Ho, Wo = H // 2, W // 2
    Po = Ho * Wo
    Hsel = H * Wp                        # rows of `m` gathered per image

    def kernel(xpf_ref, w_ref, b_ref, g_ref, o_ref):
        # xpf_ref: [1, B*L, Cin] f32   padded, row-major flattened images
        # w_ref  : [9*Cin, Cout] bf16  tap-major / channel-minor conv weights
        # b_ref  : [1, Cout]     f32
        # g_ref  : [Po, Hsel]    f32   0/1 pool-anchor gather matrix
        # o_ref  : [B, Po, Cout] f32   pooled, lane-dense output
        x = xpf_ref[0]                                        # [B*L, Cin]
        taps = [x[kh * Wp + kw: kh * Wp + kw + R, :]
                for kh in range(3) for kw in range(3)]
        xs = jnp.concatenate(taps, axis=-1)                   # [R, 9*Cin]
        acc = jnp.dot(xs.astype(jnp.bfloat16), w_ref[...],
                      preferred_element_type=jnp.float32)     # [R, Cout]
        y = jnp.maximum(acc + b_ref[...], 0.0)                # bias + ReLU
        # Vectorized 2x2 max-pool over every row at once:
        #   v[r] = max(y[r], y[r+Wp]);  m[r] = max(v[r], v[r+1])
        # => m[r] is the full 2x2 window max anchored at conv position r.
        v = jnp.maximum(y[:R - Wp, :], y[Wp:, :])
        m = jnp.maximum(v[:-1, :], v[1:, :])
        g = g_ref[...]
        pooled = [jnp.dot(g, m[b * L: b * L + Hsel, :],
                          preferred_element_type=jnp.float32)
                  for b in range(B)]                          # B x [Po, Cout]
        o_ref[...] = jnp.stack(pooled, axis=0)                # one dense store

    return kernel


def conv3x3_relu_pool(x_nhwc, w_mat, b, *, max_b):
    """x_nhwc: [N,H,W,Cin] f32; w_mat: [9*Cin,Cout] bf16; b: [1,Cout] f32.
    Returns [N, H//2, W//2, Cout] f32."""
    N, H, W, Cin = x_nhwc.shape
    Cout = w_mat.shape[-1]
    Wp, Hp = W + 2, H + 5
    L = Hp * Wp
    Ho, Wo = H // 2, W // 2
    Po = Ho * Wo
    Hsel = H * Wp

    B = _pick_block_batch(N, max_b)
    npad = -(-N // B) * B
    nblk = npad // B

    xp = jnp.pad(x_nhwc,
                 ((0, npad - N), (1, Hp - H - 1), (1, Wp - W - 1), (0, 0)))
    xpf = xp.reshape(nblk, B * L, Cin)

    # 0/1 gather matrix: row ho*Wo+wo selects the pool-window anchor
    # (conv row 2*ho, col 2*wo).  Only valid (h<H, w<W) positions are
    # selected, so junk rows in the flattened conv output never leak.
    g = np.zeros((Po, Hsel), np.float32)
    ho, wo = np.meshgrid(np.arange(Ho), np.arange(Wo), indexing="ij")
    g[(ho * Wo + wo).ravel(), (2 * ho * Wp + 2 * wo).ravel()] = 1.0
    g = jnp.asarray(g)

    kernel = _make_conv_relu_pool_kernel(H, W, Cin, Cout, B)
    out = pl.pallas_call(
        kernel,
        out_shape=jax.ShapeDtypeStruct((npad, Po, Cout), jnp.float32),
        grid=(nblk,),
        in_specs=[
            pl.BlockSpec((1, B * L, Cin), lambda i: (i, 0, 0)),
            pl.BlockSpec((9 * Cin, Cout), lambda i: (0, 0)),
            pl.BlockSpec((1, Cout), lambda i: (0, 0)),
            pl.BlockSpec((Po, Hsel), lambda i: (0, 0)),
        ],
        out_specs=pl.BlockSpec((B, Po, Cout), lambda i: (i, 0, 0)),
        compiler_params=pltpu.CompilerParams(
            dimension_semantics=("parallel",),
            vmem_limit_bytes=32 * 1024 * 1024),
    )(xpf, w_mat, b, g)
    return out[:N].reshape(N, Ho, Wo, Cout)


# ---------------------------------------------------------------------------
# Fused dense head: Linear -> ReLU -> Linear -> log_softmax, tiled over rows.
# ---------------------------------------------------------------------------
def _dense_head_kernel(x_ref, w1_ref, b1_ref, w2_ref, b2_ref, o_ref):
    # NOTE: a ragged final batch block computes exp/log on padded junk rows;
    # those rows are discarded on write-back (harmless; may flag under
    # NaN-checking debug modes).
    h = jnp.dot(x_ref[...].astype(jnp.bfloat16), w1_ref[...],
                preferred_element_type=jnp.float32)
    h = jnp.maximum(h + b1_ref[...], 0.0)
    logits = jnp.dot(h.astype(jnp.bfloat16), w2_ref[...],
                     preferred_element_type=jnp.float32) + b2_ref[...]
    z = logits - jnp.max(logits, axis=-1, keepdims=True)
    lse = jnp.log(jnp.sum(jnp.exp(z), axis=-1, keepdims=True))
    o_ref[...] = z - lse


def dense_head(x, w1, b1, w2, b2):
    N, K = x.shape
    Hd = w1.shape[1]
    Nout = w2.shape[1]
    bn = min(N, 512)
    return pl.pallas_call(
        _dense_head_kernel,
        out_shape=jax.ShapeDtypeStruct((N, Nout), jnp.float32),
        grid=(pl.cdiv(N, bn),),
        in_specs=[
            pl.BlockSpec((bn, K), lambda i: (i, 0)),
            pl.BlockSpec((K, Hd), lambda i: (0, 0)),
            pl.BlockSpec((1, Hd), lambda i: (0, 0)),
            pl.BlockSpec((Hd, Nout), lambda i: (0, 0)),
            pl.BlockSpec((1, Nout), lambda i: (0, 0)),
        ],
        out_specs=pl.BlockSpec((bn, Nout), lambda i: (i, 0)),
        compiler_params=pltpu.CompilerParams(
            dimension_semantics=("parallel",)),
    )(x, w1, b1, w2, b2)


# ---------------------------------------------------------------------------
# Parameters (PyTorch layouts) + one-time reorder/cast into kernel layouts.
# ---------------------------------------------------------------------------
def init_params(key):
    ks = jax.random.split(key, 10)

    def init(k, shape, scale=0.05):
        return jax.random.normal(k, shape, jnp.float32) * scale

    return {
        "conv1_w": init(ks[0], (32, 1, 3, 3)),   # [Cout, Cin, kh, kw]
        "conv1_b": init(ks[1], (32,)),
        "conv2_w": init(ks[2], (64, 32, 3, 3)),
        "conv2_b": init(ks[3], (64,)),
        "conv3_w": init(ks[4], (64, 64, 3, 3)),
        "conv3_b": init(ks[5], (64,)),
        "fc1_w": init(ks[6], (64 * 3 * 3, 128)), # stored [in, out]
        "fc1_b": init(ks[7], (128,)),
        "fc2_w": init(ks[8], (128, 10)),
        "fc2_b": init(ks[9], (10,)),
    }


def prepare_params(params):
    """One-time reorder/cast:
       Conv [Cout,Cin,3,3] -> [9*Cin,Cout] bf16 (tap-major, channel-minor);
       biases -> [1,C] f32; dense weights -> bf16; fc1_w rows permuted so the
       kernel's (h,w)-major / channel-minor conv3 flatten matches PyTorch's
       NCHW flatten (feature = c*9 + h*3 + w) without a runtime transpose."""
    def conv_w(w):
        cout, cin = w.shape[0], w.shape[1]
        return (jnp.transpose(w, (2, 3, 1, 0))
                .reshape(9 * cin, cout).astype(jnp.bfloat16))

    hw = np.arange(9)[:, None]
    c = np.arange(64)[None, :]
    perm = (c * 9 + hw).reshape(-1)          # new row hw*64+c <- old row c*9+hw
    fc1_w = params["fc1_w"][jnp.asarray(perm), :]

    return {
        "conv1_w": conv_w(params["conv1_w"]),
        "conv1_b": params["conv1_b"].reshape(1, -1),
        "conv2_w": conv_w(params["conv2_w"]),
        "conv2_b": params["conv2_b"].reshape(1, -1),
        "conv3_w": conv_w(params["conv3_w"]),
        "conv3_b": params["conv3_b"].reshape(1, -1),
        "fc1_w": fc1_w.astype(jnp.bfloat16),
        "fc1_b": params["fc1_b"].reshape(1, -1),
        "fc2_w": params["fc2_w"].astype(jnp.bfloat16),
        "fc2_b": params["fc2_b"].reshape(1, -1),
    }


@jax.jit
def net_forward(prepared, x_nchw):
    n = x_nchw.shape[0]
    x = jnp.transpose(x_nchw, (0, 2, 3, 1)).astype(jnp.float32)        # -> NHWC
    x = conv3x3_relu_pool(x, prepared["conv1_w"], prepared["conv1_b"], max_b=4)
    x = conv3x3_relu_pool(x, prepared["conv2_w"], prepared["conv2_b"], max_b=8)
    x = conv3x3_relu_pool(x, prepared["conv3_w"], prepared["conv3_b"], max_b=8)
    # (h,w)-major, channel-minor flatten; fc1_w rows were permuted to match.
    flat = x.reshape(n, -1)                                             # [N, 576]
    return dense_head(flat, prepared["fc1_w"], prepared["fc1_b"],
                      prepared["fc2_w"], prepared["fc2_b"])


# ---------------------------------------------------------------------------
# Pure-XLA reference (PyTorch semantics) for the correctness check.
# ---------------------------------------------------------------------------
def _reference_forward(params, x_nchw):
    x = x_nchw.astype(jnp.float32)

    def block(x, w, b):
        y = jax.lax.conv_general_dilated(
            x, w, window_strides=(1, 1), padding=((1, 1), (1, 1)),
            dimension_numbers=("NCHW", "OIHW", "NCHW"))
        y = jax.nn.relu(y + b.reshape(1, -1, 1, 1))
        return jax.lax.reduce_window(y, -jnp.inf, jax.lax.max,
                                     (1, 1, 2, 2), (1, 1, 2, 2), "VALID")

    x = block(x, params["conv1_w"], params["conv1_b"])
    x = block(x, params["conv2_w"], params["conv2_b"])
    x = block(x, params["conv3_w"], params["conv3_b"])
    flat = x.reshape(x.shape[0], -1)
    h = jax.nn.relu(flat @ params["fc1_w"] + params["fc1_b"])
    logits = h @ params["fc2_w"] + params["fc2_b"]
    return jax.nn.log_softmax(logits, axis=1)


if __name__ == "__main__":
    key = jax.random.PRNGKey(0)
    k_x, k_p = jax.random.split(key)
    x = jax.random.normal(k_x, (2, 1, 28, 28), jnp.float32)  # batch=2, 1x28x28
    params = init_params(k_p)
    prepared = prepare_params(params)

    out = jax.block_until_ready(net_forward(prepared, x))

    assert out.shape == (2, 10), out.shape
    # log_softmax rows must (approximately) exp-sum to 1
    assert jnp.allclose(jnp.sum(jnp.exp(out), axis=1), 1.0, atol=1e-4)
    # end-to-end check against the pure-XLA f32 reference (bf16 MXU operands,
    # f32 accumulation -> loose tolerance)
    ref = jax.block_until_ready(_reference_forward(params, x))
    assert jnp.allclose(out, ref, atol=2e-2, rtol=2e-2), \
        float(jnp.max(jnp.abs(out - ref)))
    print("KERNEL_OK")
</pallas_src>

<mosaic_0001>
module attributes {stable_mosaic.version = 11 : i64} {
  func.func @kernel(%arg0: i32, %arg1: memref<1x990x1xf32, #tpu.memory_space<vmem>>, %arg2: memref<9x32xbf16, #tpu.memory_space<vmem>>, %arg3: memref<1x32xf32, #tpu.memory_space<vmem>>, %arg4: memref<196x840xf32, #tpu.memory_space<vmem>>, %arg5: memref<1x196x32xf32, #tpu.memory_space<vmem>>) attributes {dimension_semantics = [#tpu.dimension_semantics<parallel>], iteration_bounds = array<i64: 2>, scalar_prefetch = 0 : i64, scratch_operands = 0 : i64, tpu.core_type = #tpu.core_type<tc>, window_params = [{transform_indices = @transform_0, window_bounds = array<i64: 1, 990, 1>}, {pipeline_mode = #tpu.pipeline_mode<synchronous>, transform_indices = @transform_1, window_bounds = array<i64: 9, 32>}, {pipeline_mode = #tpu.pipeline_mode<synchronous>, transform_indices = @transform_2, window_bounds = array<i64: 1, 32>}, {pipeline_mode = #tpu.pipeline_mode<synchronous>, transform_indices = @transform_3, window_bounds = array<i64: 196, 840>}, {transform_indices = @transform_4, window_bounds = array<i64: 1, 196, 32>}]} {
    %c0 = arith.constant 0 : index
    %c0_0 = arith.constant 0 : index
    %c0_1 = arith.constant 0 : index
    %0 = vector.load %arg1[%c0, %c0_0, %c0_1] : memref<1x990x1xf32, #tpu.memory_space<vmem>>, vector<1x990x1xf32>
    %1 = vector.shape_cast %0 : vector<1x990x1xf32> to vector<990x1xf32>
    %2 = vector.extract_strided_slice %1 {offsets = [0, 0], sizes = [900, 1], strides = [1, 1]} : vector<990x1xf32> to vector<900x1xf32>
    %3 = vector.extract_strided_slice %1 {offsets = [1, 0], sizes = [900, 1], strides = [1, 1]} : vector<990x1xf32> to vector<900x1xf32>
    %4 = vector.extract_strided_slice %1 {offsets = [2, 0], sizes = [900, 1], strides = [1, 1]} : vector<990x1xf32> to vector<900x1xf32>
    %5 = vector.extract_strided_slice %1 {offsets = [30, 0], sizes = [900, 1], strides = [1, 1]} : vector<990x1xf32> to vector<900x1xf32>
    %6 = vector.extract_strided_slice %1 {offsets = [31, 0], sizes = [900, 1], strides = [1, 1]} : vector<990x1xf32> to vector<900x1xf32>
    %7 = vector.extract_strided_slice %1 {offsets = [32, 0], sizes = [900, 1], strides = [1, 1]} : vector<990x1xf32> to vector<900x1xf32>
    %8 = vector.extract_strided_slice %1 {offsets = [60, 0], sizes = [900, 1], strides = [1, 1]} : vector<990x1xf32> to vector<900x1xf32>
    %9 = vector.extract_strided_slice %1 {offsets = [61, 0], sizes = [900, 1], strides = [1, 1]} : vector<990x1xf32> to vector<900x1xf32>
    %10 = vector.extract_strided_slice %1 {offsets = [62, 0], sizes = [900, 1], strides = [1, 1]} : vector<990x1xf32> to vector<900x1xf32>
    %11 = tpu.concatenate %2, %3, %4, %5, %6, %7, %8, %9, %10 in 1 : vector<900x1xf32>, vector<900x1xf32>, vector<900x1xf32>, vector<900x1xf32>, vector<900x1xf32>, vector<900x1xf32>, vector<900x1xf32>, vector<900x1xf32>, vector<900x1xf32> -> vector<900x9xf32>
    %12 = arith.truncf %11 : vector<900x9xf32> to vector<900x9xbf16>
    %c0_2 = arith.constant 0 : index
    %c0_3 = arith.constant 0 : index
    %13 = vector.load %arg2[%c0_2, %c0_3] : memref<9x32xbf16, #tpu.memory_space<vmem>>, vector<9x32xbf16>
    %cst = arith.constant dense<0.000000e+00> : vector<900x32xf32>
    %14 = tpu.matmul %12, %13, %cst {dimension_numbers = #tpu.dot_dimension_numbers<[1], [0], [0], [1], [0, 0, 1, 1], [], []>} : vector<900x9xbf16>, vector<9x32xbf16>, vector<900x32xf32> -> vector<900x32xf32>
    %c0_4 = arith.constant 0 : index
    %c0_5 = arith.constant 0 : index
    %15 = vector.load %arg3[%c0_4, %c0_5] : memref<1x32xf32, #tpu.memory_space<vmem>>, vector<1x32xf32>
    %16 = vector.broadcast %15 : vector<1x32xf32> to vector<900x32xf32>
    %17 = arith.addf %14, %16 : vector<900x32xf32>
    %cst_6 = arith.constant 0.000000e+00 : f32
    %18 = vector.broadcast %cst_6 : f32 to vector<900x32xf32>
    %19 = arith.maximumf %17, %18 : vector<900x32xf32>
    %20 = vector.extract_strided_slice %19 {offsets = [0, 0], sizes = [870, 32], strides = [1, 1]} : vector<900x32xf32> to vector<870x32xf32>
    %21 = vector.extract_strided_slice %19 {offsets = [30, 0], sizes = [870, 32], strides = [1, 1]} : vector<900x32xf32> to vector<870x32xf32>
    %22 = arith.maximumf %20, %21 : vector<870x32xf32>
    %23 = vector.extract_strided_slice %22 {offsets = [0, 0], sizes = [869, 32], strides = [1, 1]} : vector<870x32xf32> to vector<869x32xf32>
    %24 = vector.extract_strided_slice %22 {offsets = [1, 0], sizes = [869, 32], strides = [1, 1]} : vector<870x32xf32> to vector<869x32xf32>
    %25 = arith.maximumf %23, %24 : vector<869x32xf32>
    %c0_7 = arith.constant 0 : index
    %c0_8 = arith.constant 0 : index
    %26 = vector.load %arg4[%c0_7, %c0_8] : memref<196x840xf32, #tpu.memory_space<vmem>>, vector<196x840xf32>
    %27 = vector.extract_strided_slice %25 {offsets = [0, 0], sizes = [840, 32], strides = [1, 1]} : vector<869x32xf32> to vector<840x32xf32>
    %cst_9 = arith.constant dense<0.000000e+00> : vector<196x32xf32>
    %28 = tpu.matmul %26, %27, %cst_9 {dimension_numbers = #tpu.dot_dimension_numbers<[1], [0], [0], [1], [0, 0, 1, 1], [], []>} : vector<196x840xf32>, vector<840x32xf32>, vector<196x32xf32> -> vector<196x32xf32>
    %29 = vector.shape_cast %28 : vector<196x32xf32> to vector<1x196x32xf32>
    %c0_10 = arith.constant 0 : index
    %c0_11 = arith.constant 0 : index
    %c0_12 = arith.constant 0 : index
    %30 = vector.load %arg5[%c0_10, %c0_11, %c0_12] : memref<1x196x32xf32, #tpu.memory_space<vmem>>, vector<1x196x32xf32>
    tpu.vector_store %arg5[%c0_10, %c0_11, %c0_12], %29 {strides = array<i32>} : memref<1x196x32xf32, #tpu.memory_space<vmem>>, vector<1x196x32xf32>,
    return
  }
  func.func @transform_0(%arg0: i32) -> (i32, i32, i32) {
    %c0_i32 = arith.constant 0 : i32
    %c0_i32_0 = arith.constant 0 : i32
    %c0_i32_1 = arith.constant 0 : i32
    return %arg0, %c0_i32, %c0_i32_0 : i32, i32, i32
  }
  func.func @transform_1(%arg0: i32) -> (i32, i32) {
    %c0_i32 = arith.constant 0 : i32
    %c0_i32_0 = arith.constant 0 : i32
    %c0_i32_1 = arith.constant 0 : i32
    return %c0_i32, %c0_i32_0 : i32, i32
  }
  func.func @transform_2(%arg0: i32) -> (i32, i32) {
    %c0_i32 = arith.constant 0 : i32
    %c0_i32_0 = arith.constant 0 : i32
    %c0_i32_1 = arith.constant 0 : i32
    return %c0_i32, %c0_i32_0 : i32, i32
  }
  func.func @transform_3(%arg0: i32) -> (i32, i32) {
    %c0_i32 = arith.constant 0 : i32
    %c0_i32_0 = arith.constant 0 : i32
    %c0_i32_1 = arith.constant 0 : i32
    return %c0_i32, %c0_i32_0 : i32, i32
  }
  func.func @transform_4(%arg0: i32) -> (i32, i32, i32) {
    %c0_i32 = arith.constant 0 : i32
    %c0_i32_0 = arith.constant 0 : i32
    %c0_i32_1 = arith.constant 0 : i32
    return %arg0, %c0_i32, %c0_i32_0 : i32, i32, i32
  }
}

module attributes {stable_mosaic.version = 11 : i64} {
  func.func @kernel(%arg0: i32, %arg1: memref<1x304x32xf32, #tpu.memory_space<vmem>>, %arg2: memref<288x64xbf16, #tpu.memory_space<vmem>>, %arg3: memref<1x64xf32, #tpu.memory_space<vmem>>, %arg4: memref<49x224xf32, #tpu.memory_space<vmem>>, %arg5: memref<1x49x64xf32, #tpu.memory_space<vmem>>) attributes {dimension_semantics = [#tpu.dimension_semantics<parallel>], iteration_bounds = array<i64: 2>, scalar_prefetch = 0 : i64, scratch_operands = 0 : i64, tpu.core_type = #tpu.core_type<tc>, window_params = [{transform_indices = @transform_0, window_bounds = array<i64: 1, 304, 32>}, {pipeline_mode = #tpu.pipeline_mode<synchronous>, transform_indices = @transform_1, window_bounds = array<i64: 288, 64>}, {pipeline_mode = #tpu.pipeline_mode<synchronous>, transform_indices = @transform_2, window_bounds = array<i64: 1, 64>}, {pipeline_mode = #tpu.pipeline_mode<synchronous>, transform_indices = @transform_3, window_bounds = array<i64: 49, 224>}, {transform_indices = @transform_4, window_bounds = array<i64: 1, 49, 64>}]} {
    %c0 = arith.constant 0 : index
    %c0_0 = arith.constant 0 : index
    %c0_1 = arith.constant 0 : index
    %0 = vector.load %arg1[%c0, %c0_0, %c0_1] : memref<1x304x32xf32, #tpu.memory_space<vmem>>, vector<1x304x32xf32>
    %1 = vector.shape_cast %0 : vector<1x304x32xf32> to vector<304x32xf32>
    %2 = vector.extract_strided_slice %1 {offsets = [0, 0], sizes = [256, 32], strides = [1, 1]} : vector<304x32xf32> to vector<256x32xf32>
    %3 = vector.extract_strided_slice %1 {offsets = [1, 0], sizes = [256, 32], strides = [1, 1]} : vector<304x32xf32> to vector<256x32xf32>
    %4 = vector.extract_strided_slice %1 {offsets = [2, 0], sizes = [256, 32], strides = [1, 1]} : vector<304x32xf32> to vector<256x32xf32>
    %5 = vector.extract_strided_slice %1 {offsets = [16, 0], sizes = [256, 32], strides = [1, 1]} : vector<304x32xf32> to vector<256x32xf32>
    %6 = vector.extract_strided_slice %1 {offsets = [17, 0], sizes = [256, 32], strides = [1, 1]} : vector<304x32xf32> to vector<256x32xf32>
    %7 = vector.extract_strided_slice %1 {offsets = [18, 0], sizes = [256, 32], strides = [1, 1]} : vector<304x32xf32> to vector<256x32xf32>
    %8 = vector.extract_strided_slice %1 {offsets = [32, 0], sizes = [256, 32], strides = [1, 1]} : vector<304x32xf32> to vector<256x32xf32>
    %9 = vector.extract_strided_slice %1 {offsets = [33, 0], sizes = [256, 32], strides = [1, 1]} : vector<304x32xf32> to vector<256x32xf32>
    %10 = vector.extract_strided_slice %1 {offsets = [34, 0], sizes = [256, 32], strides = [1, 1]} : vector<304x32xf32> to vector<256x32xf32>
    %11 = tpu.concatenate %2, %3, %4, %5, %6, %7, %8, %9, %10 in 1 : vector<256x32xf32>, vector<256x32xf32>, vector<256x32xf32>, vector<256x32xf32>, vector<256x32xf32>, vector<256x32xf32>, vector<256x32xf32>, vector<256x32xf32>, vector<256x32xf32> -> vector<256x288xf32>
    %12 = arith.truncf %11 : vector<256x288xf32> to vector<256x288xbf16>
    %c0_2 = arith.constant 0 : index
    %c0_3 = arith.constant 0 : index
    %13 = vector.load %arg2[%c0_2, %c0_3] : memref<288x64xbf16, #tpu.memory_space<vmem>>, vector<288x64xbf16>
    %cst = arith.constant dense<0.000000e+00> : vector<256x64xf32>
    %14 = tpu.matmul %12, %13, %cst {dimension_numbers = #tpu.dot_dimension_numbers<[1], [0], [0], [1], [0, 0, 1, 1], [], []>} : vector<256x288xbf16>, vector<288x64xbf16>, vector<256x64xf32> -> vector<256x64xf32>
    %c0_4 = arith.constant 0 : index
    %c0_5 = arith.constant 0 : index
    %15 = vector.load %arg3[%c0_4, %c0_5] : memref<1x64xf32, #tpu.memory_space<vmem>>, vector<1x64xf32>
    %16 = vector.broadcast %15 : vector<1x64xf32> to vector<256x64xf32>
    %17 = arith.addf %14, %16 : vector<256x64xf32>
    %cst_6 = arith.constant 0.000000e+00 : f32
    %18 = vector.broadcast %cst_6 : f32 to vector<256x64xf32>
    %19 = arith.maximumf %17, %18 : vector<256x64xf32>
    %20 = vector.extract_strided_slice %19 {offsets = [0, 0], sizes = [240, 64], strides = [1, 1]} : vector<256x64xf32> to vector<240x64xf32>
    %21 = vector.extract_strided_slice %19 {offsets = [16, 0], sizes = [240, 64], strides = [1, 1]} : vector<256x64xf32> to vector<240x64xf32>
    %22 = arith.maximumf %20, %21 : vector<240x64xf32>
    %23 = vector.extract_strided_slice %22 {offsets = [0, 0], sizes = [239, 64], strides = [1, 1]} : vector<240x64xf32> to vector<239x64xf32>
    %24 = vector.extract_strided_slice %22 {offsets = [1, 0], sizes = [239, 64], strides = [1, 1]} : vector<240x64xf32> to vector<239x64xf32>
    %25 = arith.maximumf %23, %24 : vector<239x64xf32>
    %c0_7 = arith.constant 0 : index
    %c0_8 = arith.constant 0 : index
    %26 = vector.load %arg4[%c0_7, %c0_8] : memref<49x224xf32, #tpu.memory_space<vmem>>, vector<49x224xf32>
    %27 = vector.extract_strided_slice %25 {offsets = [0, 0], sizes = [224, 64], strides = [1, 1]} : vector<239x64xf32> to vector<224x64xf32>
    %cst_9 = arith.constant dense<0.000000e+00> : vector<49x64xf32>
    %28 = tpu.matmul %26, %27, %cst_9 {dimension_numbers = #tpu.dot_dimension_numbers<[1], [0], [0], [1], [0, 0, 1, 1], [], []>} : vector<49x224xf32>, vector<224x64xf32>, vector<49x64xf32> -> vector<49x64xf32>
    %29 = vector.shape_cast %28 : vector<49x64xf32> to vector<1x49x64xf32>
    %c0_10 = arith.constant 0 : index
    %c0_11 = arith.constant 0 : index
    %c0_12 = arith.constant 0 : index
    %30 = vector.load %arg5[%c0_10, %c0_11, %c0_12] : memref<1x49x64xf32, #tpu.memory_space<vmem>>, vector<1x49x64xf32>
    tpu.vector_store %arg5[%c0_10, %c0_11, %c0_12], %29 {strides = array<i32>} : memref<1x49x64xf32, #tpu.memory_space<vmem>>, vector<1x49x64xf32>,
    return
  }
  func.func @transform_0(%arg0: i32) -> (i32, i32, i32) {
    %c0_i32 = arith.constant 0 : i32
    %c0_i32_0 = arith.constant 0 : i32
    %c0_i32_1 = arith.constant 0 : i32
    return %arg0, %c0_i32, %c0_i32_0 : i32, i32, i32
  }
  func.func @transform_1(%arg0: i32) -> (i32, i32) {
    %c0_i32 = arith.constant 0 : i32
    %c0_i32_0 = arith.constant 0 : i32
    %c0_i32_1 = arith.constant 0 : i32
    return %c0_i32, %c0_i32_0 : i32, i32
  }
  func.func @transform_2(%arg0: i32) -> (i32, i32) {
    %c0_i32 = arith.constant 0 : i32
    %c0_i32_0 = arith.constant 0 : i32
    %c0_i32_1 = arith.constant 0 : i32
    return %c0_i32, %c0_i32_0 : i32, i32
  }
  func.func @transform_3(%arg0: i32) -> (i32, i32) {
    %c0_i32 = arith.constant 0 : i32
    %c0_i32_0 = arith.constant 0 : i32
    %c0_i32_1 = arith.constant 0 : i32
    return %c0_i32, %c0_i32_0 : i32, i32
  }
  func.func @transform_4(%arg0: i32) -> (i32, i32, i32) {
    %c0_i32 = arith.constant 0 : i32
    %c0_i32_0 = arith.constant 0 : i32
    %c0_i32_1 = arith.constant 0 : i32
    return %arg0, %c0_i32, %c0_i32_0 : i32, i32, i32
  }
}

module attributes {stable_mosaic.version = 11 : i64} {
  func.func @kernel(%arg0: i32, %arg1: memref<1x108x64xf32, #tpu.memory_space<vmem>>, %arg2: memref<576x64xbf16, #tpu.memory_space<vmem>>, %arg3: memref<1x64xf32, #tpu.memory_space<vmem>>, %arg4: memref<9x63xf32, #tpu.memory_space<vmem>>, %arg5: memref<1x9x64xf32, #tpu.memory_space<vmem>>) attributes {dimension_semantics = [#tpu.dimension_semantics<parallel>], iteration_bounds = array<i64: 2>, scalar_prefetch = 0 : i64, scratch_operands = 0 : i64, tpu.core_type = #tpu.core_type<tc>, window_params = [{transform_indices = @transform_0, window_bounds = array<i64: 1, 108, 64>}, {pipeline_mode = #tpu.pipeline_mode<synchronous>, transform_indices = @transform_1, window_bounds = array<i64: 576, 64>}, {pipeline_mode = #tpu.pipeline_mode<synchronous>, transform_indices = @transform_2, window_bounds = array<i64: 1, 64>}, {pipeline_mode = #tpu.pipeline_mode<synchronous>, transform_indices = @transform_3, window_bounds = array<i64: 9, 63>}, {transform_indices = @transform_4, window_bounds = array<i64: 1, 9, 64>}]} {
    %c0 = arith.constant 0 : index
    %c0_0 = arith.constant 0 : index
    %c0_1 = arith.constant 0 : index
    %0 = vector.load %arg1[%c0, %c0_0, %c0_1] : memref<1x108x64xf32, #tpu.memory_space<vmem>>, vector<1x108x64xf32>
    %1 = vector.shape_cast %0 : vector<1x108x64xf32> to vector<108x64xf32>
    %2 = vector.extract_strided_slice %1 {offsets = [0, 0], sizes = [81, 64], strides = [1, 1]} : vector<108x64xf32> to vector<81x64xf32>
    %3 = vector.extract_strided_slice %1 {offsets = [1, 0], sizes = [81, 64], strides = [1, 1]} : vector<108x64xf32> to vector<81x64xf32>
    %4 = vector.extract_strided_slice %1 {offsets = [2, 0], sizes = [81, 64], strides = [1, 1]} : vector<108x64xf32> to vector<81x64xf32>
    %5 = vector.extract_strided_slice %1 {offsets = [9, 0], sizes = [81, 64], strides = [1, 1]} : vector<108x64xf32> to vector<81x64xf32>
    %6 = vector.extract_strided_slice %1 {offsets = [10, 0], sizes = [81, 64], strides = [1, 1]} : vector<108x64xf32> to vector<81x64xf32>
    %7 = vector.extract_strided_slice %1 {offsets = [11, 0], sizes = [81, 64], strides = [1, 1]} : vector<108x64xf32> to vector<81x64xf32>
    %8 = vector.extract_strided_slice %1 {offsets = [18, 0], sizes = [81, 64], strides = [1, 1]} : vector<108x64xf32> to vector<81x64xf32>
    %9 = vector.extract_strided_slice %1 {offsets = [19, 0], sizes = [81, 64], strides = [1, 1]} : vector<108x64xf32> to vector<81x64xf32>
    %10 = vector.extract_strided_slice %1 {offsets = [20, 0], sizes = [81, 64], strides = [1, 1]} : vector<108x64xf32> to vector<81x64xf32>
    %11 = tpu.concatenate %2, %3, %4, %5, %6, %7, %8, %9, %10 in 1 : vector<81x64xf32>, vector<81x64xf32>, vector<81x64xf32>, vector<81x64xf32>, vector<81x64xf32>, vector<81x64xf32>, vector<81x64xf32>, vector<81x64xf32>, vector<81x64xf32> -> vector<81x576xf32>
    %12 = arith.truncf %11 : vector<81x576xf32> to vector<81x576xbf16>
    %c0_2 = arith.constant 0 : index
    %c0_3 = arith.constant 0 : index
    %13 = vector.load %arg2[%c0_2, %c0_3] : memref<576x64xbf16, #tpu.memory_space<vmem>>, vector<576x64xbf16>
    %cst = arith.constant dense<0.000000e+00> : vector<81x64xf32>
    %14 = tpu.matmul %12, %13, %cst {dimension_numbers = #tpu.dot_dimension_numbers<[1], [0], [0], [1], [0, 0, 1, 1], [], []>} : vector<81x576xbf16>, vector<576x64xbf16>, vector<81x64xf32> -> vector<81x64xf32>
    %c0_4 = arith.constant 0 : index
    %c0_5 = arith.constant 0 : index
    %15 = vector.load %arg3[%c0_4, %c0_5] : memref<1x64xf32, #tpu.memory_space<vmem>>, vector<1x64xf32>
    %16 = vector.broadcast %15 : vector<1x64xf32> to vector<81x64xf32>
    %17 = arith.addf %14, %16 : vector<81x64xf32>
    %cst_6 = arith.constant 0.000000e+00 : f32
    %18 = vector.broadcast %cst_6 : f32 to vector<81x64xf32>
    %19 = arith.maximumf %17, %18 : vector<81x64xf32>
    %20 = vector.extract_strided_slice %19 {offsets = [0, 0], sizes = [72, 64], strides = [1, 1]} : vector<81x64xf32> to vector<72x64xf32>
    %21 = vector.extract_strided_slice %19 {offsets = [9, 0], sizes = [72, 64], strides = [1, 1]} : vector<81x64xf32> to vector<72x64xf32>
    %22 = arith.maximumf %20, %21 : vector<72x64xf32>
    %23 = vector.extract_strided_slice %22 {offsets = [0, 0], sizes = [71, 64], strides = [1, 1]} : vector<72x64xf32> to vector<71x64xf32>
    %24 = vector.extract_strided_slice %22 {offsets = [1, 0], sizes = [71, 64], strides = [1, 1]} : vector<72x64xf32> to vector<71x64xf32>
    %25 = arith.maximumf %23, %24 : vector<71x64xf32>
    %c0_7 = arith.constant 0 : index
    %c0_8 = arith.constant 0 : index
    %26 = vector.load %arg4[%c0_7, %c0_8] : memref<9x63xf32, #tpu.memory_space<vmem>>, vector<9x63xf32>
    %27 = vector.extract_strided_slice %25 {offsets = [0, 0], sizes = [63, 64], strides = [1, 1]} : vector<71x64xf32> to vector<63x64xf32>
    %cst_9 = arith.constant dense<0.000000e+00> : vector<9x64xf32>
    %28 = tpu.matmul %26, %27, %cst_9 {dimension_numbers = #tpu.dot_dimension_numbers<[1], [0], [0], [1], [0, 0, 1, 1], [], []>} : vector<9x63xf32>, vector<63x64xf32>, vector<9x64xf32> -> vector<9x64xf32>
    %29 = vector.shape_cast %28 : vector<9x64xf32> to vector<1x9x64xf32>
    %c0_10 = arith.constant 0 : index
    %c0_11 = arith.constant 0 : index
    %c0_12 = arith.constant 0 : index
    %30 = vector.load %arg5[%c0_10, %c0_11, %c0_12] : memref<1x9x64xf32, #tpu.memory_space<vmem>>, vector<1x9x64xf32>
    tpu.vector_store %arg5[%c0_10, %c0_11, %c0_12], %29 {strides = array<i32>} : memref<1x9x64xf32, #tpu.memory_space<vmem>>, vector<1x9x64xf32>,
    return
  }
  func.func @transform_0(%arg0: i32) -> (i32, i32, i32) {
    %c0_i32 = arith.constant 0 : i32
    %c0_i32_0 = arith.constant 0 : i32
    %c0_i32_1 = arith.constant 0 : i32
    return %arg0, %c0_i32, %c0_i32_0 : i32, i32, i32
  }
  func.func @transform_1(%arg0: i32) -> (i32, i32) {
    %c0_i32 = arith.constant 0 : i32
    %c0_i32_0 = arith.constant 0 : i32
    %c0_i32_1 = arith.constant 0 : i32
    return %c0_i32, %c0_i32_0 : i32, i32
  }
  func.func @transform_2(%arg0: i32) -> (i32, i32) {
    %c0_i32 = arith.constant 0 : i32
    %c0_i32_0 = arith.constant 0 : i32
    %c0_i32_1 = arith.constant 0 : i32
    return %c0_i32, %c0_i32_0 : i32, i32
  }
  func.func @transform_3(%arg0: i32) -> (i32, i32) {
    %c0_i32 = arith.constant 0 : i32
    %c0_i32_0 = arith.constant 0 : i32
    %c0_i32_1 = arith.constant 0 : i32
    return %c0_i32, %c0_i32_0 : i32, i32
  }
  func.func @transform_4(%arg0: i32) -> (i32, i32, i32) {
    %c0_i32 = arith.constant 0 : i32
    %c0_i32_0 = arith.constant 0 : i32
    %c0_i32_1 = arith.constant 0 : i32
    return %arg0, %c0_i32, %c0_i32_0 : i32, i32, i32
  }
}

module attributes {stable_mosaic.version = 11 : i64} {
  func.func @_dense_head_kernel(%arg0: i32, %arg1: memref<2x576xf32, #tpu.memory_space<vmem>>, %arg2: memref<576x128xbf16, #tpu.memory_space<vmem>>, %arg3: memref<1x128xf32, #tpu.memory_space<vmem>>, %arg4: memref<128x10xbf16, #tpu.memory_space<vmem>>, %arg5: memref<1x10xf32, #tpu.memory_space<vmem>>, %arg6: memref<2x10xf32, #tpu.memory_space<vmem>>) attributes {dimension_semantics = [#tpu.dimension_semantics<parallel>], iteration_bounds = array<i64: 1>, scalar_prefetch = 0 : i64, scratch_operands = 0 : i64, tpu.core_type = #tpu.core_type<tc>, window_params = [{transform_indices = @transform_0, window_bounds = array<i64: 2, 576>}, {pipeline_mode = #tpu.pipeline_mode<synchronous>, transform_indices = @transform_1, window_bounds = array<i64: 576, 128>}, {pipeline_mode = #tpu.pipeline_mode<synchronous>, transform_indices = @transform_2, window_bounds = array<i64: 1, 128>}, {pipeline_mode = #tpu.pipeline_mode<synchronous>, transform_indices = @transform_3, window_bounds = array<i64: 128, 10>}, {pipeline_mode = #tpu.pipeline_mode<synchronous>, transform_indices = @transform_4, window_bounds = array<i64: 1, 10>}, {transform_indices = @transform_5, window_bounds = array<i64: 2, 10>}]} {
    %c0 = arith.constant 0 : index
    %c0_0 = arith.constant 0 : index
    %0 = vector.load %arg1[%c0, %c0_0] : memref<2x576xf32, #tpu.memory_space<vmem>>, vector<2x576xf32>
    %1 = arith.truncf %0 : vector<2x576xf32> to vector<2x576xbf16>
    %c0_1 = arith.constant 0 : index
    %c0_2 = arith.constant 0 : index
    %2 = vector.load %arg2[%c0_1, %c0_2] : memref<576x128xbf16, #tpu.memory_space<vmem>>, vector<576x128xbf16>
    %cst = arith.constant dense<0.000000e+00> : vector<2x128xf32>
    %3 = tpu.matmul %1, %2, %cst {dimension_numbers = #tpu.dot_dimension_numbers<[1], [0], [0], [1], [0, 0, 1, 1], [], []>} : vector<2x576xbf16>, vector<576x128xbf16>, vector<2x128xf32> -> vector<2x128xf32>
    %c0_3 = arith.constant 0 : index
    %c0_4 = arith.constant 0 : index
    %4 = vector.load %arg3[%c0_3, %c0_4] : memref<1x128xf32, #tpu.memory_space<vmem>>, vector<1x128xf32>
    %5 = vector.broadcast %4 : vector<1x128xf32> to vector<2x128xf32>
    %6 = arith.addf %3, %5 : vector<2x128xf32>
    %cst_5 = arith.constant 0.000000e+00 : f32
    %7 = vector.broadcast %cst_5 : f32 to vector<2x128xf32>
    %8 = arith.maximumf %6, %7 : vector<2x128xf32>
    %9 = arith.truncf %8 : vector<2x128xf32> to vector<2x128xbf16>
    %c0_6 = arith.constant 0 : index
    %c0_7 = arith.constant 0 : index
    %10 = vector.load %arg4[%c0_6, %c0_7] : memref<128x10xbf16, #tpu.memory_space<vmem>>, vector<128x10xbf16>
    %cst_8 = arith.constant dense<0.000000e+00> : vector<2x10xf32>
    %11 = tpu.matmul %9, %10, %cst_8 {dimension_numbers = #tpu.dot_dimension_numbers<[1], [0], [0], [1], [0, 0, 1, 1], [], []>} : vector<2x128xbf16>, vector<128x10xbf16>, vector<2x10xf32> -> vector<2x10xf32>
    %c0_9 = arith.constant 0 : index
    %c0_10 = arith.constant 0 : index
    %12 = vector.load %arg5[%c0_9, %c0_10] : memref<1x10xf32, #tpu.memory_space<vmem>>, vector<1x10xf32>
    %13 = vector.broadcast %12 : vector<1x10xf32> to vector<2x10xf32>
    %14 = arith.addf %11, %13 : vector<2x10xf32>
    %cst_11 = arith.constant dense<0xFF800000> : vector<2xf32>
    %15 = vector.multi_reduction <maximumf>, %14, %cst_11 [1] : vector<2x10xf32> to vector<2xf32>
    %16 = vector.shape_cast %15 : vector<2xf32> to vector<2x1xf32>
    %17 = vector.broadcast %16 : vector<2x1xf32> to vector<2x10xf32>
    %18 = arith.subf %14, %17 : vector<2x10xf32>
    %19 = math.exp %18 : vector<2x10xf32>
    %cst_12 = arith.constant dense<0.000000e+00> : vector<2xf32>
    %20 = vector.multi_reduction <add>, %19, %cst_12 [1] : vector<2x10xf32> to vector<2xf32>
    %21 = vector.shape_cast %20 : vector<2xf32> to vector<2x1xf32>
    %22 = math.log %21 : vector<2x1xf32>
    %23 = vector.broadcast %22 : vector<2x1xf32> to vector<2x10xf32>
    %24 = arith.subf %18, %23 : vector<2x10xf32>
    %c0_13 = arith.constant 0 : index
    %c0_14 = arith.constant 0 : index
    %25 = vector.load %arg6[%c0_13, %c0_14] : memref<2x10xf32, #tpu.memory_space<vmem>>, vector<2x10xf32>
    tpu.vector_store %arg6[%c0_13, %c0_14], %24 {strides = array<i32>} : memref<2x10xf32, #tpu.memory_space<vmem>>, vector<2x10xf32>,
    return
  }
  func.func @transform_0(%arg0: i32) -> (i32, i32) {
    %c0_i32 = arith.constant 0 : i32
    %c0_i32_0 = arith.constant 0 : i32
    return %arg0, %c0_i32 : i32, i32
  }
  func.func @transform_1(%arg0: i32) -> (i32, i32) {
    %c0_i32 = arith.constant 0 : i32
    %c0_i32_0 = arith.constant 0 : i32
    %c0_i32_1 = arith.constant 0 : i32
    return %c0_i32, %c0_i32_0 : i32, i32
  }
  func.func @transform_2(%arg0: i32) -> (i32, i32) {
    %c0_i32 = arith.constant 0 : i32
    %c0_i32_0 = arith.constant 0 : i32
    %c0_i32_1 = arith.constant 0 : i32
    return %c0_i32, %c0_i32_0 : i32, i32
  }
  func.func @transform_3(%arg0: i32) -> (i32, i32) {
    %c0_i32 = arith.constant 0 : i32
    %c0_i32_0 = arith.constant 0 : i32
    %c0_i32_1 = arith.constant 0 : i32
    return %c0_i32, %c0_i32_0 : i32, i32
  }
  func.func @transform_4(%arg0: i32) -> (i32, i32) {
    %c0_i32 = arith.constant 0 : i32
    %c0_i32_0 = arith.constant 0 : i32
    %c0_i32_1 = arith.constant 0 : i32
    return %c0_i32, %c0_i32_0 : i32, i32
  }
  func.func @transform_5(%arg0: i32) -> (i32, i32) {
    %c0_i32 = arith.constant 0 : i32
    %c0_i32_0 = arith.constant 0 : i32
    return %arg0, %c0_i32 : i32, i32
  }
}

</mosaic_0001>

<llo_original>
// kernel: net_forward.5
$region0: #{net_forward.5}
  #allocation0 [shape = 'u32[]', space=smem, size = 0x4, offset = 0x4, fixed_abs, tag = 'smem constant byte address 0x4 - core index']
  #allocation1 [shape = 'u32[144,128]{1,0:T(1,128)}', space=vmem, size = 0x12000, scoped, tag = 'internal scratch']
  %s0 = inlined_call_operand.vmem [shape: f32[2,304,32], index: 0, kind: input, shape index: {}]
  %s1 = inlined_call_operand.vmem [shape: bf16[288,64], index: 1, kind: input, shape index: {}]
  %s2 = inlined_call_operand.vmem [shape: f32[1,64], index: 2, kind: input, shape index: {}]
  %s3 = inlined_call_operand.vmem [shape: f32[49,224], index: 3, kind: input, shape index: {}]
  %s4 = inlined_call_operand.vmem [shape: f32[2,49,64], index: 4, kind: output, shape index: {}]
  %s5 = sld [smem:[#allocation0]]
  $region49: #{net_forward.5} parent=0
    _
  %s7 = ssub.s32 1, %s5
  %s8 = scalar_select 0, %s7, %s5
  loop: start=0, step=1, limit=4
  $region2: #{net_forward.5} parent=0 // loop_pre_header
    _
  $region3: #{net_forward.5} parent=0 // loop_header
    %s10 = sphi 0, %s14
    %p11 = scmp.ge.s32.totalorder %s10, 4
    %s20 = sphi 0, %s22
    %s23 = sphi 0, %s20
    %s24 = sphi 0, %s23
    %s40 = sphi 0, %s24
    %s44 = sphi 0, %s44
    %s46 = sphi 0, %s44
    %s47 = sphi 0, %s46
    %s61 = sphi 0, %s47
    %s65 = sphi 0, %s65
    %s67 = sphi 0, %s65
    %s68 = sphi 0, %s67
    %s82 = sphi 0, %s68
    %s86 = sphi 0, %s86
    %s88 = sphi 0, %s86
    %s89 = sphi 0, %s88
    %s103 = sphi 0, %s89
    %s109 = sphi 0, %s111
    %s112 = sphi 0, %s109
    %s113 = sphi 0, %s112
    %s129 = sphi 0, %s113
  $region4: #{net_forward.5} parent=0 // loop_header_branch
    %13 = sbr.rel (%p11) target = $region8
  $region5: #{net_forward.5} parent=0 // loop_body
    %s15 = ssub.s32 %s10, 1
    %s16 = ssub.s32 %s10, 2
    %s17 = sadd.s32 %s10, 1
    %s18 = ssub.s32 %s10, %s17
    %p19 = scmp.eq.s32.totalorder %s18, 0
    %s21 = sadd.s32 %s20, 1
    %s22 = scalar_select %p19, %s20, %s21
    %p25 = pneg %p19
    %p26 = scmp.eq.s32.totalorder %s10, 1
    %p27 = por %p25, %p26
    %p28 = scmp.ne.s32.totalorder %s20, %s23
    %p29 = scmp.eq.s32.totalorder %s10, 0
    %p30 = por %p28, %p29
    %p31 = scmp.ne.s32.totalorder %s20, %s23
    %p32 = scmp.eq.s32.totalorder %s15, 1
    %p33 = por %p31, %p32
    %p34 = scmp.ne.s32.totalorder %s23, %s24
    %p35 = scmp.eq.s32.totalorder %s15, 0
    %p36 = por %p34, %p35
    %p37 = scmp.ne.s32.totalorder %s23, %s24
    %p38 = scmp.eq.s32.totalorder %s16, 1
    %p39 = por %p37, %p38
    %p41 = scmp.ne.s32.totalorder %s24, %s40
    %p42 = scmp.eq.s32.totalorder %s16, 0
    %p43 = por %p41, %p42
    %s45 = sadd.s32 %s44, 1
    %p48 = scmp.eq.s32.totalorder %s10, 1
    %p49 = scmp.ne.s32.totalorder %s44, %s46
    %p50 = scmp.eq.s32.totalorder %s10, 0
    %p51 = por %p49, %p50
    %p52 = scmp.ne.s32.totalorder %s44, %s46
    %p53 = scmp.eq.s32.totalorder %s15, 1
    %p54 = por %p52, %p53
    %p55 = scmp.ne.s32.totalorder %s46, %s47
    %p56 = scmp.eq.s32.totalorder %s15, 0
    %p57 = por %p55, %p56
    %p58 = scmp.ne.s32.totalorder %s46, %s47
    %p59 = scmp.eq.s32.totalorder %s16, 1
    %p60 = por %p58, %p59
    %p62 = scmp.ne.s32.totalorder %s47, %s61
    %p63 = scmp.eq.s32.totalorder %s16, 0
    %p64 = por %p62, %p63
    %s66 = sadd.s32 %s65, 1
    %p69 = scmp.eq.s32.totalorder %s10, 1
    %p70 = scmp.ne.s32.totalorder %s65, %s67
    %p71 = scmp.eq.s32.totalorder %s10, 0
    %p72 = por %p70, %p71
    %p73 = scmp.ne.s32.totalorder %s65, %s67
    %p74 = scmp.eq.s32.totalorder %s15, 1
    %p75 = por %p73, %p74
    %p76 = scmp.ne.s32.totalorder %s67, %s68
    %p77 = scmp.eq.s32.totalorder %s15, 0
    %p78 = por %p76, %p77
    %p79 = scmp.ne.s32.totalorder %s67, %s68
    %p80 = scmp.eq.s32.totalorder %s16, 1
    %p81 = por %p79, %p80
    %p83 = scmp.ne.s32.totalorder %s68, %s82
    %p84 = scmp.eq.s32.totalorder %s16, 0
    %p85 = por %p83, %p84
    %s87 = sadd.s32 %s86, 1
    %p90 = scmp.eq.s32.totalorder %s10, 1
    %p91 = scmp.ne.s32.totalorder %s86, %s88
    %p92 = scmp.eq.s32.totalorder %s10, 0
    %p93 = por %p91, %p92
    %p94 = scmp.ne.s32.totalorder %s86, %s88
    %p95 = scmp.eq.s32.totalorder %s15, 1
    %p96 = por %p94, %p95
    %p97 = scmp.ne.s32.totalorder %s88, %s89
    %p98 = scmp.eq.s32.totalorder %s15, 0
    %p99 = por %p97, %p98
    %p100 = scmp.ne.s32.totalorder %s88, %s89
    %p101 = scmp.eq.s32.totalorder %s16, 1
    %p102 = por %p100, %p101
    %p104 = scmp.ne.s32.totalorder %s89, %s103
    %p105 = scmp.eq.s32.totalorder %s16, 0
    %p106 = por %p104, %p105
    %s107 = ssub.s32 %s10, %s17
    %p108 = scmp.eq.s32.totalorder %s107, 0
    %s110 = sadd.s32 %s109, 1
    %s111 = scalar_select %p108, %s109, %s110
    %p114 = pneg %p108
    %p115 = scmp.eq.s32.totalorder %s10, 1
    %p116 = por %p114, %p115
    %p117 = scmp.ne.s32.totalorder %s109, %s112
    %p118 = scmp.eq.s32.totalorder %s10, 0
    %p119 = por %p117, %p118
    %p120 = scmp.ne.s32.totalorder %s109, %s112
    %p121 = scmp.eq.s32.totalorder %s15, 1
    %p122 = por %p120, %p121
    %p123 = scmp.ne.s32.totalorder %s112, %s113
    %p124 = scmp.eq.s32.totalorder %s15, 0
    %p125 = por %p123, %p124
    %p126 = scmp.ne.s32.totalorder %s112, %s113
    %p127 = scmp.eq.s32.totalorder %s16, 1
    %p128 = por %p126, %p127
    %p130 = scmp.ne.s32.totalorder %s113, %s129
    %p131 = scmp.eq.s32.totalorder %s16, 0
    %p132 = por %p130, %p131
    %p133 = scmp.le.s32.totalorder 1, %s10
    %p134 = scmp.lt.s32.totalorder %s10, 3
    %p135 = pnand %p133, %p134
    %p136 = pneg %p135
    // Predicated region
    $region9: #{net_forward.5} parent=5 // pred_check
      _
    $region10: #{net_forward.5} parent=5 // pred_check_branch
      %138 = sbr.rel (%p135) target = $region12
    $region11: #{net_forward.5} parent=5 // pred_region
      %s139 = ssub.s32 %s10, 1
      // Predicated region
      $region13: #{net_forward.5} parent=11 // pred_check
        %p140 = pneg %p57
      $region14: #{net_forward.5} parent=11 // pred_check_branch
        %142 = sbr.rel (%p140) target = $region16
      $region15: #{net_forward.5} parent=11 // pred_region
        _
      $region16: #{net_forward.5} parent=11 // pred_fallthru
        _
      // Predicated region
      $region17: #{net_forward.5} parent=11 // pred_check
        %p143 = pneg %p78
      $region18: #{net_forward.5} parent=11 // pred_check_branch
        %145 = sbr.rel (%p143) target = $region20
      $region19: #{net_forward.5} parent=11 // pred_region
        _
      $region20: #{net_forward.5} parent=11 // pred_fallthru
        _
      // Predicated region
      $region21: #{net_forward.5} parent=11 // pred_check
        %p146 = pneg %p99
      $region22: #{net_forward.5} parent=11 // pred_check_branch
        %148 = sbr.rel (%p146) target = $region24
      $region23: #{net_forward.5} parent=11 // pred_region
        _
      $region24: #{net_forward.5} parent=11 // pred_fallthru
        _
    $region12: #{net_forward.5} parent=5 // pred_fallthru
      _
    %p149 = scmp.lt.s32.totalorder %s10, 2
    // Predicated region
    $region25: #{net_forward.5} parent=5 // pred_check
      %p150 = pneg %p149
    $region26: #{net_forward.5} parent=5 // pred_check_branch
      %152 = sbr.rel (%p150) target = $region28
    $region27: #{net_forward.5} parent=5 // pred_region
      // Predicated region
      $region29: #{net_forward.5} parent=27 // pred_check
        %p153 = pneg %p30
      $region30: #{net_forward.5} parent=27 // pred_check_branch
        %155 = sbr.rel (%p153) target = $region32
      $region31: #{net_forward.5} parent=27 // pred_region
        %p156 = scmp.lt.s32.totalorder %s10, 1
        %s157 = scalar_select %p156, %s10, 1
        %s158 = smul.addr %s157, 38
        %s159 = smul.addr %s158, 8
        %s160 = scalar_lea.vmem %s0, %s159
      $region32: #{net_forward.5} parent=27 // pred_fallthru
        _
    $region28: #{net_forward.5} parent=5 // pred_fallthru
      _
    %p161 = scmp.le.s32.totalorder 1, %s10
    %p162 = scmp.lt.s32.totalorder %s10, 3
    %p163 = pnand %p161, %p162
    %p164 = pneg %p163
    // Predicated region
    $region33: #{net_forward.5} parent=5 // pred_check
      _
    $region34: #{net_forward.5} parent=5 // pred_check_branch
      %166 = sbr.rel (%p163) target = $region36
    $region35: #{net_forward.5} parent=5 // pred_region
      %s167 = ssub.s32 %s10, 1
      %p168 = scmp.lt.s32.totalorder %s15, 1
      %s169 = scalar_select %p168, %s15, 1
      %s170 = smul.addr %s169, 38
      %s171 = smul.addr %s170, 8
      %s172 = scalar_lea.vmem %s0, %s171
      %p173 = pneg %p36
      %p174 = pneg %p33
      %p175 = pneg %p57
      %p176 = pneg %p54
      %p177 = pneg %p78
      %p178 = pneg %p75
      %p179 = pneg %p99
      %p180 = pneg %p96
      %p181 = pneg %p125
      %p182 = pneg %p122
      %p183 = scmp.lt.s32.totalorder %s15, 1
      %s184 = scalar_select %p183, %s15, 1
      %s185 = smul.addr %s184, 7
      %s186 = smul.addr %s185, 8
      %s187 = scalar_lea.vmem %s4, %s186
      %p188 = scmp.lt.s32.totalorder %s15, 1
      %s189 = scalar_select %p188, %s15, 1
      %s190 = smul.addr %s189, 38
      %s191 = smul.addr %s190, 8
      %s192 = scalar_lea.vmem %s0, %s191
      %p193 = scmp.lt.s32.totalorder %s15, 1
      %s194 = scalar_select %p193, %s15, 1
      %s195 = smul.addr %s194, 7
      %s196 = smul.addr %s195, 8
      %s197 = scalar_lea.vmem %s4, %s196
      %v199 = vld [vmem:[%s192] sm:$0xff]
      %v200 = vld [vmem:[%s192 + $0x8] sm:$0xff]
      %v201 = vld [vmem:[%s192 + $0x10] sm:$0xff]
      %v202 = vld [vmem:[%s192 + $0x18] sm:$0xff]
      %v203 = vld [vmem:[%s192 + $0x20] sm:$0xff]
      %v204 = vld [vmem:[%s192 + $0x28] sm:$0xff]
      %v205 = vld [vmem:[%s192 + $0x30] sm:$0xff]
      %v206 = vld [vmem:[%s192 + $0x38] sm:$0xff]
      %v207 = vld [vmem:[%s192 + $0x40] sm:$0xff]
      %v208 = vld [vmem:[%s192 + $0x48] sm:$0xff]
      %v209 = vld [vmem:[%s192 + $0x50] sm:$0xff]
      %v210 = vld [vmem:[%s192 + $0x58] sm:$0xff]
      %v211 = vld [vmem:[%s192 + $0x60] sm:$0xff]
      %v212 = vld [vmem:[%s192 + $0x68] sm:$0xff]
      %v213 = vld [vmem:[%s192 + $0x70] sm:$0xff]
      %v214 = vld [vmem:[%s192 + $0x78] sm:$0xff]
      %v215 = vld [vmem:[%s192 + $0x80] sm:$0xff]
      %v216 = vld [vmem:[%s192 + $0x88] sm:$0xff]
      %v217 = vld [vmem:[%s192 + $0x90] sm:$0xff]
      %v218 = vld [vmem:[%s192 + $0x98] sm:$0xff]
      %v219 = vld [vmem:[%s192 + $0xa0] sm:$0xff]
      %v220 = vld [vmem:[%s192 + $0xa8] sm:$0xff]
      %v221 = vld [vmem:[%s192 + $0xb0] sm:$0xff]
      %v222 = vld [vmem:[%s192 + $0xb8] sm:$0xff]
      %v223 = vld [vmem:[%s192 + $0xc0] sm:$0xff]
      %v224 = vld [vmem:[%s192 + $0xc8] sm:$0xff]
      %v225 = vld [vmem:[%s192 + $0xd0] sm:$0xff]
      %v226 = vld [vmem:[%s192 + $0xd8] sm:$0xff]
      %v227 = vld [vmem:[%s192 + $0xe0] sm:$0xff]
      %v228 = vld [vmem:[%s192 + $0xe8] sm:$0xff]
      %v229 = vld [vmem:[%s192 + $0xf0] sm:$0xff]
      %v230 = vld [vmem:[%s192 + $0xf8] sm:$0xff]
      %v231 = vld [vmem:[%s192 + $0x100] sm:$0xff]
      %v232 = vld [vmem:[%s192 + $0x108] sm:$0xff]
      %v233 = vld [vmem:[%s192 + $0x110] sm:$0xff]
      %v234 = vld [vmem:[%s192 + $0x118] sm:$0xff]
      %v235 = vld [vmem:[%s192 + $0x120] sm:$0xff]
      %vm269 = vcmask 1046528
      %v270 = vrot.slane %v199, 1
      %v271 = vrot.slane %v200, 1
      %v272 = vsel %vm269, %v270, %v271
      %v273 = vrot.slane %v201, 1
      %v274 = vsel %vm269, %v271, %v273
      %v275 = vrot.slane %v202, 1
      %v276 = vsel %vm269, %v273, %v275
      %v277 = vrot.slane %v203, 1
      %v278 = vsel %vm269, %v275, %v277
      %v279 = vrot.slane %v204, 1
      %v280 = vsel %vm269, %v277, %v279
      %v281 = vrot.slane %v205, 1
      %v282 = vsel %vm269, %v279, %v281
      %v283 = vrot.slane %v206, 1
      %v284 = vsel %vm269, %v281, %v283
      %v285 = vrot.slane %v207, 1
      %v286 = vsel %vm269, %v283, %v285
      %v287 = vrot.slane %v208, 1
      %v288 = vsel %vm269, %v285, %v287
      %v289 = vrot.slane %v209, 1
      %v290 = vsel %vm269, %v287, %v289
      %v291 = vrot.slane %v210, 1
      %v292 = vsel %vm269, %v289, %v291
      %v293 = vrot.slane %v211, 1
      %v294 = vsel %vm269, %v291, %v293
      %v295 = vrot.slane %v212, 1
      %v296 = vsel %vm269, %v293, %v295
      %v297 = vrot.slane %v213, 1
      %v298 = vsel %vm269, %v295, %v297
      %v299 = vrot.slane %v214, 1
      %v300 = vsel %vm269, %v297, %v299
      %v301 = vrot.slane %v215, 1
      %v302 = vsel %vm269, %v299, %v301
      %v303 = vrot.slane %v216, 1
      %v304 = vsel %vm269, %v301, %v303
      %v305 = vrot.slane %v217, 1
      %v306 = vsel %vm269, %v303, %v305
      %v307 = vrot.slane %v218, 1
      %v308 = vsel %vm269, %v305, %v307
      %v309 = vrot.slane %v219, 1
      %v310 = vsel %vm269, %v307, %v309
      %v311 = vrot.slane %v220, 1
      %v312 = vsel %vm269, %v309, %v311
      %v313 = vrot.slane %v221, 1
      %v314 = vsel %vm269, %v311, %v313
      %v315 = vrot.slane %v222, 1
      %v316 = vsel %vm269, %v313, %v315
      %v317 = vrot.slane %v223, 1
      %v318 = vsel %vm269, %v315, %v317
      %v319 = vrot.slane %v224, 1
      %v320 = vsel %vm269, %v317, %v319
      %v321 = vrot.slane %v225, 1
      %v322 = vsel %vm269, %v319, %v321
      %v323 = vrot.slane %v226, 1
      %v324 = vsel %vm269, %v321, %v323
      %v325 = vrot.slane %v227, 1
      %v326 = vsel %vm269, %v323, %v325
      %v327 = vrot.slane %v228, 1
      %v328 = vsel %vm269, %v325, %v327
      %v329 = vrot.slane %v229, 1
      %v330 = vsel %vm269, %v327, %v329
      %v331 = vrot.slane %v230, 1
      %v332 = vsel %vm269, %v329, %v331
      %v333 = vrot.slane %v231, 1
      %v334 = vsel %vm269, %v331, %v333
      %335 = vrot.lane.b32.xlu0 %v272, 32
      %v336 = vpop.permute.xlu0 %335
      %337 = vrot.lane.b32.xlu0 %v274, 32
      %v338 = vpop.permute.xlu0 %337
      %339 = vrot.lane.b32.xlu0 %v276, 32
      %v340 = vpop.permute.xlu0 %339
      %341 = vrot.lane.b32.xlu0 %v278, 32
      %v342 = vpop.permute.xlu0 %341
      %343 = vrot.lane.b32.xlu0 %v280, 32
      %v344 = vpop.permute.xlu0 %343
      %345 = vrot.lane.b32.xlu0 %v282, 32
      %v346 = vpop.permute.xlu0 %345
      %347 = vrot.lane.b32.xlu0 %v284, 32
      %v348 = vpop.permute.xlu0 %347
      %349 = vrot.lane.b32.xlu0 %v286, 32
      %v350 = vpop.permute.xlu0 %349
      %351 = vrot.lane.b32.xlu0 %v288, 32
      %v352 = vpop.permute.xlu0 %351
      %353 = vrot.lane.b32.xlu0 %v290, 32
      %v354 = vpop.permute.xlu0 %353
      %355 = vrot.lane.b32.xlu0 %v292, 32
      %v356 = vpop.permute.xlu0 %355
      %357 = vrot.lane.b32.xlu0 %v294, 32
      %v358 = vpop.permute.xlu0 %357
      %359 = vrot.lane.b32.xlu0 %v296, 32
      %v360 = vpop.permute.xlu0 %359
      %361 = vrot.lane.b32.xlu0 %v298, 32
      %v362 = vpop.permute.xlu0 %361
      %363 = vrot.lane.b32.xlu0 %v300, 32
      %v364 = vpop.permute.xlu0 %363
      %365 = vrot.lane.b32.xlu0 %v302, 32
      %v366 = vpop.permute.xlu0 %365
      %367 = vrot.lane.b32.xlu0 %v304, 32
      %v368 = vpop.permute.xlu0 %367
      %369 = vrot.lane.b32.xlu0 %v306, 32
      %v370 = vpop.permute.xlu0 %369
      %371 = vrot.lane.b32.xlu0 %v308, 32
      %v372 = vpop.permute.xlu0 %371
      %373 = vrot.lane.b32.xlu0 %v310, 32
      %v374 = vpop.permute.xlu0 %373
      %375 = vrot.lane.b32.xlu0 %v312, 32
      %v376 = vpop.permute.xlu0 %375
      %377 = vrot.lane.b32.xlu0 %v314, 32
      %v378 = vpop.permute.xlu0 %377
      %379 = vrot.lane.b32.xlu0 %v316, 32
      %v380 = vpop.permute.xlu0 %379
      %381 = vrot.lane.b32.xlu0 %v318, 32
      %v382 = vpop.permute.xlu0 %381
      %383 = vrot.lane.b32.xlu0 %v320, 32
      %v384 = vpop.permute.xlu0 %383
      %385 = vrot.lane.b32.xlu0 %v322, 32
      %v386 = vpop.permute.xlu0 %385
      %387 = vrot.lane.b32.xlu0 %v324, 32
      %v388 = vpop.permute.xlu0 %387
      %389 = vrot.lane.b32.xlu0 %v326, 32
      %v390 = vpop.permute.xlu0 %389
      %391 = vrot.lane.b32.xlu0 %v328, 32
      %v392 = vpop.permute.xlu0 %391
      %393 = vrot.lane.b32.xlu0 %v330, 32
      %v394 = vpop.permute.xlu0 %393
      %395 = vrot.lane.b32.xlu0 %v332, 32
      %v396 = vpop.permute.xlu0 %395
      %397 = vrot.lane.b32.xlu0 %v334, 32
      %v398 = vpop.permute.xlu0 %397
      %vm431 = vcmask 1045504
      %v432 = vrot.slane %v199, 2
      %v433 = vrot.slane %v200, 2
      %v434 = vsel %vm431, %v432, %v433
      %v435 = vrot.slane %v201, 2
      %v436 = vsel %vm431, %v433, %v435
      %v437 = vrot.slane %v202, 2
      %v438 = vsel %vm431, %v435, %v437
      %v439 = vrot.slane %v203, 2
      %v440 = vsel %vm431, %v437, %v439
      %v441 = vrot.slane %v204, 2
      %v442 = vsel %vm431, %v439, %v441
      %v443 = vrot.slane %v205, 2
      %v444 = vsel %vm431, %v441, %v443
      %v445 = vrot.slane %v206, 2
      %v446 = vsel %vm431, %v443, %v445
      %v447 = vrot.slane %v207, 2
      %v448 = vsel %vm431, %v445, %v447
      %v449 = vrot.slane %v208, 2
      %v450 = vsel %vm431, %v447, %v449
      %v451 = vrot.slane %v209, 2
      %v452 = vsel %vm431, %v449, %v451
      %v453 = vrot.slane %v210, 2
      %v454 = vsel %vm431, %v451, %v453
      %v455 = vrot.slane %v211, 2
      %v456 = vsel %vm431, %v453, %v455
      %v457 = vrot.slane %v212, 2
      %v458 = vsel %vm431, %v455, %v457
      %v459 = vrot.slane %v213, 2
      %v460 = vsel %vm431, %v457, %v459
      %v461 = vrot.slane %v214, 2
      %v462 = vsel %vm431, %v459, %v461
      %v463 = vrot.slane %v215, 2
      %v464 = vsel %vm431, %v461, %v463
      %v465 = vrot.slane %v216, 2
      %v466 = vsel %vm431, %v463, %v465
      %v467 = vrot.slane %v217, 2
      %v468 = vsel %vm431, %v465, %v467
      %v469 = vrot.slane %v218, 2
      %v470 = vsel %vm431, %v467, %v469
      %v471 = vrot.slane %v219, 2
      %v472 = vsel %vm431, %v469, %v471
      %v473 = vrot.slane %v220, 2
      %v474 = vsel %vm431, %v471, %v473
      %v475 = vrot.slane %v221, 2
      %v476 = vsel %vm431, %v473, %v475
      %v477 = vrot.slane %v222, 2
      %v478 = vsel %vm431, %v475, %v477
      %v479 = vrot.slane %v223, 2
      %v480 = vsel %vm431, %v477, %v479
      %v481 = vrot.slane %v224, 2
      %v482 = vsel %vm431, %v479, %v481
      %v483 = vrot.slane %v225, 2
      %v484 = vsel %vm431, %v481, %v483
      %v485 = vrot.slane %v226, 2
      %v486 = vsel %vm431, %v483, %v485
      %v487 = vrot.slane %v227, 2
      %v488 = vsel %vm431, %v485, %v487
      %v489 = vrot.slane %v228, 2
      %v490 = vsel %vm431, %v487, %v489
      %v491 = vrot.slane %v229, 2
      %v492 = vsel %vm431, %v489, %v491
      %v493 = vrot.slane %v230, 2
      %v494 = vsel %vm431, %v491, %v493
      %v495 = vrot.slane %v231, 2
      %v496 = vsel %vm431, %v493, %v495
      %497 = vrot.lane.b32.xlu0 %v434, 64
      %v498 = vpop.permute.xlu0 %497
      %499 = vrot.lane.b32.xlu0 %v436, 64
      %v500 = vpop.permute.xlu0 %499
      %501 = vrot.lane.b32.xlu0 %v438, 64
      %v502 = vpop.permute.xlu0 %501
      %503 = vrot.lane.b32.xlu0 %v440, 64
      %v504 = vpop.permute.xlu0 %503
      %505 = vrot.lane.b32.xlu0 %v442, 64
      %v506 = vpop.permute.xlu0 %505
      %507 = vrot.lane.b32.xlu0 %v444, 64
      %v508 = vpop.permute.xlu0 %507
      %509 = vrot.lane.b32.xlu0 %v446, 64
      %v510 = vpop.permute.xlu0 %509
      %511 = vrot.lane.b32.xlu0 %v448, 64
      %v512 = vpop.permute.xlu0 %511
      %513 = vrot.lane.b32.xlu0 %v450, 64
      %v514 = vpop.permute.xlu0 %513
      %515 = vrot.lane.b32.xlu0 %v452, 64
      %v516 = vpop.permute.xlu0 %515
      %517 = vrot.lane.b32.xlu0 %v454, 64
      %v518 = vpop.permute.xlu0 %517
      %519 = vrot.lane.b32.xlu0 %v456, 64
      %v520 = vpop.permute.xlu0 %519
      %521 = vrot.lane.b32.xlu0 %v458, 64
      %v522 = vpop.permute.xlu0 %521
      %523 = vrot.lane.b32.xlu0 %v460, 64
      %v524 = vpop.permute.xlu0 %523
      %525 = vrot.lane.b32.xlu0 %v462, 64
      %v526 = vpop.permute.xlu0 %525
      %527 = vrot.lane.b32.xlu0 %v464, 64
      %v528 = vpop.permute.xlu0 %527
      %529 = vrot.lane.b32.xlu0 %v466, 64
      %v530 = vpop.permute.xlu0 %529
      %531 = vrot.lane.b32.xlu0 %v468, 64
      %v532 = vpop.permute.xlu0 %531
      %533 = vrot.lane.b32.xlu0 %v470, 64
      %v534 = vpop.permute.xlu0 %533
      %535 = vrot.lane.b32.xlu0 %v472, 64
      %v536 = vpop.permute.xlu0 %535
      %537 = vrot.lane.b32.xlu0 %v474, 64
      %v538 = vpop.permute.xlu0 %537
      %539 = vrot.lane.b32.xlu0 %v476, 64
      %v540 = vpop.permute.xlu0 %539
      %541 = vrot.lane.b32.xlu0 %v478, 64
      %v542 = vpop.permute.xlu0 %541
      %543 = vrot.lane.b32.xlu0 %v480, 64
      %v544 = vpop.permute.xlu0 %543
      %545 = vrot.lane.b32.xlu0 %v482, 64
      %v546 = vpop.permute.xlu0 %545
      %547 = vrot.lane.b32.xlu0 %v484, 64
      %v548 = vpop.permute.xlu0 %547
      %549 = vrot.lane.b32.xlu0 %v486, 64
      %v550 = vpop.permute.xlu0 %549
      %551 = vrot.lane.b32.xlu0 %v488, 64
      %v552 = vpop.permute.xlu0 %551
      %553 = vrot.lane.b32.xlu0 %v490, 64
      %v554 = vpop.permute.xlu0 %553
      %555 = vrot.lane.b32.xlu0 %v492, 64
      %v556 = vpop.permute.xlu0 %555
      %557 = vrot.lane.b32.xlu0 %v494, 64
      %v558 = vpop.permute.xlu0 %557
      %559 = vrot.lane.b32.xlu0 %v496, 64
      %v560 = vpop.permute.xlu0 %559
      %594 = vrot.lane.b32.xlu0 %v201, 96
      %v595 = vpop.permute.xlu0 %594
      %596 = vrot.lane.b32.xlu0 %v202, 96
      %v597 = vpop.permute.xlu0 %596
      %598 = vrot.lane.b32.xlu0 %v203, 96
      %v599 = vpop.permute.xlu0 %598
      %600 = vrot.lane.b32.xlu0 %v204, 96
      %v601 = vpop.permute.xlu0 %600
      %602 = vrot.lane.b32.xlu0 %v205, 96
      %v603 = vpop.permute.xlu0 %602
      %604 = vrot.lane.b32.xlu0 %v206, 96
      %v605 = vpop.permute.xlu0 %604
      %606 = vrot.lane.b32.xlu0 %v207, 96
      %v607 = vpop.permute.xlu0 %606
      %608 = vrot.lane.b32.xlu0 %v208, 96
      %v609 = vpop.permute.xlu0 %608
      %610 = vrot.lane.b32.xlu0 %v209, 96
      %v611 = vpop.permute.xlu0 %610
      %612 = vrot.lane.b32.xlu0 %v210, 96
      %v613 = vpop.permute.xlu0 %612
      %614 = vrot.lane.b32.xlu0 %v211, 96
      %v615 = vpop.permute.xlu0 %614
      %616 = vrot.lane.b32.xlu0 %v212, 96
      %v617 = vpop.permute.xlu0 %616
      %618 = vrot.lane.b32.xlu0 %v213, 96
      %v619 = vpop.permute.xlu0 %618
      %620 = vrot.lane.b32.xlu0 %v214, 96
      %v621 = vpop.permute.xlu0 %620
      %622 = vrot.lane.b32.xlu0 %v215, 96
      %v623 = vpop.permute.xlu0 %622
      %624 = vrot.lane.b32.xlu0 %v216, 96
      %v625 = vpop.permute.xlu0 %624
      %626 = vrot.lane.b32.xlu0 %v217, 96
      %v627 = vpop.permute.xlu0 %626
      %628 = vrot.lane.b32.xlu0 %v218, 96
      %v629 = vpop.permute.xlu0 %628
      %630 = vrot.lane.b32.xlu0 %v219, 96
      %v631 = vpop.permute.xlu0 %630
      %632 = vrot.lane.b32.xlu0 %v220, 96
      %v633 = vpop.permute.xlu0 %632
      %634 = vrot.lane.b32.xlu0 %v221, 96
      %v635 = vpop.permute.xlu0 %634
      %636 = vrot.lane.b32.xlu0 %v222, 96
      %v637 = vpop.permute.xlu0 %636
      %638 = vrot.lane.b32.xlu0 %v223, 96
      %v639 = vpop.permute.xlu0 %638
      %640 = vrot.lane.b32.xlu0 %v224, 96
      %v641 = vpop.permute.xlu0 %640
      %642 = vrot.lane.b32.xlu0 %v225, 96
      %v643 = vpop.permute.xlu0 %642
      %644 = vrot.lane.b32.xlu0 %v226, 96
      %v645 = vpop.permute.xlu0 %644
      %646 = vrot.lane.b32.xlu0 %v227, 96
      %v647 = vpop.permute.xlu0 %646
      %648 = vrot.lane.b32.xlu0 %v228, 96
      %v649 = vpop.permute.xlu0 %648
      %650 = vrot.lane.b32.xlu0 %v229, 96
      %v651 = vpop.permute.xlu0 %650
      %652 = vrot.lane.b32.xlu0 %v230, 96
      %v653 = vpop.permute.xlu0 %652
      %654 = vrot.lane.b32.xlu0 %v231, 96
      %v655 = vpop.permute.xlu0 %654
      %656 = vrot.lane.b32.xlu0 %v232, 96
      %v657 = vpop.permute.xlu0 %656
      %v691 = vrot.slane %v232, 1
      %v692 = vsel %vm269, %v333, %v691
      %v693 = vrot.slane %v233, 1
      %v694 = vsel %vm269, %v691, %v693
      %v727 = vrot.slane %v232, 2
      %v728 = vsel %vm431, %v495, %v727
      %v729 = vrot.slane %v233, 2
      %v730 = vsel %vm431, %v727, %v729
      %731 = vrot.lane.b32.xlu0 %v438, 32
      %v732 = vpop.permute.xlu0 %731
      %733 = vrot.lane.b32.xlu0 %v440, 32
      %v734 = vpop.permute.xlu0 %733
      %735 = vrot.lane.b32.xlu0 %v442, 32
      %v736 = vpop.permute.xlu0 %735
      %737 = vrot.lane.b32.xlu0 %v444, 32
      %v738 = vpop.permute.xlu0 %737
      %739 = vrot.lane.b32.xlu0 %v446, 32
      %v740 = vpop.permute.xlu0 %739
      %741 = vrot.lane.b32.xlu0 %v448, 32
      %v742 = vpop.permute.xlu0 %741
      %743 = vrot.lane.b32.xlu0 %v450, 32
      %v744 = vpop.permute.xlu0 %743
      %745 = vrot.lane.b32.xlu0 %v452, 32
      %v746 = vpop.permute.xlu0 %745
      %747 = vrot.lane.b32.xlu0 %v454, 32
      %v748 = vpop.permute.xlu0 %747
      %749 = vrot.lane.b32.xlu0 %v456, 32
      %v750 = vpop.permute.xlu0 %749
      %751 = vrot.lane.b32.xlu0 %v458, 32
      %v752 = vpop.permute.xlu0 %751
      %753 = vrot.lane.b32.xlu0 %v460, 32
      %v754 = vpop.permute.xlu0 %753
      %755 = vrot.lane.b32.xlu0 %v462, 32
      %v756 = vpop.permute.xlu0 %755
      %757 = vrot.lane.b32.xlu0 %v464, 32
      %v758 = vpop.permute.xlu0 %757
      %759 = vrot.lane.b32.xlu0 %v466, 32
      %v760 = vpop.permute.xlu0 %759
      %761 = vrot.lane.b32.xlu0 %v468, 32
      %v762 = vpop.permute.xlu0 %761
      %763 = vrot.lane.b32.xlu0 %v470, 32
      %v764 = vpop.permute.xlu0 %763
      %765 = vrot.lane.b32.xlu0 %v472, 32
      %v766 = vpop.permute.xlu0 %765
      %767 = vrot.lane.b32.xlu0 %v474, 32
      %v768 = vpop.permute.xlu0 %767
      %769 = vrot.lane.b32.xlu0 %v476, 32
      %v770 = vpop.permute.xlu0 %769
      %771 = vrot.lane.b32.xlu0 %v478, 32
      %v772 = vpop.permute.xlu0 %771
      %773 = vrot.lane.b32.xlu0 %v480, 32
      %v774 = vpop.permute.xlu0 %773
      %775 = vrot.lane.b32.xlu0 %v482, 32
      %v776 = vpop.permute.xlu0 %775
      %777 = vrot.lane.b32.xlu0 %v484, 32
      %v778 = vpop.permute.xlu0 %777
      %779 = vrot.lane.b32.xlu0 %v486, 32
      %v780 = vpop.permute.xlu0 %779
      %781 = vrot.lane.b32.xlu0 %v488, 32
      %v782 = vpop.permute.xlu0 %781
      %783 = vrot.lane.b32.xlu0 %v490, 32
      %v784 = vpop.permute.xlu0 %783
      %785 = vrot.lane.b32.xlu0 %v492, 32
      %v786 = vpop.permute.xlu0 %785
      %787 = vrot.lane.b32.xlu0 %v494, 32
      %v788 = vpop.permute.xlu0 %787
      %789 = vrot.lane.b32.xlu0 %v496, 32
      %v790 = vpop.permute.xlu0 %789
      %791 = vrot.lane.b32.xlu0 %v728, 32
      %v792 = vpop.permute.xlu0 %791
      %793 = vrot.lane.b32.xlu0 %v730, 32
      %v794 = vpop.permute.xlu0 %793
      %828 = vrot.lane.b32.xlu0 %v203, 64
      %v829 = vpop.permute.xlu0 %828
      %830 = vrot.lane.b32.xlu0 %v204, 64
      %v831 = vpop.permute.xlu0 %830
      %832 = vrot.lane.b32.xlu0 %v205, 64
      %v833 = vpop.permute.xlu0 %832
      %834 = vrot.lane.b32.xlu0 %v206, 64
      %v835 = vpop.permute.xlu0 %834
      %836 = vrot.lane.b32.xlu0 %v207, 64
      %v837 = vpop.permute.xlu0 %836
      %838 = vrot.lane.b32.xlu0 %v208, 64
      %v839 = vpop.permute.xlu0 %838
      %840 = vrot.lane.b32.xlu0 %v209, 64
      %v841 = vpop.permute.xlu0 %840
      %842 = vrot.lane.b32.xlu0 %v210, 64
      %v843 = vpop.permute.xlu0 %842
      %844 = vrot.lane.b32.xlu0 %v211, 64
      %v845 = vpop.permute.xlu0 %844
      %846 = vrot.lane.b32.xlu0 %v212, 64
      %v847 = vpop.permute.xlu0 %846
      %848 = vrot.lane.b32.xlu0 %v213, 64
      %v849 = vpop.permute.xlu0 %848
      %850 = vrot.lane.b32.xlu0 %v214, 64
      %v851 = vpop.permute.xlu0 %850
      %852 = vrot.lane.b32.xlu0 %v215, 64
      %v853 = vpop.permute.xlu0 %852
      %854 = vrot.lane.b32.xlu0 %v216, 64
      %v855 = vpop.permute.xlu0 %854
      %856 = vrot.lane.b32.xlu0 %v217, 64
      %v857 = vpop.permute.xlu0 %856
      %858 = vrot.lane.b32.xlu0 %v218, 64
      %v859 = vpop.permute.xlu0 %858
      %860 = vrot.lane.b32.xlu0 %v219, 64
      %v861 = vpop.permute.xlu0 %860
      %862 = vrot.lane.b32.xlu0 %v220, 64
      %v863 = vpop.permute.xlu0 %862
      %864 = vrot.lane.b32.xlu0 %v221, 64
      %v865 = vpop.permute.xlu0 %864
      %866 = vrot.lane.b32.xlu0 %v222, 64
      %v867 = vpop.permute.xlu0 %866
      %868 = vrot.lane.b32.xlu0 %v223, 64
      %v869 = vpop.permute.xlu0 %868
      %870 = vrot.lane.b32.xlu0 %v224, 64
      %v871 = vpop.permute.xlu0 %870
      %872 = vrot.lane.b32.xlu0 %v225, 64
      %v873 = vpop.permute.xlu0 %872
      %874 = vrot.lane.b32.xlu0 %v226, 64
      %v875 = vpop.permute.xlu0 %874
      %876 = vrot.lane.b32.xlu0 %v227, 64
      %v877 = vpop.permute.xlu0 %876
      %878 = vrot.lane.b32.xlu0 %v228, 64
      %v879 = vpop.permute.xlu0 %878
      %880 = vrot.lane.b32.xlu0 %v229, 64
      %v881 = vpop.permute.xlu0 %880
      %882 = vrot.lane.b32.xlu0 %v230, 64
      %v883 = vpop.permute.xlu0 %882
      %884 = vrot.lane.b32.xlu0 %v231, 64
      %v885 = vpop.permute.xlu0 %884
      %886 = vrot.lane.b32.xlu0 %v232, 64
      %v887 = vpop.permute.xlu0 %886
      %888 = vrot.lane.b32.xlu0 %v233, 64
      %v889 = vpop.permute.xlu0 %888
      %890 = vrot.lane.b32.xlu0 %v234, 64
      %v891 = vpop.permute.xlu0 %890
      %v925 = vrot.slane %v234, 1
      %v926 = vsel %vm269, %v693, %v925
      %v927 = vrot.slane %v235, 1
      %v928 = vsel %vm269, %v925, %v927
      %929 = vrot.lane.b32.xlu0 %v280, 96
      %v930 = vpop.permute.xlu0 %929
      %931 = vrot.lane.b32.xlu0 %v282, 96
      %v932 = vpop.permute.xlu0 %931
      %933 = vrot.lane.b32.xlu0 %v284, 96
      %v934 = vpop.permute.xlu0 %933
      %935 = vrot.lane.b32.xlu0 %v286, 96
      %v936 = vpop.permute.xlu0 %935
      %937 = vrot.lane.b32.xlu0 %v288, 96
      %v938 = vpop.permute.xlu0 %937
      %939 = vrot.lane.b32.xlu0 %v290, 96
      %v940 = vpop.permute.xlu0 %939
      %941 = vrot.lane.b32.xlu0 %v292, 96
      %v942 = vpop.permute.xlu0 %941
      %943 = vrot.lane.b32.xlu0 %v294, 96
      %v944 = vpop.permute.xlu0 %943
      %945 = vrot.lane.b32.xlu0 %v296, 96
      %v946 = vpop.permute.xlu0 %945
      %947 = vrot.lane.b32.xlu0 %v298, 96
      %v948 = vpop.permute.xlu0 %947
      %949 = vrot.lane.b32.xlu0 %v300, 96
      %v950 = vpop.permute.xlu0 %949
      %951 = vrot.lane.b32.xlu0 %v302, 96
      %v952 = vpop.permute.xlu0 %951
      %953 = vrot.lane.b32.xlu0 %v304, 96
      %v954 = vpop.permute.xlu0 %953
      %955 = vrot.lane.b32.xlu0 %v306, 96
      %v956 = vpop.permute.xlu0 %955
      %957 = vrot.lane.b32.xlu0 %v308, 96
      %v958 = vpop.permute.xlu0 %957
      %959 = vrot.lane.b32.xlu0 %v310, 96
      %v960 = vpop.permute.xlu0 %959
      %961 = vrot.lane.b32.xlu0 %v312, 96
      %v962 = vpop.permute.xlu0 %961
      %963 = vrot.lane.b32.xlu0 %v314, 96
      %v964 = vpop.permute.xlu0 %963
      %965 = vrot.lane.b32.xlu0 %v316, 96
      %v966 = vpop.permute.xlu0 %965
      %967 = vrot.lane.b32.xlu0 %v318, 96
      %v968 = vpop.permute.xlu0 %967
      %969 = vrot.lane.b32.xlu0 %v320, 96
      %v970 = vpop.permute.xlu0 %969
      %971 = vrot.lane.b32.xlu0 %v322, 96
      %v972 = vpop.permute.xlu0 %971
      %973 = vrot.lane.b32.xlu0 %v324, 96
      %v974 = vpop.permute.xlu0 %973
      %975 = vrot.lane.b32.xlu0 %v326, 96
      %v976 = vpop.permute.xlu0 %975
      %977 = vrot.lane.b32.xlu0 %v328, 96
      %v978 = vpop.permute.xlu0 %977
      %979 = vrot.lane.b32.xlu0 %v330, 96
      %v980 = vpop.permute.xlu0 %979
      %981 = vrot.lane.b32.xlu0 %v332, 96
      %v982 = vpop.permute.xlu0 %981
      %983 = vrot.lane.b32.xlu0 %v334, 96
      %v984 = vpop.permute.xlu0 %983
      %985 = vrot.lane.b32.xlu0 %v692, 96
      %v986 = vpop.permute.xlu0 %985
      %987 = vrot.lane.b32.xlu0 %v694, 96
      %v988 = vpop.permute.xlu0 %987
      %989 = vrot.lane.b32.xlu0 %v926, 96
      %v990 = vpop.permute.xlu0 %989
      %991 = vrot.lane.b32.xlu0 %v928, 96
      %v992 = vpop.permute.xlu0 %991
      %v1025 = vrot.slane %v234, 2
      %v1026 = vsel %vm431, %v729, %v1025
      %v1027 = vrot.slane %v235, 2
      %v1028 = vsel %vm431, %v1025, %v1027
      %vm1061 = vcmask 261120
      %v1062 = vsel %vm1061, %v199, %v336
      %v1063 = vsel %vm1061, %v200, %v338
      %v1064 = vsel %vm1061, %v201, %v340
      %v1065 = vsel %vm1061, %v202, %v342
      %v1066 = vsel %vm1061, %v203, %v344
      %v1067 = vsel %vm1061, %v204, %v346
      %v1068 = vsel %vm1061, %v205, %v348
      %v1069 = vsel %vm1061, %v206, %v350
      %v1070 = vsel %vm1061, %v207, %v352
      %v1071 = vsel %vm1061, %v208, %v354
      %v1072 = vsel %vm1061, %v209, %v356
      %v1073 = vsel %vm1061, %v210, %v358
      %v1074 = vsel %vm1061, %v211, %v360
      %v1075 = vsel %vm1061, %v212, %v362
      %v1076 = vsel %vm1061, %v213, %v364
      %v1077 = vsel %vm1061, %v214, %v366
      %v1078 = vsel %vm1061, %v215, %v368
      %v1079 = vsel %vm1061, %v216, %v370
      %v1080 = vsel %vm1061, %v217, %v372
      %v1081 = vsel %vm1061, %v218, %v374
      %v1082 = vsel %vm1061, %v219, %v376
      %v1083 = vsel %vm1061, %v220, %v378
      %v1084 = vsel %vm1061, %v221, %v380
      %v1085 = vsel %vm1061, %v222, %v382
      %v1086 = vsel %vm1061, %v223, %v384
      %v1087 = vsel %vm1061, %v224, %v386
      %v1088 = vsel %vm1061, %v225, %v388
      %v1089 = vsel %vm1061, %v226, %v390
      %v1090 = vsel %vm1061, %v227, %v392
      %v1091 = vsel %vm1061, %v228, %v394
      %v1092 = vsel %vm1061, %v229, %v396
      %v1093 = vsel %vm1061, %v230, %v398
      %vm1094 = vcmask 523264
      %v1095 = vsel %vm1094, %v1062, %v498
      %v1096 = vsel %vm1094, %v1063, %v500
      %v1097 = vsel %vm1094, %v1064, %v502
      %v1098 = vsel %vm1094, %v1065, %v504
      %v1099 = vsel %vm1094, %v1066, %v506
      %v1100 = vsel %vm1094, %v1067, %v508
      %v1101 = vsel %vm1094, %v1068, %v510
      %v1102 = vsel %vm1094, %v1069, %v512
      %v1103 = vsel %vm1094, %v1070, %v514
      %v1104 = vsel %vm1094, %v1071, %v516
      %v1105 = vsel %vm1094, %v1072, %v518
      %v1106 = vsel %vm1094, %v1073, %v520
      %v1107 = vsel %vm1094, %v1074, %v522
      %v1108 = vsel %vm1094, %v1075, %v524
      %v1109 = vsel %vm1094, %v1076, %v526
      %v1110 = vsel %vm1094, %v1077, %v528
      %v1111 = vsel %vm1094, %v1078, %v530
      %v1112 = vsel %vm1094, %v1079, %v532
      %v1113 = vsel %vm1094, %v1080, %v534
      %v1114 = vsel %vm1094, %v1081, %v536
      %v1115 = vsel %vm1094, %v1082, %v538
      %v1116 = vsel %vm1094, %v1083, %v540
      %v1117 = vsel %vm1094, %v1084, %v542
      %v1118 = vsel %vm1094, %v1085, %v544
      %v1119 = vsel %vm1094, %v1086, %v546
      %v1120 = vsel %vm1094, %v1087, %v548
      %v1121 = vsel %vm1094, %v1088, %v550
      %v1122 = vsel %vm1094, %v1089, %v552
      %v1123 = vsel %vm1094, %v1090, %v554
      %v1124 = vsel %vm1094, %v1091, %v556
      %v1125 = vsel %vm1094, %v1092, %v558
      %v1126 = vsel %vm1094, %v1093, %v560
      %vm1127 = vcmask 785408
      %v1128 = vsel %vm1127, %v1095, %v595
      %v1129 = vsel %vm1127, %v1096, %v597
      %v1130 = vsel %vm1127, %v1097, %v599
      %v1131 = vsel %vm1127, %v1098, %v601
      %v1132 = vsel %vm1127, %v1099, %v603
      %v1133 = vsel %vm1127, %v1100, %v605
      %v1134 = vsel %vm1127, %v1101, %v607
      %v1135 = vsel %vm1127, %v1102, %v609
      %v1136 = vsel %vm1127, %v1103, %v611
      %v1137 = vsel %vm1127, %v1104, %v613
      %v1138 = vsel %vm1127, %v1105, %v615
      %v1139 = vsel %vm1127, %v1106, %v617
      %v1140 = vsel %vm1127, %v1107, %v619
      %v1141 = vsel %vm1127, %v1108, %v621
      %v1142 = vsel %vm1127, %v1109, %v623
      %v1143 = vsel %vm1127, %v1110, %v625
      %v1144 = vsel %vm1127, %v1111, %v627
      %v1145 = vsel %vm1127, %v1112, %v629
      %v1146 = vsel %vm1127, %v1113, %v631
      %v1147 = vsel %vm1127, %v1114, %v633
      %v1148 = vsel %vm1127, %v1115, %v635
      %v1149 = vsel %vm1127, %v1116, %v637
      %v1150 = vsel %vm1127, %v1117, %v639
      %v1151 = vsel %vm1127, %v1118, %v641
      %v1152 = vsel %vm1127, %v1119, %v643
      %v1153 = vsel %vm1127, %v1120, %v645
      %v1154 = vsel %vm1127, %v1121, %v647
      %v1155 = vsel %vm1127, %v1122, %v649
      %v1156 = vsel %vm1127, %v1123, %v651
      %v1157 = vsel %vm1127, %v1124, %v653
      %v1158 = vsel %vm1127, %v1125, %v655
      %v1159 = vsel %vm1127, %v1126, %v657
      %v1160 = vsel %vm1061, %v276, %v732
      %v1161 = vsel %vm1061, %v278, %v734
      %v1162 = vsel %vm1061, %v280, %v736
      %v1163 = vsel %vm1061, %v282, %v738
      %v1164 = vsel %vm1061, %v284, %v740
      %v1165 = vsel %vm1061, %v286, %v742
      %v1166 = vsel %vm1061, %v288, %v744
      %v1167 = vsel %vm1061, %v290, %v746
      %v1168 = vsel %vm1061, %v292, %v748
      %v1169 = vsel %vm1061, %v294, %v750
      %v1170 = vsel %vm1061, %v296, %v752
      %v1171 = vsel %vm1061, %v298, %v754
      %v1172 = vsel %vm1061, %v300, %v756
      %v1173 = vsel %vm1061, %v302, %v758
      %v1174 = vsel %vm1061, %v304, %v760
      %v1175 = vsel %vm1061, %v306, %v762
      %v1176 = vsel %vm1061, %v308, %v764
      %v1177 = vsel %vm1061, %v310, %v766
      %v1178 = vsel %vm1061, %v312, %v768
      %v1179 = vsel %vm1061, %v314, %v770
      %v1180 = vsel %vm1061, %v316, %v772
      %v1181 = vsel %vm1061, %v318, %v774
      %v1182 = vsel %vm1061, %v320, %v776
      %v1183 = vsel %vm1061, %v322, %v778
      %v1184 = vsel %vm1061, %v324, %v780
      %v1185 = vsel %vm1061, %v326, %v782
      %v1186 = vsel %vm1061, %v328, %v784
      %v1187 = vsel %vm1061, %v330, %v786
      %v1188 = vsel %vm1061, %v332, %v788
      %v1189 = vsel %vm1061, %v334, %v790
      %v1190 = vsel %vm1061, %v692, %v792
      %v1191 = vsel %vm1061, %v694, %v794
      %v1192 = vsel %vm1094, %v1160, %v829
      %v1193 = vsel %vm1094, %v1161, %v831
      %v1194 = vsel %vm1094, %v1162, %v833
      %v1195 = vsel %vm1094, %v1163, %v835
      %v1196 = vsel %vm1094, %v1164, %v837
      %v1197 = vsel %vm1094, %v1165, %v839
      %v1198 = vsel %vm1094, %v1166, %v841
      %v1199 = vsel %vm1094, %v1167, %v843
      %v1200 = vsel %vm1094, %v1168, %v845
      %v1201 = vsel %vm1094, %v1169, %v847
      %v1202 = vsel %vm1094, %v1170, %v849
      %v1203 = vsel %vm1094, %v1171, %v851
      %v1204 = vsel %vm1094, %v1172, %v853
      %v1205 = vsel %vm1094, %v1173, %v855
      %v1206 = vsel %vm1094, %v1174, %v857
      %v1207 = vsel %vm1094, %v1175, %v859
      %v1208 = vsel %vm1094, %v1176, %v861
      %v1209 = vsel %vm1094, %v1177, %v863
      %v1210 = vsel %vm1094, %v1178, %v865
      %v1211 = vsel %vm1094, %v1179, %v867
      %v1212 = vsel %vm1094, %v1180, %v869
      %v1213 = vsel %vm1094, %v1181, %v871
      %v1214 = vsel %vm1094, %v1182, %v873
      %v1215 = vsel %vm1094, %v1183, %v875
      %v1216 = vsel %vm1094, %v1184, %v877
      %v1217 = vsel %vm1094, %v1185, %v879
      %v1218 = vsel %vm1094, %v1186, %v881
      %v1219 = vsel %vm1094, %v1187, %v883
      %v1220 = vsel %vm1094, %v1188, %v885
      %v1221 = vsel %vm1094, %v1189, %v887
      %v1222 = vsel %vm1094, %v1190, %v889
      %v1223 = vsel %vm1094, %v1191, %v891
      %v1224 = vsel %vm1127, %v1192, %v930
      %v1225 = vsel %vm1127, %v1193, %v932
      %v1226 = vsel %vm1127, %v1194, %v934
      %v1227 = vsel %vm1127, %v1195, %v936
      %v1228 = vsel %vm1127, %v1196, %v938
      %v1229 = vsel %vm1127, %v1197, %v940
      %v1230 = vsel %vm1127, %v1198, %v942
      %v1231 = vsel %vm1127, %v1199, %v944
      %v1232 = vsel %vm1127, %v1200, %v946
      %v1233 = vsel %vm1127, %v1201, %v948
      %v1234 = vsel %vm1127, %v1202, %v950
      %v1235 = vsel %vm1127, %v1203, %v952
      %v1236 = vsel %vm1127, %v1204, %v954
      %v1237 = vsel %vm1127, %v1205, %v956
      %v1238 = vsel %vm1127, %v1206, %v958
      %v1239 = vsel %vm1127, %v1207, %v960
      %v1240 = vsel %vm1127, %v1208, %v962
      %v1241 = vsel %vm1127, %v1209, %v964
      %v1242 = vsel %vm1127, %v1210, %v966
      %v1243 = vsel %vm1127, %v1211, %v968
      %v1244 = vsel %vm1127, %v1212, %v970
      %v1245 = vsel %vm1127, %v1213, %v972
      %v1246 = vsel %vm1127, %v1214, %v974
      %v1247 = vsel %vm1127, %v1215, %v976
      %v1248 = vsel %vm1127, %v1216, %v978
      %v1249 = vsel %vm1127, %v1217, %v980
      %v1250 = vsel %vm1127, %v1218, %v982
      %v1251 = vsel %vm1127, %v1219, %v984
      %v1252 = vsel %vm1127, %v1220, %v986
      %v1253 = vsel %vm1127, %v1221, %v988
      %v1254 = vsel %vm1127, %v1222, %v990
      %v1255 = vsel %vm1127, %v1223, %v992
      %v1256 = vpack.c.bf16 %v1129, %v1128
      %v1257 = vpack.c.bf16 %v1225, %v1224
      %v1258 = vpack.c.bf16 %v444, %v442
      %v1259 = vpack.c.bf16 %v1131, %v1130
      %v1260 = vpack.c.bf16 %v1227, %v1226
      %v1261 = vpack.c.bf16 %v448, %v446
      %v1262 = vpack.c.bf16 %v1133, %v1132
      %v1263 = vpack.c.bf16 %v1229, %v1228
      %v1264 = vpack.c.bf16 %v452, %v450
      %v1265 = vpack.c.bf16 %v1135, %v1134
      %v1266 = vpack.c.bf16 %v1231, %v1230
      %v1267 = vpack.c.bf16 %v456, %v454
      %v1268 = vpack.c.bf16 %v1137, %v1136
      %v1269 = vpack.c.bf16 %v1233, %v1232
      %v1270 = vpack.c.bf16 %v460, %v458
      %v1271 = vpack.c.bf16 %v1139, %v1138
      %v1272 = vpack.c.bf16 %v1235, %v1234
      %v1273 = vpack.c.bf16 %v464, %v462
      %v1274 = vpack.c.bf16 %v1141, %v1140
      %v1275 = vpack.c.bf16 %v1237, %v1236
      %v1276 = vpack.c.bf16 %v468, %v466
      %v1277 = vpack.c.bf16 %v1143, %v1142
      %v1278 = vpack.c.bf16 %v1239, %v1238
      %v1279 = vpack.c.bf16 %v472, %v470
      %v1280 = vpack.c.bf16 %v1145, %v1144
      %v1281 = vpack.c.bf16 %v1241, %v1240
      %v1282 = vpack.c.bf16 %v476, %v474
      %v1283 = vpack.c.bf16 %v1147, %v1146
      %v1284 = vpack.c.bf16 %v1243, %v1242
      %v1285 = vpack.c.bf16 %v480, %v478
      %v1286 = vpack.c.bf16 %v1149, %v1148
      %v1287 = vpack.c.bf16 %v1245, %v1244
      %v1288 = vpack.c.bf16 %v484, %v482
      %v1289 = vpack.c.bf16 %v1151, %v1150
      %v1290 = vpack.c.bf16 %v1247, %v1246
      %v1291 = vpack.c.bf16 %v488, %v486
      %v1292 = vpack.c.bf16 %v1153, %v1152
      %v1293 = vpack.c.bf16 %v1249, %v1248
      %v1294 = vpack.c.bf16 %v492, %v490
      %v1295 = vpack.c.bf16 %v1155, %v1154
      %v1296 = vpack.c.bf16 %v1251, %v1250
      %v1297 = vpack.c.bf16 %v496, %v494
      %v1298 = vpack.c.bf16 %v1157, %v1156
      %v1299 = vpack.c.bf16 %v1253, %v1252
      %v1300 = vpack.c.bf16 %v730, %v728
      %v1301 = vpack.c.bf16 %v1159, %v1158
      %v1302 = vpack.c.bf16 %v1255, %v1254
      %v1303 = vpack.c.bf16 %v1028, %v1026
      %v1304 = vld [vmem:[%s1] sm:$0xf]
      %v1305 = vld [vmem:[%s1 + $0x4] sm:$0xf]
      %v1306 = vld [vmem:[%s1 + $0x8] sm:$0xf]
      %v1307 = vld [vmem:[%s1 + $0xc] sm:$0xf]
      %v1308 = vld [vmem:[%s1 + $0x10] sm:$0xf]
      %v1309 = vld [vmem:[%s1 + $0x14] sm:$0xf]
      %v1310 = vld [vmem:[%s1 + $0x18] sm:$0xf]
      %v1311 = vld [vmem:[%s1 + $0x1c] sm:$0xf]
      %v1312 = vld [vmem:[%s1 + $0x20] sm:$0xf]
      %v1313 = vld [vmem:[%s1 + $0x24] sm:$0xf]
      %v1314 = vld [vmem:[%s1 + $0x28] sm:$0xf]
      %v1315 = vld [vmem:[%s1 + $0x2c] sm:$0xf]
      %v1316 = vld [vmem:[%s1 + $0x30] sm:$0xf]
      %v1317 = vld [vmem:[%s1 + $0x34] sm:$0xf]
      %v1318 = vld [vmem:[%s1 + $0x38] sm:$0xf]
      %v1319 = vld [vmem:[%s1 + $0x3c] sm:$0xf]
      %v1320 = vld [vmem:[%s1 + $0x40] sm:$0xf]
      %v1321 = vld [vmem:[%s1 + $0x44] sm:$0xf]
      %v1322 = vld [vmem:[%s1 + $0x48] sm:$0xf]
      %v1323 = vld [vmem:[%s1 + $0x4c] sm:$0xf]
      %v1324 = vld [vmem:[%s1 + $0x50] sm:$0xf]
      %v1325 = vld [vmem:[%s1 + $0x54] sm:$0xf]
      %v1326 = vld [vmem:[%s1 + $0x58] sm:$0xf]
      %v1327 = vld [vmem:[%s1 + $0x5c] sm:$0xf]
      %v1328 = vld [vmem:[%s1 + $0x60] sm:$0xf]
      %v1329 = vld [vmem:[%s1 + $0x64] sm:$0xf]
      %v1330 = vld [vmem:[%s1 + $0x68] sm:$0xf]
      %v1331 = vld [vmem:[%s1 + $0x6c] sm:$0xf]
      %v1332 = vld [vmem:[%s1 + $0x70] sm:$0xf]
      %v1333 = vld [vmem:[%s1 + $0x74] sm:$0xf]
      %v1334 = vld [vmem:[%s1 + $0x78] sm:$0xf]
      %v1335 = vld [vmem:[%s1 + $0x7c] sm:$0xf]
      %v1336 = vld [vmem:[%s1 + $0x80] sm:$0xf]
      %v1337 = vld [vmem:[%s1 + $0x84] sm:$0xf]
      %v1338 = vld [vmem:[%s1 + $0x88] sm:$0xf]
      %v1339 = vld [vmem:[%s1 + $0x8c] sm:$0xf]
      %v1340 = vld [vmem:[%s2] sm:$0x1]
      %v1342 = vlaneseq
      %v1343 = vshrl.u32 %v1342, 7
      %v1344 = vsub.s32 0, %v1343
      %v1345 = vrot.slane %v1340, %v1344
      %v1383 = vunpack.c.l.b16 %v1304
      %v1384 = vunpack.c.l.b16 %v1305
      %v1385 = vunpack.c.l.b16 %v1306
      %v1386 = vunpack.c.l.b16 %v1307
      %v1387 = vunpack.c.l.b16 %v1308
      %v1388 = vunpack.c.l.b16 %v1309
      %v1389 = vunpack.c.l.b16 %v1310
      %v1390 = vunpack.c.l.b16 %v1311
      %v1391 = vunpack.c.l.b16 %v1312
      %v1392 = vunpack.c.l.b16 %v1313
      %v1393 = vunpack.c.l.b16 %v1314
      %v1394 = vunpack.c.l.b16 %v1315
      %v1395 = vunpack.c.l.b16 %v1316
      %v1396 = vunpack.c.l.b16 %v1317
      %v1397 = vunpack.c.l.b16 %v1318
      %v1398 = vunpack.c.l.b16 %v1319
      %v1399 = vunpack.c.l.b16 %v1320
      %v1400 = vunpack.c.l.b16 %v1321
      %v1401 = vunpack.c.l.b16 %v1322
      %v1402 = vunpack.c.l.b16 %v1323
      %v1403 = vunpack.c.l.b16 %v1324
      %v1404 = vunpack.c.l.b16 %v1325
      %v1405 = vunpack.c.l.b16 %v1326
      %v1406 = vunpack.c.l.b16 %v1327
      %v1407 = vunpack.c.l.b16 %v1328
      %v1408 = vunpack.c.l.b16 %v1329
      %v1409 = vunpack.c.l.b16 %v1330
      %v1410 = vunpack.c.l.b16 %v1331
      %v1411 = vunpack.c.l.b16 %v1332
      %v1412 = vunpack.c.l.b16 %v1333
      %v1413 = vunpack.c.l.b16 %v1334
      %v1414 = vunpack.c.l.b16 %v1335
      %v1415 = vunpack.c.l.b16 %v1336
      %v1416 = vunpack.c.l.b16 %v1337
      %v1417 = vunpack.c.l.b16 %v1338
      %v1418 = vunpack.c.l.b16 %v1339
      %v1419 = vpack.c.b16 %v1384, %v1383
      %v1420 = vpack.c.b16 %v1386, %v1385
      %v1421 = vpack.c.b16 %v1388, %v1387
      %v1422 = vpack.c.b16 %v1390, %v1389
      %v1423 = vpack.c.b16 %v1392, %v1391
      %v1424 = vpack.c.b16 %v1394, %v1393
      %v1425 = vpack.c.b16 %v1396, %v1395
      %v1426 = vpack.c.b16 %v1398, %v1397
      %v1427 = vpack.c.b16 %v1400, %v1399
      %v1428 = vpack.c.b16 %v1402, %v1401
      %v1429 = vpack.c.b16 %v1404, %v1403
      %v1430 = vpack.c.b16 %v1406, %v1405
      %v1431 = vpack.c.b16 %v1408, %v1407
      %v1432 = vpack.c.b16 %v1410, %v1409
      %v1433 = vpack.c.b16 %v1412, %v1411
      %v1434 = vpack.c.b16 %v1414, %v1413
      %v1435 = vpack.c.b16 %v1416, %v1415
      %v1436 = vpack.c.b16 %v1418, %v1417
      %v1456 = vsel %vm1061, %v1258, 0
      %v1459 = vsel %vm1061, %v1261, 0
      %v1462 = vsel %vm1061, %v1264, 0
      %v1465 = vsel %vm1061, %v1267, 0
      %v1468 = vsel %vm1061, %v1270, 0
      %v1471 = vsel %vm1061, %v1273, 0
      %v1474 = vsel %vm1061, %v1276, 0
      %v1477 = vsel %vm1061, %v1279, 0
      %v1480 = vsel %vm1061, %v1282, 0
      %v1483 = vsel %vm1061, %v1285, 0
      %v1486 = vsel %vm1061, %v1288, 0
      %v1489 = vsel %vm1061, %v1291, 0
      %v1492 = vsel %vm1061, %v1294, 0
      %v1495 = vsel %vm1061, %v1297, 0
      %v1498 = vsel %vm1061, %v1300, 0
      %v1501 = vsel %vm1061, %v1303, 0
      %1503 = vmatprep.subr.bf16.mxu0 0
      %1504 = vmatpush1.bf16.msra.mxu0 %v1419
      %1505 = vmatprep.subr.bf16.mxu0 0
      %1506 = vmatpush1.bf16.msra.mxu0 %v1420
      %1507 = vmatprep.subr.bf16.mxu0 0
      %1508 = vmatpush1.bf16.msra.mxu0 %v1421
      %1509 = vmatprep.subr.bf16.mxu0 0
      %1510 = vmatpush1.bf16.msra.mxu0 %v1422
      %1511 = vmatprep.subr.bf16.mxu0 0
      %1512 = vmatpush1.bf16.msra.mxu0 %v1423
      %1513 = vmatprep.subr.bf16.mxu0 0
      %1514 = vmatpush1.bf16.msra.mxu0 %v1424
      %1515 = vmatprep.subr.bf16.mxu0 0
      %1516 = vmatpush1.bf16.msra.mxu0 %v1425
      %1517 = vmatprep.subr.bf16.mxu0 0
      %1518 = vmatpush1.bf16.msra.mxu0 %v1426
      %1519 = vmatprep.subr.bf16.mxu0 0
      %1520 = vmatpush1.bf16.msra.mxu0 %v1427
      %1521 = vmatprep.subr.bf16.mxu0 0
      %1522 = vmatpush1.bf16.msra.mxu0 %v1428
      %1523 = vmatprep.subr.bf16.mxu0 0
      %1524 = vmatpush1.bf16.msra.mxu0 %v1429
      %1525 = vmatprep.subr.bf16.mxu0 0
      %1526 = vmatpush1.bf16.msra.mxu0 %v1430
      %1527 = vmatprep.subr.bf16.mxu0 0
      %1528 = vmatpush1.bf16.msra.mxu0 %v1431
      %1529 = vmatprep.subr.bf16.mxu0 0
      %1530 = vmatpush1.bf16.msra.mxu0 %v1432
      %1531 = vmatprep.subr.bf16.mxu0 0
      %1532 = vmatpush1.bf16.msra.mxu0 %v1433
      %1533 = vmatprep.subr.bf16.mxu0 0
      %1534 = vmatpush1.bf16.msra.mxu0 %v1434
      %1535 = vmatprep.mubr.bf16.mxu0 %v1257
      %1536 = vmatmul.mubr.bf16.gmra.mrb[0].mxu0 %v1256
      %v1537 = vpop.f32.mrb[0].mxu0
      %v1538 = vadd.f32 %v1345, %v1537
      %v1539 = vpop.f32.mrb[0].mxu0
      %v1540 = vpop.f32.mrb[0].mxu0
      %v1541 = vadd.f32 %v1345, %v1540
      %v1542 = vpop.f32.mrb[0].mxu0
      %1543 = vmatprep.mubr.bf16.mxu0 %v1260
      %1544 = vmatmul.mubr.bf16.gmra.mrb[0].mxu0 %v1259
      %v1545 = vpop.f32.mrb[0].mxu0
      %v1546 = vadd.f32 %v1345, %v1545
      %v1547 = vpop.f32.mrb[0].mxu0
      %v1548 = vpop.f32.mrb[0].mxu0
      %v1549 = vadd.f32 %v1345, %v1548
      %v1550 = vpop.f32.mrb[0].mxu0
      %1551 = vmatprep.mubr.bf16.mxu0 %v1263
      %1552 = vmatmul.mubr.bf16.gmra.mrb[0].mxu0 %v1262
      %v1553 = vpop.f32.mrb[0].mxu0
      %v1554 = vadd.f32 %v1345, %v1553
      %v1555 = vpop.f32.mrb[0].mxu0
      %v1556 = vpop.f32.mrb[0].mxu0
      %v1557 = vadd.f32 %v1345, %v1556
      %v1558 = vpop.f32.mrb[0].mxu0
      %1559 = vmatprep.mubr.bf16.mxu0 %v1266
      %1560 = vmatmul.mubr.bf16.gmra.mrb[0].mxu0 %v1265
      %v1561 = vpop.f32.mrb[0].mxu0
      %v1562 = vadd.f32 %v1345, %v1561
      %v1563 = vpop.f32.mrb[0].mxu0
      %v1564 = vpop.f32.mrb[0].mxu0
      %v1565 = vadd.f32 %v1345, %v1564
      %v1566 = vpop.f32.mrb[0].mxu0
      %1567 = vmatprep.mubr.bf16.mxu0 %v1269
      %1568 = vmatmul.mubr.bf16.gmra.mrb[0].mxu0 %v1268
      %v1569 = vpop.f32.mrb[0].mxu0
      %v1570 = vadd.f32 %v1345, %v1569
      %v1571 = vpop.f32.mrb[0].mxu0
      %v1572 = vpop.f32.mrb[0].mxu0
      %v1573 = vadd.f32 %v1345, %v1572
      %v1574 = vpop.f32.mrb[0].mxu0
      %1575 = vmatprep.mubr.bf16.mxu0 %v1272
      %1576 = vmatmul.mubr.bf16.gmra.mrb[0].mxu0 %v1271
      %v1577 = vpop.f32.mrb[0].mxu0
      %v1578 = vadd.f32 %v1345, %v1577
      %v1579 = vpop.f32.mrb[0].mxu0
      %v1580 = vpop.f32.mrb[0].mxu0
      %v1581 = vadd.f32 %v1345, %v1580
      %v1582 = vpop.f32.mrb[0].mxu0
      %1583 = vmatprep.mubr.bf16.mxu0 %v1275
      %1584 = vmatmul.mubr.bf16.gmra.mrb[0].mxu0 %v1274
      %v1585 = vpop.f32.mrb[0].mxu0
      %v1586 = vadd.f32 %v1345, %v1585
      %v1587 = vpop.f32.mrb[0].mxu0
      %v1588 = vpop.f32.mrb[0].mxu0
      %v1589 = vadd.f32 %v1345, %v1588
      %v1590 = vpop.f32.mrb[0].mxu0
      %1591 = vmatprep.mubr.bf16.mxu0 %v1278
      %1592 = vmatmul.mubr.bf16.gmra.mrb[0].mxu0 %v1277
      %v1593 = vpop.f32.mrb[0].mxu0
      %v1594 = vadd.f32 %v1345, %v1593
      %v1595 = vpop.f32.mrb[0].mxu0
      %v1596 = vpop.f32.mrb[0].mxu0
      %v1597 = vadd.f32 %v1345, %v1596
      %v1598 = vpop.f32.mrb[0].mxu0
      %1599 = vmatprep.mubr.bf16.mxu0 %v1281
      %1600 = vmatmul.mubr.bf16.gmra.mrb[0].mxu0 %v1280
      %v1601 = vpop.f32.mrb[0].mxu0
      %v1602 = vadd.f32 %v1345, %v1601
      %v1603 = vpop.f32.mrb[0].mxu0
      %v1604 = vpop.f32.mrb[0].mxu0
      %v1605 = vadd.f32 %v1345, %v1604
      %v1606 = vpop.f32.mrb[0].mxu0
      %1607 = vmatprep.mubr.bf16.mxu0 %v1284
      %1608 = vmatmul.mubr.bf16.gmra.mrb[0].mxu0 %v1283
      %v1609 = vpop.f32.mrb[0].mxu0
      %v1610 = vadd.f32 %v1345, %v1609
      %v1611 = vpop.f32.mrb[0].mxu0
      %v1612 = vpop.f32.mrb[0].mxu0
      %v1613 = vadd.f32 %v1345, %v1612
      %v1614 = vpop.f32.mrb[0].mxu0
      %1615 = vmatprep.mubr.bf16.mxu0 %v1287
      %1616 = vmatmul.mubr.bf16.gmra.mrb[0].mxu0 %v1286
      %v1617 = vpop.f32.mrb[0].mxu0
      %v1618 = vadd.f32 %v1345, %v1617
      %v1619 = vpop.f32.mrb[0].mxu0
      %v1620 = vpop.f32.mrb[0].mxu0
      %v1621 = vadd.f32 %v1345, %v1620
      %v1622 = vpop.f32.mrb[0].mxu0
      %1623 = vmatprep.mubr.bf16.mxu0 %v1290
      %1624 = vmatmul.mubr.bf16.gmra.mrb[0].mxu0 %v1289
      %v1625 = vpop.f32.mrb[0].mxu0
      %v1626 = vadd.f32 %v1345, %v1625
      %v1627 = vpop.f32.mrb[0].mxu0
      %v1628 = vpop.f32.mrb[0].mxu0
      %v1629 = vadd.f32 %v1345, %v1628
      %v1630 = vpop.f32.mrb[0].mxu0
      %1631 = vmatprep.mubr.bf16.mxu0 %v1293
      %1632 = vmatmul.mubr.bf16.gmra.mrb[0].mxu0 %v1292
      %v1633 = vpop.f32.mrb[0].mxu0
      %v1634 = vadd.f32 %v1345, %v1633
      %v1635 = vpop.f32.mrb[0].mxu0
      %v1636 = vpop.f32.mrb[0].mxu0
      %v1637 = vadd.f32 %v1345, %v1636
      %v1638 = vpop.f32.mrb[0].mxu0
      %1639 = vmatprep.mubr.bf16.mxu0 %v1296
      %1640 = vmatmul.mubr.bf16.gmra.mrb[0].mxu0 %v1295
      %v1641 = vpop.f32.mrb[0].mxu0
      %v1642 = vadd.f32 %v1345, %v1641
      %v1643 = vpop.f32.mrb[0].mxu0
      %v1644 = vpop.f32.mrb[0].mxu0
      %v1645 = vadd.f32 %v1345, %v1644
      %v1646 = vpop.f32.mrb[0].mxu0
      %1647 = vmatprep.mubr.bf16.mxu0 %v1299
      %1648 = vmatmul.mubr.bf16.gmra.mrb[0].mxu0 %v1298
      %v1649 = vpop.f32.mrb[0].mxu0
      %v1650 = vadd.f32 %v1345, %v1649
      %v1651 = vpop.f32.mrb[0].mxu0
      %v1652 = vpop.f32.mrb[0].mxu0
      %v1653 = vadd.f32 %v1345, %v1652
      %v1654 = vpop.f32.mrb[0].mxu0
      %1655 = vmatprep.mubr.bf16.mxu0 %v1302
      %1656 = vmatmul.mubr.bf16.gmra.mrb[0].mxu0 %v1301
      %v1657 = vpop.f32.mrb[0].mxu0
      %v1658 = vadd.f32 %v1345, %v1657
      %v1659 = vpop.f32.mrb[0].mxu0
      %v1660 = vpop.f32.mrb[0].mxu0
      %v1661 = vpop.f32.mrb[0].mxu0
      %1662 = vdwg.mxu0
      %1663 = vmatprep.subr.bf16.mxu0 0
      %1664 = vmatpush1.bf16.msra.mxu0 %v1435
      %1665 = vmatprep.subr.bf16.mxu0 0
      %1666 = vmatpush1.bf16.msra.mxu0 %v1436
      %1667 = vmatprep.subr.bf16.mxu0 0
      %1668 = vmatpush1.bf16.msra.mxu0 0
      %1669 = vmatprep.subr.bf16.mxu0 0
      %1670 = vmatpush1.bf16.msra.mxu0 0
      %1671 = vmatprep.subr.bf16.mxu0 0
      %1672 = vmatpush1.bf16.msra.mxu0 0
      %1673 = vmatprep.subr.bf16.mxu0 0
      %1674 = vmatpush1.bf16.msra.mxu0 0
      %1675 = vmatprep.subr.bf16.mxu0 0
      %1676 = vmatpush1.bf16.msra.mxu0 0
      %1677 = vmatprep.subr.bf16.mxu0 0
      %1678 = vmatpush1.bf16.msra.mxu0 0
      %1679 = vmatprep.subr.bf16.mxu0 0
      %1680 = vmatpush1.bf16.msra.mxu0 0
      %1681 = vmatprep.subr.bf16.mxu0 0
      %1682 = vmatpush1.bf16.msra.mxu0 0
      %1683 = vmatprep.subr.bf16.mxu0 0
      %1684 = vmatpush1.bf16.msra.mxu0 0
      %1685 = vmatprep.subr.bf16.mxu0 0
      %1686 = vmatpush1.bf16.msra.mxu0 0
      %1687 = vmatprep.subr.bf16.mxu0 0
      %1688 = vmatpush1.bf16.msra.mxu0 0
      %1689 = vmatprep.subr.bf16.mxu0 0
      %1690 = vmatpush1.bf16.msra.mxu0 0
      %1691 = vmatprep.subr.bf16.mxu0 0
      %1692 = vmatpush1.bf16.msra.mxu0 0
      %1693 = vmatprep.subr.bf16.mxu0 0
      %1694 = vmatpush1.bf16.msra.mxu0 0
      %1695 = vmatprep.mubr.bf16.mxu0 0
      %1696 = vmatmul.mubr.bf16.gmra.mrb[0].mxu0 %v1456
      %v1697 = vpop.f32.mrb[0].mxu0
      %v1698 = vadd.f32 %v1538, %v1697
      %v1699 = vpop.f32.mrb[0].mxu0
      %v1700 = vpop.f32.mrb[0].mxu0
      %v1701 = vadd.f32 %v1541, %v1700
      %v1702 = vpop.f32.mrb[0].mxu0
      %1703 = vmatprep.mubr.bf16.mxu0 0
      %1704 = vmatmul.mubr.bf16.gmra.mrb[0].mxu0 %v1459
      %v1705 = vpop.f32.mrb[0].mxu0
      %v1706 = vadd.f32 %v1546, %v1705
      %v1707 = vpop.f32.mrb[0].mxu0
      %v1708 = vpop.f32.mrb[0].mxu0
      %v1709 = vadd.f32 %v1549, %v1708
      %v1710 = vpop.f32.mrb[0].mxu0
      %1711 = vmatprep.mubr.bf16.mxu0 0
      %1712 = vmatmul.mubr.bf16.gmra.mrb[0].mxu0 %v1462
      %v1713 = vpop.f32.mrb[0].mxu0
      %v1714 = vadd.f32 %v1554, %v1713
      %v1715 = vpop.f32.mrb[0].mxu0
      %v1716 = vpop.f32.mrb[0].mxu0
      %v1717 = vadd.f32 %v1557, %v1716
      %v1718 = vpop.f32.mrb[0].mxu0
      %1719 = vmatprep.mubr.bf16.mxu0 0
      %1720 = vmatmul.mubr.bf16.gmra.mrb[0].mxu0 %v1465
      %v1721 = vpop.f32.mrb[0].mxu0
      %v1722 = vadd.f32 %v1562, %v1721
      %v1723 = vpop.f32.mrb[0].mxu0
      %v1724 = vpop.f32.mrb[0].mxu0
      %v1725 = vadd.f32 %v1565, %v1724
      %v1726 = vpop.f32.mrb[0].mxu0
      %1727 = vmatprep.mubr.bf16.mxu0 0
      %1728 = vmatmul.mubr.bf16.gmra.mrb[0].mxu0 %v1468
      %v1729 = vpop.f32.mrb[0].mxu0
      %v1730 = vadd.f32 %v1570, %v1729
      %v1731 = vpop.f32.mrb[0].mxu0
      %v1732 = vpop.f32.mrb[0].mxu0
      %v1733 = vadd.f32 %v1573, %v1732
      %v1734 = vpop.f32.mrb[0].mxu0
      %1735 = vmatprep.mubr.bf16.mxu0 0
      %1736 = vmatmul.mubr.bf16.gmra.mrb[0].mxu0 %v1471
      %v1737 = vpop.f32.mrb[0].mxu0
      %v1738 = vadd.f32 %v1578, %v1737
      %v1739 = vpop.f32.mrb[0].mxu0
      %v1740 = vpop.f32.mrb[0].mxu0
      %v1741 = vadd.f32 %v1581, %v1740
      %v1742 = vpop.f32.mrb[0].mxu0
      %1743 = vmatprep.mubr.bf16.mxu0 0
      %1744 = vmatmul.mubr.bf16.gmra.mrb[0].mxu0 %v1474
      %v1745 = vpop.f32.mrb[0].mxu0
      %v1746 = vadd.f32 %v1586, %v1745
      %v1747 = vpop.f32.mrb[0].mxu0
      %v1748 = vpop.f32.mrb[0].mxu0
      %v1749 = vadd.f32 %v1589, %v1748
      %v1750 = vpop.f32.mrb[0].mxu0
      %1751 = vmatprep.mubr.bf16.mxu0 0
      %1752 = vmatmul.mubr.bf16.gmra.mrb[0].mxu0 %v1477
      %v1753 = vpop.f32.mrb[0].mxu0
      %v1754 = vadd.f32 %v1594, %v1753
      %v1755 = vpop.f32.mrb[0].mxu0
      %v1756 = vpop.f32.mrb[0].mxu0
      %v1757 = vadd.f32 %v1597, %v1756
      %v1758 = vpop.f32.mrb[0].mxu0
      %1759 = vmatprep.mubr.bf16.mxu0 0
      %1760 = vmatmul.mubr.bf16.gmra.mrb[0].mxu0 %v1480
      %v1761 = vpop.f32.mrb[0].mxu0
      %v1762 = vadd.f32 %v1602, %v1761
      %v1763 = vpop.f32.mrb[0].mxu0
      %v1764 = vpop.f32.mrb[0].mxu0
      %v1765 = vadd.f32 %v1605, %v1764
      %v1766 = vpop.f32.mrb[0].mxu0
      %1767 = vmatprep.mubr.bf16.mxu0 0
      %1768 = vmatmul.mubr.bf16.gmra.mrb[0].mxu0 %v1483
      %v1769 = vpop.f32.mrb[0].mxu0
      %v1770 = vadd.f32 %v1610, %v1769
      %v1771 = vpop.f32.mrb[0].mxu0
      %v1772 = vpop.f32.mrb[0].mxu0
      %v1773 = vadd.f32 %v1613, %v1772
      %v1774 = vpop.f32.mrb[0].mxu0
      %1775 = vmatprep.mubr.bf16.mxu0 0
      %1776 = vmatmul.mubr.bf16.gmra.mrb[0].mxu0 %v1486
      %v1777 = vpop.f32.mrb[0].mxu0
      %v1778 = vadd.f32 %v1618, %v1777
      %v1779 = vpop.f32.mrb[0].mxu0
      %v1780 = vpop.f32.mrb[0].mxu0
      %v1781 = vadd.f32 %v1621, %v1780
      %v1782 = vpop.f32.mrb[0].mxu0
      %1783 = vmatprep.mubr.bf16.mxu0 0
      %1784 = vmatmul.mubr.bf16.gmra.mrb[0].mxu0 %v1489
      %v1785 = vpop.f32.mrb[0].mxu0
      %v1786 = vadd.f32 %v1626, %v1785
      %v1787 = vpop.f32.mrb[0].mxu0
      %v1788 = vpop.f32.mrb[0].mxu0
      %v1789 = vadd.f32 %v1629, %v1788
      %v1790 = vpop.f32.mrb[0].mxu0
      %1791 = vmatprep.mubr.bf16.mxu0 0
      %1792 = vmatmul.mubr.bf16.gmra.mrb[0].mxu0 %v1492
      %v1793 = vpop.f32.mrb[0].mxu0
      %v1794 = vadd.f32 %v1634, %v1793
      %v1795 = vpop.f32.mrb[0].mxu0
      %v1796 = vpop.f32.mrb[0].mxu0
      %v1797 = vadd.f32 %v1637, %v1796
      %v1798 = vpop.f32.mrb[0].mxu0
      %1799 = vmatprep.mubr.bf16.mxu0 0
      %1800 = vmatmul.mubr.bf16.gmra.mrb[0].mxu0 %v1495
      %v1801 = vpop.f32.mrb[0].mxu0
      %v1802 = vadd.f32 %v1642, %v1801
      %v1803 = vpop.f32.mrb[0].mxu0
      %v1804 = vpop.f32.mrb[0].mxu0
      %v1805 = vadd.f32 %v1645, %v1804
      %v1806 = vpop.f32.mrb[0].mxu0
      %1807 = vmatprep.mubr.bf16.mxu0 0
      %1808 = vmatmul.mubr.bf16.gmra.mrb[0].mxu0 %v1498
      %v1809 = vpop.f32.mrb[0].mxu0
      %v1810 = vadd.f32 %v1650, %v1809
      %v1811 = vpop.f32.mrb[0].mxu0
      %v1812 = vpop.f32.mrb[0].mxu0
      %v1813 = vadd.f32 %v1653, %v1812
      %v1814 = vpop.f32.mrb[0].mxu0
      %1815 = vmatprep.mubr.bf16.mxu0 0
      %1816 = vmatmul.mubr.bf16.gmra.mrb[0].mxu0 %v1501
      %v1817 = vpop.f32.mrb[0].mxu0
      %v1818 = vadd.f32 %v1658, %v1817
      %v1819 = vpop.f32.mrb[0].mxu0
      %v1820 = vpop.f32.mrb[0].mxu0
      %v1821 = vpop.f32.mrb[0].mxu0
      %1822 = vdwg.mxu0
      %v1823 = vmax.f32 %v1698, 0.0
      %v1824 = vmax.f32 %v1701, 0.0
      %v1825 = vmax.f32 %v1706, 0.0
      %v1826 = vmax.f32 %v1709, 0.0
      %v1827 = vmax.f32 %v1714, 0.0
      %v1828 = vmax.f32 %v1717, 0.0
      %v1829 = vmax.f32 %v1722, 0.0
      %v1830 = vmax.f32 %v1725, 0.0
      %v1831 = vmax.f32 %v1730, 0.0
      %v1832 = vmax.f32 %v1733, 0.0
      %v1833 = vmax.f32 %v1738, 0.0
      %v1834 = vmax.f32 %v1741, 0.0
      %v1835 = vmax.f32 %v1746, 0.0
      %v1836 = vmax.f32 %v1749, 0.0
      %v1837 = vmax.f32 %v1754, 0.0
      %v1838 = vmax.f32 %v1757, 0.0
      %v1839 = vmax.f32 %v1762, 0.0
      %v1840 = vmax.f32 %v1765, 0.0
      %v1841 = vmax.f32 %v1770, 0.0
      %v1842 = vmax.f32 %v1773, 0.0
      %v1843 = vmax.f32 %v1778, 0.0
      %v1844 = vmax.f32 %v1781, 0.0
      %v1845 = vmax.f32 %v1786, 0.0
      %v1846 = vmax.f32 %v1789, 0.0
      %v1847 = vmax.f32 %v1794, 0.0
      %v1848 = vmax.f32 %v1797, 0.0
      %v1849 = vmax.f32 %v1802, 0.0
      %v1850 = vmax.f32 %v1805, 0.0
      %v1851 = vmax.f32 %v1810, 0.0
      %v1852 = vmax.f32 %v1813, 0.0
      %v1853 = vmax.f32 %v1818, 0.0
      %v1854 = vmax.f32 %v1823, %v1825
      %v1855 = vmax.f32 %v1824, %v1826
      %v1856 = vmax.f32 %v1825, %v1827
      %v1857 = vmax.f32 %v1826, %v1828
      %v1858 = vmax.f32 %v1827, %v1829
      %v1859 = vmax.f32 %v1828, %v1830
      %v1860 = vmax.f32 %v1829, %v1831
      %v1861 = vmax.f32 %v1830, %v1832
      %v1862 = vmax.f32 %v1831, %v1833
      %v1863 = vmax.f32 %v1832, %v1834
      %v1864 = vmax.f32 %v1833, %v1835
      %v1865 = vmax.f32 %v1834, %v1836
      %v1866 = vmax.f32 %v1835, %v1837
      %v1867 = vmax.f32 %v1836, %v1838
      %v1868 = vmax.f32 %v1837, %v1839
      %v1869 = vmax.f32 %v1838, %v1840
      %v1870 = vmax.f32 %v1839, %v1841
      %v1871 = vmax.f32 %v1840, %v1842
      %v1872 = vmax.f32 %v1841, %v1843
      %v1873 = vmax.f32 %v1842, %v1844
      %v1874 = vmax.f32 %v1843, %v1845
      %v1875 = vmax.f32 %v1844, %v1846
      %v1876 = vmax.f32 %v1845, %v1847
      %v1877 = vmax.f32 %v1846, %v1848
      %v1878 = vmax.f32 %v1847, %v1849
      %v1879 = vmax.f32 %v1848, %v1850
      %v1880 = vmax.f32 %v1849, %v1851
      %v1881 = vmax.f32 %v1850, %v1852
      %v1882 = vmax.f32 %v1851, %v1853
      %v1912 = vrot.slane %v1854, 1
      %v1913 = vrot.slane %v1855, 1
      %v1914 = vsel %vm269, %v1912, %v1913
      %v1915 = vrot.slane %v1856, 1
      %v1916 = vsel %vm269, %v1913, %v1915
      %v1917 = vrot.slane %v1857, 1
      %v1918 = vsel %vm269, %v1915, %v1917
      %v1919 = vrot.slane %v1858, 1
      %v1920 = vsel %vm269, %v1917, %v1919
      %v1921 = vrot.slane %v1859, 1
      %v1922 = vsel %vm269, %v1919, %v1921
      %v1923 = vrot.slane %v1860, 1
      %v1924 = vsel %vm269, %v1921, %v1923
      %v1925 = vrot.slane %v1861, 1
      %v1926 = vsel %vm269, %v1923, %v1925
      %v1927 = vrot.slane %v1862, 1
      %v1928 = vsel %vm269, %v1925, %v1927
      %v1929 = vrot.slane %v1863, 1
      %v1930 = vsel %vm269, %v1927, %v1929
      %v1931 = vrot.slane %v1864, 1
      %v1932 = vsel %vm269, %v1929, %v1931
      %v1933 = vrot.slane %v1865, 1
      %v1934 = vsel %vm269, %v1931, %v1933
      %v1935 = vrot.slane %v1866, 1
      %v1936 = vsel %vm269, %v1933, %v1935
      %v1937 = vrot.slane %v1867, 1
      %v1938 = vsel %vm269, %v1935, %v1937
      %v1939 = vrot.slane %v1868, 1
      %v1940 = vsel %vm269, %v1937, %v1939
      %v1941 = vrot.slane %v1869, 1
      %v1942 = vsel %vm269, %v1939, %v1941
      %v1943 = vrot.slane %v1870, 1
      %v1944 = vsel %vm269, %v1941, %v1943
      %v1945 = vrot.slane %v1871, 1
      %v1946 = vsel %vm269, %v1943, %v1945
      %v1947 = vrot.slane %v1872, 1
      %v1948 = vsel %vm269, %v1945, %v1947
      %v1949 = vrot.slane %v1873, 1
      %v1950 = vsel %vm269, %v1947, %v1949
      %v1951 = vrot.slane %v1874, 1
      %v1952 = vsel %vm269, %v1949, %v1951
      %v1953 = vrot.slane %v1875, 1
      %v1954 = vsel %vm269, %v1951, %v1953
      %v1955 = vrot.slane %v1876, 1
      %v1956 = vsel %vm269, %v1953, %v1955
      %v1957 = vrot.slane %v1877, 1
      %v1958 = vsel %vm269, %v1955, %v1957
      %v1959 = vrot.slane %v1878, 1
      %v1960 = vsel %vm269, %v1957, %v1959
      %v1961 = vrot.slane %v1879, 1
      %v1962 = vsel %vm269, %v1959, %v1961
      %v1963 = vrot.slane %v1880, 1
      %v1964 = vsel %vm269, %v1961, %v1963
      %v1965 = vrot.slane %v1881, 1
      %v1966 = vsel %vm269, %v1963, %v1965
      %v1967 = vrot.slane %v1882, 1
      %v1968 = vsel %vm269, %v1965, %v1967
      %v1997 = vmax.f32 %v1854, %v1914
      %v1998 = vmax.f32 %v1855, %v1916
      %v1999 = vmax.f32 %v1856, %v1918
      %v2000 = vmax.f32 %v1857, %v1920
      %v2001 = vmax.f32 %v1858, %v1922
      %v2002 = vmax.f32 %v1859, %v1924
      %v2003 = vmax.f32 %v1860, %v1926
      %v2004 = vmax.f32 %v1861, %v1928
      %v2005 = vmax.f32 %v1862, %v1930
      %v2006 = vmax.f32 %v1863, %v1932
      %v2007 = vmax.f32 %v1864, %v1934
      %v2008 = vmax.f32 %v1865, %v1936
      %v2009 = vmax.f32 %v1866, %v1938
      %v2010 = vmax.f32 %v1867, %v1940
      %v2011 = vmax.f32 %v1868, %v1942
      %v2012 = vmax.f32 %v1869, %v1944
      %v2013 = vmax.f32 %v1870, %v1946
      %v2014 = vmax.f32 %v1871, %v1948
      %v2015 = vmax.f32 %v1872, %v1950
      %v2016 = vmax.f32 %v1873, %v1952
      %v2017 = vmax.f32 %v1874, %v1954
      %v2018 = vmax.f32 %v1875, %v1956
      %v2019 = vmax.f32 %v1876, %v1958
      %v2020 = vmax.f32 %v1877, %v1960
      %v2021 = vmax.f32 %v1878, %v1962
      %v2022 = vmax.f32 %v1879, %v1964
      %v2023 = vmax.f32 %v1880, %v1966
      %v2024 = vmax.f32 %v1881, %v1968
      %v2025 = vld [vmem:[%s3] sm:$0xff]
      %v2026 = vld [vmem:[%s3 + $0x8] sm:$0xff]
      %v2027 = vld [vmem:[%s3 + $0x10] sm:$0xff]
      %v2028 = vld [vmem:[%s3 + $0x18] sm:$0xff]
      %v2029 = vld [vmem:[%s3 + $0x20] sm:$0xff]
      %v2030 = vld [vmem:[%s3 + $0x28] sm:$0xff]
      %v2031 = vld [vmem:[%s3 + $0x30] sm:$0xff]
      %v2032 = vld [vmem:[%s3 + $0x38] sm:$0xff]
      %v2033 = vld [vmem:[%s3 + $0x40] sm:$0xff]
      %v2034 = vld [vmem:[%s3 + $0x48] sm:$0xff]
      %v2035 = vld [vmem:[%s3 + $0x50] sm:$0xff]
      %v2036 = vld [vmem:[%s3 + $0x58] sm:$0xff]
      %v2037 = vld [vmem:[%s3 + $0x60] sm:$0x1]
      %v2038 = vld [vmem:[%s3 + $0x68] sm:$0x1]
      %v2040 = vsel %vm1127, %v2026, 0
      %v2043 = vsel %vm1127, %v2028, 0
      %v2046 = vsel %vm1127, %v2030, 0
      %v2049 = vsel %vm1127, %v2032, 0
      %v2052 = vsel %vm1127, %v2034, 0
      %v2055 = vsel %vm1127, %v2036, 0
      %v2058 = vsel %vm1127, %v2038, 0
      %2060 = vmatprep.subr.mxu0 0.0
      %2061 = vmatpush1.msra.mxu0 %v1997
      %2062 = vmatprep.subr.mxu0 0.0
      %2063 = vmatpush1.msra.mxu0 %v1998
      %2064 = vmatprep.subr.mxu0 0.0
      %2065 = vmatpush1.msra.mxu0 %v1999
      %2066 = vmatprep.subr.mxu0 0.0
      %2067 = vmatpush1.msra.mxu0 %v2000
      %2068 = vmatprep.subr.mxu0 0.0
      %2069 = vmatpush1.msra.mxu0 %v2001
      %2070 = vmatprep.subr.mxu0 0.0
      %2071 = vmatpush1.msra.mxu0 %v2002
      %2072 = vmatprep.subr.mxu0 0.0
      %2073 = vmatpush1.msra.mxu0 %v2003
      %2074 = vmatprep.subr.mxu0 0.0
      %2075 = vmatpush1.msra.mxu0 %v2004
      %2076 = vmatprep.subr.mxu0 0.0
      %2077 = vmatpush1.msra.mxu0 %v2005
      %2078 = vmatprep.subr.mxu0 0.0
      %2079 = vmatpush1.msra.mxu0 %v2006
      %2080 = vmatprep.subr.mxu0 0.0
      %2081 = vmatpush1.msra.mxu0 %v2007
      %2082 = vmatprep.subr.mxu0 0.0
      %2083 = vmatpush1.msra.mxu0 %v2008
      %2084 = vmatprep.subr.mxu0 0.0
      %2085 = vmatpush1.msra.mxu0 %v2009
      %2086 = vmatprep.subr.mxu0 0.0
      %2087 = vmatpush1.msra.mxu0 %v2010
      %2088 = vmatprep.subr.mxu0 0.0
      %2089 = vmatpush1.msra.mxu0 %v2011
      %2090 = vmatprep.subr.mxu0 0.0
      %2091 = vmatpush1.msra.mxu0 %v2012
      %2092 = vmatprep.subr.mxu0 0.0
      %2093 = vmatpush1.msra.mxu0 %v2013
      %2094 = vmatprep.subr.mxu0 0.0
      %2095 = vmatpush1.msra.mxu0 %v2014
      %2096 = vmatprep.subr.mxu0 0.0
      %2097 = vmatpush1.msra.mxu0 %v2015
      %2098 = vmatprep.subr.mxu0 0.0
      %2099 = vmatpush1.msra.mxu0 %v2016
      %2100 = vmatprep.subr.mxu0 0.0
      %2101 = vmatpush1.msra.mxu0 %v2017
      %2102 = vmatprep.subr.mxu0 0.0
      %2103 = vmatpush1.msra.mxu0 %v2018
      %2104 = vmatprep.subr.mxu0 0.0
      %2105 = vmatpush1.msra.mxu0 %v2019
      %2106 = vmatprep.subr.mxu0 0.0
      %2107 = vmatpush1.msra.mxu0 %v2020
      %2108 = vmatprep.subr.mxu0 0.0
      %2109 = vmatpush1.msra.mxu0 %v2021
      %2110 = vmatprep.subr.mxu0 0.0
      %2111 = vmatpush1.msra.mxu0 %v2022
      %2112 = vmatprep.subr.mxu0 0.0
      %2113 = vmatpush1.msra.mxu0 %v2023
      %2114 = vmatprep.subr.mxu0 0.0
      %2115 = vmatpush1.msra.mxu0 %v2024
      %2116 = vmatprep.subr.mxu0 0.0
      %2117 = vmatpush1.msra.mxu0 0.0
      %2118 = vmatprep.subr.mxu0 0.0
      %2119 = vmatpush1.msra.mxu0 0.0
      %2120 = vmatprep.subr.mxu0 0.0
      %2121 = vmatpush1.msra.mxu0 0.0
      %2122 = vmatprep.subr.mxu0 0.0
      %2123 = vmatpush1.msra.mxu0 0.0
      %2124 = vmatprep.mubr.f32.mxu0 %v2040
      %2125 = vmatmul.mubr.f32.gmra.mrb[0].mxu0 %v2025
      %v2126 = vpop.f32.mrb[0].mxu0
      %v2127 = vadd.f32 0.0, %v2126
      %v2128 = vpop.f32.mrb[0].mxu0
      %2129 = vmatprep.mubr.f32.mxu0 %v2043
      %2130 = vmatmul.mubr.f32.gmra.mrb[0].mxu0 %v2027
      %v2131 = vpop.f32.mrb[0].mxu0
      %v2132 = vadd.f32 0.0, %v2131
      %v2133 = vpop.f32.mrb[0].mxu0
      %2134 = vmatprep.mubr.f32.mxu0 %v2046
      %2135 = vmatmul.mubr.f32.gmra.mrb[0].mxu0 %v2029
      %v2136 = vpop.f32.mrb[0].mxu0
      %v2137 = vadd.f32 0.0, %v2136
      %v2138 = vpop.f32.mrb[0].mxu0
      %2139 = vmatprep.mubr.f32.mxu0 %v2049
      %2140 = vmatmul.mubr.f32.gmra.mrb[0].mxu0 %v2031
      %v2141 = vpop.f32.mrb[0].mxu0
      %v2142 = vadd.f32 0.0, %v2141
      %v2143 = vpop.f32.mrb[0].mxu0
      %2144 = vmatprep.mubr.f32.mxu0 %v2052
      %2145 = vmatmul.mubr.f32.gmra.mrb[0].mxu0 %v2033
      %v2146 = vpop.f32.mrb[0].mxu0
      %v2147 = vadd.f32 0.0, %v2146
      %v2148 = vpop.f32.mrb[0].mxu0
      %2149 = vmatprep.mubr.f32.mxu0 %v2055
      %2150 = vmatmul.mubr.f32.gmra.mrb[0].mxu0 %v2035
      %v2151 = vpop.f32.mrb[0].mxu0
      %v2152 = vadd.f32 0.0, %v2151
      %v2153 = vpop.f32.mrb[0].mxu0
      %2154 = vmatprep.mubr.f32.mxu0 %v2058
      %2155 = vmatmul.mubr.f32.gmra.mrb[0].mxu0 %v2037
      %v2156 = vpop.f32.mrb[0].mxu0
      %v2157 = vadd.f32 0.0, %v2156
      %v2158 = vpop.f32.mrb[0].mxu0
      %2159 = vdwg.mxu0
      %2160 = vst.msk [vmem:[%s197] sm:$0xff] %vm1094, %v2127
      %2161 = vst.msk [vmem:[%s197 + $0x8] sm:$0xff] %vm1094, %v2132
      %2162 = vst.msk [vmem:[%s197 + $0x10] sm:$0xff] %vm1094, %v2137
      %2163 = vst.msk [vmem:[%s197 + $0x18] sm:$0xff] %vm1094, %v2142
      %2164 = vst.msk [vmem:[%s197 + $0x20] sm:$0xff] %vm1094, %v2147
      %2165 = vst.msk [vmem:[%s197 + $0x28] sm:$0xff] %vm1094, %v2152
      %vm2166 = vcmask 516096
      %2167 = vst.msk [vmem:[%s197 + $0x30] sm:$0x1] %vm2166, %v2157
      %p2168 = scmp.lt.s32.totalorder %s15, 1
      %s2169 = scalar_select %p2168, %s15, 1
      %s2170 = smul.addr %s2169, 7
      %s2171 = smul.addr %s2170, 8
      %s2172 = scalar_lea.vmem %s4, %s2171
      // Predicated region
      $region37: #{net_forward.5} parent=35 // pred_check
        %p2173 = pneg %p122
      $region38: #{net_forward.5} parent=35 // pred_check_branch
        %2175 = sbr.rel (%p2173) target = $region40
      $region39: #{net_forward.5} parent=35 // pred_region
        _
      $region40: #{net_forward.5} parent=35 // pred_fallthru
        _
    $region36: #{net_forward.5} parent=5 // pred_fallthru
      _
    %p2176 = scmp.le.s32.totalorder 2, %s10
    // Predicated region
    $region41: #{net_forward.5} parent=5 // pred_check
      %p2177 = pneg %p2176
    $region42: #{net_forward.5} parent=5 // pred_check_branch
      %2179 = sbr.rel (%p2177) target = $region44
    $region43: #{net_forward.5} parent=5 // pred_region
      %s2180 = ssub.s32 %s10, 2
      // Predicated region
      $region45: #{net_forward.5} parent=43 // pred_check
        %p2181 = pneg %p128
      $region46: #{net_forward.5} parent=43 // pred_check_branch
        %2183 = sbr.rel (%p2181) target = $region48
      $region47: #{net_forward.5} parent=43 // pred_region
        %p2184 = scmp.lt.s32.totalorder %s16, 1
        %s2185 = scalar_select %p2184, %s16, 1
        %s2186 = smul.addr %s2185, 7
        %s2187 = smul.addr %s2186, 8
        %s2188 = scalar_lea.vmem %s4, %s2187
      $region48: #{net_forward.5} parent=43 // pred_fallthru
        _
    $region44: #{net_forward.5} parent=5 // pred_fallthru
      _
  $region6: #{net_forward.5} parent=0 // loop_footer
    %s14 = sadd.s32 1, %s10
  $region7: #{net_forward.5} parent=0 // loop_footer_branch
    %9 = sbr.rel target = $region3
  $region8: #{net_forward.5} parent=0 // loop_exit
    _

// kernel: net_forward.6
$region0: #{net_forward.6}
  #allocation0 [shape = 'u32[]', space=smem, size = 0x4, offset = 0x4, fixed_abs, tag = 'smem constant byte address 0x4 - core index']
  #allocation1 [shape = 'u32[144,128]{1,0:T(1,128)}', space=vmem, size = 0x12000, scoped, tag = 'internal scratch']
  %s0 = inlined_call_operand.vmem [shape: f32[2,108,64], index: 0, kind: input, shape index: {}]
  %s1 = inlined_call_operand.vmem [shape: bf16[576,64], index: 1, kind: input, shape index: {}]
  %s2 = inlined_call_operand.vmem [shape: f32[1,64], index: 2, kind: input, shape index: {}]
  %s3 = inlined_call_operand.vmem [shape: f32[9,63], index: 3, kind: input, shape index: {}]
  %s4 = inlined_call_operand.vmem [shape: f32[2,9,64], index: 4, kind: output, shape index: {}]
  %s5 = sld [smem:[#allocation0]]
  $region49: #{net_forward.6} parent=0
    _
  %s7 = ssub.s32 1, %s5
  %s8 = scalar_select 0, %s7, %s5
  loop: start=0, step=1, limit=4
  $region2: #{net_forward.6} parent=0 // loop_pre_header
    _
  $region3: #{net_forward.6} parent=0 // loop_header
    %s10 = sphi 0, %s14
    %p11 = scmp.ge.s32.totalorder %s10, 4
    %s20 = sphi 0, %s22
    %s23 = sphi 0, %s20
    %s24 = sphi 0, %s23
    %s40 = sphi 0, %s24
    %s44 = sphi 0, %s44
    %s46 = sphi 0, %s44
    %s47 = sphi 0, %s46
    %s61 = sphi 0, %s47
    %s65 = sphi 0, %s65
    %s67 = sphi 0, %s65
    %s68 = sphi 0, %s67
    %s82 = sphi 0, %s68
    %s86 = sphi 0, %s86
    %s88 = sphi 0, %s86
    %s89 = sphi 0, %s88
    %s103 = sphi 0, %s89
    %s109 = sphi 0, %s111
    %s112 = sphi 0, %s109
    %s113 = sphi 0, %s112
    %s129 = sphi 0, %s113
  $region4: #{net_forward.6} parent=0 // loop_header_branch
    %13 = sbr.rel (%p11) target = $region8
  $region5: #{net_forward.6} parent=0 // loop_body
    %s15 = ssub.s32 %s10, 1
    %s16 = ssub.s32 %s10, 2
    %s17 = sadd.s32 %s10, 1
    %s18 = ssub.s32 %s10, %s17
    %p19 = scmp.eq.s32.totalorder %s18, 0
    %s21 = sadd.s32 %s20, 1
    %s22 = scalar_select %p19, %s20, %s21
    %p25 = pneg %p19
    %p26 = scmp.eq.s32.totalorder %s10, 1
    %p27 = por %p25, %p26
    %p28 = scmp.ne.s32.totalorder %s20, %s23
    %p29 = scmp.eq.s32.totalorder %s10, 0
    %p30 = por %p28, %p29
    %p31 = scmp.ne.s32.totalorder %s20, %s23
    %p32 = scmp.eq.s32.totalorder %s15, 1
    %p33 = por %p31, %p32
    %p34 = scmp.ne.s32.totalorder %s23, %s24
    %p35 = scmp.eq.s32.totalorder %s15, 0
    %p36 = por %p34, %p35
    %p37 = scmp.ne.s32.totalorder %s23, %s24
    %p38 = scmp.eq.s32.totalorder %s16, 1
    %p39 = por %p37, %p38
    %p41 = scmp.ne.s32.totalorder %s24, %s40
    %p42 = scmp.eq.s32.totalorder %s16, 0
    %p43 = por %p41, %p42
    %s45 = sadd.s32 %s44, 1
    %p48 = scmp.eq.s32.totalorder %s10, 1
    %p49 = scmp.ne.s32.totalorder %s44, %s46
    %p50 = scmp.eq.s32.totalorder %s10, 0
    %p51 = por %p49, %p50
    %p52 = scmp.ne.s32.totalorder %s44, %s46
    %p53 = scmp.eq.s32.totalorder %s15, 1
    %p54 = por %p52, %p53
    %p55 = scmp.ne.s32.totalorder %s46, %s47
    %p56 = scmp.eq.s32.totalorder %s15, 0
    %p57 = por %p55, %p56
    %p58 = scmp.ne.s32.totalorder %s46, %s47
    %p59 = scmp.eq.s32.totalorder %s16, 1
    %p60 = por %p58, %p59
    %p62 = scmp.ne.s32.totalorder %s47, %s61
    %p63 = scmp.eq.s32.totalorder %s16, 0
    %p64 = por %p62, %p63
    %s66 = sadd.s32 %s65, 1
    %p69 = scmp.eq.s32.totalorder %s10, 1
    %p70 = scmp.ne.s32.totalorder %s65, %s67
    %p71 = scmp.eq.s32.totalorder %s10, 0
    %p72 = por %p70, %p71
    %p73 = scmp.ne.s32.totalorder %s65, %s67
    %p74 = scmp.eq.s32.totalorder %s15, 1
    %p75 = por %p73, %p74
    %p76 = scmp.ne.s32.totalorder %s67, %s68
    %p77 = scmp.eq.s32.totalorder %s15, 0
    %p78 = por %p76, %p77
    %p79 = scmp.ne.s32.totalorder %s67, %s68
    %p80 = scmp.eq.s32.totalorder %s16, 1
    %p81 = por %p79, %p80
    %p83 = scmp.ne.s32.totalorder %s68, %s82
    %p84 = scmp.eq.s32.totalorder %s16, 0
    %p85 = por %p83, %p84
    %s87 = sadd.s32 %s86, 1
    %p90 = scmp.eq.s32.totalorder %s10, 1
    %p91 = scmp.ne.s32.totalorder %s86, %s88
    %p92 = scmp.eq.s32.totalorder %s10, 0
    %p93 = por %p91, %p92
    %p94 = scmp.ne.s32.totalorder %s86, %s88
    %p95 = scmp.eq.s32.totalorder %s15, 1
    %p96 = por %p94, %p95
    %p97 = scmp.ne.s32.totalorder %s88, %s89
    %p98 = scmp.eq.s32.totalorder %s15, 0
    %p99 = por %p97, %p98
    %p100 = scmp.ne.s32.totalorder %s88, %s89
    %p101 = scmp.eq.s32.totalorder %s16, 1
    %p102 = por %p100, %p101
    %p104 = scmp.ne.s32.totalorder %s89, %s103
    %p105 = scmp.eq.s32.totalorder %s16, 0
    %p106 = por %p104, %p105
    %s107 = ssub.s32 %s10, %s17
    %p108 = scmp.eq.s32.totalorder %s107, 0
    %s110 = sadd.s32 %s109, 1
    %s111 = scalar_select %p108, %s109, %s110
    %p114 = pneg %p108
    %p115 = scmp.eq.s32.totalorder %s10, 1
    %p116 = por %p114, %p115
    %p117 = scmp.ne.s32.totalorder %s109, %s112
    %p118 = scmp.eq.s32.totalorder %s10, 0
    %p119 = por %p117, %p118
    %p120 = scmp.ne.s32.totalorder %s109, %s112
    %p121 = scmp.eq.s32.totalorder %s15, 1
    %p122 = por %p120, %p121
    %p123 = scmp.ne.s32.totalorder %s112, %s113
    %p124 = scmp.eq.s32.totalorder %s15, 0
    %p125 = por %p123, %p124
    %p126 = scmp.ne.s32.totalorder %s112, %s113
    %p127 = scmp.eq.s32.totalorder %s16, 1
    %p128 = por %p126, %p127
    %p130 = scmp.ne.s32.totalorder %s113, %s129
    %p131 = scmp.eq.s32.totalorder %s16, 0
    %p132 = por %p130, %p131
    %p133 = scmp.le.s32.totalorder 1, %s10
    %p134 = scmp.lt.s32.totalorder %s10, 3
    %p135 = pnand %p133, %p134
    %p136 = pneg %p135
    // Predicated region
    $region9: #{net_forward.6} parent=5 // pred_check
      _
    $region10: #{net_forward.6} parent=5 // pred_check_branch
      %138 = sbr.rel (%p135) target = $region12
    $region11: #{net_forward.6} parent=5 // pred_region
      %s139 = ssub.s32 %s10, 1
      // Predicated region
      $region13: #{net_forward.6} parent=11 // pred_check
        %p140 = pneg %p57
      $region14: #{net_forward.6} parent=11 // pred_check_branch
        %142 = sbr.rel (%p140) target = $region16
      $region15: #{net_forward.6} parent=11 // pred_region
        _
      $region16: #{net_forward.6} parent=11 // pred_fallthru
        _
      // Predicated region
      $region17: #{net_forward.6} parent=11 // pred_check
        %p143 = pneg %p78
      $region18: #{net_forward.6} parent=11 // pred_check_branch
        %145 = sbr.rel (%p143) target = $region20
      $region19: #{net_forward.6} parent=11 // pred_region
        _
      $region20: #{net_forward.6} parent=11 // pred_fallthru
        _
      // Predicated region
      $region21: #{net_forward.6} parent=11 // pred_check
        %p146 = pneg %p99
      $region22: #{net_forward.6} parent=11 // pred_check_branch
        %148 = sbr.rel (%p146) target = $region24
      $region23: #{net_forward.6} parent=11 // pred_region
        _
      $region24: #{net_forward.6} parent=11 // pred_fallthru
        _
    $region12: #{net_forward.6} parent=5 // pred_fallthru
      _
    %p149 = scmp.lt.s32.totalorder %s10, 2
    // Predicated region
    $region25: #{net_forward.6} parent=5 // pred_check
      %p150 = pneg %p149
    $region26: #{net_forward.6} parent=5 // pred_check_branch
      %152 = sbr.rel (%p150) target = $region28
    $region27: #{net_forward.6} parent=5 // pred_region
      // Predicated region
      $region29: #{net_forward.6} parent=27 // pred_check
        %p153 = pneg %p30
      $region30: #{net_forward.6} parent=27 // pred_check_branch
        %155 = sbr.rel (%p153) target = $region32
      $region31: #{net_forward.6} parent=27 // pred_region
        %p156 = scmp.lt.s32.totalorder %s10, 1
        %s157 = scalar_select %p156, %s10, 1
        %s158 = smul.addr %s157, 14
        %s159 = smul.addr %s158, 8
        %s160 = scalar_lea.vmem %s0, %s159
      $region32: #{net_forward.6} parent=27 // pred_fallthru
        _
    $region28: #{net_forward.6} parent=5 // pred_fallthru
      _
    %p161 = scmp.le.s32.totalorder 1, %s10
    %p162 = scmp.lt.s32.totalorder %s10, 3
    %p163 = pnand %p161, %p162
    %p164 = pneg %p163
    // Predicated region
    $region33: #{net_forward.6} parent=5 // pred_check
      _
    $region34: #{net_forward.6} parent=5 // pred_check_branch
      %166 = sbr.rel (%p163) target = $region36
    $region35: #{net_forward.6} parent=5 // pred_region
      %s167 = ssub.s32 %s10, 1
      %p168 = scmp.lt.s32.totalorder %s15, 1
      %s169 = scalar_select %p168, %s15, 1
      %s170 = smul.addr %s169, 14
      %s171 = smul.addr %s170, 8
      %s172 = scalar_lea.vmem %s0, %s171
      %p173 = pneg %p36
      %p174 = pneg %p33
      %p175 = pneg %p57
      %p176 = pneg %p54
      %p177 = pneg %p78
      %p178 = pneg %p75
      %p179 = pneg %p99
      %p180 = pneg %p96
      %p181 = pneg %p125
      %p182 = pneg %p122
      %p183 = scmp.lt.s32.totalorder %s15, 1
      %s184 = scalar_select %p183, %s15, 1
      %s185 = smul.addr %s184, 2
      %s186 = smul.addr %s185, 8
      %s187 = scalar_lea.vmem %s4, %s186
      %p188 = scmp.lt.s32.totalorder %s15, 1
      %s189 = scalar_select %p188, %s15, 1
      %s190 = smul.addr %s189, 14
      %s191 = smul.addr %s190, 8
      %s192 = scalar_lea.vmem %s0, %s191
      %p193 = scmp.lt.s32.totalorder %s15, 1
      %s194 = scalar_select %p193, %s15, 1
      %s195 = smul.addr %s194, 2
      %s196 = smul.addr %s195, 8
      %s197 = scalar_lea.vmem %s4, %s196
      %v199 = vld [vmem:[%s192] sm:$0xff]
      %v200 = vld [vmem:[%s192 + $0x8] sm:$0xff]
      %v201 = vld [vmem:[%s192 + $0x10] sm:$0xff]
      %v202 = vld [vmem:[%s192 + $0x18] sm:$0xff]
      %v203 = vld [vmem:[%s192 + $0x20] sm:$0xff]
      %v204 = vld [vmem:[%s192 + $0x28] sm:$0xff]
      %v205 = vld [vmem:[%s192 + $0x30] sm:$0xff]
      %v206 = vld [vmem:[%s192 + $0x38] sm:$0xff]
      %v207 = vld [vmem:[%s192 + $0x40] sm:$0xff]
      %v208 = vld [vmem:[%s192 + $0x48] sm:$0xff]
      %v209 = vld [vmem:[%s192 + $0x50] sm:$0xff]
      %v210 = vld [vmem:[%s192 + $0x58] sm:$0xff]
      %v211 = vld [vmem:[%s192 + $0x60] sm:$0xff]
      %vm223 = vcmask 1046528
      %v224 = vrot.slane %v199, 1
      %v225 = vrot.slane %v200, 1
      %v226 = vsel %vm223, %v224, %v225
      %v227 = vrot.slane %v201, 1
      %v228 = vsel %vm223, %v225, %v227
      %v229 = vrot.slane %v202, 1
      %v230 = vsel %vm223, %v227, %v229
      %v231 = vrot.slane %v203, 1
      %v232 = vsel %vm223, %v229, %v231
      %v233 = vrot.slane %v204, 1
      %v234 = vsel %vm223, %v231, %v233
      %v235 = vrot.slane %v205, 1
      %v236 = vsel %vm223, %v233, %v235
      %v237 = vrot.slane %v206, 1
      %v238 = vsel %vm223, %v235, %v237
      %v239 = vrot.slane %v207, 1
      %v240 = vsel %vm223, %v237, %v239
      %v241 = vrot.slane %v208, 1
      %v242 = vsel %vm223, %v239, %v241
      %v243 = vrot.slane %v209, 1
      %v244 = vsel %vm223, %v241, %v243
      %245 = vrot.lane.b32.xlu0 %v226, 64
      %v246 = vpop.permute.xlu0 %245
      %247 = vrot.lane.b32.xlu0 %v228, 64
      %v248 = vpop.permute.xlu0 %247
      %249 = vrot.lane.b32.xlu0 %v230, 64
      %v250 = vpop.permute.xlu0 %249
      %251 = vrot.lane.b32.xlu0 %v232, 64
      %v252 = vpop.permute.xlu0 %251
      %253 = vrot.lane.b32.xlu0 %v234, 64
      %v254 = vpop.permute.xlu0 %253
      %255 = vrot.lane.b32.xlu0 %v236, 64
      %v256 = vpop.permute.xlu0 %255
      %257 = vrot.lane.b32.xlu0 %v238, 64
      %v258 = vpop.permute.xlu0 %257
      %259 = vrot.lane.b32.xlu0 %v240, 64
      %v260 = vpop.permute.xlu0 %259
      %261 = vrot.lane.b32.xlu0 %v242, 64
      %v262 = vpop.permute.xlu0 %261
      %263 = vrot.lane.b32.xlu0 %v244, 64
      %v264 = vpop.permute.xlu0 %263
      %265 = vrot.lane.b32.xlu0 %v243, 64
      %v266 = vpop.permute.xlu0 %265
      %vm278 = vcmask 1045504
      %v279 = vrot.slane %v199, 2
      %v280 = vrot.slane %v200, 2
      %v281 = vsel %vm278, %v279, %v280
      %v282 = vrot.slane %v201, 2
      %v283 = vsel %vm278, %v280, %v282
      %v284 = vrot.slane %v202, 2
      %v285 = vsel %vm278, %v282, %v284
      %v286 = vrot.slane %v203, 2
      %v287 = vsel %vm278, %v284, %v286
      %v288 = vrot.slane %v204, 2
      %v289 = vsel %vm278, %v286, %v288
      %v290 = vrot.slane %v205, 2
      %v291 = vsel %vm278, %v288, %v290
      %v292 = vrot.slane %v206, 2
      %v293 = vsel %vm278, %v290, %v292
      %v294 = vrot.slane %v207, 2
      %v295 = vsel %vm278, %v292, %v294
      %v296 = vrot.slane %v208, 2
      %v297 = vsel %vm278, %v294, %v296
      %v298 = vrot.slane %v209, 2
      %v299 = vsel %vm278, %v296, %v298
      %v312 = vrot.slane %v210, 1
      %v313 = vsel %vm223, %v243, %v312
      %314 = vrot.lane.b32.xlu0 %v313, 64
      %v315 = vpop.permute.xlu0 %314
      %316 = vrot.lane.b32.xlu0 %v312, 64
      %v317 = vpop.permute.xlu0 %316
      %v320 = vrot.slane %v210, 2
      %v321 = vsel %vm278, %v298, %v320
      %vm324 = vcmask 1044480
      %v325 = vrot.slane %v200, 3
      %v326 = vrot.slane %v201, 3
      %v327 = vsel %vm324, %v325, %v326
      %v328 = vrot.slane %v202, 3
      %v329 = vsel %vm324, %v326, %v328
      %v330 = vrot.slane %v203, 3
      %v331 = vsel %vm324, %v328, %v330
      %v332 = vrot.slane %v204, 3
      %v333 = vsel %vm324, %v330, %v332
      %v334 = vrot.slane %v205, 3
      %v335 = vsel %vm324, %v332, %v334
      %v336 = vrot.slane %v206, 3
      %v337 = vsel %vm324, %v334, %v336
      %v338 = vrot.slane %v207, 3
      %v339 = vsel %vm324, %v336, %v338
      %v340 = vrot.slane %v208, 3
      %v341 = vsel %vm324, %v338, %v340
      %v342 = vrot.slane %v209, 3
      %v343 = vsel %vm324, %v340, %v342
      %v344 = vrot.slane %v210, 3
      %v345 = vsel %vm324, %v342, %v344
      %346 = vrot.lane.b32.xlu0 %v327, 64
      %v347 = vpop.permute.xlu0 %346
      %348 = vrot.lane.b32.xlu0 %v329, 64
      %v349 = vpop.permute.xlu0 %348
      %350 = vrot.lane.b32.xlu0 %v331, 64
      %v351 = vpop.permute.xlu0 %350
      %352 = vrot.lane.b32.xlu0 %v333, 64
      %v353 = vpop.permute.xlu0 %352
      %354 = vrot.lane.b32.xlu0 %v335, 64
      %v355 = vpop.permute.xlu0 %354
      %356 = vrot.lane.b32.xlu0 %v337, 64
      %v357 = vpop.permute.xlu0 %356
      %358 = vrot.lane.b32.xlu0 %v339, 64
      %v359 = vpop.permute.xlu0 %358
      %360 = vrot.lane.b32.xlu0 %v341, 64
      %v361 = vpop.permute.xlu0 %360
      %362 = vrot.lane.b32.xlu0 %v343, 64
      %v363 = vpop.permute.xlu0 %362
      %364 = vrot.lane.b32.xlu0 %v345, 64
      %v365 = vpop.permute.xlu0 %364
      %366 = vrot.lane.b32.xlu0 %v344, 64
      %v367 = vpop.permute.xlu0 %366
      %v380 = vrot.slane %v211, 2
      %v381 = vsel %vm278, %v320, %v380
      %v384 = vrot.slane %v211, 3
      %v385 = vsel %vm324, %v344, %v384
      %386 = vrot.lane.b32.xlu0 %v385, 64
      %v387 = vpop.permute.xlu0 %386
      %388 = vrot.lane.b32.xlu0 %v384, 64
      %v389 = vpop.permute.xlu0 %388
      %vm392 = vcmask 1043456
      %v393 = vrot.slane %v201, 4
      %v394 = vrot.slane %v202, 4
      %v395 = vsel %vm392, %v393, %v394
      %v396 = vrot.slane %v203, 4
      %v397 = vsel %vm392, %v394, %v396
      %v398 = vrot.slane %v204, 4
      %v399 = vsel %vm392, %v396, %v398
      %v400 = vrot.slane %v205, 4
      %v401 = vsel %vm392, %v398, %v400
      %v402 = vrot.slane %v206, 4
      %v403 = vsel %vm392, %v400, %v402
      %v404 = vrot.slane %v207, 4
      %v405 = vsel %vm392, %v402, %v404
      %v406 = vrot.slane %v208, 4
      %v407 = vsel %vm392, %v404, %v406
      %v408 = vrot.slane %v209, 4
      %v409 = vsel %vm392, %v406, %v408
      %v410 = vrot.slane %v210, 4
      %v411 = vsel %vm392, %v408, %v410
      %v412 = vrot.slane %v211, 4
      %v413 = vsel %vm392, %v410, %v412
      %vm425 = vcmask 523264
      %v426 = vsel %vm425, %v199, %v246
      %v427 = vsel %vm425, %v200, %v248
      %v428 = vsel %vm425, %v201, %v250
      %v429 = vsel %vm425, %v202, %v252
      %v430 = vsel %vm425, %v203, %v254
      %v431 = vsel %vm425, %v204, %v256
      %v432 = vsel %vm425, %v205, %v258
      %v433 = vsel %vm425, %v206, %v260
      %v434 = vsel %vm425, %v207, %v262
      %v435 = vsel %vm425, %v208, %v264
      %v436 = vsel %vm425, %v209, %v266
      %v437 = vsel %vm425, %v281, %v248
      %v438 = vsel %vm425, %v283, %v250
      %v439 = vsel %vm425, %v285, %v252
      %v440 = vsel %vm425, %v287, %v254
      %v441 = vsel %vm425, %v289, %v256
      %v442 = vsel %vm425, %v291, %v258
      %v443 = vsel %vm425, %v293, %v260
      %v444 = vsel %vm425, %v295, %v262
      %v445 = vsel %vm425, %v297, %v264
      %v446 = vsel %vm425, %v299, %v315
      %v447 = vsel %vm425, %v298, %v317
      %v448 = vsel %vm425, %v283, %v347
      %v449 = vsel %vm425, %v285, %v349
      %v450 = vsel %vm425, %v287, %v351
      %v451 = vsel %vm425, %v289, %v353
      %v452 = vsel %vm425, %v291, %v355
      %v453 = vsel %vm425, %v293, %v357
      %v454 = vsel %vm425, %v295, %v359
      %v455 = vsel %vm425, %v297, %v361
      %v456 = vsel %vm425, %v299, %v363
      %v457 = vsel %vm425, %v321, %v365
      %v458 = vsel %vm425, %v320, %v367
      %v459 = vsel %vm425, %v381, %v387
      %v460 = vsel %vm425, %v380, %v389
      %v461 = vpack.c.bf16 %v427, %v426
      %v462 = vpack.c.bf16 %v438, %v437
      %v463 = vpack.c.bf16 %v449, %v448
      %v464 = vpack.c.bf16 %v450, %v449
      %v465 = vpack.c.bf16 %v397, %v395
      %v466 = vpack.c.bf16 %v429, %v428
      %v467 = vpack.c.bf16 %v440, %v439
      %v468 = vpack.c.bf16 %v451, %v450
      %v469 = vpack.c.bf16 %v452, %v451
      %v470 = vpack.c.bf16 %v401, %v399
      %v471 = vpack.c.bf16 %v431, %v430
      %v472 = vpack.c.bf16 %v442, %v441
      %v473 = vpack.c.bf16 %v453, %v452
      %v474 = vpack.c.bf16 %v454, %v453
      %v475 = vpack.c.bf16 %v405, %v403
      %v476 = vpack.c.bf16 %v433, %v432
      %v477 = vpack.c.bf16 %v444, %v443
      %v478 = vpack.c.bf16 %v455, %v454
      %v479 = vpack.c.bf16 %v456, %v455
      %v480 = vpack.c.bf16 %v409, %v407
      %v481 = vpack.c.bf16 %v435, %v434
      %v482 = vpack.c.bf16 %v446, %v445
      %v483 = vpack.c.bf16 %v457, %v456
      %v484 = vpack.c.bf16 %v459, %v457
      %v485 = vpack.c.bf16 %v413, %v411
      %v486 = vpack.c.bf16 %v436, %v436
      %v487 = vpack.c.bf16 %v447, %v447
      %v488 = vpack.c.bf16 %v458, %v458
      %v489 = vpack.c.bf16 %v460, %v460
      %v490 = vpack.c.bf16 %v412, %v412
      %v491 = vld [vmem:[%s1] sm:$0xf]
      %v492 = vld [vmem:[%s1 + $0x4] sm:$0xf]
      %v493 = vld [vmem:[%s1 + $0x8] sm:$0xf]
      %v494 = vld [vmem:[%s1 + $0xc] sm:$0xf]
      %v495 = vld [vmem:[%s1 + $0x10] sm:$0xf]
      %v496 = vld [vmem:[%s1 + $0x14] sm:$0xf]
      %v497 = vld [vmem:[%s1 + $0x18] sm:$0xf]
      %v498 = vld [vmem:[%s1 + $0x1c] sm:$0xf]
      %v499 = vld [vmem:[%s1 + $0x20] sm:$0xf]
      %v500 = vld [vmem:[%s1 + $0x24] sm:$0xf]
      %v501 = vld [vmem:[%s1 + $0x28] sm:$0xf]
      %v502 = vld [vmem:[%s1 + $0x2c] sm:$0xf]
      %v503 = vld [vmem:[%s1 + $0x30] sm:$0xf]
      %v504 = vld [vmem:[%s1 + $0x34] sm:$0xf]
      %v505 = vld [vmem:[%s1 + $0x38] sm:$0xf]
      %v506 = vld [vmem:[%s1 + $0x3c] sm:$0xf]
      %v507 = vld [vmem:[%s1 + $0x40] sm:$0xf]
      %v508 = vld [vmem:[%s1 + $0x44] sm:$0xf]
      %v509 = vld [vmem:[%s1 + $0x48] sm:$0xf]
      %v510 = vld [vmem:[%s1 + $0x4c] sm:$0xf]
      %v511 = vld [vmem:[%s1 + $0x50] sm:$0xf]
      %v512 = vld [vmem:[%s1 + $0x54] sm:$0xf]
      %v513 = vld [vmem:[%s1 + $0x58] sm:$0xf]
      %v514 = vld [vmem:[%s1 + $0x5c] sm:$0xf]
      %v515 = vld [vmem:[%s1 + $0x60] sm:$0xf]
      %v516 = vld [vmem:[%s1 + $0x64] sm:$0xf]
      %v517 = vld [vmem:[%s1 + $0x68] sm:$0xf]
      %v518 = vld [vmem:[%s1 + $0x6c] sm:$0xf]
      %v519 = vld [vmem:[%s1 + $0x70] sm:$0xf]
      %v520 = vld [vmem:[%s1 + $0x74] sm:$0xf]
      %v521 = vld [vmem:[%s1 + $0x78] sm:$0xf]
      %v522 = vld [vmem:[%s1 + $0x7c] sm:$0xf]
      %v523 = vld [vmem:[%s1 + $0x80] sm:$0xf]
      %v524 = vld [vmem:[%s1 + $0x84] sm:$0xf]
      %v525 = vld [vmem:[%s1 + $0x88] sm:$0xf]
      %v526 = vld [vmem:[%s1 + $0x8c] sm:$0xf]
      %v527 = vld [vmem:[%s1 + $0x90] sm:$0xf]
      %v528 = vld [vmem:[%s1 + $0x94] sm:$0xf]
      %v529 = vld [vmem:[%s1 + $0x98] sm:$0xf]
      %v530 = vld [vmem:[%s1 + $0x9c] sm:$0xf]
      %v531 = vld [vmem:[%s1 + $0xa0] sm:$0xf]
      %v532 = vld [vmem:[%s1 + $0xa4] sm:$0xf]
      %v533 = vld [vmem:[%s1 + $0xa8] sm:$0xf]
      %v534 = vld [vmem:[%s1 + $0xac] sm:$0xf]
      %v535 = vld [vmem:[%s1 + $0xb0] sm:$0xf]
      %v536 = vld [vmem:[%s1 + $0xb4] sm:$0xf]
      %v537 = vld [vmem:[%s1 + $0xb8] sm:$0xf]
      %v538 = vld [vmem:[%s1 + $0xbc] sm:$0xf]
      %v539 = vld [vmem:[%s1 + $0xc0] sm:$0xf]
      %v540 = vld [vmem:[%s1 + $0xc4] sm:$0xf]
      %v541 = vld [vmem:[%s1 + $0xc8] sm:$0xf]
      %v542 = vld [vmem:[%s1 + $0xcc] sm:$0xf]
      %v543 = vld [vmem:[%s1 + $0xd0] sm:$0xf]
      %v544 = vld [vmem:[%s1 + $0xd4] sm:$0xf]
      %v545 = vld [vmem:[%s1 + $0xd8] sm:$0xf]
      %v546 = vld [vmem:[%s1 + $0xdc] sm:$0xf]
      %v547 = vld [vmem:[%s1 + $0xe0] sm:$0xf]
      %v548 = vld [vmem:[%s1 + $0xe4] sm:$0xf]
      %v549 = vld [vmem:[%s1 + $0xe8] sm:$0xf]
      %v550 = vld [vmem:[%s1 + $0xec] sm:$0xf]
      %v551 = vld [vmem:[%s1 + $0xf0] sm:$0xf]
      %v552 = vld [vmem:[%s1 + $0xf4] sm:$0xf]
      %v553 = vld [vmem:[%s1 + $0xf8] sm:$0xf]
      %v554 = vld [vmem:[%s1 + $0xfc] sm:$0xf]
      %v555 = vld [vmem:[%s1 + $0x100] sm:$0xf]
      %v556 = vld [vmem:[%s1 + $0x104] sm:$0xf]
      %v557 = vld [vmem:[%s1 + $0x108] sm:$0xf]
      %v558 = vld [vmem:[%s1 + $0x10c] sm:$0xf]
      %v559 = vld [vmem:[%s1 + $0x110] sm:$0xf]
      %v560 = vld [vmem:[%s1 + $0x114] sm:$0xf]
      %v561 = vld [vmem:[%s1 + $0x118] sm:$0xf]
      %v562 = vld [vmem:[%s1 + $0x11c] sm:$0xf]
      %v563 = vld [vmem:[%s2] sm:$0x1]
      %v565 = vlaneseq
      %v566 = vshrl.u32 %v565, 7
      %v567 = vsub.s32 0, %v566
      %v568 = vrot.slane %v563, %v567
      %v642 = vunpack.c.l.b16 %v491
      %v643 = vunpack.c.l.b16 %v492
      %v644 = vunpack.c.l.b16 %v493
      %v645 = vunpack.c.l.b16 %v494
      %v646 = vunpack.c.l.b16 %v495
      %v647 = vunpack.c.l.b16 %v496
      %v648 = vunpack.c.l.b16 %v497
      %v649 = vunpack.c.l.b16 %v498
      %v650 = vunpack.c.l.b16 %v499
      %v651 = vunpack.c.l.b16 %v500
      %v652 = vunpack.c.l.b16 %v501
      %v653 = vunpack.c.l.b16 %v502
      %v654 = vunpack.c.l.b16 %v503
      %v655 = vunpack.c.l.b16 %v504
      %v656 = vunpack.c.l.b16 %v505
      %v657 = vunpack.c.l.b16 %v506
      %v658 = vunpack.c.l.b16 %v507
      %v659 = vunpack.c.l.b16 %v508
      %v660 = vunpack.c.l.b16 %v509
      %v661 = vunpack.c.l.b16 %v510
      %v662 = vunpack.c.l.b16 %v511
      %v663 = vunpack.c.l.b16 %v512
      %v664 = vunpack.c.l.b16 %v513
      %v665 = vunpack.c.l.b16 %v514
      %v666 = vunpack.c.l.b16 %v515
      %v667 = vunpack.c.l.b16 %v516
      %v668 = vunpack.c.l.b16 %v517
      %v669 = vunpack.c.l.b16 %v518
      %v670 = vunpack.c.l.b16 %v519
      %v671 = vunpack.c.l.b16 %v520
      %v672 = vunpack.c.l.b16 %v521
      %v673 = vunpack.c.l.b16 %v522
      %v674 = vunpack.c.l.b16 %v523
      %v675 = vunpack.c.l.b16 %v524
      %v676 = vunpack.c.l.b16 %v525
      %v677 = vunpack.c.l.b16 %v526
      %v678 = vunpack.c.l.b16 %v527
      %v679 = vunpack.c.l.b16 %v528
      %v680 = vunpack.c.l.b16 %v529
      %v681 = vunpack.c.l.b16 %v530
      %v682 = vunpack.c.l.b16 %v531
      %v683 = vunpack.c.l.b16 %v532
      %v684 = vunpack.c.l.b16 %v533
      %v685 = vunpack.c.l.b16 %v534
      %v686 = vunpack.c.l.b16 %v535
      %v687 = vunpack.c.l.b16 %v536
      %v688 = vunpack.c.l.b16 %v537
      %v689 = vunpack.c.l.b16 %v538
      %v690 = vunpack.c.l.b16 %v539
      %v691 = vunpack.c.l.b16 %v540
      %v692 = vunpack.c.l.b16 %v541
      %v693 = vunpack.c.l.b16 %v542
      %v694 = vunpack.c.l.b16 %v543
      %v695 = vunpack.c.l.b16 %v544
      %v696 = vunpack.c.l.b16 %v545
      %v697 = vunpack.c.l.b16 %v546
      %v698 = vunpack.c.l.b16 %v547
      %v699 = vunpack.c.l.b16 %v548
      %v700 = vunpack.c.l.b16 %v549
      %v701 = vunpack.c.l.b16 %v550
      %v702 = vunpack.c.l.b16 %v551
      %v703 = vunpack.c.l.b16 %v552
      %v704 = vunpack.c.l.b16 %v553
      %v705 = vunpack.c.l.b16 %v554
      %v706 = vunpack.c.l.b16 %v555
      %v707 = vunpack.c.l.b16 %v556
      %v708 = vunpack.c.l.b16 %v557
      %v709 = vunpack.c.l.b16 %v558
      %v710 = vunpack.c.l.b16 %v559
      %v711 = vunpack.c.l.b16 %v560
      %v712 = vunpack.c.l.b16 %v561
      %v713 = vunpack.c.l.b16 %v562
      %v714 = vpack.c.b16 %v643, %v642
      %v715 = vpack.c.b16 %v645, %v644
      %v716 = vpack.c.b16 %v647, %v646
      %v717 = vpack.c.b16 %v649, %v648
      %v718 = vpack.c.b16 %v651, %v650
      %v719 = vpack.c.b16 %v653, %v652
      %v720 = vpack.c.b16 %v655, %v654
      %v721 = vpack.c.b16 %v657, %v656
      %v722 = vpack.c.b16 %v659, %v658
      %v723 = vpack.c.b16 %v661, %v660
      %v724 = vpack.c.b16 %v663, %v662
      %v725 = vpack.c.b16 %v665, %v664
      %v726 = vpack.c.b16 %v667, %v666
      %v727 = vpack.c.b16 %v669, %v668
      %v728 = vpack.c.b16 %v671, %v670
      %v729 = vpack.c.b16 %v673, %v672
      %v730 = vpack.c.b16 %v675, %v674
      %v731 = vpack.c.b16 %v677, %v676
      %v732 = vpack.c.b16 %v679, %v678
      %v733 = vpack.c.b16 %v681, %v680
      %v734 = vpack.c.b16 %v683, %v682
      %v735 = vpack.c.b16 %v685, %v684
      %v736 = vpack.c.b16 %v687, %v686
      %v737 = vpack.c.b16 %v689, %v688
      %v738 = vpack.c.b16 %v691, %v690
      %v739 = vpack.c.b16 %v693, %v692
      %v740 = vpack.c.b16 %v695, %v694
      %v741 = vpack.c.b16 %v697, %v696
      %v742 = vpack.c.b16 %v699, %v698
      %v743 = vpack.c.b16 %v701, %v700
      %v744 = vpack.c.b16 %v703, %v702
      %v745 = vpack.c.b16 %v705, %v704
      %v746 = vpack.c.b16 %v707, %v706
      %v747 = vpack.c.b16 %v709, %v708
      %v748 = vpack.c.b16 %v711, %v710
      %v749 = vpack.c.b16 %v713, %v712
      %v787 = vsel %vm425, %v465, 0
      %v790 = vsel %vm425, %v470, 0
      %v793 = vsel %vm425, %v475, 0
      %v796 = vsel %vm425, %v480, 0
      %v799 = vsel %vm425, %v485, 0
      %v802 = vsel %vm425, %v490, 0
      %804 = vmatprep.subr.bf16.mxu0 0
      %805 = vmatpush1.bf16.msra.mxu0 %v714
      %806 = vmatprep.subr.bf16.mxu0 0
      %807 = vmatpush1.bf16.msra.mxu0 %v715
      %808 = vmatprep.subr.bf16.mxu0 0
      %809 = vmatpush1.bf16.msra.mxu0 %v716
      %810 = vmatprep.subr.bf16.mxu0 0
      %811 = vmatpush1.bf16.msra.mxu0 %v717
      %812 = vmatprep.subr.bf16.mxu0 0
      %813 = vmatpush1.bf16.msra.mxu0 %v718
      %814 = vmatprep.subr.bf16.mxu0 0
      %815 = vmatpush1.bf16.msra.mxu0 %v719
      %816 = vmatprep.subr.bf16.mxu0 0
      %817 = vmatpush1.bf16.msra.mxu0 %v720
      %818 = vmatprep.subr.bf16.mxu0 0
      %819 = vmatpush1.bf16.msra.mxu0 %v721
      %820 = vmatprep.subr.bf16.mxu0 0
      %821 = vmatpush1.bf16.msra.mxu0 %v722
      %822 = vmatprep.subr.bf16.mxu0 0
      %823 = vmatpush1.bf16.msra.mxu0 %v723
      %824 = vmatprep.subr.bf16.mxu0 0
      %825 = vmatpush1.bf16.msra.mxu0 %v724
      %826 = vmatprep.subr.bf16.mxu0 0
      %827 = vmatpush1.bf16.msra.mxu0 %v725
      %828 = vmatprep.subr.bf16.mxu0 0
      %829 = vmatpush1.bf16.msra.mxu0 %v726
      %830 = vmatprep.subr.bf16.mxu0 0
      %831 = vmatpush1.bf16.msra.mxu0 %v727
      %832 = vmatprep.subr.bf16.mxu0 0
      %833 = vmatpush1.bf16.msra.mxu0 %v728
      %834 = vmatprep.subr.bf16.mxu0 0
      %835 = vmatpush1.bf16.msra.mxu0 %v729
      %836 = vmatprep.mubr.bf16.mxu0 %v462
      %837 = vmatmul.mubr.bf16.gmra.mrb[0].mxu0 %v461
      %v838 = vpop.f32.mrb[0].mxu0
      %v839 = vadd.f32 %v568, %v838
      %v840 = vpop.f32.mrb[0].mxu0
      %v841 = vpop.f32.mrb[0].mxu0
      %v842 = vadd.f32 %v568, %v841
      %v843 = vpop.f32.mrb[0].mxu0
      %844 = vmatprep.mubr.bf16.mxu0 %v467
      %845 = vmatmul.mubr.bf16.gmra.mrb[0].mxu0 %v466
      %v846 = vpop.f32.mrb[0].mxu0
      %v847 = vadd.f32 %v568, %v846
      %v848 = vpop.f32.mrb[0].mxu0
      %v849 = vpop.f32.mrb[0].mxu0
      %v850 = vadd.f32 %v568, %v849
      %v851 = vpop.f32.mrb[0].mxu0
      %852 = vmatprep.mubr.bf16.mxu0 %v472
      %853 = vmatmul.mubr.bf16.gmra.mrb[0].mxu0 %v471
      %v854 = vpop.f32.mrb[0].mxu0
      %v855 = vadd.f32 %v568, %v854
      %v856 = vpop.f32.mrb[0].mxu0
      %v857 = vpop.f32.mrb[0].mxu0
      %v858 = vadd.f32 %v568, %v857
      %v859 = vpop.f32.mrb[0].mxu0
      %860 = vmatprep.mubr.bf16.mxu0 %v477
      %861 = vmatmul.mubr.bf16.gmra.mrb[0].mxu0 %v476
      %v862 = vpop.f32.mrb[0].mxu0
      %v863 = vadd.f32 %v568, %v862
      %v864 = vpop.f32.mrb[0].mxu0
      %v865 = vpop.f32.mrb[0].mxu0
      %v866 = vadd.f32 %v568, %v865
      %v867 = vpop.f32.mrb[0].mxu0
      %868 = vmatprep.mubr.bf16.mxu0 %v482
      %869 = vmatmul.mubr.bf16.gmra.mrb[0].mxu0 %v481
      %v870 = vpop.f32.mrb[0].mxu0
      %v871 = vadd.f32 %v568, %v870
      %v872 = vpop.f32.mrb[0].mxu0
      %v873 = vpop.f32.mrb[0].mxu0
      %v874 = vadd.f32 %v568, %v873
      %v875 = vpop.f32.mrb[0].mxu0
      %876 = vmatprep.mubr.bf16.mxu0 %v487
      %877 = vmatmul.mubr.bf16.gmra.mrb[0].mxu0 %v486
      %v878 = vpop.f32.mrb[0].mxu0
      %v879 = vadd.f32 %v568, %v878
      %v880 = vpop.f32.mrb[0].mxu0
      %v881 = vpop.f32.mrb[0].mxu0
      %v882 = vpop.f32.mrb[0].mxu0
      %883 = vdwg.mxu0
      %884 = vmatprep.subr.bf16.mxu0 0
      %885 = vmatpush1.bf16.msra.mxu0 %v730
      %886 = vmatprep.subr.bf16.mxu0 0
      %887 = vmatpush1.bf16.msra.mxu0 %v731
      %888 = vmatprep.subr.bf16.mxu0 0
      %889 = vmatpush1.bf16.msra.mxu0 %v732
      %890 = vmatprep.subr.bf16.mxu0 0
      %891 = vmatpush1.bf16.msra.mxu0 %v733
      %892 = vmatprep.subr.bf16.mxu0 0
      %893 = vmatpush1.bf16.msra.mxu0 %v734
      %894 = vmatprep.subr.bf16.mxu0 0
      %895 = vmatpush1.bf16.msra.mxu0 %v735
      %896 = vmatprep.subr.bf16.mxu0 0
      %897 = vmatpush1.bf16.msra.mxu0 %v736
      %898 = vmatprep.subr.bf16.mxu0 0
      %899 = vmatpush1.bf16.msra.mxu0 %v737
      %900 = vmatprep.subr.bf16.mxu0 0
      %901 = vmatpush1.bf16.msra.mxu0 %v738
      %902 = vmatprep.subr.bf16.mxu0 0
      %903 = vmatpush1.bf16.msra.mxu0 %v739
      %904 = vmatprep.subr.bf16.mxu0 0
      %905 = vmatpush1.bf16.msra.mxu0 %v740
      %906 = vmatprep.subr.bf16.mxu0 0
      %907 = vmatpush1.bf16.msra.mxu0 %v741
      %908 = vmatprep.subr.bf16.mxu0 0
      %909 = vmatpush1.bf16.msra.mxu0 %v742
      %910 = vmatprep.subr.bf16.mxu0 0
      %911 = vmatpush1.bf16.msra.mxu0 %v743
      %912 = vmatprep.subr.bf16.mxu0 0
      %913 = vmatpush1.bf16.msra.mxu0 %v744
      %914 = vmatprep.subr.bf16.mxu0 0
      %915 = vmatpush1.bf16.msra.mxu0 %v745
      %916 = vmatprep.mubr.bf16.mxu0 %v464
      %917 = vmatmul.mubr.bf16.gmra.mrb[0].mxu0 %v463
      %v918 = vpop.f32.mrb[0].mxu0
      %v919 = vadd.f32 %v839, %v918
      %v920 = vpop.f32.mrb[0].mxu0
      %v921 = vpop.f32.mrb[0].mxu0
      %v922 = vadd.f32 %v842, %v921
      %v923 = vpop.f32.mrb[0].mxu0
      %924 = vmatprep.mubr.bf16.mxu0 %v469
      %925 = vmatmul.mubr.bf16.gmra.mrb[0].mxu0 %v468
      %v926 = vpop.f32.mrb[0].mxu0
      %v927 = vadd.f32 %v847, %v926
      %v928 = vpop.f32.mrb[0].mxu0
      %v929 = vpop.f32.mrb[0].mxu0
      %v930 = vadd.f32 %v850, %v929
      %v931 = vpop.f32.mrb[0].mxu0
      %932 = vmatprep.mubr.bf16.mxu0 %v474
      %933 = vmatmul.mubr.bf16.gmra.mrb[0].mxu0 %v473
      %v934 = vpop.f32.mrb[0].mxu0
      %v935 = vadd.f32 %v855, %v934
      %v936 = vpop.f32.mrb[0].mxu0
      %v937 = vpop.f32.mrb[0].mxu0
      %v938 = vadd.f32 %v858, %v937
      %v939 = vpop.f32.mrb[0].mxu0
      %940 = vmatprep.mubr.bf16.mxu0 %v479
      %941 = vmatmul.mubr.bf16.gmra.mrb[0].mxu0 %v478
      %v942 = vpop.f32.mrb[0].mxu0
      %v943 = vadd.f32 %v863, %v942
      %v944 = vpop.f32.mrb[0].mxu0
      %v945 = vpop.f32.mrb[0].mxu0
      %v946 = vadd.f32 %v866, %v945
      %v947 = vpop.f32.mrb[0].mxu0
      %948 = vmatprep.mubr.bf16.mxu0 %v484
      %949 = vmatmul.mubr.bf16.gmra.mrb[0].mxu0 %v483
      %v950 = vpop.f32.mrb[0].mxu0
      %v951 = vadd.f32 %v871, %v950
      %v952 = vpop.f32.mrb[0].mxu0
      %v953 = vpop.f32.mrb[0].mxu0
      %v954 = vadd.f32 %v874, %v953
      %v955 = vpop.f32.mrb[0].mxu0
      %956 = vmatprep.mubr.bf16.mxu0 %v489
      %957 = vmatmul.mubr.bf16.gmra.mrb[0].mxu0 %v488
      %v958 = vpop.f32.mrb[0].mxu0
      %v959 = vadd.f32 %v879, %v958
      %v960 = vpop.f32.mrb[0].mxu0
      %v961 = vpop.f32.mrb[0].mxu0
      %v962 = vpop.f32.mrb[0].mxu0
      %963 = vdwg.mxu0
      %964 = vmatprep.subr.bf16.mxu0 0
      %965 = vmatpush1.bf16.msra.mxu0 %v746
      %966 = vmatprep.subr.bf16.mxu0 0
      %967 = vmatpush1.bf16.msra.mxu0 %v747
      %968 = vmatprep.subr.bf16.mxu0 0
      %969 = vmatpush1.bf16.msra.mxu0 %v748
      %970 = vmatprep.subr.bf16.mxu0 0
      %971 = vmatpush1.bf16.msra.mxu0 %v749
      %972 = vmatprep.subr.bf16.mxu0 0
      %973 = vmatpush1.bf16.msra.mxu0 0
      %974 = vmatprep.subr.bf16.mxu0 0
      %975 = vmatpush1.bf16.msra.mxu0 0
      %976 = vmatprep.subr.bf16.mxu0 0
      %977 = vmatpush1.bf16.msra.mxu0 0
      %978 = vmatprep.subr.bf16.mxu0 0
      %979 = vmatpush1.bf16.msra.mxu0 0
      %980 = vmatprep.subr.bf16.mxu0 0
      %981 = vmatpush1.bf16.msra.mxu0 0
      %982 = vmatprep.subr.bf16.mxu0 0
      %983 = vmatpush1.bf16.msra.mxu0 0
      %984 = vmatprep.subr.bf16.mxu0 0
      %985 = vmatpush1.bf16.msra.mxu0 0
      %986 = vmatprep.subr.bf16.mxu0 0
      %987 = vmatpush1.bf16.msra.mxu0 0
      %988 = vmatprep.subr.bf16.mxu0 0
      %989 = vmatpush1.bf16.msra.mxu0 0
      %990 = vmatprep.subr.bf16.mxu0 0
      %991 = vmatpush1.bf16.msra.mxu0 0
      %992 = vmatprep.subr.bf16.mxu0 0
      %993 = vmatpush1.bf16.msra.mxu0 0
      %994 = vmatprep.subr.bf16.mxu0 0
      %995 = vmatpush1.bf16.msra.mxu0 0
      %996 = vmatprep.mubr.bf16.mxu0 0
      %997 = vmatmul.mubr.bf16.gmra.mrb[0].mxu0 %v787
      %v998 = vpop.f32.mrb[0].mxu0
      %v999 = vadd.f32 %v919, %v998
      %v1000 = vpop.f32.mrb[0].mxu0
      %v1001 = vpop.f32.mrb[0].mxu0
      %v1002 = vadd.f32 %v922, %v1001
      %v1003 = vpop.f32.mrb[0].mxu0
      %1004 = vmatprep.mubr.bf16.mxu0 0
      %1005 = vmatmul.mubr.bf16.gmra.mrb[0].mxu0 %v790
      %v1006 = vpop.f32.mrb[0].mxu0
      %v1007 = vadd.f32 %v927, %v1006
      %v1008 = vpop.f32.mrb[0].mxu0
      %v1009 = vpop.f32.mrb[0].mxu0
      %v1010 = vadd.f32 %v930, %v1009
      %v1011 = vpop.f32.mrb[0].mxu0
      %1012 = vmatprep.mubr.bf16.mxu0 0
      %1013 = vmatmul.mubr.bf16.gmra.mrb[0].mxu0 %v793
      %v1014 = vpop.f32.mrb[0].mxu0
      %v1015 = vadd.f32 %v935, %v1014
      %v1016 = vpop.f32.mrb[0].mxu0
      %v1017 = vpop.f32.mrb[0].mxu0
      %v1018 = vadd.f32 %v938, %v1017
      %v1019 = vpop.f32.mrb[0].mxu0
      %1020 = vmatprep.mubr.bf16.mxu0 0
      %1021 = vmatmul.mubr.bf16.gmra.mrb[0].mxu0 %v796
      %v1022 = vpop.f32.mrb[0].mxu0
      %v1023 = vadd.f32 %v943, %v1022
      %v1024 = vpop.f32.mrb[0].mxu0
      %v1025 = vpop.f32.mrb[0].mxu0
      %v1026 = vadd.f32 %v946, %v1025
      %v1027 = vpop.f32.mrb[0].mxu0
      %1028 = vmatprep.mubr.bf16.mxu0 0
      %1029 = vmatmul.mubr.bf16.gmra.mrb[0].mxu0 %v799
      %v1030 = vpop.f32.mrb[0].mxu0
      %v1031 = vadd.f32 %v951, %v1030
      %v1032 = vpop.f32.mrb[0].mxu0
      %v1033 = vpop.f32.mrb[0].mxu0
      %v1034 = vadd.f32 %v954, %v1033
      %v1035 = vpop.f32.mrb[0].mxu0
      %1036 = vmatprep.mubr.bf16.mxu0 0
      %1037 = vmatmul.mubr.bf16.gmra.mrb[0].mxu0 %v802
      %v1038 = vpop.f32.mrb[0].mxu0
      %v1039 = vadd.f32 %v959, %v1038
      %v1040 = vpop.f32.mrb[0].mxu0
      %v1041 = vpop.f32.mrb[0].mxu0
      %v1042 = vpop.f32.mrb[0].mxu0
      %1043 = vdwg.mxu0
      %v1044 = vmax.f32 %v999, 0.0
      %v1045 = vmax.f32 %v1002, 0.0
      %v1046 = vmax.f32 %v1007, 0.0
      %v1047 = vmax.f32 %v1010, 0.0
      %v1048 = vmax.f32 %v1015, 0.0
      %v1049 = vmax.f32 %v1018, 0.0
      %v1050 = vmax.f32 %v1023, 0.0
      %v1051 = vmax.f32 %v1026, 0.0
      %v1052 = vmax.f32 %v1031, 0.0
      %v1053 = vmax.f32 %v1034, 0.0
      %v1054 = vmax.f32 %v1039, 0.0
      %v1065 = vrot.slane %v1045, 1
      %v1066 = vrot.slane %v1046, 1
      %v1067 = vsel %vm223, %v1065, %v1066
      %v1068 = vrot.slane %v1047, 1
      %v1069 = vsel %vm223, %v1066, %v1068
      %v1070 = vrot.slane %v1048, 1
      %v1071 = vsel %vm223, %v1068, %v1070
      %v1072 = vrot.slane %v1049, 1
      %v1073 = vsel %vm223, %v1070, %v1072
      %v1074 = vrot.slane %v1050, 1
      %v1075 = vsel %vm223, %v1072, %v1074
      %v1076 = vrot.slane %v1051, 1
      %v1077 = vsel %vm223, %v1074, %v1076
      %v1078 = vrot.slane %v1052, 1
      %v1079 = vsel %vm223, %v1076, %v1078
      %v1080 = vrot.slane %v1053, 1
      %v1081 = vsel %vm223, %v1078, %v1080
      %v1082 = vrot.slane %v1054, 1
      %v1083 = vsel %vm223, %v1080, %v1082
      %v1093 = vmax.f32 %v1044, %v1067
      %v1094 = vmax.f32 %v1045, %v1069
      %v1095 = vmax.f32 %v1046, %v1071
      %v1096 = vmax.f32 %v1047, %v1073
      %v1097 = vmax.f32 %v1048, %v1075
      %v1098 = vmax.f32 %v1049, %v1077
      %v1099 = vmax.f32 %v1050, %v1079
      %v1100 = vmax.f32 %v1051, %v1081
      %v1101 = vmax.f32 %v1052, %v1083
      %v1111 = vrot.slane %v1093, 1
      %v1112 = vrot.slane %v1094, 1
      %v1113 = vsel %vm223, %v1111, %v1112
      %v1114 = vrot.slane %v1095, 1
      %v1115 = vsel %vm223, %v1112, %v1114
      %v1116 = vrot.slane %v1096, 1
      %v1117 = vsel %vm223, %v1114, %v1116
      %v1118 = vrot.slane %v1097, 1
      %v1119 = vsel %vm223, %v1116, %v1118
      %v1120 = vrot.slane %v1098, 1
      %v1121 = vsel %vm223, %v1118, %v1120
      %v1122 = vrot.slane %v1099, 1
      %v1123 = vsel %vm223, %v1120, %v1122
      %v1124 = vrot.slane %v1100, 1
      %v1125 = vsel %vm223, %v1122, %v1124
      %v1126 = vrot.slane %v1101, 1
      %v1127 = vsel %vm223, %v1124, %v1126
      %v1136 = vmax.f32 %v1093, %v1113
      %v1137 = vmax.f32 %v1094, %v1115
      %v1138 = vmax.f32 %v1095, %v1117
      %v1139 = vmax.f32 %v1096, %v1119
      %v1140 = vmax.f32 %v1097, %v1121
      %v1141 = vmax.f32 %v1098, %v1123
      %v1142 = vmax.f32 %v1099, %v1125
      %v1143 = vmax.f32 %v1100, %v1127
      %v1144 = vld [vmem:[%s3] sm:$0xff]
      %v1145 = vld [vmem:[%s3 + $0x8] sm:$0x1]
      %vm1146 = vcmask 515072
      %v1148 = vsel %vm1146, %v1144, 0
      %v1151 = vsel %vm1146, %v1145, 0
      %v1154 = vsel %vm223, %v1143, 0
      %1156 = vmatprep.subr.mxu0 0.0
      %1157 = vmatpush1.msra.mxu0 %v1136
      %1158 = vmatprep.subr.mxu0 0.0
      %1159 = vmatpush1.msra.mxu0 %v1137
      %1160 = vmatprep.subr.mxu0 0.0
      %1161 = vmatpush1.msra.mxu0 %v1138
      %1162 = vmatprep.subr.mxu0 0.0
      %1163 = vmatpush1.msra.mxu0 %v1139
      %1164 = vmatprep.subr.mxu0 0.0
      %1165 = vmatpush1.msra.mxu0 %v1140
      %1166 = vmatprep.subr.mxu0 0.0
      %1167 = vmatpush1.msra.mxu0 %v1141
      %1168 = vmatprep.subr.mxu0 0.0
      %1169 = vmatpush1.msra.mxu0 %v1142
      %1170 = vmatprep.subr.mxu0 0.0
      %1171 = vmatpush1.msra.mxu0 %v1154
      %1172 = vmatprep.subr.mxu0 0.0
      %1173 = vmatpush1.msra.mxu0 0.0
      %1174 = vmatprep.subr.mxu0 0.0
      %1175 = vmatpush1.msra.mxu0 0.0
      %1176 = vmatprep.subr.mxu0 0.0
      %1177 = vmatpush1.msra.mxu0 0.0
      %1178 = vmatprep.subr.mxu0 0.0
      %1179 = vmatpush1.msra.mxu0 0.0
      %1180 = vmatprep.subr.mxu0 0.0
      %1181 = vmatpush1.msra.mxu0 0.0
      %1182 = vmatprep.subr.mxu0 0.0
      %1183 = vmatpush1.msra.mxu0 0.0
      %1184 = vmatprep.subr.mxu0 0.0
      %1185 = vmatpush1.msra.mxu0 0.0
      %1186 = vmatprep.subr.mxu0 0.0
      %1187 = vmatpush1.msra.mxu0 0.0
      %1188 = vmatprep.subr.mxu0 0.0
      %1189 = vmatpush1.msra.mxu0 0.0
      %1190 = vmatprep.subr.mxu0 0.0
      %1191 = vmatpush1.msra.mxu0 0.0
      %1192 = vmatprep.subr.mxu0 0.0
      %1193 = vmatpush1.msra.mxu0 0.0
      %1194 = vmatprep.subr.mxu0 0.0
      %1195 = vmatpush1.msra.mxu0 0.0
      %1196 = vmatprep.subr.mxu0 0.0
      %1197 = vmatpush1.msra.mxu0 0.0
      %1198 = vmatprep.subr.mxu0 0.0
      %1199 = vmatpush1.msra.mxu0 0.0
      %1200 = vmatprep.subr.mxu0 0.0
      %1201 = vmatpush1.msra.mxu0 0.0
      %1202 = vmatprep.subr.mxu0 0.0
      %1203 = vmatpush1.msra.mxu0 0.0
      %1204 = vmatprep.subr.mxu0 0.0
      %1205 = vmatpush1.msra.mxu0 0.0
      %1206 = vmatprep.subr.mxu0 0.0
      %1207 = vmatpush1.msra.mxu0 0.0
      %1208 = vmatprep.subr.mxu0 0.0
      %1209 = vmatpush1.msra.mxu0 0.0
      %1210 = vmatprep.subr.mxu0 0.0
      %1211 = vmatpush1.msra.mxu0 0.0
      %1212 = vmatprep.subr.mxu0 0.0
      %1213 = vmatpush1.msra.mxu0 0.0
      %1214 = vmatprep.subr.mxu0 0.0
      %1215 = vmatpush1.msra.mxu0 0.0
      %1216 = vmatprep.subr.mxu0 0.0
      %1217 = vmatpush1.msra.mxu0 0.0
      %1218 = vmatprep.subr.mxu0 0.0
      %1219 = vmatpush1.msra.mxu0 0.0
      %1220 = vmatprep.mubr.f32.mxu0 0.0
      %1221 = vmatmul.mubr.f32.gmra.mrb[0].mxu0 %v1148
      %v1222 = vpop.f32.mrb[0].mxu0
      %v1223 = vadd.f32 0.0, %v1222
      %v1224 = vpop.f32.mrb[0].mxu0
      %1225 = vmatprep.mubr.f32.mxu0 0.0
      %1226 = vmatmul.mubr.f32.gmra.mrb[0].mxu0 %v1151
      %v1227 = vpop.f32.mrb[0].mxu0
      %v1228 = vadd.f32 0.0, %v1227
      %v1229 = vpop.f32.mrb[0].mxu0
      %1230 = vdwg.mxu0
      %1231 = vst.msk [vmem:[%s197] sm:$0xff] %vm425, %v1223
      %vm1232 = vcmask 516096
      %1233 = vst.msk [vmem:[%s197 + $0x8] sm:$0x1] %vm1232, %v1228
      %p1234 = scmp.lt.s32.totalorder %s15, 1
      %s1235 = scalar_select %p1234, %s15, 1
      %s1236 = smul.addr %s1235, 2
      %s1237 = smul.addr %s1236, 8
      %s1238 = scalar_lea.vmem %s4, %s1237
      // Predicated region
      $region37: #{net_forward.6} parent=35 // pred_check
        %p1239 = pneg %p122
      $region38: #{net_forward.6} parent=35 // pred_check_branch
        %1241 = sbr.rel (%p1239) target = $region40
      $region39: #{net_forward.6} parent=35 // pred_region
        _
      $region40: #{net_forward.6} parent=35 // pred_fallthru
        _
    $region36: #{net_forward.6} parent=5 // pred_fallthru
      _
    %p1242 = scmp.le.s32.totalorder 2, %s10
    // Predicated region
    $region41: #{net_forward.6} parent=5 // pred_check
      %p1243 = pneg %p1242
    $region42: #{net_forward.6} parent=5 // pred_check_branch
      %1245 = sbr.rel (%p1243) target = $region44
    $region43: #{net_forward.6} parent=5 // pred_region
      %s1246 = ssub.s32 %s10, 2
      // Predicated region
      $region45: #{net_forward.6} parent=43 // pred_check
        %p1247 = pneg %p128
      $region46: #{net_forward.6} parent=43 // pred_check_branch
        %1249 = sbr.rel (%p1247) target = $region48
      $region47: #{net_forward.6} parent=43 // pred_region
        %p1250 = scmp.lt.s32.totalorder %s16, 1
        %s1251 = scalar_select %p1250, %s16, 1
        %s1252 = smul.addr %s1251, 2
        %s1253 = smul.addr %s1252, 8
        %s1254 = scalar_lea.vmem %s4, %s1253
      $region48: #{net_forward.6} parent=43 // pred_fallthru
        _
    $region44: #{net_forward.6} parent=5 // pred_fallthru
      _
  $region6: #{net_forward.6} parent=0 // loop_footer
    %s14 = sadd.s32 1, %s10
  $region7: #{net_forward.6} parent=0 // loop_footer_branch
    %9 = sbr.rel target = $region3
  $region8: #{net_forward.6} parent=0 // loop_exit
    _

// kernel: net_forward.7
$region0: #{net_forward.7}
  #allocation0 [shape = 'u32[]', space=smem, size = 0x4, offset = 0x4, fixed_abs, tag = 'smem constant byte address 0x4 - core index']
  #allocation1 [shape = 'u32[144,128]{1,0:T(1,128)}', space=vmem, size = 0x12000, scoped, tag = 'internal scratch']
  %s0 = inlined_call_operand.vmem [shape: f32[2,576], index: 0, kind: input, shape index: {}]
  %s1 = inlined_call_operand.vmem [shape: bf16[576,128], index: 1, kind: input, shape index: {}]
  %s2 = inlined_call_operand.vmem [shape: f32[1,128], index: 2, kind: input, shape index: {}]
  %s3 = inlined_call_operand.vmem [shape: bf16[128,10], index: 3, kind: input, shape index: {}]
  %s4 = inlined_call_operand.vmem [shape: f32[1,10], index: 4, kind: input, shape index: {}]
  %s5 = inlined_call_operand.hbm [shape: f32[2,10], index: 5, kind: output, shape index: {}]
  %s6 = sld [smem:[#allocation0]]
  $region30: #{net_forward.7} parent=0
    _
  %s8 = ssub.s32 1, %s6
  %s9 = scalar_select 0, %s8, %s6
  $region1: #{net_forward.7} parent=0
    #allocation2 [shape = 'u8[1024]{0}', space=vmem, size = 0x400, scoped, tag = 'output window, operand 0, single buffered']
    #allocation3 [shape = 's32[1]{0}', space=sflag, size = 0x4, scoped, tag = 'scoped memory for net_forward.7']
    %10 = vsyncpa [#allocation3], 0
    // Predicated region
    $region2: #{net_forward.7} parent=1 // pred_check
      _
    $region3: #{net_forward.7} parent=1 // pred_check_branch
      %12 = sbr.rel (0) target = $region5
    $region4: #{net_forward.7} parent=1 // pred_region
      _
    $region5: #{net_forward.7} parent=1 // pred_fallthru
      _
    // Predicated region
    $region6: #{net_forward.7} parent=1 // pred_check
      _
    $region7: #{net_forward.7} parent=1 // pred_check_branch
      %14 = sbr.rel (0) target = $region9
    $region8: #{net_forward.7} parent=1 // pred_region
      _
    $region9: #{net_forward.7} parent=1 // pred_fallthru
      _
    // Predicated region
    $region10: #{net_forward.7} parent=1 // pred_check
      _
    $region11: #{net_forward.7} parent=1 // pred_check_branch
      %16 = sbr.rel (0) target = $region13
    $region12: #{net_forward.7} parent=1 // pred_region
      _
    $region13: #{net_forward.7} parent=1 // pred_fallthru
      _
    // Predicated region
    $region14: #{net_forward.7} parent=1 // pred_check
      _
    $region15: #{net_forward.7} parent=1 // pred_check_branch
      %18 = sbr.rel (0) target = $region17
    $region16: #{net_forward.7} parent=1 // pred_region
      _
    $region17: #{net_forward.7} parent=1 // pred_fallthru
      _
    // Predicated region
    $region18: #{net_forward.7} parent=1 // pred_check
      _
    $region19: #{net_forward.7} parent=1 // pred_check_branch
      %20 = sbr.rel (0) target = $region21
    $region20: #{net_forward.7} parent=1 // pred_region
      _
    $region21: #{net_forward.7} parent=1 // pred_fallthru
      _
    %v22 = vld [vmem:[%s0] sm:$0xff]
    %v23 = vld [vmem:[%s0 + $0x8] sm:$0x3]
    %v26 = vcombine.high %v22, %v22
    %v28 = vunpack.c.l.s4 1983009808
    %v29 = vunpack.c.0.s8 %v28
    %v30 = vlaneseq
    %v31 = vshrl.u32 %v30, 7
    %v32 = vsub.s32 %v29, %v31
    %v33 = vrot.slane %v22, %v32
    %v35 = vunpack.c.l.s4 1983009808
    %v36 = vunpack.c.0.s8 %v35
    %v37 = vlaneseq
    %v38 = vshrl.u32 %v37, 7
    %v39 = vsub.s32 %v36, %v38
    %v40 = vrot.slane %v26, %v39
    %v41 = vcombine.high %v33, %v33
    %v42 = vcombine.high %v40, %v40
    %v44 = vunpack.c.l.s4 1983009808
    %v45 = vunpack.c.0.s8 %v44
    %v46 = vlaneseq
    %v47 = vshrl.u32 %v46, 7
    %v48 = vsub.s32 %v45, %v47
    %v49 = vrot.slane %v23, %v48
    %v55 = vpack.c.bf16 %v33, %v33
    %v56 = vpack.c.bf16 %v41, %v41
    %v57 = vpack.c.bf16 %v40, %v40
    %v58 = vpack.c.bf16 %v42, %v42
    %v59 = vpack.c.bf16 %v49, %v49
    %v60 = vld [vmem:[%s1] sm:$0xf]
    %v61 = vld [vmem:[%s1 + $0x4] sm:$0xf]
    %v62 = vld [vmem:[%s1 + $0x8] sm:$0xf]
    %v63 = vld [vmem:[%s1 + $0xc] sm:$0xf]
    %v64 = vld [vmem:[%s1 + $0x10] sm:$0xf]
    %v65 = vld [vmem:[%s1 + $0x14] sm:$0xf]
    %v66 = vld [vmem:[%s1 + $0x18] sm:$0xf]
    %v67 = vld [vmem:[%s1 + $0x1c] sm:$0xf]
    %v68 = vld [vmem:[%s1 + $0x20] sm:$0xf]
    %v69 = vld [vmem:[%s1 + $0x24] sm:$0xf]
    %v70 = vld [vmem:[%s1 + $0x28] sm:$0xf]
    %v71 = vld [vmem:[%s1 + $0x2c] sm:$0xf]
    %v72 = vld [vmem:[%s1 + $0x30] sm:$0xf]
    %v73 = vld [vmem:[%s1 + $0x34] sm:$0xf]
    %v74 = vld [vmem:[%s1 + $0x38] sm:$0xf]
    %v75 = vld [vmem:[%s1 + $0x3c] sm:$0xf]
    %v76 = vld [vmem:[%s1 + $0x40] sm:$0xf]
    %v77 = vld [vmem:[%s1 + $0x44] sm:$0xf]
    %v78 = vld [vmem:[%s1 + $0x48] sm:$0xf]
    %v79 = vld [vmem:[%s1 + $0x4c] sm:$0xf]
    %v80 = vld [vmem:[%s1 + $0x50] sm:$0xf]
    %v81 = vld [vmem:[%s1 + $0x54] sm:$0xf]
    %v82 = vld [vmem:[%s1 + $0x58] sm:$0xf]
    %v83 = vld [vmem:[%s1 + $0x5c] sm:$0xf]
    %v84 = vld [vmem:[%s1 + $0x60] sm:$0xf]
    %v85 = vld [vmem:[%s1 + $0x64] sm:$0xf]
    %v86 = vld [vmem:[%s1 + $0x68] sm:$0xf]
    %v87 = vld [vmem:[%s1 + $0x6c] sm:$0xf]
    %v88 = vld [vmem:[%s1 + $0x70] sm:$0xf]
    %v89 = vld [vmem:[%s1 + $0x74] sm:$0xf]
    %v90 = vld [vmem:[%s1 + $0x78] sm:$0xf]
    %v91 = vld [vmem:[%s1 + $0x7c] sm:$0xf]
    %v92 = vld [vmem:[%s1 + $0x80] sm:$0xf]
    %v93 = vld [vmem:[%s1 + $0x84] sm:$0xf]
    %v94 = vld [vmem:[%s1 + $0x88] sm:$0xf]
    %v95 = vld [vmem:[%s1 + $0x8c] sm:$0xf]
    %v96 = vld [vmem:[%s1 + $0x90] sm:$0xf]
    %v97 = vld [vmem:[%s1 + $0x94] sm:$0xf]
    %v98 = vld [vmem:[%s1 + $0x98] sm:$0xf]
    %v99 = vld [vmem:[%s1 + $0x9c] sm:$0xf]
    %v100 = vld [vmem:[%s1 + $0xa0] sm:$0xf]
    %v101 = vld [vmem:[%s1 + $0xa4] sm:$0xf]
    %v102 = vld [vmem:[%s1 + $0xa8] sm:$0xf]
    %v103 = vld [vmem:[%s1 + $0xac] sm:$0xf]
    %v104 = vld [vmem:[%s1 + $0xb0] sm:$0xf]
    %v105 = vld [vmem:[%s1 + $0xb4] sm:$0xf]
    %v106 = vld [vmem:[%s1 + $0xb8] sm:$0xf]
    %v107 = vld [vmem:[%s1 + $0xbc] sm:$0xf]
    %v108 = vld [vmem:[%s1 + $0xc0] sm:$0xf]
    %v109 = vld [vmem:[%s1 + $0xc4] sm:$0xf]
    %v110 = vld [vmem:[%s1 + $0xc8] sm:$0xf]
    %v111 = vld [vmem:[%s1 + $0xcc] sm:$0xf]
    %v112 = vld [vmem:[%s1 + $0xd0] sm:$0xf]
    %v113 = vld [vmem:[%s1 + $0xd4] sm:$0xf]
    %v114 = vld [vmem:[%s1 + $0xd8] sm:$0xf]
    %v115 = vld [vmem:[%s1 + $0xdc] sm:$0xf]
    %v116 = vld [vmem:[%s1 + $0xe0] sm:$0xf]
    %v117 = vld [vmem:[%s1 + $0xe4] sm:$0xf]
    %v118 = vld [vmem:[%s1 + $0xe8] sm:$0xf]
    %v119 = vld [vmem:[%s1 + $0xec] sm:$0xf]
    %v120 = vld [vmem:[%s1 + $0xf0] sm:$0xf]
    %v121 = vld [vmem:[%s1 + $0xf4] sm:$0xf]
    %v122 = vld [vmem:[%s1 + $0xf8] sm:$0xf]
    %v123 = vld [vmem:[%s1 + $0xfc] sm:$0xf]
    %v124 = vld [vmem:[%s1 + $0x100] sm:$0xf]
    %v125 = vld [vmem:[%s1 + $0x104] sm:$0xf]
    %v126 = vld [vmem:[%s1 + $0x108] sm:$0xf]
    %v127 = vld [vmem:[%s1 + $0x10c] sm:$0xf]
    %v128 = vld [vmem:[%s1 + $0x110] sm:$0xf]
    %v129 = vld [vmem:[%s1 + $0x114] sm:$0xf]
    %v130 = vld [vmem:[%s1 + $0x118] sm:$0xf]
    %v131 = vld [vmem:[%s1 + $0x11c] sm:$0xf]
    %v132 = vld [vmem:[%s2] sm:$0x1]
    %v134 = vlaneseq
    %v135 = vshrl.u32 %v134, 7
    %v136 = vsub.s32 0, %v135
    %v137 = vrot.slane %v132, %v136
    %v211 = vunpack.c.l.b16 %v60
    %v212 = vunpack.c.l.b16 %v61
    %v213 = vunpack.c.l.b16 %v62
    %v214 = vunpack.c.l.b16 %v63
    %v215 = vunpack.c.l.b16 %v64
    %v216 = vunpack.c.l.b16 %v65
    %v217 = vunpack.c.l.b16 %v66
    %v218 = vunpack.c.l.b16 %v67
    %v219 = vunpack.c.l.b16 %v68
    %v220 = vunpack.c.l.b16 %v69
    %v221 = vunpack.c.l.b16 %v70
    %v222 = vunpack.c.l.b16 %v71
    %v223 = vunpack.c.l.b16 %v72
    %v224 = vunpack.c.l.b16 %v73
    %v225 = vunpack.c.l.b16 %v74
    %v226 = vunpack.c.l.b16 %v75
    %v227 = vunpack.c.l.b16 %v76
    %v228 = vunpack.c.l.b16 %v77
    %v229 = vunpack.c.l.b16 %v78
    %v230 = vunpack.c.l.b16 %v79
    %v231 = vunpack.c.l.b16 %v80
    %v232 = vunpack.c.l.b16 %v81
    %v233 = vunpack.c.l.b16 %v82
    %v234 = vunpack.c.l.b16 %v83
    %v235 = vunpack.c.l.b16 %v84
    %v236 = vunpack.c.l.b16 %v85
    %v237 = vunpack.c.l.b16 %v86
    %v238 = vunpack.c.l.b16 %v87
    %v239 = vunpack.c.l.b16 %v88
    %v240 = vunpack.c.l.b16 %v89
    %v241 = vunpack.c.l.b16 %v90
    %v242 = vunpack.c.l.b16 %v91
    %v243 = vunpack.c.l.b16 %v92
    %v244 = vunpack.c.l.b16 %v93
    %v245 = vunpack.c.l.b16 %v94
    %v246 = vunpack.c.l.b16 %v95
    %v247 = vunpack.c.l.b16 %v96
    %v248 = vunpack.c.l.b16 %v97
    %v249 = vunpack.c.l.b16 %v98
    %v250 = vunpack.c.l.b16 %v99
    %v251 = vunpack.c.l.b16 %v100
    %v252 = vunpack.c.l.b16 %v101
    %v253 = vunpack.c.l.b16 %v102
    %v254 = vunpack.c.l.b16 %v103
    %v255 = vunpack.c.l.b16 %v104
    %v256 = vunpack.c.l.b16 %v105
    %v257 = vunpack.c.l.b16 %v106
    %v258 = vunpack.c.l.b16 %v107
    %v259 = vunpack.c.l.b16 %v108
    %v260 = vunpack.c.l.b16 %v109
    %v261 = vunpack.c.l.b16 %v110
    %v262 = vunpack.c.l.b16 %v111
    %v263 = vunpack.c.l.b16 %v112
    %v264 = vunpack.c.l.b16 %v113
    %v265 = vunpack.c.l.b16 %v114
    %v266 = vunpack.c.l.b16 %v115
    %v267 = vunpack.c.l.b16 %v116
    %v268 = vunpack.c.l.b16 %v117
    %v269 = vunpack.c.l.b16 %v118
    %v270 = vunpack.c.l.b16 %v119
    %v271 = vunpack.c.l.b16 %v120
    %v272 = vunpack.c.l.b16 %v121
    %v273 = vunpack.c.l.b16 %v122
    %v274 = vunpack.c.l.b16 %v123
    %v275 = vunpack.c.l.b16 %v124
    %v276 = vunpack.c.l.b16 %v125
    %v277 = vunpack.c.l.b16 %v126
    %v278 = vunpack.c.l.b16 %v127
    %v279 = vunpack.c.l.b16 %v128
    %v280 = vunpack.c.l.b16 %v129
    %v281 = vunpack.c.l.b16 %v130
    %v282 = vunpack.c.l.b16 %v131
    %v283 = vpack.c.b16 %v212, %v211
    %v284 = vpack.c.b16 %v214, %v213
    %v285 = vpack.c.b16 %v216, %v215
    %v286 = vpack.c.b16 %v218, %v217
    %v287 = vpack.c.b16 %v220, %v219
    %v288 = vpack.c.b16 %v222, %v221
    %v289 = vpack.c.b16 %v224, %v223
    %v290 = vpack.c.b16 %v226, %v225
    %v291 = vpack.c.b16 %v228, %v227
    %v292 = vpack.c.b16 %v230, %v229
    %v293 = vpack.c.b16 %v232, %v231
    %v294 = vpack.c.b16 %v234, %v233
    %v295 = vpack.c.b16 %v236, %v235
    %v296 = vpack.c.b16 %v238, %v237
    %v297 = vpack.c.b16 %v240, %v239
    %v298 = vpack.c.b16 %v242, %v241
    %v299 = vpack.c.b16 %v244, %v243
    %v300 = vpack.c.b16 %v246, %v245
    %v301 = vpack.c.b16 %v248, %v247
    %v302 = vpack.c.b16 %v250, %v249
    %v303 = vpack.c.b16 %v252, %v251
    %v304 = vpack.c.b16 %v254, %v253
    %v305 = vpack.c.b16 %v256, %v255
    %v306 = vpack.c.b16 %v258, %v257
    %v307 = vpack.c.b16 %v260, %v259
    %v308 = vpack.c.b16 %v262, %v261
    %v309 = vpack.c.b16 %v264, %v263
    %v310 = vpack.c.b16 %v266, %v265
    %v311 = vpack.c.b16 %v268, %v267
    %v312 = vpack.c.b16 %v270, %v269
    %v313 = vpack.c.b16 %v272, %v271
    %v314 = vpack.c.b16 %v274, %v273
    %v315 = vpack.c.b16 %v276, %v275
    %v316 = vpack.c.b16 %v278, %v277
    %v317 = vpack.c.b16 %v280, %v279
    %v318 = vpack.c.b16 %v282, %v281
    %vm355 = vcmask 523264
    %v357 = vsel %vm355, %v59, 0
    %359 = vmatprep.subr.bf16.mxu0 0
    %360 = vmatpush1.bf16.msra.mxu0 %v283
    %361 = vmatprep.subr.bf16.mxu0 0
    %362 = vmatpush1.bf16.msra.mxu0 %v284
    %363 = vmatprep.subr.bf16.mxu0 0
    %364 = vmatpush1.bf16.msra.mxu0 %v285
    %365 = vmatprep.subr.bf16.mxu0 0
    %366 = vmatpush1.bf16.msra.mxu0 %v286
    %367 = vmatprep.subr.bf16.mxu0 0
    %368 = vmatpush1.bf16.msra.mxu0 %v287
    %369 = vmatprep.subr.bf16.mxu0 0
    %370 = vmatpush1.bf16.msra.mxu0 %v288
    %371 = vmatprep.subr.bf16.mxu0 0
    %372 = vmatpush1.bf16.msra.mxu0 %v289
    %373 = vmatprep.subr.bf16.mxu0 0
    %374 = vmatpush1.bf16.msra.mxu0 %v290
    %375 = vmatprep.subr.bf16.mxu0 0
    %376 = vmatpush1.bf16.msra.mxu0 %v291
    %377 = vmatprep.subr.bf16.mxu0 0
    %378 = vmatpush1.bf16.msra.mxu0 %v292
    %379 = vmatprep.subr.bf16.mxu0 0
    %380 = vmatpush1.bf16.msra.mxu0 %v293
    %381 = vmatprep.subr.bf16.mxu0 0
    %382 = vmatpush1.bf16.msra.mxu0 %v294
    %383 = vmatprep.subr.bf16.mxu0 0
    %384 = vmatpush1.bf16.msra.mxu0 %v295
    %385 = vmatprep.subr.bf16.mxu0 0
    %386 = vmatpush1.bf16.msra.mxu0 %v296
    %387 = vmatprep.subr.bf16.mxu0 0
    %388 = vmatpush1.bf16.msra.mxu0 %v297
    %389 = vmatprep.subr.bf16.mxu0 0
    %390 = vmatpush1.bf16.msra.mxu0 %v298
    %391 = vmatprep.mubr.bf16.mxu0 %v56
    %392 = vmatmul.mubr.bf16.gmra.mrb[0].mxu0 %v55
    %v393 = vpop.f32.mrb[0].mxu0
    %v394 = vadd.f32 %v137, %v393
    %v395 = vpop.f32.mrb[0].mxu0
    %v396 = vpop.f32.mrb[0].mxu0
    %v397 = vpop.f32.mrb[0].mxu0
    %398 = vdwg.mxu0
    %399 = vmatprep.subr.bf16.mxu0 0
    %400 = vmatpush1.bf16.msra.mxu0 %v299
    %401 = vmatprep.subr.bf16.mxu0 0
    %402 = vmatpush1.bf16.msra.mxu0 %v300
    %403 = vmatprep.subr.bf16.mxu0 0
    %404 = vmatpush1.bf16.msra.mxu0 %v301
    %405 = vmatprep.subr.bf16.mxu0 0
    %406 = vmatpush1.bf16.msra.mxu0 %v302
    %407 = vmatprep.subr.bf16.mxu0 0
    %408 = vmatpush1.bf16.msra.mxu0 %v303
    %409 = vmatprep.subr.bf16.mxu0 0
    %410 = vmatpush1.bf16.msra.mxu0 %v304
    %411 = vmatprep.subr.bf16.mxu0 0
    %412 = vmatpush1.bf16.msra.mxu0 %v305
    %413 = vmatprep.subr.bf16.mxu0 0
    %414 = vmatpush1.bf16.msra.mxu0 %v306
    %415 = vmatprep.subr.bf16.mxu0 0
    %416 = vmatpush1.bf16.msra.mxu0 %v307
    %417 = vmatprep.subr.bf16.mxu0 0
    %418 = vmatpush1.bf16.msra.mxu0 %v308
    %419 = vmatprep.subr.bf16.mxu0 0
    %420 = vmatpush1.bf16.msra.mxu0 %v309
    %421 = vmatprep.subr.bf16.mxu0 0
    %422 = vmatpush1.bf16.msra.mxu0 %v310
    %423 = vmatprep.subr.bf16.mxu0 0
    %424 = vmatpush1.bf16.msra.mxu0 %v311
    %425 = vmatprep.subr.bf16.mxu0 0
    %426 = vmatpush1.bf16.msra.mxu0 %v312
    %427 = vmatprep.subr.bf16.mxu0 0
    %428 = vmatpush1.bf16.msra.mxu0 %v313
    %429 = vmatprep.subr.bf16.mxu0 0
    %430 = vmatpush1.bf16.msra.mxu0 %v314
    %431 = vmatprep.mubr.bf16.mxu0 %v58
    %432 = vmatmul.mubr.bf16.gmra.mrb[0].mxu0 %v57
    %v433 = vpop.f32.mrb[0].mxu0
    %v434 = vadd.f32 %v394, %v433
    %v435 = vpop.f32.mrb[0].mxu0
    %v436 = vpop.f32.mrb[0].mxu0
    %v437 = vpop.f32.mrb[0].mxu0
    %438 = vdwg.mxu0
    %439 = vmatprep.subr.bf16.mxu0 0
    %440 = vmatpush1.bf16.msra.mxu0 %v315
    %441 = vmatprep.subr.bf16.mxu0 0
    %442 = vmatpush1.bf16.msra.mxu0 %v316
    %443 = vmatprep.subr.bf16.mxu0 0
    %444 = vmatpush1.bf16.msra.mxu0 %v317
    %445 = vmatprep.subr.bf16.mxu0 0
    %446 = vmatpush1.bf16.msra.mxu0 %v318
    %447 = vmatprep.subr.bf16.mxu0 0
    %448 = vmatpush1.bf16.msra.mxu0 0
    %449 = vmatprep.subr.bf16.mxu0 0
    %450 = vmatpush1.bf16.msra.mxu0 0
    %451 = vmatprep.subr.bf16.mxu0 0
    %452 = vmatpush1.bf16.msra.mxu0 0
    %453 = vmatprep.subr.bf16.mxu0 0
    %454 = vmatpush1.bf16.msra.mxu0 0
    %455 = vmatprep.subr.bf16.mxu0 0
    %456 = vmatpush1.bf16.msra.mxu0 0
    %457 = vmatprep.subr.bf16.mxu0 0
    %458 = vmatpush1.bf16.msra.mxu0 0
    %459 = vmatprep.subr.bf16.mxu0 0
    %460 = vmatpush1.bf16.msra.mxu0 0
    %461 = vmatprep.subr.bf16.mxu0 0
    %462 = vmatpush1.bf16.msra.mxu0 0
    %463 = vmatprep.subr.bf16.mxu0 0
    %464 = vmatpush1.bf16.msra.mxu0 0
    %465 = vmatprep.subr.bf16.mxu0 0
    %466 = vmatpush1.bf16.msra.mxu0 0
    %467 = vmatprep.subr.bf16.mxu0 0
    %468 = vmatpush1.bf16.msra.mxu0 0
    %469 = vmatprep.subr.bf16.mxu0 0
    %470 = vmatpush1.bf16.msra.mxu0 0
    %471 = vmatprep.mubr.bf16.mxu0 0
    %472 = vmatmul.mubr.bf16.gmra.mrb[0].mxu0 %v357
    %v473 = vpop.f32.mrb[0].mxu0
    %v474 = vadd.f32 %v434, %v473
    %v475 = vpop.f32.mrb[0].mxu0
    %v476 = vpop.f32.mrb[0].mxu0
    %v477 = vpop.f32.mrb[0].mxu0
    %478 = vdwg.mxu0
    %v479 = vmax.f32 %v474, 0.0
    %v480 = vpack.c.bf16 %v479, %v479
    %v481 = vld [vmem:[%s3] sm:$0xf]
    %v482 = vld [vmem:[%s3 + $0x4] sm:$0xf]
    %v483 = vld [vmem:[%s3 + $0x8] sm:$0xf]
    %v484 = vld [vmem:[%s3 + $0xc] sm:$0xf]
    %v485 = vld [vmem:[%s3 + $0x10] sm:$0xf]
    %v486 = vld [vmem:[%s3 + $0x14] sm:$0xf]
    %v487 = vld [vmem:[%s3 + $0x18] sm:$0xf]
    %v488 = vld [vmem:[%s3 + $0x1c] sm:$0xf]
    %v489 = vld [vmem:[%s3 + $0x20] sm:$0xf]
    %v490 = vld [vmem:[%s3 + $0x24] sm:$0xf]
    %v491 = vld [vmem:[%s3 + $0x28] sm:$0xf]
    %v492 = vld [vmem:[%s3 + $0x2c] sm:$0xf]
    %v493 = vld [vmem:[%s3 + $0x30] sm:$0xf]
    %v494 = vld [vmem:[%s3 + $0x34] sm:$0xf]
    %v495 = vld [vmem:[%s3 + $0x38] sm:$0xf]
    %v496 = vld [vmem:[%s3 + $0x3c] sm:$0xf]
    %v497 = vld [vmem:[%s4] sm:$0x1]
    %v499 = vlaneseq
    %v500 = vshrl.u32 %v499, 7
    %v501 = vsub.s32 0, %v500
    %v502 = vrot.slane %v497, %v501
    %v520 = vunpack.c.l.b16 %v481
    %v521 = vunpack.c.l.b16 %v482
    %v522 = vunpack.c.l.b16 %v483
    %v523 = vunpack.c.l.b16 %v484
    %v524 = vunpack.c.l.b16 %v485
    %v525 = vunpack.c.l.b16 %v486
    %v526 = vunpack.c.l.b16 %v487
    %v527 = vunpack.c.l.b16 %v488
    %v528 = vunpack.c.l.b16 %v489
    %v529 = vunpack.c.l.b16 %v490
    %v530 = vunpack.c.l.b16 %v491
    %v531 = vunpack.c.l.b16 %v492
    %v532 = vunpack.c.l.b16 %v493
    %v533 = vunpack.c.l.b16 %v494
    %v534 = vunpack.c.l.b16 %v495
    %v535 = vunpack.c.l.b16 %v496
    %v536 = vpack.c.b16 %v521, %v520
    %v537 = vpack.c.b16 %v523, %v522
    %v538 = vpack.c.b16 %v525, %v524
    %v539 = vpack.c.b16 %v527, %v526
    %v540 = vpack.c.b16 %v529, %v528
    %v541 = vpack.c.b16 %v531, %v530
    %v542 = vpack.c.b16 %v533, %v532
    %v543 = vpack.c.b16 %v535, %v534
    %552 = vmatprep.subr.bf16.mxu0 0
    %553 = vmatpush1.bf16.msra.mxu0 %v536
    %554 = vmatprep.subr.bf16.mxu0 0
    %555 = vmatpush1.bf16.msra.mxu0 %v537
    %556 = vmatprep.subr.bf16.mxu0 0
    %557 = vmatpush1.bf16.msra.mxu0 %v538
    %558 = vmatprep.subr.bf16.mxu0 0
    %559 = vmatpush1.bf16.msra.mxu0 %v539
    %560 = vmatprep.subr.bf16.mxu0 0
    %561 = vmatpush1.bf16.msra.mxu0 %v540
    %562 = vmatprep.subr.bf16.mxu0 0
    %563 = vmatpush1.bf16.msra.mxu0 %v541
    %564 = vmatprep.subr.bf16.mxu0 0
    %565 = vmatpush1.bf16.msra.mxu0 %v542
    %566 = vmatprep.subr.bf16.mxu0 0
    %567 = vmatpush1.bf16.msra.mxu0 %v543
    %568 = vmatprep.subr.bf16.mxu0 0
    %569 = vmatpush1.bf16.msra.mxu0 0
    %570 = vmatprep.subr.bf16.mxu0 0
    %571 = vmatpush1.bf16.msra.mxu0 0
    %572 = vmatprep.subr.bf16.mxu0 0
    %573 = vmatpush1.bf16.msra.mxu0 0
    %574 = vmatprep.subr.bf16.mxu0 0
    %575 = vmatpush1.bf16.msra.mxu0 0
    %576 = vmatprep.subr.bf16.mxu0 0
    %577 = vmatpush1.bf16.msra.mxu0 0
    %578 = vmatprep.subr.bf16.mxu0 0
    %579 = vmatpush1.bf16.msra.mxu0 0
    %580 = vmatprep.subr.bf16.mxu0 0
    %581 = vmatpush1.bf16.msra.mxu0 0
    %582 = vmatprep.subr.bf16.mxu0 0
    %583 = vmatpush1.bf16.msra.mxu0 0
    %584 = vmatprep.mubr.bf16.mxu0 0
    %585 = vmatmul.mubr.bf16.gmra.mrb[0].mxu0 %v480
    %v586 = vpop.f32.mrb[0].mxu0
    %v587 = vadd.f32 %v502, %v586
    %v588 = vpop.f32.mrb[0].mxu0
    %v589 = vpop.f32.mrb[0].mxu0
    %v590 = vpop.f32.mrb[0].mxu0
    %591 = vdwg.mxu0
    %vm592 = vcmask 74752
    %v593 = vsel %vm592, %v587, -inf
    %594 = vmax.xlane.f32.xlu0 %v593
    %v595 = vpop.xlane.xlu0 %594
    %v596 = vsub.f32 %v587, %v595
    %v597 = vmul.f32 %v596, 1.442695
    %v598 = vpow.pop %v597
    %v599 = vsel %vm592, %v598, 0.0
    %600 = vadd.xlane.f32.xlu0 %v599
    %v601 = vpop.xlane.xlu0 %600
    %v602 = vlog2.pop %v601
    %v603 = vmul.f32 %v602, 0.6931472
    %v604 = vsub.f32 %v596, %v603
    %605 = vst.msk [vmem:[#allocation2] sm:$0x3] %vm592, %v604
    // Predicated region
    $region22: #{net_forward.7} parent=1 // pred_check
      _
    $region23: #{net_forward.7} parent=1 // pred_check_branch
      %607 = sbr.rel (0) target = $region25
    $region24: #{net_forward.7} parent=1 // pred_region
      %s609 = ssub.s32 32, 32
      %610 = vsyncadd [#allocation3], %s609
      %s612 = sshll.u32 [#allocation2], 4
      %s613 = int_to_ptr.vmem [resolvable:$true] %s612
      %615 = dma.vmem_to_hbm [thread:$0]  %s613, 32, %s5, [#allocation3]
    $region25: #{net_forward.7} parent=1 // pred_fallthru
      _
    // Predicated region
    $region26: #{net_forward.7} parent=1 // pred_check
      _
    $region27: #{net_forward.7} parent=1 // pred_check_branch
      %617 = sbr.rel (0) target = $region29
    $region28: #{net_forward.7} parent=1 // pred_region
      %618 = dma.done [#allocation3], 32
    $region29: #{net_forward.7} parent=1 // pred_fallthru
      _
    %619 = vsyncpa [#allocation3], 1

// kernel: net_forward.4
$region0: #{net_forward.4}
  #allocation0 [shape = 'u32[]', space=smem, size = 0x4, offset = 0x4, fixed_abs, tag = 'smem constant byte address 0x4 - core index']
  #allocation1 [shape = 'u32[144,128]{1,0:T(1,128)}', space=vmem, size = 0x12000, scoped, tag = 'internal scratch']
  %s0 = inlined_call_operand.vmem [shape: f32[2,990,1], index: 0, kind: input, shape index: {}]
  %s1 = inlined_call_operand.vmem [shape: bf16[9,32], index: 1, kind: input, shape index: {}]
  %s2 = inlined_call_operand.vmem [shape: f32[1,32], index: 2, kind: input, shape index: {}]
  %s3 = inlined_call_operand.vmem [shape: f32[196,840], index: 3, kind: input, shape index: {}]
  %s4 = inlined_call_operand.vmem [shape: f32[2,196,32], index: 4, kind: output, shape index: {}]
  %s5 = sld [smem:[#allocation0]]
  $region49: #{net_forward.4} parent=0
    _
  %s7 = ssub.s32 1, %s5
  %s8 = scalar_select 0, %s7, %s5
  loop: start=0, step=1, limit=4
  $region2: #{net_forward.4} parent=0 // loop_pre_header
    _
  $region3: #{net_forward.4} parent=0 // loop_header
    %s10 = sphi 0, %s14
    %p11 = scmp.ge.s32.totalorder %s10, 4
    %s20 = sphi 0, %s22
    %s23 = sphi 0, %s20
    %s24 = sphi 0, %s23
    %s40 = sphi 0, %s24
    %s44 = sphi 0, %s44
    %s46 = sphi 0, %s44
    %s47 = sphi 0, %s46
    %s61 = sphi 0, %s47
    %s65 = sphi 0, %s65
    %s67 = sphi 0, %s65
    %s68 = sphi 0, %s67
    %s82 = sphi 0, %s68
    %s86 = sphi 0, %s86
    %s88 = sphi 0, %s86
    %s89 = sphi 0, %s88
    %s103 = sphi 0, %s89
    %s109 = sphi 0, %s111
    %s112 = sphi 0, %s109
    %s113 = sphi 0, %s112
    %s129 = sphi 0, %s113
  $region4: #{net_forward.4} parent=0 // loop_header_branch
    %13 = sbr.rel (%p11) target = $region8
  $region5: #{net_forward.4} parent=0 // loop_body
    %s15 = ssub.s32 %s10, 1
    %s16 = ssub.s32 %s10, 2
    %s17 = sadd.s32 %s10, 1
    %s18 = ssub.s32 %s10, %s17
    %p19 = scmp.eq.s32.totalorder %s18, 0
    %s21 = sadd.s32 %s20, 1
    %s22 = scalar_select %p19, %s20, %s21
    %p25 = pneg %p19
    %p26 = scmp.eq.s32.totalorder %s10, 1
    %p27 = por %p25, %p26
    %p28 = scmp.ne.s32.totalorder %s20, %s23
    %p29 = scmp.eq.s32.totalorder %s10, 0
    %p30 = por %p28, %p29
    %p31 = scmp.ne.s32.totalorder %s20, %s23
    %p32 = scmp.eq.s32.totalorder %s15, 1
    %p33 = por %p31, %p32
    %p34 = scmp.ne.s32.totalorder %s23, %s24
    %p35 = scmp.eq.s32.totalorder %s15, 0
    %p36 = por %p34, %p35
    %p37 = scmp.ne.s32.totalorder %s23, %s24
    %p38 = scmp.eq.s32.totalorder %s16, 1
    %p39 = por %p37, %p38
    %p41 = scmp.ne.s32.totalorder %s24, %s40
    %p42 = scmp.eq.s32.totalorder %s16, 0
    %p43 = por %p41, %p42
    %s45 = sadd.s32 %s44, 1
    %p48 = scmp.eq.s32.totalorder %s10, 1
    %p49 = scmp.ne.s32.totalorder %s44, %s46
    %p50 = scmp.eq.s32.totalorder %s10, 0
    %p51 = por %p49, %p50
    %p52 = scmp.ne.s32.totalorder %s44, %s46
    %p53 = scmp.eq.s32.totalorder %s15, 1
    %p54 = por %p52, %p53
    %p55 = scmp.ne.s32.totalorder %s46, %s47
    %p56 = scmp.eq.s32.totalorder %s15, 0
    %p57 = por %p55, %p56
    %p58 = scmp.ne.s32.totalorder %s46, %s47
    %p59 = scmp.eq.s32.totalorder %s16, 1
    %p60 = por %p58, %p59
    %p62 = scmp.ne.s32.totalorder %s47, %s61
    %p63 = scmp.eq.s32.totalorder %s16, 0
    %p64 = por %p62, %p63
    %s66 = sadd.s32 %s65, 1
    %p69 = scmp.eq.s32.totalorder %s10, 1
    %p70 = scmp.ne.s32.totalorder %s65, %s67
    %p71 = scmp.eq.s32.totalorder %s10, 0
    %p72 = por %p70, %p71
    %p73 = scmp.ne.s32.totalorder %s65, %s67
    %p74 = scmp.eq.s32.totalorder %s15, 1
    %p75 = por %p73, %p74
    %p76 = scmp.ne.s32.totalorder %s67, %s68
    %p77 = scmp.eq.s32.totalorder %s15, 0
    %p78 = por %p76, %p77
    %p79 = scmp.ne.s32.totalorder %s67, %s68
    %p80 = scmp.eq.s32.totalorder %s16, 1
    %p81 = por %p79, %p80
    %p83 = scmp.ne.s32.totalorder %s68, %s82
    %p84 = scmp.eq.s32.totalorder %s16, 0
    %p85 = por %p83, %p84
    %s87 = sadd.s32 %s86, 1
    %p90 = scmp.eq.s32.totalorder %s10, 1
    %p91 = scmp.ne.s32.totalorder %s86, %s88
    %p92 = scmp.eq.s32.totalorder %s10, 0
    %p93 = por %p91, %p92
    %p94 = scmp.ne.s32.totalorder %s86, %s88
    %p95 = scmp.eq.s32.totalorder %s15, 1
    %p96 = por %p94, %p95
    %p97 = scmp.ne.s32.totalorder %s88, %s89
    %p98 = scmp.eq.s32.totalorder %s15, 0
    %p99 = por %p97, %p98
    %p100 = scmp.ne.s32.totalorder %s88, %s89
    %p101 = scmp.eq.s32.totalorder %s16, 1
    %p102 = por %p100, %p101
    %p104 = scmp.ne.s32.totalorder %s89, %s103
    %p105 = scmp.eq.s32.totalorder %s16, 0
    %p106 = por %p104, %p105
    %s107 = ssub.s32 %s10, %s17
    %p108 = scmp.eq.s32.totalorder %s107, 0
    %s110 = sadd.s32 %s109, 1
    %s111 = scalar_select %p108, %s109, %s110
    %p114 = pneg %p108
    %p115 = scmp.eq.s32.totalorder %s10, 1
    %p116 = por %p114, %p115
    %p117 = scmp.ne.s32.totalorder %s109, %s112
    %p118 = scmp.eq.s32.totalorder %s10, 0
    %p119 = por %p117, %p118
    %p120 = scmp.ne.s32.totalorder %s109, %s112
    %p121 = scmp.eq.s32.totalorder %s15, 1
    %p122 = por %p120, %p121
    %p123 = scmp.ne.s32.totalorder %s112, %s113
    %p124 = scmp.eq.s32.totalorder %s15, 0
    %p125 = por %p123, %p124
    %p126 = scmp.ne.s32.totalorder %s112, %s113
    %p127 = scmp.eq.s32.totalorder %s16, 1
    %p128 = por %p126, %p127
    %p130 = scmp.ne.s32.totalorder %s113, %s129
    %p131 = scmp.eq.s32.totalorder %s16, 0
    %p132 = por %p130, %p131
    %p133 = scmp.le.s32.totalorder 1, %s10
    %p134 = scmp.lt.s32.totalorder %s10, 3
    %p135 = pnand %p133, %p134
    %p136 = pneg %p135
    // Predicated region
    $region9: #{net_forward.4} parent=5 // pred_check
      _
    $region10: #{net_forward.4} parent=5 // pred_check_branch
      %138 = sbr.rel (%p135) target = $region12
    $region11: #{net_forward.4} parent=5 // pred_region
      %s139 = ssub.s32 %s10, 1
      // Predicated region
      $region13: #{net_forward.4} parent=11 // pred_check
        %p140 = pneg %p57
      $region14: #{net_forward.4} parent=11 // pred_check_branch
        %142 = sbr.rel (%p140) target = $region16
      $region15: #{net_forward.4} parent=11 // pred_region
        _
      $region16: #{net_forward.4} parent=11 // pred_fallthru
        _
      // Predicated region
      $region17: #{net_forward.4} parent=11 // pred_check
        %p143 = pneg %p78
      $region18: #{net_forward.4} parent=11 // pred_check_branch
        %145 = sbr.rel (%p143) target = $region20
      $region19: #{net_forward.4} parent=11 // pred_region
        _
      $region20: #{net_forward.4} parent=11 // pred_fallthru
        _
      // Predicated region
      $region21: #{net_forward.4} parent=11 // pred_check
        %p146 = pneg %p99
      $region22: #{net_forward.4} parent=11 // pred_check_branch
        %148 = sbr.rel (%p146) target = $region24
      $region23: #{net_forward.4} parent=11 // pred_region
        _
      $region24: #{net_forward.4} parent=11 // pred_fallthru
        _
    $region12: #{net_forward.4} parent=5 // pred_fallthru
      _
    %p149 = scmp.lt.s32.totalorder %s10, 2
    // Predicated region
    $region25: #{net_forward.4} parent=5 // pred_check
      %p150 = pneg %p149
    $region26: #{net_forward.4} parent=5 // pred_check_branch
      %152 = sbr.rel (%p150) target = $region28
    $region27: #{net_forward.4} parent=5 // pred_region
      // Predicated region
      $region29: #{net_forward.4} parent=27 // pred_check
        %p153 = pneg %p30
      $region30: #{net_forward.4} parent=27 // pred_check_branch
        %155 = sbr.rel (%p153) target = $region32
      $region31: #{net_forward.4} parent=27 // pred_region
        %p156 = scmp.lt.s32.totalorder %s10, 1
        %s157 = scalar_select %p156, %s10, 1
        %s158 = smul.addr %s157, 124
        %s159 = smul.addr %s158, 8
        %s160 = scalar_lea.vmem %s0, %s159
      $region32: #{net_forward.4} parent=27 // pred_fallthru
        _
    $region28: #{net_forward.4} parent=5 // pred_fallthru
      _
    %p161 = scmp.le.s32.totalorder 1, %s10
    %p162 = scmp.lt.s32.totalorder %s10, 3
    %p163 = pnand %p161, %p162
    %p164 = pneg %p163
    // Predicated region
    $region33: #{net_forward.4} parent=5 // pred_check
      _
    $region34: #{net_forward.4} parent=5 // pred_check_branch
      %166 = sbr.rel (%p163) target = $region36
    $region35: #{net_forward.4} parent=5 // pred_region
      %s167 = ssub.s32 %s10, 1
      %p168 = scmp.lt.s32.totalorder %s15, 1
      %s169 = scalar_select %p168, %s15, 1
      %s170 = smul.addr %s169, 124
      %s171 = smul.addr %s170, 8
      %s172 = scalar_lea.vmem %s0, %s171
      %p173 = pneg %p36
      %p174 = pneg %p33
      %p175 = pneg %p57
      %p176 = pneg %p54
      %p177 = pneg %p78
      %p178 = pneg %p75
      %p179 = pneg %p99
      %p180 = pneg %p96
      %p181 = pneg %p125
      %p182 = pneg %p122
      %p183 = scmp.lt.s32.totalorder %s15, 1
      %s184 = scalar_select %p183, %s15, 1
      %s185 = smul.addr %s184, 25
      %s186 = smul.addr %s185, 8
      %s187 = scalar_lea.vmem %s4, %s186
      %p188 = scmp.lt.s32.totalorder %s15, 1
      %s189 = scalar_select %p188, %s15, 1
      %s190 = smul.addr %s189, 124
      %s191 = smul.addr %s190, 8
      %s192 = scalar_lea.vmem %s0, %s191
      %p193 = scmp.lt.s32.totalorder %s15, 1
      %s194 = scalar_select %p193, %s15, 1
      %s195 = smul.addr %s194, 25
      %s196 = smul.addr %s195, 8
      %s197 = scalar_lea.vmem %s4, %s196
      %v199 = vld [vmem:[%s192] sm:$0xff]
      %v200 = vld [vmem:[%s192 + $0x8] sm:$0xff]
      %v201 = vld [vmem:[%s192 + $0x10] sm:$0xff]
      %v202 = vld [vmem:[%s192 + $0x18] sm:$0xff]
      %v203 = vld [vmem:[%s192 + $0x20] sm:$0xff]
      %v204 = vld [vmem:[%s192 + $0x28] sm:$0xff]
      %v205 = vld [vmem:[%s192 + $0x30] sm:$0xff]
      %v206 = vld [vmem:[%s192 + $0x38] sm:$0xff]
      %v207 = vld [vmem:[%s192 + $0x40] sm:$0xff]
      %v208 = vld [vmem:[%s192 + $0x48] sm:$0xff]
      %v209 = vld [vmem:[%s192 + $0x50] sm:$0xff]
      %v210 = vld [vmem:[%s192 + $0x58] sm:$0xff]
      %v211 = vld [vmem:[%s192 + $0x60] sm:$0xff]
      %v212 = vld [vmem:[%s192 + $0x68] sm:$0xff]
      %v213 = vld [vmem:[%s192 + $0x70] sm:$0xff]
      %v214 = vld [vmem:[%s192 + $0x78] sm:$0xff]
      %v215 = vld [vmem:[%s192 + $0x80] sm:$0xff]
      %v216 = vld [vmem:[%s192 + $0x88] sm:$0xff]
      %v217 = vld [vmem:[%s192 + $0x90] sm:$0xff]
      %v218 = vld [vmem:[%s192 + $0x98] sm:$0xff]
      %v219 = vld [vmem:[%s192 + $0xa0] sm:$0xff]
      %v220 = vld [vmem:[%s192 + $0xa8] sm:$0xff]
      %v221 = vld [vmem:[%s192 + $0xb0] sm:$0xff]
      %v222 = vld [vmem:[%s192 + $0xb8] sm:$0xff]
      %v223 = vld [vmem:[%s192 + $0xc0] sm:$0xff]
      %v224 = vld [vmem:[%s192 + $0xc8] sm:$0xff]
      %v225 = vld [vmem:[%s192 + $0xd0] sm:$0xff]
      %v226 = vld [vmem:[%s192 + $0xd8] sm:$0xff]
      %v227 = vld [vmem:[%s192 + $0xe0] sm:$0xff]
      %v228 = vld [vmem:[%s192 + $0xe8] sm:$0xff]
      %v229 = vld [vmem:[%s192 + $0xf0] sm:$0xff]
      %v230 = vld [vmem:[%s192 + $0xf8] sm:$0xff]
      %v231 = vld [vmem:[%s192 + $0x100] sm:$0xff]
      %v232 = vld [vmem:[%s192 + $0x108] sm:$0xff]
      %v233 = vld [vmem:[%s192 + $0x110] sm:$0xff]
      %v234 = vld [vmem:[%s192 + $0x118] sm:$0xff]
      %v235 = vld [vmem:[%s192 + $0x120] sm:$0xff]
      %v236 = vld [vmem:[%s192 + $0x128] sm:$0xff]
      %v237 = vld [vmem:[%s192 + $0x130] sm:$0xff]
      %v238 = vld [vmem:[%s192 + $0x138] sm:$0xff]
      %v239 = vld [vmem:[%s192 + $0x140] sm:$0xff]
      %v240 = vld [vmem:[%s192 + $0x148] sm:$0xff]
      %v241 = vld [vmem:[%s192 + $0x150] sm:$0xff]
      %v242 = vld [vmem:[%s192 + $0x158] sm:$0xff]
      %v243 = vld [vmem:[%s192 + $0x160] sm:$0xff]
      %v244 = vld [vmem:[%s192 + $0x168] sm:$0xff]
      %v245 = vld [vmem:[%s192 + $0x170] sm:$0xff]
      %v246 = vld [vmem:[%s192 + $0x178] sm:$0xff]
      %v247 = vld [vmem:[%s192 + $0x180] sm:$0xff]
      %v248 = vld [vmem:[%s192 + $0x188] sm:$0xff]
      %v249 = vld [vmem:[%s192 + $0x190] sm:$0xff]
      %v250 = vld [vmem:[%s192 + $0x198] sm:$0xff]
      %v251 = vld [vmem:[%s192 + $0x1a0] sm:$0xff]
      %v252 = vld [vmem:[%s192 + $0x1a8] sm:$0xff]
      %v253 = vld [vmem:[%s192 + $0x1b0] sm:$0xff]
      %v254 = vld [vmem:[%s192 + $0x1b8] sm:$0xff]
      %v255 = vld [vmem:[%s192 + $0x1c0] sm:$0xff]
      %v256 = vld [vmem:[%s192 + $0x1c8] sm:$0xff]
      %v257 = vld [vmem:[%s192 + $0x1d0] sm:$0xff]
      %v258 = vld [vmem:[%s192 + $0x1d8] sm:$0xff]
      %v259 = vld [vmem:[%s192 + $0x1e0] sm:$0xff]
      %v260 = vld [vmem:[%s192 + $0x1e8] sm:$0xff]
      %v261 = vld [vmem:[%s192 + $0x1f0] sm:$0xff]
      %v262 = vld [vmem:[%s192 + $0x1f8] sm:$0xff]
      %v263 = vld [vmem:[%s192 + $0x200] sm:$0xff]
      %v264 = vld [vmem:[%s192 + $0x208] sm:$0xff]
      %v265 = vld [vmem:[%s192 + $0x210] sm:$0xff]
      %v266 = vld [vmem:[%s192 + $0x218] sm:$0xff]
      %v267 = vld [vmem:[%s192 + $0x220] sm:$0xff]
      %v268 = vld [vmem:[%s192 + $0x228] sm:$0xff]
      %v269 = vld [vmem:[%s192 + $0x230] sm:$0xff]
      %v270 = vld [vmem:[%s192 + $0x238] sm:$0xff]
      %v271 = vld [vmem:[%s192 + $0x240] sm:$0xff]
      %v272 = vld [vmem:[%s192 + $0x248] sm:$0xff]
      %v273 = vld [vmem:[%s192 + $0x250] sm:$0xff]
      %v274 = vld [vmem:[%s192 + $0x258] sm:$0xff]
      %v275 = vld [vmem:[%s192 + $0x260] sm:$0xff]
      %v276 = vld [vmem:[%s192 + $0x268] sm:$0xff]
      %v277 = vld [vmem:[%s192 + $0x270] sm:$0xff]
      %v278 = vld [vmem:[%s192 + $0x278] sm:$0xff]
      %v279 = vld [vmem:[%s192 + $0x280] sm:$0xff]
      %v280 = vld [vmem:[%s192 + $0x288] sm:$0xff]
      %v281 = vld [vmem:[%s192 + $0x290] sm:$0xff]
      %v282 = vld [vmem:[%s192 + $0x298] sm:$0xff]
      %v283 = vld [vmem:[%s192 + $0x2a0] sm:$0xff]
      %v284 = vld [vmem:[%s192 + $0x2a8] sm:$0xff]
      %v285 = vld [vmem:[%s192 + $0x2b0] sm:$0xff]
      %v286 = vld [vmem:[%s192 + $0x2b8] sm:$0xff]
      %v287 = vld [vmem:[%s192 + $0x2c0] sm:$0xff]
      %v288 = vld [vmem:[%s192 + $0x2c8] sm:$0xff]
      %v289 = vld [vmem:[%s192 + $0x2d0] sm:$0xff]
      %v290 = vld [vmem:[%s192 + $0x2d8] sm:$0xff]
      %v291 = vld [vmem:[%s192 + $0x2e0] sm:$0xff]
      %v292 = vld [vmem:[%s192 + $0x2e8] sm:$0xff]
      %v293 = vld [vmem:[%s192 + $0x2f0] sm:$0xff]
      %v294 = vld [vmem:[%s192 + $0x2f8] sm:$0xff]
      %v295 = vld [vmem:[%s192 + $0x300] sm:$0xff]
      %v296 = vld [vmem:[%s192 + $0x308] sm:$0xff]
      %v297 = vld [vmem:[%s192 + $0x310] sm:$0xff]
      %v298 = vld [vmem:[%s192 + $0x318] sm:$0xff]
      %v299 = vld [vmem:[%s192 + $0x320] sm:$0xff]
      %v300 = vld [vmem:[%s192 + $0x328] sm:$0xff]
      %v301 = vld [vmem:[%s192 + $0x330] sm:$0xff]
      %v302 = vld [vmem:[%s192 + $0x338] sm:$0xff]
      %v303 = vld [vmem:[%s192 + $0x340] sm:$0xff]
      %v304 = vld [vmem:[%s192 + $0x348] sm:$0xff]
      %v305 = vld [vmem:[%s192 + $0x350] sm:$0xff]
      %v306 = vld [vmem:[%s192 + $0x358] sm:$0xff]
      %v307 = vld [vmem:[%s192 + $0x360] sm:$0xff]
      %v308 = vld [vmem:[%s192 + $0x368] sm:$0xff]
      %v309 = vld [vmem:[%s192 + $0x370] sm:$0xff]
      %v310 = vld [vmem:[%s192 + $0x378] sm:$0xff]
      %v311 = vld [vmem:[%s192 + $0x380] sm:$0xff]
      %v312 = vld [vmem:[%s192 + $0x388] sm:$0xff]
      %v313 = vld [vmem:[%s192 + $0x390] sm:$0xff]
      %v314 = vld [vmem:[%s192 + $0x398] sm:$0xff]
      %v315 = vld [vmem:[%s192 + $0x3a0] sm:$0xff]
      %v316 = vld [vmem:[%s192 + $0x3a8] sm:$0xff]
      %v317 = vld [vmem:[%s192 + $0x3b0] sm:$0xff]
      %v318 = vld [vmem:[%s192 + $0x3b8] sm:$0xff]
      %v319 = vld [vmem:[%s192 + $0x3c0] sm:$0xff]
      %vm433 = vcmask 1046528
      %v434 = vrot.slane %v199, 1
      %v435 = vrot.slane %v200, 1
      %v436 = vsel %vm433, %v434, %v435
      %v437 = vrot.slane %v201, 1
      %v438 = vsel %vm433, %v435, %v437
      %v439 = vrot.slane %v202, 1
      %v440 = vsel %vm433, %v437, %v439
      %v441 = vrot.slane %v203, 1
      %v442 = vsel %vm433, %v439, %v441
      %v443 = vrot.slane %v204, 1
      %v444 = vsel %vm433, %v441, %v443
      %v445 = vrot.slane %v205, 1
      %v446 = vsel %vm433, %v443, %v445
      %v447 = vrot.slane %v206, 1
      %v448 = vsel %vm433, %v445, %v447
      %v449 = vrot.slane %v207, 1
      %v450 = vsel %vm433, %v447, %v449
      %v451 = vrot.slane %v208, 1
      %v452 = vsel %vm433, %v449, %v451
      %v453 = vrot.slane %v209, 1
      %v454 = vsel %vm433, %v451, %v453
      %v455 = vrot.slane %v210, 1
      %v456 = vsel %vm433, %v453, %v455
      %v457 = vrot.slane %v211, 1
      %v458 = vsel %vm433, %v455, %v457
      %v459 = vrot.slane %v212, 1
      %v460 = vsel %vm433, %v457, %v459
      %v461 = vrot.slane %v213, 1
      %v462 = vsel %vm433, %v459, %v461
      %v463 = vrot.slane %v214, 1
      %v464 = vsel %vm433, %v461, %v463
      %v465 = vrot.slane %v215, 1
      %v466 = vsel %vm433, %v463, %v465
      %v467 = vrot.slane %v216, 1
      %v468 = vsel %vm433, %v465, %v467
      %v469 = vrot.slane %v217, 1
      %v470 = vsel %vm433, %v467, %v469
      %v471 = vrot.slane %v218, 1
      %v472 = vsel %vm433, %v469, %v471
      %v473 = vrot.slane %v219, 1
      %v474 = vsel %vm433, %v471, %v473
      %v475 = vrot.slane %v220, 1
      %v476 = vsel %vm433, %v473, %v475
      %v477 = vrot.slane %v221, 1
      %v478 = vsel %vm433, %v475, %v477
      %v479 = vrot.slane %v222, 1
      %v480 = vsel %vm433, %v477, %v479
      %v481 = vrot.slane %v223, 1
      %v482 = vsel %vm433, %v479, %v481
      %v483 = vrot.slane %v224, 1
      %v484 = vsel %vm433, %v481, %v483
      %v485 = vrot.slane %v225, 1
      %v486 = vsel %vm433, %v483, %v485
      %v487 = vrot.slane %v226, 1
      %v488 = vsel %vm433, %v485, %v487
      %v489 = vrot.slane %v227, 1
      %v490 = vsel %vm433, %v487, %v489
      %v491 = vrot.slane %v228, 1
      %v492 = vsel %vm433, %v489, %v491
      %v493 = vrot.slane %v229, 1
      %v494 = vsel %vm433, %v491, %v493
      %v495 = vrot.slane %v230, 1
      %v496 = vsel %vm433, %v493, %v495
      %v497 = vrot.slane %v231, 1
      %v498 = vsel %vm433, %v495, %v497
      %v499 = vrot.slane %v232, 1
      %v500 = vsel %vm433, %v497, %v499
      %v501 = vrot.slane %v233, 1
      %v502 = vsel %vm433, %v499, %v501
      %v503 = vrot.slane %v234, 1
      %v504 = vsel %vm433, %v501, %v503
      %v505 = vrot.slane %v235, 1
      %v506 = vsel %vm433, %v503, %v505
      %v507 = vrot.slane %v236, 1
      %v508 = vsel %vm433, %v505, %v507
      %v509 = vrot.slane %v237, 1
      %v510 = vsel %vm433, %v507, %v509
      %v511 = vrot.slane %v238, 1
      %v512 = vsel %vm433, %v509, %v511
      %v513 = vrot.slane %v239, 1
      %v514 = vsel %vm433, %v511, %v513
      %v515 = vrot.slane %v240, 1
      %v516 = vsel %vm433, %v513, %v515
      %v517 = vrot.slane %v241, 1
      %v518 = vsel %vm433, %v515, %v517
      %v519 = vrot.slane %v242, 1
      %v520 = vsel %vm433, %v517, %v519
      %v521 = vrot.slane %v243, 1
      %v522 = vsel %vm433, %v519, %v521
      %v523 = vrot.slane %v244, 1
      %v524 = vsel %vm433, %v521, %v523
      %v525 = vrot.slane %v245, 1
      %v526 = vsel %vm433, %v523, %v525
      %v527 = vrot.slane %v246, 1
      %v528 = vsel %vm433, %v525, %v527
      %v529 = vrot.slane %v247, 1
      %v530 = vsel %vm433, %v527, %v529
      %v531 = vrot.slane %v248, 1
      %v532 = vsel %vm433, %v529, %v531
      %v533 = vrot.slane %v249, 1
      %v534 = vsel %vm433, %v531, %v533
      %v535 = vrot.slane %v250, 1
      %v536 = vsel %vm433, %v533, %v535
      %v537 = vrot.slane %v251, 1
      %v538 = vsel %vm433, %v535, %v537
      %v539 = vrot.slane %v252, 1
      %v540 = vsel %vm433, %v537, %v539
      %v541 = vrot.slane %v253, 1
      %v542 = vsel %vm433, %v539, %v541
      %v543 = vrot.slane %v254, 1
      %v544 = vsel %vm433, %v541, %v543
      %v545 = vrot.slane %v255, 1
      %v546 = vsel %vm433, %v543, %v545
      %v547 = vrot.slane %v256, 1
      %v548 = vsel %vm433, %v545, %v547
      %v549 = vrot.slane %v257, 1
      %v550 = vsel %vm433, %v547, %v549
      %v551 = vrot.slane %v258, 1
      %v552 = vsel %vm433, %v549, %v551
      %v553 = vrot.slane %v259, 1
      %v554 = vsel %vm433, %v551, %v553
      %v555 = vrot.slane %v260, 1
      %v556 = vsel %vm433, %v553, %v555
      %v557 = vrot.slane %v261, 1
      %v558 = vsel %vm433, %v555, %v557
      %v559 = vrot.slane %v262, 1
      %v560 = vsel %vm433, %v557, %v559
      %v561 = vrot.slane %v263, 1
      %v562 = vsel %vm433, %v559, %v561
      %v563 = vrot.slane %v264, 1
      %v564 = vsel %vm433, %v561, %v563
      %v565 = vrot.slane %v265, 1
      %v566 = vsel %vm433, %v563, %v565
      %v567 = vrot.slane %v266, 1
      %v568 = vsel %vm433, %v565, %v567
      %v569 = vrot.slane %v267, 1
      %v570 = vsel %vm433, %v567, %v569
      %v571 = vrot.slane %v268, 1
      %v572 = vsel %vm433, %v569, %v571
      %v573 = vrot.slane %v269, 1
      %v574 = vsel %vm433, %v571, %v573
      %v575 = vrot.slane %v270, 1
      %v576 = vsel %vm433, %v573, %v575
      %v577 = vrot.slane %v271, 1
      %v578 = vsel %vm433, %v575, %v577
      %v579 = vrot.slane %v272, 1
      %v580 = vsel %vm433, %v577, %v579
      %v581 = vrot.slane %v273, 1
      %v582 = vsel %vm433, %v579, %v581
      %v583 = vrot.slane %v274, 1
      %v584 = vsel %vm433, %v581, %v583
      %v585 = vrot.slane %v275, 1
      %v586 = vsel %vm433, %v583, %v585
      %v587 = vrot.slane %v276, 1
      %v588 = vsel %vm433, %v585, %v587
      %v589 = vrot.slane %v277, 1
      %v590 = vsel %vm433, %v587, %v589
      %v591 = vrot.slane %v278, 1
      %v592 = vsel %vm433, %v589, %v591
      %v593 = vrot.slane %v279, 1
      %v594 = vsel %vm433, %v591, %v593
      %v595 = vrot.slane %v280, 1
      %v596 = vsel %vm433, %v593, %v595
      %v597 = vrot.slane %v281, 1
      %v598 = vsel %vm433, %v595, %v597
      %v599 = vrot.slane %v282, 1
      %v600 = vsel %vm433, %v597, %v599
      %v601 = vrot.slane %v283, 1
      %v602 = vsel %vm433, %v599, %v601
      %v603 = vrot.slane %v284, 1
      %v604 = vsel %vm433, %v601, %v603
      %v605 = vrot.slane %v285, 1
      %v606 = vsel %vm433, %v603, %v605
      %v607 = vrot.slane %v286, 1
      %v608 = vsel %vm433, %v605, %v607
      %v609 = vrot.slane %v287, 1
      %v610 = vsel %vm433, %v607, %v609
      %v611 = vrot.slane %v288, 1
      %v612 = vsel %vm433, %v609, %v611
      %v613 = vrot.slane %v289, 1
      %v614 = vsel %vm433, %v611, %v613
      %v615 = vrot.slane %v290, 1
      %v616 = vsel %vm433, %v613, %v615
      %v617 = vrot.slane %v291, 1
      %v618 = vsel %vm433, %v615, %v617
      %v619 = vrot.slane %v292, 1
      %v620 = vsel %vm433, %v617, %v619
      %v621 = vrot.slane %v293, 1
      %v622 = vsel %vm433, %v619, %v621
      %v623 = vrot.slane %v294, 1
      %v624 = vsel %vm433, %v621, %v623
      %v625 = vrot.slane %v295, 1
      %v626 = vsel %vm433, %v623, %v625
      %v627 = vrot.slane %v296, 1
      %v628 = vsel %vm433, %v625, %v627
      %v629 = vrot.slane %v297, 1
      %v630 = vsel %vm433, %v627, %v629
      %v631 = vrot.slane %v298, 1
      %v632 = vsel %vm433, %v629, %v631
      %v633 = vrot.slane %v299, 1
      %v634 = vsel %vm433, %v631, %v633
      %v635 = vrot.slane %v300, 1
      %v636 = vsel %vm433, %v633, %v635
      %v637 = vrot.slane %v301, 1
      %v638 = vsel %vm433, %v635, %v637
      %v639 = vrot.slane %v302, 1
      %v640 = vsel %vm433, %v637, %v639
      %v641 = vrot.slane %v303, 1
      %v642 = vsel %vm433, %v639, %v641
      %v643 = vrot.slane %v304, 1
      %v644 = vsel %vm433, %v641, %v643
      %v645 = vrot.slane %v305, 1
      %v646 = vsel %vm433, %v643, %v645
      %v647 = vrot.slane %v306, 1
      %v648 = vsel %vm433, %v645, %v647
      %v649 = vrot.slane %v307, 1
      %v650 = vsel %vm433, %v647, %v649
      %v651 = vrot.slane %v308, 1
      %v652 = vsel %vm433, %v649, %v651
      %v653 = vrot.slane %v309, 1
      %v654 = vsel %vm433, %v651, %v653
      %v655 = vrot.slane %v310, 1
      %v656 = vsel %vm433, %v653, %v655
      %v657 = vrot.slane %v311, 1
      %v658 = vsel %vm433, %v655, %v657
      %659 = vrot.lane.b32.xlu0 %v436, 1
      %v660 = vpop.permute.xlu0 %659
      %661 = vrot.lane.b32.xlu0 %v438, 1
      %v662 = vpop.permute.xlu0 %661
      %663 = vrot.lane.b32.xlu0 %v440, 1
      %v664 = vpop.permute.xlu0 %663
      %665 = vrot.lane.b32.xlu0 %v442, 1
      %v666 = vpop.permute.xlu0 %665
      %667 = vrot.lane.b32.xlu0 %v444, 1
      %v668 = vpop.permute.xlu0 %667
      %669 = vrot.lane.b32.xlu0 %v446, 1
      %v670 = vpop.permute.xlu0 %669
      %671 = vrot.lane.b32.xlu0 %v448, 1
      %v672 = vpop.permute.xlu0 %671
      %673 = vrot.lane.b32.xlu0 %v450, 1
      %v674 = vpop.permute.xlu0 %673
      %675 = vrot.lane.b32.xlu0 %v452, 1
      %v676 = vpop.permute.xlu0 %675
      %677 = vrot.lane.b32.xlu0 %v454, 1
      %v678 = vpop.permute.xlu0 %677
      %679 = vrot.lane.b32.xlu0 %v456, 1
      %v680 = vpop.permute.xlu0 %679
      %681 = vrot.lane.b32.xlu0 %v458, 1
      %v682 = vpop.permute.xlu0 %681
      %683 = vrot.lane.b32.xlu0 %v460, 1
      %v684 = vpop.permute.xlu0 %683
      %685 = vrot.lane.b32.xlu0 %v462, 1
      %v686 = vpop.permute.xlu0 %685
      %687 = vrot.lane.b32.xlu0 %v464, 1
      %v688 = vpop.permute.xlu0 %687
      %689 = vrot.lane.b32.xlu0 %v466, 1
      %v690 = vpop.permute.xlu0 %689
      %691 = vrot.lane.b32.xlu0 %v468, 1
      %v692 = vpop.permute.xlu0 %691
      %693 = vrot.lane.b32.xlu0 %v470, 1
      %v694 = vpop.permute.xlu0 %693
      %695 = vrot.lane.b32.xlu0 %v472, 1
      %v696 = vpop.permute.xlu0 %695
      %697 = vrot.lane.b32.xlu0 %v474, 1
      %v698 = vpop.permute.xlu0 %697
      %699 = vrot.lane.b32.xlu0 %v476, 1
      %v700 = vpop.permute.xlu0 %699
      %701 = vrot.lane.b32.xlu0 %v478, 1
      %v702 = vpop.permute.xlu0 %701
      %703 = vrot.lane.b32.xlu0 %v480, 1
      %v704 = vpop.permute.xlu0 %703
      %705 = vrot.lane.b32.xlu0 %v482, 1
      %v706 = vpop.permute.xlu0 %705
      %707 = vrot.lane.b32.xlu0 %v484, 1
      %v708 = vpop.permute.xlu0 %707
      %709 = vrot.lane.b32.xlu0 %v486, 1
      %v710 = vpop.permute.xlu0 %709
      %711 = vrot.lane.b32.xlu0 %v488, 1
      %v712 = vpop.permute.xlu0 %711
      %713 = vrot.lane.b32.xlu0 %v490, 1
      %v714 = vpop.permute.xlu0 %713
      %715 = vrot.lane.b32.xlu0 %v492, 1
      %v716 = vpop.permute.xlu0 %715
      %717 = vrot.lane.b32.xlu0 %v494, 1
      %v718 = vpop.permute.xlu0 %717
      %719 = vrot.lane.b32.xlu0 %v496, 1
      %v720 = vpop.permute.xlu0 %719
      %721 = vrot.lane.b32.xlu0 %v498, 1
      %v722 = vpop.permute.xlu0 %721
      %723 = vrot.lane.b32.xlu0 %v500, 1
      %v724 = vpop.permute.xlu0 %723
      %725 = vrot.lane.b32.xlu0 %v502, 1
      %v726 = vpop.permute.xlu0 %725
      %727 = vrot.lane.b32.xlu0 %v504, 1
      %v728 = vpop.permute.xlu0 %727
      %729 = vrot.lane.b32.xlu0 %v506, 1
      %v730 = vpop.permute.xlu0 %729
      %731 = vrot.lane.b32.xlu0 %v508, 1
      %v732 = vpop.permute.xlu0 %731
      %733 = vrot.lane.b32.xlu0 %v510, 1
      %v734 = vpop.permute.xlu0 %733
      %735 = vrot.lane.b32.xlu0 %v512, 1
      %v736 = vpop.permute.xlu0 %735
      %737 = vrot.lane.b32.xlu0 %v514, 1
      %v738 = vpop.permute.xlu0 %737
      %739 = vrot.lane.b32.xlu0 %v516, 1
      %v740 = vpop.permute.xlu0 %739
      %741 = vrot.lane.b32.xlu0 %v518, 1
      %v742 = vpop.permute.xlu0 %741
      %743 = vrot.lane.b32.xlu0 %v520, 1
      %v744 = vpop.permute.xlu0 %743
      %745 = vrot.lane.b32.xlu0 %v522, 1
      %v746 = vpop.permute.xlu0 %745
      %747 = vrot.lane.b32.xlu0 %v524, 1
      %v748 = vpop.permute.xlu0 %747
      %749 = vrot.lane.b32.xlu0 %v526, 1
      %v750 = vpop.permute.xlu0 %749
      %751 = vrot.lane.b32.xlu0 %v528, 1
      %v752 = vpop.permute.xlu0 %751
      %753 = vrot.lane.b32.xlu0 %v530, 1
      %v754 = vpop.permute.xlu0 %753
      %755 = vrot.lane.b32.xlu0 %v532, 1
      %v756 = vpop.permute.xlu0 %755
      %757 = vrot.lane.b32.xlu0 %v534, 1
      %v758 = vpop.permute.xlu0 %757
      %759 = vrot.lane.b32.xlu0 %v536, 1
      %v760 = vpop.permute.xlu0 %759
      %761 = vrot.lane.b32.xlu0 %v538, 1
      %v762 = vpop.permute.xlu0 %761
      %763 = vrot.lane.b32.xlu0 %v540, 1
      %v764 = vpop.permute.xlu0 %763
      %765 = vrot.lane.b32.xlu0 %v542, 1
      %v766 = vpop.permute.xlu0 %765
      %767 = vrot.lane.b32.xlu0 %v544, 1
      %v768 = vpop.permute.xlu0 %767
      %769 = vrot.lane.b32.xlu0 %v546, 1
      %v770 = vpop.permute.xlu0 %769
      %771 = vrot.lane.b32.xlu0 %v548, 1
      %v772 = vpop.permute.xlu0 %771
      %773 = vrot.lane.b32.xlu0 %v550, 1
      %v774 = vpop.permute.xlu0 %773
      %775 = vrot.lane.b32.xlu0 %v552, 1
      %v776 = vpop.permute.xlu0 %775
      %777 = vrot.lane.b32.xlu0 %v554, 1
      %v778 = vpop.permute.xlu0 %777
      %779 = vrot.lane.b32.xlu0 %v556, 1
      %v780 = vpop.permute.xlu0 %779
      %781 = vrot.lane.b32.xlu0 %v558, 1
      %v782 = vpop.permute.xlu0 %781
      %783 = vrot.lane.b32.xlu0 %v560, 1
      %v784 = vpop.permute.xlu0 %783
      %785 = vrot.lane.b32.xlu0 %v562, 1
      %v786 = vpop.permute.xlu0 %785
      %787 = vrot.lane.b32.xlu0 %v564, 1
      %v788 = vpop.permute.xlu0 %787
      %789 = vrot.lane.b32.xlu0 %v566, 1
      %v790 = vpop.permute.xlu0 %789
      %791 = vrot.lane.b32.xlu0 %v568, 1
      %v792 = vpop.permute.xlu0 %791
      %793 = vrot.lane.b32.xlu0 %v570, 1
      %v794 = vpop.permute.xlu0 %793
      %795 = vrot.lane.b32.xlu0 %v572, 1
      %v796 = vpop.permute.xlu0 %795
      %797 = vrot.lane.b32.xlu0 %v574, 1
      %v798 = vpop.permute.xlu0 %797
      %799 = vrot.lane.b32.xlu0 %v576, 1
      %v800 = vpop.permute.xlu0 %799
      %801 = vrot.lane.b32.xlu0 %v578, 1
      %v802 = vpop.permute.xlu0 %801
      %803 = vrot.lane.b32.xlu0 %v580, 1
      %v804 = vpop.permute.xlu0 %803
      %805 = vrot.lane.b32.xlu0 %v582, 1
      %v806 = vpop.permute.xlu0 %805
      %807 = vrot.lane.b32.xlu0 %v584, 1
      %v808 = vpop.permute.xlu0 %807
      %809 = vrot.lane.b32.xlu0 %v586, 1
      %v810 = vpop.permute.xlu0 %809
      %811 = vrot.lane.b32.xlu0 %v588, 1
      %v812 = vpop.permute.xlu0 %811
      %813 = vrot.lane.b32.xlu0 %v590, 1
      %v814 = vpop.permute.xlu0 %813
      %815 = vrot.lane.b32.xlu0 %v592, 1
      %v816 = vpop.permute.xlu0 %815
      %817 = vrot.lane.b32.xlu0 %v594, 1
      %v818 = vpop.permute.xlu0 %817
      %819 = vrot.lane.b32.xlu0 %v596, 1
      %v820 = vpop.permute.xlu0 %819
      %821 = vrot.lane.b32.xlu0 %v598, 1
      %v822 = vpop.permute.xlu0 %821
      %823 = vrot.lane.b32.xlu0 %v600, 1
      %v824 = vpop.permute.xlu0 %823
      %825 = vrot.lane.b32.xlu0 %v602, 1
      %v826 = vpop.permute.xlu0 %825
      %827 = vrot.lane.b32.xlu0 %v604, 1
      %v828 = vpop.permute.xlu0 %827
      %829 = vrot.lane.b32.xlu0 %v606, 1
      %v830 = vpop.permute.xlu0 %829
      %831 = vrot.lane.b32.xlu0 %v608, 1
      %v832 = vpop.permute.xlu0 %831
      %833 = vrot.lane.b32.xlu0 %v610, 1
      %v834 = vpop.permute.xlu0 %833
      %835 = vrot.lane.b32.xlu0 %v612, 1
      %v836 = vpop.permute.xlu0 %835
      %837 = vrot.lane.b32.xlu0 %v614, 1
      %v838 = vpop.permute.xlu0 %837
      %839 = vrot.lane.b32.xlu0 %v616, 1
      %v840 = vpop.permute.xlu0 %839
      %841 = vrot.lane.b32.xlu0 %v618, 1
      %v842 = vpop.permute.xlu0 %841
      %843 = vrot.lane.b32.xlu0 %v620, 1
      %v844 = vpop.permute.xlu0 %843
      %845 = vrot.lane.b32.xlu0 %v622, 1
      %v846 = vpop.permute.xlu0 %845
      %847 = vrot.lane.b32.xlu0 %v624, 1
      %v848 = vpop.permute.xlu0 %847
      %849 = vrot.lane.b32.xlu0 %v626, 1
      %v850 = vpop.permute.xlu0 %849
      %851 = vrot.lane.b32.xlu0 %v628, 1
      %v852 = vpop.permute.xlu0 %851
      %853 = vrot.lane.b32.xlu0 %v630, 1
      %v854 = vpop.permute.xlu0 %853
      %855 = vrot.lane.b32.xlu0 %v632, 1
      %v856 = vpop.permute.xlu0 %855
      %857 = vrot.lane.b32.xlu0 %v634, 1
      %v858 = vpop.permute.xlu0 %857
      %859 = vrot.lane.b32.xlu0 %v636, 1
      %v860 = vpop.permute.xlu0 %859
      %861 = vrot.lane.b32.xlu0 %v638, 1
      %v862 = vpop.permute.xlu0 %861
      %863 = vrot.lane.b32.xlu0 %v640, 1
      %v864 = vpop.permute.xlu0 %863
      %865 = vrot.lane.b32.xlu0 %v642, 1
      %v866 = vpop.permute.xlu0 %865
      %867 = vrot.lane.b32.xlu0 %v644, 1
      %v868 = vpop.permute.xlu0 %867
      %869 = vrot.lane.b32.xlu0 %v646, 1
      %v870 = vpop.permute.xlu0 %869
      %871 = vrot.lane.b32.xlu0 %v648, 1
      %v872 = vpop.permute.xlu0 %871
      %873 = vrot.lane.b32.xlu0 %v650, 1
      %v874 = vpop.permute.xlu0 %873
      %875 = vrot.lane.b32.xlu0 %v652, 1
      %v876 = vpop.permute.xlu0 %875
      %877 = vrot.lane.b32.xlu0 %v654, 1
      %v878 = vpop.permute.xlu0 %877
      %879 = vrot.lane.b32.xlu0 %v656, 1
      %v880 = vpop.permute.xlu0 %879
      %881 = vrot.lane.b32.xlu0 %v658, 1
      %v882 = vpop.permute.xlu0 %881
      %883 = vrot.lane.b32.xlu0 %v657, 1
      %v884 = vpop.permute.xlu0 %883
      %vm998 = vcmask 1045504
      %v999 = vrot.slane %v199, 2
      %v1000 = vrot.slane %v200, 2
      %v1001 = vsel %vm998, %v999, %v1000
      %v1002 = vrot.slane %v201, 2
      %v1003 = vsel %vm998, %v1000, %v1002
      %v1004 = vrot.slane %v202, 2
      %v1005 = vsel %vm998, %v1002, %v1004
      %v1006 = vrot.slane %v203, 2
      %v1007 = vsel %vm998, %v1004, %v1006
      %v1008 = vrot.slane %v204, 2
      %v1009 = vsel %vm998, %v1006, %v1008
      %v1010 = vrot.slane %v205, 2
      %v1011 = vsel %vm998, %v1008, %v1010
      %v1012 = vrot.slane %v206, 2
      %v1013 = vsel %vm998, %v1010, %v1012
      %v1014 = vrot.slane %v207, 2
      %v1015 = vsel %vm998, %v1012, %v1014
      %v1016 = vrot.slane %v208, 2
      %v1017 = vsel %vm998, %v1014, %v1016
      %v1018 = vrot.slane %v209, 2
      %v1019 = vsel %vm998, %v1016, %v1018
      %v1020 = vrot.slane %v210, 2
      %v1021 = vsel %vm998, %v1018, %v1020
      %v1022 = vrot.slane %v211, 2
      %v1023 = vsel %vm998, %v1020, %v1022
      %v1024 = vrot.slane %v212, 2
      %v1025 = vsel %vm998, %v1022, %v1024
      %v1026 = vrot.slane %v213, 2
      %v1027 = vsel %vm998, %v1024, %v1026
      %v1028 = vrot.slane %v214, 2
      %v1029 = vsel %vm998, %v1026, %v1028
      %v1030 = vrot.slane %v215, 2
      %v1031 = vsel %vm998, %v1028, %v1030
      %v1032 = vrot.slane %v216, 2
      %v1033 = vsel %vm998, %v1030, %v1032
      %v1034 = vrot.slane %v217, 2
      %v1035 = vsel %vm998, %v1032, %v1034
      %v1036 = vrot.slane %v218, 2
      %v1037 = vsel %vm998, %v1034, %v1036
      %v1038 = vrot.slane %v219, 2
      %v1039 = vsel %vm998, %v1036, %v1038
      %v1040 = vrot.slane %v220, 2
      %v1041 = vsel %vm998, %v1038, %v1040
      %v1042 = vrot.slane %v221, 2
      %v1043 = vsel %vm998, %v1040, %v1042
      %v1044 = vrot.slane %v222, 2
      %v1045 = vsel %vm998, %v1042, %v1044
      %v1046 = vrot.slane %v223, 2
      %v1047 = vsel %vm998, %v1044, %v1046
      %v1048 = vrot.slane %v224, 2
      %v1049 = vsel %vm998, %v1046, %v1048
      %v1050 = vrot.slane %v225, 2
      %v1051 = vsel %vm998, %v1048, %v1050
      %v1052 = vrot.slane %v226, 2
      %v1053 = vsel %vm998, %v1050, %v1052
      %v1054 = vrot.slane %v227, 2
      %v1055 = vsel %vm998, %v1052, %v1054
      %v1056 = vrot.slane %v228, 2
      %v1057 = vsel %vm998, %v1054, %v1056
      %v1058 = vrot.slane %v229, 2
      %v1059 = vsel %vm998, %v1056, %v1058
      %v1060 = vrot.slane %v230, 2
      %v1061 = vsel %vm998, %v1058, %v1060
      %v1062 = vrot.slane %v231, 2
      %v1063 = vsel %vm998, %v1060, %v1062
      %v1064 = vrot.slane %v232, 2
      %v1065 = vsel %vm998, %v1062, %v1064
      %v1066 = vrot.slane %v233, 2
      %v1067 = vsel %vm998, %v1064, %v1066
      %v1068 = vrot.slane %v234, 2
      %v1069 = vsel %vm998, %v1066, %v1068
      %v1070 = vrot.slane %v235, 2
      %v1071 = vsel %vm998, %v1068, %v1070
      %v1072 = vrot.slane %v236, 2
      %v1073 = vsel %vm998, %v1070, %v1072
      %v1074 = vrot.slane %v237, 2
      %v1075 = vsel %vm998, %v1072, %v1074
      %v1076 = vrot.slane %v238, 2
      %v1077 = vsel %vm998, %v1074, %v1076
      %v1078 = vrot.slane %v239, 2
      %v1079 = vsel %vm998, %v1076, %v1078
      %v1080 = vrot.slane %v240, 2
      %v1081 = vsel %vm998, %v1078, %v1080
      %v1082 = vrot.slane %v241, 2
      %v1083 = vsel %vm998, %v1080, %v1082
      %v1084 = vrot.slane %v242, 2
      %v1085 = vsel %vm998, %v1082, %v1084
      %v1086 = vrot.slane %v243, 2
      %v1087 = vsel %vm998, %v1084, %v1086
      %v1088 = vrot.slane %v244, 2
      %v1089 = vsel %vm998, %v1086, %v1088
      %v1090 = vrot.slane %v245, 2
      %v1091 = vsel %vm998, %v1088, %v1090
      %v1092 = vrot.slane %v246, 2
      %v1093 = vsel %vm998, %v1090, %v1092
      %v1094 = vrot.slane %v247, 2
      %v1095 = vsel %vm998, %v1092, %v1094
      %v1096 = vrot.slane %v248, 2
      %v1097 = vsel %vm998, %v1094, %v1096
      %v1098 = vrot.slane %v249, 2
      %v1099 = vsel %vm998, %v1096, %v1098
      %v1100 = vrot.slane %v250, 2
      %v1101 = vsel %vm998, %v1098, %v1100
      %v1102 = vrot.slane %v251, 2
      %v1103 = vsel %vm998, %v1100, %v1102
      %v1104 = vrot.slane %v252, 2
      %v1105 = vsel %vm998, %v1102, %v1104
      %v1106 = vrot.slane %v253, 2
      %v1107 = vsel %vm998, %v1104, %v1106
      %v1108 = vrot.slane %v254, 2
      %v1109 = vsel %vm998, %v1106, %v1108
      %v1110 = vrot.slane %v255, 2
      %v1111 = vsel %vm998, %v1108, %v1110
      %v1112 = vrot.slane %v256, 2
      %v1113 = vsel %vm998, %v1110, %v1112
      %v1114 = vrot.slane %v257, 2
      %v1115 = vsel %vm998, %v1112, %v1114
      %v1116 = vrot.slane %v258, 2
      %v1117 = vsel %vm998, %v1114, %v1116
      %v1118 = vrot.slane %v259, 2
      %v1119 = vsel %vm998, %v1116, %v1118
      %v1120 = vrot.slane %v260, 2
      %v1121 = vsel %vm998, %v1118, %v1120
      %v1122 = vrot.slane %v261, 2
      %v1123 = vsel %vm998, %v1120, %v1122
      %v1124 = vrot.slane %v262, 2
      %v1125 = vsel %vm998, %v1122, %v1124
      %v1126 = vrot.slane %v263, 2
      %v1127 = vsel %vm998, %v1124, %v1126
      %v1128 = vrot.slane %v264, 2
      %v1129 = vsel %vm998, %v1126, %v1128
      %v1130 = vrot.slane %v265, 2
      %v1131 = vsel %vm998, %v1128, %v1130
      %v1132 = vrot.slane %v266, 2
      %v1133 = vsel %vm998, %v1130, %v1132
      %v1134 = vrot.slane %v267, 2
      %v1135 = vsel %vm998, %v1132, %v1134
      %v1136 = vrot.slane %v268, 2
      %v1137 = vsel %vm998, %v1134, %v1136
      %v1138 = vrot.slane %v269, 2
      %v1139 = vsel %vm998, %v1136, %v1138
      %v1140 = vrot.slane %v270, 2
      %v1141 = vsel %vm998, %v1138, %v1140
      %v1142 = vrot.slane %v271, 2
      %v1143 = vsel %vm998, %v1140, %v1142
      %v1144 = vrot.slane %v272, 2
      %v1145 = vsel %vm998, %v1142, %v1144
      %v1146 = vrot.slane %v273, 2
      %v1147 = vsel %vm998, %v1144, %v1146
      %v1148 = vrot.slane %v274, 2
      %v1149 = vsel %vm998, %v1146, %v1148
      %v1150 = vrot.slane %v275, 2
      %v1151 = vsel %vm998, %v1148, %v1150
      %v1152 = vrot.slane %v276, 2
      %v1153 = vsel %vm998, %v1150, %v1152
      %v1154 = vrot.slane %v277, 2
      %v1155 = vsel %vm998, %v1152, %v1154
      %v1156 = vrot.slane %v278, 2
      %v1157 = vsel %vm998, %v1154, %v1156
      %v1158 = vrot.slane %v279, 2
      %v1159 = vsel %vm998, %v1156, %v1158
      %v1160 = vrot.slane %v280, 2
      %v1161 = vsel %vm998, %v1158, %v1160
      %v1162 = vrot.slane %v281, 2
      %v1163 = vsel %vm998, %v1160, %v1162
      %v1164 = vrot.slane %v282, 2
      %v1165 = vsel %vm998, %v1162, %v1164
      %v1166 = vrot.slane %v283, 2
      %v1167 = vsel %vm998, %v1164, %v1166
      %v1168 = vrot.slane %v284, 2
      %v1169 = vsel %vm998, %v1166, %v1168
      %v1170 = vrot.slane %v285, 2
      %v1171 = vsel %vm998, %v1168, %v1170
      %v1172 = vrot.slane %v286, 2
      %v1173 = vsel %vm998, %v1170, %v1172
      %v1174 = vrot.slane %v287, 2
      %v1175 = vsel %vm998, %v1172, %v1174
      %v1176 = vrot.slane %v288, 2
      %v1177 = vsel %vm998, %v1174, %v1176
      %v1178 = vrot.slane %v289, 2
      %v1179 = vsel %vm998, %v1176, %v1178
      %v1180 = vrot.slane %v290, 2
      %v1181 = vsel %vm998, %v1178, %v1180
      %v1182 = vrot.slane %v291, 2
      %v1183 = vsel %vm998, %v1180, %v1182
      %v1184 = vrot.slane %v292, 2
      %v1185 = vsel %vm998, %v1182, %v1184
      %v1186 = vrot.slane %v293, 2
      %v1187 = vsel %vm998, %v1184, %v1186
      %v1188 = vrot.slane %v294, 2
      %v1189 = vsel %vm998, %v1186, %v1188
      %v1190 = vrot.slane %v295, 2
      %v1191 = vsel %vm998, %v1188, %v1190
      %v1192 = vrot.slane %v296, 2
      %v1193 = vsel %vm998, %v1190, %v1192
      %v1194 = vrot.slane %v297, 2
      %v1195 = vsel %vm998, %v1192, %v1194
      %v1196 = vrot.slane %v298, 2
      %v1197 = vsel %vm998, %v1194, %v1196
      %v1198 = vrot.slane %v299, 2
      %v1199 = vsel %vm998, %v1196, %v1198
      %v1200 = vrot.slane %v300, 2
      %v1201 = vsel %vm998, %v1198, %v1200
      %v1202 = vrot.slane %v301, 2
      %v1203 = vsel %vm998, %v1200, %v1202
      %v1204 = vrot.slane %v302, 2
      %v1205 = vsel %vm998, %v1202, %v1204
      %v1206 = vrot.slane %v303, 2
      %v1207 = vsel %vm998, %v1204, %v1206
      %v1208 = vrot.slane %v304, 2
      %v1209 = vsel %vm998, %v1206, %v1208
      %v1210 = vrot.slane %v305, 2
      %v1211 = vsel %vm998, %v1208, %v1210
      %v1212 = vrot.slane %v306, 2
      %v1213 = vsel %vm998, %v1210, %v1212
      %v1214 = vrot.slane %v307, 2
      %v1215 = vsel %vm998, %v1212, %v1214
      %v1216 = vrot.slane %v308, 2
      %v1217 = vsel %vm998, %v1214, %v1216
      %v1218 = vrot.slane %v309, 2
      %v1219 = vsel %vm998, %v1216, %v1218
      %v1220 = vrot.slane %v310, 2
      %v1221 = vsel %vm998, %v1218, %v1220
      %v1222 = vrot.slane %v311, 2
      %v1223 = vsel %vm998, %v1220, %v1222
      %1224 = vrot.lane.b32.xlu0 %v1001, 2
      %v1225 = vpop.permute.xlu0 %1224
      %1226 = vrot.lane.b32.xlu0 %v1003, 2
      %v1227 = vpop.permute.xlu0 %1226
      %1228 = vrot.lane.b32.xlu0 %v1005, 2
      %v1229 = vpop.permute.xlu0 %1228
      %1230 = vrot.lane.b32.xlu0 %v1007, 2
      %v1231 = vpop.permute.xlu0 %1230
      %1232 = vrot.lane.b32.xlu0 %v1009, 2
      %v1233 = vpop.permute.xlu0 %1232
      %1234 = vrot.lane.b32.xlu0 %v1011, 2
      %v1235 = vpop.permute.xlu0 %1234
      %1236 = vrot.lane.b32.xlu0 %v1013, 2
      %v1237 = vpop.permute.xlu0 %1236
      %1238 = vrot.lane.b32.xlu0 %v1015, 2
      %v1239 = vpop.permute.xlu0 %1238
      %1240 = vrot.lane.b32.xlu0 %v1017, 2
      %v1241 = vpop.permute.xlu0 %1240
      %1242 = vrot.lane.b32.xlu0 %v1019, 2
      %v1243 = vpop.permute.xlu0 %1242
      %1244 = vrot.lane.b32.xlu0 %v1021, 2
      %v1245 = vpop.permute.xlu0 %1244
      %1246 = vrot.lane.b32.xlu0 %v1023, 2
      %v1247 = vpop.permute.xlu0 %1246
      %1248 = vrot.lane.b32.xlu0 %v1025, 2
      %v1249 = vpop.permute.xlu0 %1248
      %1250 = vrot.lane.b32.xlu0 %v1027, 2
      %v1251 = vpop.permute.xlu0 %1250
      %1252 = vrot.lane.b32.xlu0 %v1029, 2
      %v1253 = vpop.permute.xlu0 %1252
      %1254 = vrot.lane.b32.xlu0 %v1031, 2
      %v1255 = vpop.permute.xlu0 %1254
      %1256 = vrot.lane.b32.xlu0 %v1033, 2
      %v1257 = vpop.permute.xlu0 %1256
      %1258 = vrot.lane.b32.xlu0 %v1035, 2
      %v1259 = vpop.permute.xlu0 %1258
      %1260 = vrot.lane.b32.xlu0 %v1037, 2
      %v1261 = vpop.permute.xlu0 %1260
      %1262 = vrot.lane.b32.xlu0 %v1039, 2
      %v1263 = vpop.permute.xlu0 %1262
      %1264 = vrot.lane.b32.xlu0 %v1041, 2
      %v1265 = vpop.permute.xlu0 %1264
      %1266 = vrot.lane.b32.xlu0 %v1043, 2
      %v1267 = vpop.permute.xlu0 %1266
      %1268 = vrot.lane.b32.xlu0 %v1045, 2
      %v1269 = vpop.permute.xlu0 %1268
      %1270 = vrot.lane.b32.xlu0 %v1047, 2
      %v1271 = vpop.permute.xlu0 %1270
      %1272 = vrot.lane.b32.xlu0 %v1049, 2
      %v1273 = vpop.permute.xlu0 %1272
      %1274 = vrot.lane.b32.xlu0 %v1051, 2
      %v1275 = vpop.permute.xlu0 %1274
      %1276 = vrot.lane.b32.xlu0 %v1053, 2
      %v1277 = vpop.permute.xlu0 %1276
      %1278 = vrot.lane.b32.xlu0 %v1055, 2
      %v1279 = vpop.permute.xlu0 %1278
      %1280 = vrot.lane.b32.xlu0 %v1057, 2
      %v1281 = vpop.permute.xlu0 %1280
      %1282 = vrot.lane.b32.xlu0 %v1059, 2
      %v1283 = vpop.permute.xlu0 %1282
      %1284 = vrot.lane.b32.xlu0 %v1061, 2
      %v1285 = vpop.permute.xlu0 %1284
      %1286 = vrot.lane.b32.xlu0 %v1063, 2
      %v1287 = vpop.permute.xlu0 %1286
      %1288 = vrot.lane.b32.xlu0 %v1065, 2
      %v1289 = vpop.permute.xlu0 %1288
      %1290 = vrot.lane.b32.xlu0 %v1067, 2
      %v1291 = vpop.permute.xlu0 %1290
      %1292 = vrot.lane.b32.xlu0 %v1069, 2
      %v1293 = vpop.permute.xlu0 %1292
      %1294 = vrot.lane.b32.xlu0 %v1071, 2
      %v1295 = vpop.permute.xlu0 %1294
      %1296 = vrot.lane.b32.xlu0 %v1073, 2
      %v1297 = vpop.permute.xlu0 %1296
      %1298 = vrot.lane.b32.xlu0 %v1075, 2
      %v1299 = vpop.permute.xlu0 %1298
      %1300 = vrot.lane.b32.xlu0 %v1077, 2
      %v1301 = vpop.permute.xlu0 %1300
      %1302 = vrot.lane.b32.xlu0 %v1079, 2
      %v1303 = vpop.permute.xlu0 %1302
      %1304 = vrot.lane.b32.xlu0 %v1081, 2
      %v1305 = vpop.permute.xlu0 %1304
      %1306 = vrot.lane.b32.xlu0 %v1083, 2
      %v1307 = vpop.permute.xlu0 %1306
      %1308 = vrot.lane.b32.xlu0 %v1085, 2
      %v1309 = vpop.permute.xlu0 %1308
      %1310 = vrot.lane.b32.xlu0 %v1087, 2
      %v1311 = vpop.permute.xlu0 %1310
      %1312 = vrot.lane.b32.xlu0 %v1089, 2
      %v1313 = vpop.permute.xlu0 %1312
      %1314 = vrot.lane.b32.xlu0 %v1091, 2
      %v1315 = vpop.permute.xlu0 %1314
      %1316 = vrot.lane.b32.xlu0 %v1093, 2
      %v1317 = vpop.permute.xlu0 %1316
      %1318 = vrot.lane.b32.xlu0 %v1095, 2
      %v1319 = vpop.permute.xlu0 %1318
      %1320 = vrot.lane.b32.xlu0 %v1097, 2
      %v1321 = vpop.permute.xlu0 %1320
      %1322 = vrot.lane.b32.xlu0 %v1099, 2
      %v1323 = vpop.permute.xlu0 %1322
      %1324 = vrot.lane.b32.xlu0 %v1101, 2
      %v1325 = vpop.permute.xlu0 %1324
      %1326 = vrot.lane.b32.xlu0 %v1103, 2
      %v1327 = vpop.permute.xlu0 %1326
      %1328 = vrot.lane.b32.xlu0 %v1105, 2
      %v1329 = vpop.permute.xlu0 %1328
      %1330 = vrot.lane.b32.xlu0 %v1107, 2
      %v1331 = vpop.permute.xlu0 %1330
      %1332 = vrot.lane.b32.xlu0 %v1109, 2
      %v1333 = vpop.permute.xlu0 %1332
      %1334 = vrot.lane.b32.xlu0 %v1111, 2
      %v1335 = vpop.permute.xlu0 %1334
      %1336 = vrot.lane.b32.xlu0 %v1113, 2
      %v1337 = vpop.permute.xlu0 %1336
      %1338 = vrot.lane.b32.xlu0 %v1115, 2
      %v1339 = vpop.permute.xlu0 %1338
      %1340 = vrot.lane.b32.xlu0 %v1117, 2
      %v1341 = vpop.permute.xlu0 %1340
      %1342 = vrot.lane.b32.xlu0 %v1119, 2
      %v1343 = vpop.permute.xlu0 %1342
      %1344 = vrot.lane.b32.xlu0 %v1121, 2
      %v1345 = vpop.permute.xlu0 %1344
      %1346 = vrot.lane.b32.xlu0 %v1123, 2
      %v1347 = vpop.permute.xlu0 %1346
      %1348 = vrot.lane.b32.xlu0 %v1125, 2
      %v1349 = vpop.permute.xlu0 %1348
      %1350 = vrot.lane.b32.xlu0 %v1127, 2
      %v1351 = vpop.permute.xlu0 %1350
      %1352 = vrot.lane.b32.xlu0 %v1129, 2
      %v1353 = vpop.permute.xlu0 %1352
      %1354 = vrot.lane.b32.xlu0 %v1131, 2
      %v1355 = vpop.permute.xlu0 %1354
      %1356 = vrot.lane.b32.xlu0 %v1133, 2
      %v1357 = vpop.permute.xlu0 %1356
      %1358 = vrot.lane.b32.xlu0 %v1135, 2
      %v1359 = vpop.permute.xlu0 %1358
      %1360 = vrot.lane.b32.xlu0 %v1137, 2
      %v1361 = vpop.permute.xlu0 %1360
      %1362 = vrot.lane.b32.xlu0 %v1139, 2
      %v1363 = vpop.permute.xlu0 %1362
      %1364 = vrot.lane.b32.xlu0 %v1141, 2
      %v1365 = vpop.permute.xlu0 %1364
      %1366 = vrot.lane.b32.xlu0 %v1143, 2
      %v1367 = vpop.permute.xlu0 %1366
      %1368 = vrot.lane.b32.xlu0 %v1145, 2
      %v1369 = vpop.permute.xlu0 %1368
      %1370 = vrot.lane.b32.xlu0 %v1147, 2
      %v1371 = vpop.permute.xlu0 %1370
      %1372 = vrot.lane.b32.xlu0 %v1149, 2
      %v1373 = vpop.permute.xlu0 %1372
      %1374 = vrot.lane.b32.xlu0 %v1151, 2
      %v1375 = vpop.permute.xlu0 %1374
      %1376 = vrot.lane.b32.xlu0 %v1153, 2
      %v1377 = vpop.permute.xlu0 %1376
      %1378 = vrot.lane.b32.xlu0 %v1155, 2
      %v1379 = vpop.permute.xlu0 %1378
      %1380 = vrot.lane.b32.xlu0 %v1157, 2
      %v1381 = vpop.permute.xlu0 %1380
      %1382 = vrot.lane.b32.xlu0 %v1159, 2
      %v1383 = vpop.permute.xlu0 %1382
      %1384 = vrot.lane.b32.xlu0 %v1161, 2
      %v1385 = vpop.permute.xlu0 %1384
      %1386 = vrot.lane.b32.xlu0 %v1163, 2
      %v1387 = vpop.permute.xlu0 %1386
      %1388 = vrot.lane.b32.xlu0 %v1165, 2
      %v1389 = vpop.permute.xlu0 %1388
      %1390 = vrot.lane.b32.xlu0 %v1167, 2
      %v1391 = vpop.permute.xlu0 %1390
      %1392 = vrot.lane.b32.xlu0 %v1169, 2
      %v1393 = vpop.permute.xlu0 %1392
      %1394 = vrot.lane.b32.xlu0 %v1171, 2
      %v1395 = vpop.permute.xlu0 %1394
      %1396 = vrot.lane.b32.xlu0 %v1173, 2
      %v1397 = vpop.permute.xlu0 %1396
      %1398 = vrot.lane.b32.xlu0 %v1175, 2
      %v1399 = vpop.permute.xlu0 %1398
      %1400 = vrot.lane.b32.xlu0 %v1177, 2
      %v1401 = vpop.permute.xlu0 %1400
      %1402 = vrot.lane.b32.xlu0 %v1179, 2
      %v1403 = vpop.permute.xlu0 %1402
      %1404 = vrot.lane.b32.xlu0 %v1181, 2
      %v1405 = vpop.permute.xlu0 %1404
      %1406 = vrot.lane.b32.xlu0 %v1183, 2
      %v1407 = vpop.permute.xlu0 %1406
      %1408 = vrot.lane.b32.xlu0 %v1185, 2
      %v1409 = vpop.permute.xlu0 %1408
      %1410 = vrot.lane.b32.xlu0 %v1187, 2
      %v1411 = vpop.permute.xlu0 %1410
      %1412 = vrot.lane.b32.xlu0 %v1189, 2
      %v1413 = vpop.permute.xlu0 %1412
      %1414 = vrot.lane.b32.xlu0 %v1191, 2
      %v1415 = vpop.permute.xlu0 %1414
      %1416 = vrot.lane.b32.xlu0 %v1193, 2
      %v1417 = vpop.permute.xlu0 %1416
      %1418 = vrot.lane.b32.xlu0 %v1195, 2
      %v1419 = vpop.permute.xlu0 %1418
      %1420 = vrot.lane.b32.xlu0 %v1197, 2
      %v1421 = vpop.permute.xlu0 %1420
      %1422 = vrot.lane.b32.xlu0 %v1199, 2
      %v1423 = vpop.permute.xlu0 %1422
      %1424 = vrot.lane.b32.xlu0 %v1201, 2
      %v1425 = vpop.permute.xlu0 %1424
      %1426 = vrot.lane.b32.xlu0 %v1203, 2
      %v1427 = vpop.permute.xlu0 %1426
      %1428 = vrot.lane.b32.xlu0 %v1205, 2
      %v1429 = vpop.permute.xlu0 %1428
      %1430 = vrot.lane.b32.xlu0 %v1207, 2
      %v1431 = vpop.permute.xlu0 %1430
      %1432 = vrot.lane.b32.xlu0 %v1209, 2
      %v1433 = vpop.permute.xlu0 %1432
      %1434 = vrot.lane.b32.xlu0 %v1211, 2
      %v1435 = vpop.permute.xlu0 %1434
      %1436 = vrot.lane.b32.xlu0 %v1213, 2
      %v1437 = vpop.permute.xlu0 %1436
      %1438 = vrot.lane.b32.xlu0 %v1215, 2
      %v1439 = vpop.permute.xlu0 %1438
      %1440 = vrot.lane.b32.xlu0 %v1217, 2
      %v1441 = vpop.permute.xlu0 %1440
      %1442 = vrot.lane.b32.xlu0 %v1219, 2
      %v1443 = vpop.permute.xlu0 %1442
      %1444 = vrot.lane.b32.xlu0 %v1221, 2
      %v1445 = vpop.permute.xlu0 %1444
      %1446 = vrot.lane.b32.xlu0 %v1223, 2
      %v1447 = vpop.permute.xlu0 %1446
      %1448 = vrot.lane.b32.xlu0 %v1222, 2
      %v1449 = vpop.permute.xlu0 %1448
      %vm1567 = vcmask 1041408
      %v1568 = vrot.slane %v202, 6
      %v1569 = vrot.slane %v203, 6
      %v1570 = vsel %vm1567, %v1568, %v1569
      %v1571 = vrot.slane %v204, 6
      %v1572 = vsel %vm1567, %v1569, %v1571
      %v1573 = vrot.slane %v205, 6
      %v1574 = vsel %vm1567, %v1571, %v1573
      %v1575 = vrot.slane %v206, 6
      %v1576 = vsel %vm1567, %v1573, %v1575
      %v1577 = vrot.slane %v207, 6
      %v1578 = vsel %vm1567, %v1575, %v1577
      %v1579 = vrot.slane %v208, 6
      %v1580 = vsel %vm1567, %v1577, %v1579
      %v1581 = vrot.slane %v209, 6
      %v1582 = vsel %vm1567, %v1579, %v1581
      %v1583 = vrot.slane %v210, 6
      %v1584 = vsel %vm1567, %v1581, %v1583
      %v1585 = vrot.slane %v211, 6
      %v1586 = vsel %vm1567, %v1583, %v1585
      %v1587 = vrot.slane %v212, 6
      %v1588 = vsel %vm1567, %v1585, %v1587
      %v1589 = vrot.slane %v213, 6
      %v1590 = vsel %vm1567, %v1587, %v1589
      %v1591 = vrot.slane %v214, 6
      %v1592 = vsel %vm1567, %v1589, %v1591
      %v1593 = vrot.slane %v215, 6
      %v1594 = vsel %vm1567, %v1591, %v1593
      %v1595 = vrot.slane %v216, 6
      %v1596 = vsel %vm1567, %v1593, %v1595
      %v1597 = vrot.slane %v217, 6
      %v1598 = vsel %vm1567, %v1595, %v1597
      %v1599 = vrot.slane %v218, 6
      %v1600 = vsel %vm1567, %v1597, %v1599
      %v1601 = vrot.slane %v219, 6
      %v1602 = vsel %vm1567, %v1599, %v1601
      %v1603 = vrot.slane %v220, 6
      %v1604 = vsel %vm1567, %v1601, %v1603
      %v1605 = vrot.slane %v221, 6
      %v1606 = vsel %vm1567, %v1603, %v1605
      %v1607 = vrot.slane %v222, 6
      %v1608 = vsel %vm1567, %v1605, %v1607
      %v1609 = vrot.slane %v223, 6
      %v1610 = vsel %vm1567, %v1607, %v1609
      %v1611 = vrot.slane %v224, 6
      %v1612 = vsel %vm1567, %v1609, %v1611
      %v1613 = vrot.slane %v225, 6
      %v1614 = vsel %vm1567, %v1611, %v1613
      %v1615 = vrot.slane %v226, 6
      %v1616 = vsel %vm1567, %v1613, %v1615
      %v1617 = vrot.slane %v227, 6
      %v1618 = vsel %vm1567, %v1615, %v1617
      %v1619 = vrot.slane %v228, 6
      %v1620 = vsel %vm1567, %v1617, %v1619
      %v1621 = vrot.slane %v229, 6
      %v1622 = vsel %vm1567, %v1619, %v1621
      %v1623 = vrot.slane %v230, 6
      %v1624 = vsel %vm1567, %v1621, %v1623
      %v1625 = vrot.slane %v231, 6
      %v1626 = vsel %vm1567, %v1623, %v1625
      %v1627 = vrot.slane %v232, 6
      %v1628 = vsel %vm1567, %v1625, %v1627
      %v1629 = vrot.slane %v233, 6
      %v1630 = vsel %vm1567, %v1627, %v1629
      %v1631 = vrot.slane %v234, 6
      %v1632 = vsel %vm1567, %v1629, %v1631
      %v1633 = vrot.slane %v235, 6
      %v1634 = vsel %vm1567, %v1631, %v1633
      %v1635 = vrot.slane %v236, 6
      %v1636 = vsel %vm1567, %v1633, %v1635
      %v1637 = vrot.slane %v237, 6
      %v1638 = vsel %vm1567, %v1635, %v1637
      %v1639 = vrot.slane %v238, 6
      %v1640 = vsel %vm1567, %v1637, %v1639
      %v1641 = vrot.slane %v239, 6
      %v1642 = vsel %vm1567, %v1639, %v1641
      %v1643 = vrot.slane %v240, 6
      %v1644 = vsel %vm1567, %v1641, %v1643
      %v1645 = vrot.slane %v241, 6
      %v1646 = vsel %vm1567, %v1643, %v1645
      %v1647 = vrot.slane %v242, 6
      %v1648 = vsel %vm1567, %v1645, %v1647
      %v1649 = vrot.slane %v243, 6
      %v1650 = vsel %vm1567, %v1647, %v1649
      %v1651 = vrot.slane %v244, 6
      %v1652 = vsel %vm1567, %v1649, %v1651
      %v1653 = vrot.slane %v245, 6
      %v1654 = vsel %vm1567, %v1651, %v1653
      %v1655 = vrot.slane %v246, 6
      %v1656 = vsel %vm1567, %v1653, %v1655
      %v1657 = vrot.slane %v247, 6
      %v1658 = vsel %vm1567, %v1655, %v1657
      %v1659 = vrot.slane %v248, 6
      %v1660 = vsel %vm1567, %v1657, %v1659
      %v1661 = vrot.slane %v249, 6
      %v1662 = vsel %vm1567, %v1659, %v1661
      %v1663 = vrot.slane %v250, 6
      %v1664 = vsel %vm1567, %v1661, %v1663
      %v1665 = vrot.slane %v251, 6
      %v1666 = vsel %vm1567, %v1663, %v1665
      %v1667 = vrot.slane %v252, 6
      %v1668 = vsel %vm1567, %v1665, %v1667
      %v1669 = vrot.slane %v253, 6
      %v1670 = vsel %vm1567, %v1667, %v1669
      %v1671 = vrot.slane %v254, 6
      %v1672 = vsel %vm1567, %v1669, %v1671
      %v1673 = vrot.slane %v255, 6
      %v1674 = vsel %vm1567, %v1671, %v1673
      %v1675 = vrot.slane %v256, 6
      %v1676 = vsel %vm1567, %v1673, %v1675
      %v1677 = vrot.slane %v257, 6
      %v1678 = vsel %vm1567, %v1675, %v1677
      %v1679 = vrot.slane %v258, 6
      %v1680 = vsel %vm1567, %v1677, %v1679
      %v1681 = vrot.slane %v259, 6
      %v1682 = vsel %vm1567, %v1679, %v1681
      %v1683 = vrot.slane %v260, 6
      %v1684 = vsel %vm1567, %v1681, %v1683
      %v1685 = vrot.slane %v261, 6
      %v1686 = vsel %vm1567, %v1683, %v1685
      %v1687 = vrot.slane %v262, 6
      %v1688 = vsel %vm1567, %v1685, %v1687
      %v1689 = vrot.slane %v263, 6
      %v1690 = vsel %vm1567, %v1687, %v1689
      %v1691 = vrot.slane %v264, 6
      %v1692 = vsel %vm1567, %v1689, %v1691
      %v1693 = vrot.slane %v265, 6
      %v1694 = vsel %vm1567, %v1691, %v1693
      %v1695 = vrot.slane %v266, 6
      %v1696 = vsel %vm1567, %v1693, %v1695
      %v1697 = vrot.slane %v267, 6
      %v1698 = vsel %vm1567, %v1695, %v1697
      %v1699 = vrot.slane %v268, 6
      %v1700 = vsel %vm1567, %v1697, %v1699
      %v1701 = vrot.slane %v269, 6
      %v1702 = vsel %vm1567, %v1699, %v1701
      %v1703 = vrot.slane %v270, 6
      %v1704 = vsel %vm1567, %v1701, %v1703
      %v1705 = vrot.slane %v271, 6
      %v1706 = vsel %vm1567, %v1703, %v1705
      %v1707 = vrot.slane %v272, 6
      %v1708 = vsel %vm1567, %v1705, %v1707
      %v1709 = vrot.slane %v273, 6
      %v1710 = vsel %vm1567, %v1707, %v1709
      %v1711 = vrot.slane %v274, 6
      %v1712 = vsel %vm1567, %v1709, %v1711
      %v1713 = vrot.slane %v275, 6
      %v1714 = vsel %vm1567, %v1711, %v1713
      %v1715 = vrot.slane %v276, 6
      %v1716 = vsel %vm1567, %v1713, %v1715
      %v1717 = vrot.slane %v277, 6
      %v1718 = vsel %vm1567, %v1715, %v1717
      %v1719 = vrot.slane %v278, 6
      %v1720 = vsel %vm1567, %v1717, %v1719
      %v1721 = vrot.slane %v279, 6
      %v1722 = vsel %vm1567, %v1719, %v1721
      %v1723 = vrot.slane %v280, 6
      %v1724 = vsel %vm1567, %v1721, %v1723
      %v1725 = vrot.slane %v281, 6
      %v1726 = vsel %vm1567, %v1723, %v1725
      %v1727 = vrot.slane %v282, 6
      %v1728 = vsel %vm1567, %v1725, %v1727
      %v1729 = vrot.slane %v283, 6
      %v1730 = vsel %vm1567, %v1727, %v1729
      %v1731 = vrot.slane %v284, 6
      %v1732 = vsel %vm1567, %v1729, %v1731
      %v1733 = vrot.slane %v285, 6
      %v1734 = vsel %vm1567, %v1731, %v1733
      %v1735 = vrot.slane %v286, 6
      %v1736 = vsel %vm1567, %v1733, %v1735
      %v1737 = vrot.slane %v287, 6
      %v1738 = vsel %vm1567, %v1735, %v1737
      %v1739 = vrot.slane %v288, 6
      %v1740 = vsel %vm1567, %v1737, %v1739
      %v1741 = vrot.slane %v289, 6
      %v1742 = vsel %vm1567, %v1739, %v1741
      %v1743 = vrot.slane %v290, 6
      %v1744 = vsel %vm1567, %v1741, %v1743
      %v1745 = vrot.slane %v291, 6
      %v1746 = vsel %vm1567, %v1743, %v1745
      %v1747 = vrot.slane %v292, 6
      %v1748 = vsel %vm1567, %v1745, %v1747
      %v1749 = vrot.slane %v293, 6
      %v1750 = vsel %vm1567, %v1747, %v1749
      %v1751 = vrot.slane %v294, 6
      %v1752 = vsel %vm1567, %v1749, %v1751
      %v1753 = vrot.slane %v295, 6
      %v1754 = vsel %vm1567, %v1751, %v1753
      %v1755 = vrot.slane %v296, 6
      %v1756 = vsel %vm1567, %v1753, %v1755
      %v1757 = vrot.slane %v297, 6
      %v1758 = vsel %vm1567, %v1755, %v1757
      %v1759 = vrot.slane %v298, 6
      %v1760 = vsel %vm1567, %v1757, %v1759
      %v1761 = vrot.slane %v299, 6
      %v1762 = vsel %vm1567, %v1759, %v1761
      %v1763 = vrot.slane %v300, 6
      %v1764 = vsel %vm1567, %v1761, %v1763
      %v1765 = vrot.slane %v301, 6
      %v1766 = vsel %vm1567, %v1763, %v1765
      %v1767 = vrot.slane %v302, 6
      %v1768 = vsel %vm1567, %v1765, %v1767
      %v1769 = vrot.slane %v303, 6
      %v1770 = vsel %vm1567, %v1767, %v1769
      %v1771 = vrot.slane %v304, 6
      %v1772 = vsel %vm1567, %v1769, %v1771
      %v1773 = vrot.slane %v305, 6
      %v1774 = vsel %vm1567, %v1771, %v1773
      %v1775 = vrot.slane %v306, 6
      %v1776 = vsel %vm1567, %v1773, %v1775
      %v1777 = vrot.slane %v307, 6
      %v1778 = vsel %vm1567, %v1775, %v1777
      %v1779 = vrot.slane %v308, 6
      %v1780 = vsel %vm1567, %v1777, %v1779
      %v1781 = vrot.slane %v309, 6
      %v1782 = vsel %vm1567, %v1779, %v1781
      %v1783 = vrot.slane %v310, 6
      %v1784 = vsel %vm1567, %v1781, %v1783
      %v1785 = vrot.slane %v311, 6
      %v1786 = vsel %vm1567, %v1783, %v1785
      %v1787 = vrot.slane %v312, 6
      %v1788 = vsel %vm1567, %v1785, %v1787
      %v1789 = vrot.slane %v313, 6
      %v1790 = vsel %vm1567, %v1787, %v1789
      %v1791 = vrot.slane %v314, 6
      %v1792 = vsel %vm1567, %v1789, %v1791
      %v1793 = vrot.slane %v315, 6
      %v1794 = vsel %vm1567, %v1791, %v1793
      %1795 = vrot.lane.b32.xlu0 %v1570, 3
      %v1796 = vpop.permute.xlu0 %1795
      %1797 = vrot.lane.b32.xlu0 %v1572, 3
      %v1798 = vpop.permute.xlu0 %1797
      %1799 = vrot.lane.b32.xlu0 %v1574, 3
      %v1800 = vpop.permute.xlu0 %1799
      %1801 = vrot.lane.b32.xlu0 %v1576, 3
      %v1802 = vpop.permute.xlu0 %1801
      %1803 = vrot.lane.b32.xlu0 %v1578, 3
      %v1804 = vpop.permute.xlu0 %1803
      %1805 = vrot.lane.b32.xlu0 %v1580, 3
      %v1806 = vpop.permute.xlu0 %1805
      %1807 = vrot.lane.b32.xlu0 %v1582, 3
      %v1808 = vpop.permute.xlu0 %1807
      %1809 = vrot.lane.b32.xlu0 %v1584, 3
      %v1810 = vpop.permute.xlu0 %1809
      %1811 = vrot.lane.b32.xlu0 %v1586, 3
      %v1812 = vpop.permute.xlu0 %1811
      %1813 = vrot.lane.b32.xlu0 %v1588, 3
      %v1814 = vpop.permute.xlu0 %1813
      %1815 = vrot.lane.b32.xlu0 %v1590, 3
      %v1816 = vpop.permute.xlu0 %1815
      %1817 = vrot.lane.b32.xlu0 %v1592, 3
      %v1818 = vpop.permute.xlu0 %1817
      %1819 = vrot.lane.b32.xlu0 %v1594, 3
      %v1820 = vpop.permute.xlu0 %1819
      %1821 = vrot.lane.b32.xlu0 %v1596, 3
      %v1822 = vpop.permute.xlu0 %1821
      %1823 = vrot.lane.b32.xlu0 %v1598, 3
      %v1824 = vpop.permute.xlu0 %1823
      %1825 = vrot.lane.b32.xlu0 %v1600, 3
      %v1826 = vpop.permute.xlu0 %1825
      %1827 = vrot.lane.b32.xlu0 %v1602, 3
      %v1828 = vpop.permute.xlu0 %1827
      %1829 = vrot.lane.b32.xlu0 %v1604, 3
      %v1830 = vpop.permute.xlu0 %1829
      %1831 = vrot.lane.b32.xlu0 %v1606, 3
      %v1832 = vpop.permute.xlu0 %1831
      %1833 = vrot.lane.b32.xlu0 %v1608, 3
      %v1834 = vpop.permute.xlu0 %1833
      %1835 = vrot.lane.b32.xlu0 %v1610, 3
      %v1836 = vpop.permute.xlu0 %1835
      %1837 = vrot.lane.b32.xlu0 %v1612, 3
      %v1838 = vpop.permute.xlu0 %1837
      %1839 = vrot.lane.b32.xlu0 %v1614, 3
      %v1840 = vpop.permute.xlu0 %1839
      %1841 = vrot.lane.b32.xlu0 %v1616, 3
      %v1842 = vpop.permute.xlu0 %1841
      %1843 = vrot.lane.b32.xlu0 %v1618, 3
      %v1844 = vpop.permute.xlu0 %1843
      %1845 = vrot.lane.b32.xlu0 %v1620, 3
      %v1846 = vpop.permute.xlu0 %1845
      %1847 = vrot.lane.b32.xlu0 %v1622, 3
      %v1848 = vpop.permute.xlu0 %1847
      %1849 = vrot.lane.b32.xlu0 %v1624, 3
      %v1850 = vpop.permute.xlu0 %1849
      %1851 = vrot.lane.b32.xlu0 %v1626, 3
      %v1852 = vpop.permute.xlu0 %1851
      %1853 = vrot.lane.b32.xlu0 %v1628, 3
      %v1854 = vpop.permute.xlu0 %1853
      %1855 = vrot.lane.b32.xlu0 %v1630, 3
      %v1856 = vpop.permute.xlu0 %1855
      %1857 = vrot.lane.b32.xlu0 %v1632, 3
      %v1858 = vpop.permute.xlu0 %1857
      %1859 = vrot.lane.b32.xlu0 %v1634, 3
      %v1860 = vpop.permute.xlu0 %1859
      %1861 = vrot.lane.b32.xlu0 %v1636, 3
      %v1862 = vpop.permute.xlu0 %1861
      %1863 = vrot.lane.b32.xlu0 %v1638, 3
      %v1864 = vpop.permute.xlu0 %1863
      %1865 = vrot.lane.b32.xlu0 %v1640, 3
      %v1866 = vpop.permute.xlu0 %1865
      %1867 = vrot.lane.b32.xlu0 %v1642, 3
      %v1868 = vpop.permute.xlu0 %1867
      %1869 = vrot.lane.b32.xlu0 %v1644, 3
      %v1870 = vpop.permute.xlu0 %1869
      %1871 = vrot.lane.b32.xlu0 %v1646, 3
      %v1872 = vpop.permute.xlu0 %1871
      %1873 = vrot.lane.b32.xlu0 %v1648, 3
      %v1874 = vpop.permute.xlu0 %1873
      %1875 = vrot.lane.b32.xlu0 %v1650, 3
      %v1876 = vpop.permute.xlu0 %1875
      %1877 = vrot.lane.b32.xlu0 %v1652, 3
      %v1878 = vpop.permute.xlu0 %1877
      %1879 = vrot.lane.b32.xlu0 %v1654, 3
      %v1880 = vpop.permute.xlu0 %1879
      %1881 = vrot.lane.b32.xlu0 %v1656, 3
      %v1882 = vpop.permute.xlu0 %1881
      %1883 = vrot.lane.b32.xlu0 %v1658, 3
      %v1884 = vpop.permute.xlu0 %1883
      %1885 = vrot.lane.b32.xlu0 %v1660, 3
      %v1886 = vpop.permute.xlu0 %1885
      %1887 = vrot.lane.b32.xlu0 %v1662, 3
      %v1888 = vpop.permute.xlu0 %1887
      %1889 = vrot.lane.b32.xlu0 %v1664, 3
      %v1890 = vpop.permute.xlu0 %1889
      %1891 = vrot.lane.b32.xlu0 %v1666, 3
      %v1892 = vpop.permute.xlu0 %1891
      %1893 = vrot.lane.b32.xlu0 %v1668, 3
      %v1894 = vpop.permute.xlu0 %1893
      %1895 = vrot.lane.b32.xlu0 %v1670, 3
      %v1896 = vpop.permute.xlu0 %1895
      %1897 = vrot.lane.b32.xlu0 %v1672, 3
      %v1898 = vpop.permute.xlu0 %1897
      %1899 = vrot.lane.b32.xlu0 %v1674, 3
      %v1900 = vpop.permute.xlu0 %1899
      %1901 = vrot.lane.b32.xlu0 %v1676, 3
      %v1902 = vpop.permute.xlu0 %1901
      %1903 = vrot.lane.b32.xlu0 %v1678, 3
      %v1904 = vpop.permute.xlu0 %1903
      %1905 = vrot.lane.b32.xlu0 %v1680, 3
      %v1906 = vpop.permute.xlu0 %1905
      %1907 = vrot.lane.b32.xlu0 %v1682, 3
      %v1908 = vpop.permute.xlu0 %1907
      %1909 = vrot.lane.b32.xlu0 %v1684, 3
      %v1910 = vpop.permute.xlu0 %1909
      %1911 = vrot.lane.b32.xlu0 %v1686, 3
      %v1912 = vpop.permute.xlu0 %1911
      %1913 = vrot.lane.b32.xlu0 %v1688, 3
      %v1914 = vpop.permute.xlu0 %1913
      %1915 = vrot.lane.b32.xlu0 %v1690, 3
      %v1916 = vpop.permute.xlu0 %1915
      %1917 = vrot.lane.b32.xlu0 %v1692, 3
      %v1918 = vpop.permute.xlu0 %1917
      %1919 = vrot.lane.b32.xlu0 %v1694, 3
      %v1920 = vpop.permute.xlu0 %1919
      %1921 = vrot.lane.b32.xlu0 %v1696, 3
      %v1922 = vpop.permute.xlu0 %1921
      %1923 = vrot.lane.b32.xlu0 %v1698, 3
      %v1924 = vpop.permute.xlu0 %1923
      %1925 = vrot.lane.b32.xlu0 %v1700, 3
      %v1926 = vpop.permute.xlu0 %1925
      %1927 = vrot.lane.b32.xlu0 %v1702, 3
      %v1928 = vpop.permute.xlu0 %1927
      %1929 = vrot.lane.b32.xlu0 %v1704, 3
      %v1930 = vpop.permute.xlu0 %1929
      %1931 = vrot.lane.b32.xlu0 %v1706, 3
      %v1932 = vpop.permute.xlu0 %1931
      %1933 = vrot.lane.b32.xlu0 %v1708, 3
      %v1934 = vpop.permute.xlu0 %1933
      %1935 = vrot.lane.b32.xlu0 %v1710, 3
      %v1936 = vpop.permute.xlu0 %1935
      %1937 = vrot.lane.b32.xlu0 %v1712, 3
      %v1938 = vpop.permute.xlu0 %1937
      %1939 = vrot.lane.b32.xlu0 %v1714, 3
      %v1940 = vpop.permute.xlu0 %1939
      %1941 = vrot.lane.b32.xlu0 %v1716, 3
      %v1942 = vpop.permute.xlu0 %1941
      %1943 = vrot.lane.b32.xlu0 %v1718, 3
      %v1944 = vpop.permute.xlu0 %1943
      %1945 = vrot.lane.b32.xlu0 %v1720, 3
      %v1946 = vpop.permute.xlu0 %1945
      %1947 = vrot.lane.b32.xlu0 %v1722, 3
      %v1948 = vpop.permute.xlu0 %1947
      %1949 = vrot.lane.b32.xlu0 %v1724, 3
      %v1950 = vpop.permute.xlu0 %1949
      %1951 = vrot.lane.b32.xlu0 %v1726, 3
      %v1952 = vpop.permute.xlu0 %1951
      %1953 = vrot.lane.b32.xlu0 %v1728, 3
      %v1954 = vpop.permute.xlu0 %1953
      %1955 = vrot.lane.b32.xlu0 %v1730, 3
      %v1956 = vpop.permute.xlu0 %1955
      %1957 = vrot.lane.b32.xlu0 %v1732, 3
      %v1958 = vpop.permute.xlu0 %1957
      %1959 = vrot.lane.b32.xlu0 %v1734, 3
      %v1960 = vpop.permute.xlu0 %1959
      %1961 = vrot.lane.b32.xlu0 %v1736, 3
      %v1962 = vpop.permute.xlu0 %1961
      %1963 = vrot.lane.b32.xlu0 %v1738, 3
      %v1964 = vpop.permute.xlu0 %1963
      %1965 = vrot.lane.b32.xlu0 %v1740, 3
      %v1966 = vpop.permute.xlu0 %1965
      %1967 = vrot.lane.b32.xlu0 %v1742, 3
      %v1968 = vpop.permute.xlu0 %1967
      %1969 = vrot.lane.b32.xlu0 %v1744, 3
      %v1970 = vpop.permute.xlu0 %1969
      %1971 = vrot.lane.b32.xlu0 %v1746, 3
      %v1972 = vpop.permute.xlu0 %1971
      %1973 = vrot.lane.b32.xlu0 %v1748, 3
      %v1974 = vpop.permute.xlu0 %1973
      %1975 = vrot.lane.b32.xlu0 %v1750, 3
      %v1976 = vpop.permute.xlu0 %1975
      %1977 = vrot.lane.b32.xlu0 %v1752, 3
      %v1978 = vpop.permute.xlu0 %1977
      %1979 = vrot.lane.b32.xlu0 %v1754, 3
      %v1980 = vpop.permute.xlu0 %1979
      %1981 = vrot.lane.b32.xlu0 %v1756, 3
      %v1982 = vpop.permute.xlu0 %1981
      %1983 = vrot.lane.b32.xlu0 %v1758, 3
      %v1984 = vpop.permute.xlu0 %1983
      %1985 = vrot.lane.b32.xlu0 %v1760, 3
      %v1986 = vpop.permute.xlu0 %1985
      %1987 = vrot.lane.b32.xlu0 %v1762, 3
      %v1988 = vpop.permute.xlu0 %1987
      %1989 = vrot.lane.b32.xlu0 %v1764, 3
      %v1990 = vpop.permute.xlu0 %1989
      %1991 = vrot.lane.b32.xlu0 %v1766, 3
      %v1992 = vpop.permute.xlu0 %1991
      %1993 = vrot.lane.b32.xlu0 %v1768, 3
      %v1994 = vpop.permute.xlu0 %1993
      %1995 = vrot.lane.b32.xlu0 %v1770, 3
      %v1996 = vpop.permute.xlu0 %1995
      %1997 = vrot.lane.b32.xlu0 %v1772, 3
      %v1998 = vpop.permute.xlu0 %1997
      %1999 = vrot.lane.b32.xlu0 %v1774, 3
      %v2000 = vpop.permute.xlu0 %1999
      %2001 = vrot.lane.b32.xlu0 %v1776, 3
      %v2002 = vpop.permute.xlu0 %2001
      %2003 = vrot.lane.b32.xlu0 %v1778, 3
      %v2004 = vpop.permute.xlu0 %2003
      %2005 = vrot.lane.b32.xlu0 %v1780, 3
      %v2006 = vpop.permute.xlu0 %2005
      %2007 = vrot.lane.b32.xlu0 %v1782, 3
      %v2008 = vpop.permute.xlu0 %2007
      %2009 = vrot.lane.b32.xlu0 %v1784, 3
      %v2010 = vpop.permute.xlu0 %2009
      %2011 = vrot.lane.b32.xlu0 %v1786, 3
      %v2012 = vpop.permute.xlu0 %2011
      %2013 = vrot.lane.b32.xlu0 %v1788, 3
      %v2014 = vpop.permute.xlu0 %2013
      %2015 = vrot.lane.b32.xlu0 %v1790, 3
      %v2016 = vpop.permute.xlu0 %2015
      %2017 = vrot.lane.b32.xlu0 %v1792, 3
      %v2018 = vpop.permute.xlu0 %2017
      %2019 = vrot.lane.b32.xlu0 %v1794, 3
      %v2020 = vpop.permute.xlu0 %2019
      %vm2134 = vcmask 1040384
      %v2135 = vrot.slane %v202, 7
      %v2136 = vrot.slane %v203, 7
      %v2137 = vsel %vm2134, %v2135, %v2136
      %v2138 = vrot.slane %v204, 7
      %v2139 = vsel %vm2134, %v2136, %v2138
      %v2140 = vrot.slane %v205, 7
      %v2141 = vsel %vm2134, %v2138, %v2140
      %v2142 = vrot.slane %v206, 7
      %v2143 = vsel %vm2134, %v2140, %v2142
      %v2144 = vrot.slane %v207, 7
      %v2145 = vsel %vm2134, %v2142, %v2144
      %v2146 = vrot.slane %v208, 7
      %v2147 = vsel %vm2134, %v2144, %v2146
      %v2148 = vrot.slane %v209, 7
      %v2149 = vsel %vm2134, %v2146, %v2148
      %v2150 = vrot.slane %v210, 7
      %v2151 = vsel %vm2134, %v2148, %v2150
      %v2152 = vrot.slane %v211, 7
      %v2153 = vsel %vm2134, %v2150, %v2152
      %v2154 = vrot.slane %v212, 7
      %v2155 = vsel %vm2134, %v2152, %v2154
      %v2156 = vrot.slane %v213, 7
      %v2157 = vsel %vm2134, %v2154, %v2156
      %v2158 = vrot.slane %v214, 7
      %v2159 = vsel %vm2134, %v2156, %v2158
      %v2160 = vrot.slane %v215, 7
      %v2161 = vsel %vm2134, %v2158, %v2160
      %v2162 = vrot.slane %v216, 7
      %v2163 = vsel %vm2134, %v2160, %v2162
      %v2164 = vrot.slane %v217, 7
      %v2165 = vsel %vm2134, %v2162, %v2164
      %v2166 = vrot.slane %v218, 7
      %v2167 = vsel %vm2134, %v2164, %v2166
      %v2168 = vrot.slane %v219, 7
      %v2169 = vsel %vm2134, %v2166, %v2168
      %v2170 = vrot.slane %v220, 7
      %v2171 = vsel %vm2134, %v2168, %v2170
      %v2172 = vrot.slane %v221, 7
      %v2173 = vsel %vm2134, %v2170, %v2172
      %v2174 = vrot.slane %v222, 7
      %v2175 = vsel %vm2134, %v2172, %v2174
      %v2176 = vrot.slane %v223, 7
      %v2177 = vsel %vm2134, %v2174, %v2176
      %v2178 = vrot.slane %v224, 7
      %v2179 = vsel %vm2134, %v2176, %v2178
      %v2180 = vrot.slane %v225, 7
      %v2181 = vsel %vm2134, %v2178, %v2180
      %v2182 = vrot.slane %v226, 7
      %v2183 = vsel %vm2134, %v2180, %v2182
      %v2184 = vrot.slane %v227, 7
      %v2185 = vsel %vm2134, %v2182, %v2184
      %v2186 = vrot.slane %v228, 7
      %v2187 = vsel %vm2134, %v2184, %v2186
      %v2188 = vrot.slane %v229, 7
      %v2189 = vsel %vm2134, %v2186, %v2188
      %v2190 = vrot.slane %v230, 7
      %v2191 = vsel %vm2134, %v2188, %v2190
      %v2192 = vrot.slane %v231, 7
      %v2193 = vsel %vm2134, %v2190, %v2192
      %v2194 = vrot.slane %v232, 7
      %v2195 = vsel %vm2134, %v2192, %v2194
      %v2196 = vrot.slane %v233, 7
      %v2197 = vsel %vm2134, %v2194, %v2196
      %v2198 = vrot.slane %v234, 7
      %v2199 = vsel %vm2134, %v2196, %v2198
      %v2200 = vrot.slane %v235, 7
      %v2201 = vsel %vm2134, %v2198, %v2200
      %v2202 = vrot.slane %v236, 7
      %v2203 = vsel %vm2134, %v2200, %v2202
      %v2204 = vrot.slane %v237, 7
      %v2205 = vsel %vm2134, %v2202, %v2204
      %v2206 = vrot.slane %v238, 7
      %v2207 = vsel %vm2134, %v2204, %v2206
      %v2208 = vrot.slane %v239, 7
      %v2209 = vsel %vm2134, %v2206, %v2208
      %v2210 = vrot.slane %v240, 7
      %v2211 = vsel %vm2134, %v2208, %v2210
      %v2212 = vrot.slane %v241, 7
      %v2213 = vsel %vm2134, %v2210, %v2212
      %v2214 = vrot.slane %v242, 7
      %v2215 = vsel %vm2134, %v2212, %v2214
      %v2216 = vrot.slane %v243, 7
      %v2217 = vsel %vm2134, %v2214, %v2216
      %v2218 = vrot.slane %v244, 7
      %v2219 = vsel %vm2134, %v2216, %v2218
      %v2220 = vrot.slane %v245, 7
      %v2221 = vsel %vm2134, %v2218, %v2220
      %v2222 = vrot.slane %v246, 7
      %v2223 = vsel %vm2134, %v2220, %v2222
      %v2224 = vrot.slane %v247, 7
      %v2225 = vsel %vm2134, %v2222, %v2224
      %v2226 = vrot.slane %v248, 7
      %v2227 = vsel %vm2134, %v2224, %v2226
      %v2228 = vrot.slane %v249, 7
      %v2229 = vsel %vm2134, %v2226, %v2228
      %v2230 = vrot.slane %v250, 7
      %v2231 = vsel %vm2134, %v2228, %v2230
      %v2232 = vrot.slane %v251, 7
      %v2233 = vsel %vm2134, %v2230, %v2232
      %v2234 = vrot.slane %v252, 7
      %v2235 = vsel %vm2134, %v2232, %v2234
      %v2236 = vrot.slane %v253, 7
      %v2237 = vsel %vm2134, %v2234, %v2236
      %v2238 = vrot.slane %v254, 7
      %v2239 = vsel %vm2134, %v2236, %v2238
      %v2240 = vrot.slane %v255, 7
      %v2241 = vsel %vm2134, %v2238, %v2240
      %v2242 = vrot.slane %v256, 7
      %v2243 = vsel %vm2134, %v2240, %v2242
      %v2244 = vrot.slane %v257, 7
      %v2245 = vsel %vm2134, %v2242, %v2244
      %v2246 = vrot.slane %v258, 7
      %v2247 = vsel %vm2134, %v2244, %v2246
      %v2248 = vrot.slane %v259, 7
      %v2249 = vsel %vm2134, %v2246, %v2248
      %v2250 = vrot.slane %v260, 7
      %v2251 = vsel %vm2134, %v2248, %v2250
      %v2252 = vrot.slane %v261, 7
      %v2253 = vsel %vm2134, %v2250, %v2252
      %v2254 = vrot.slane %v262, 7
      %v2255 = vsel %vm2134, %v2252, %v2254
      %v2256 = vrot.slane %v263, 7
      %v2257 = vsel %vm2134, %v2254, %v2256
      %v2258 = vrot.slane %v264, 7
      %v2259 = vsel %vm2134, %v2256, %v2258
      %v2260 = vrot.slane %v265, 7
      %v2261 = vsel %vm2134, %v2258, %v2260
      %v2262 = vrot.slane %v266, 7
      %v2263 = vsel %vm2134, %v2260, %v2262
      %v2264 = vrot.slane %v267, 7
      %v2265 = vsel %vm2134, %v2262, %v2264
      %v2266 = vrot.slane %v268, 7
      %v2267 = vsel %vm2134, %v2264, %v2266
      %v2268 = vrot.slane %v269, 7
      %v2269 = vsel %vm2134, %v2266, %v2268
      %v2270 = vrot.slane %v270, 7
      %v2271 = vsel %vm2134, %v2268, %v2270
      %v2272 = vrot.slane %v271, 7
      %v2273 = vsel %vm2134, %v2270, %v2272
      %v2274 = vrot.slane %v272, 7
      %v2275 = vsel %vm2134, %v2272, %v2274
      %v2276 = vrot.slane %v273, 7
      %v2277 = vsel %vm2134, %v2274, %v2276
      %v2278 = vrot.slane %v274, 7
      %v2279 = vsel %vm2134, %v2276, %v2278
      %v2280 = vrot.slane %v275, 7
      %v2281 = vsel %vm2134, %v2278, %v2280
      %v2282 = vrot.slane %v276, 7
      %v2283 = vsel %vm2134, %v2280, %v2282
      %v2284 = vrot.slane %v277, 7
      %v2285 = vsel %vm2134, %v2282, %v2284
      %v2286 = vrot.slane %v278, 7
      %v2287 = vsel %vm2134, %v2284, %v2286
      %v2288 = vrot.slane %v279, 7
      %v2289 = vsel %vm2134, %v2286, %v2288
      %v2290 = vrot.slane %v280, 7
      %v2291 = vsel %vm2134, %v2288, %v2290
      %v2292 = vrot.slane %v281, 7
      %v2293 = vsel %vm2134, %v2290, %v2292
      %v2294 = vrot.slane %v282, 7
      %v2295 = vsel %vm2134, %v2292, %v2294
      %v2296 = vrot.slane %v283, 7
      %v2297 = vsel %vm2134, %v2294, %v2296
      %v2298 = vrot.slane %v284, 7
      %v2299 = vsel %vm2134, %v2296, %v2298
      %v2300 = vrot.slane %v285, 7
      %v2301 = vsel %vm2134, %v2298, %v2300
      %v2302 = vrot.slane %v286, 7
      %v2303 = vsel %vm2134, %v2300, %v2302
      %v2304 = vrot.slane %v287, 7
      %v2305 = vsel %vm2134, %v2302, %v2304
      %v2306 = vrot.slane %v288, 7
      %v2307 = vsel %vm2134, %v2304, %v2306
      %v2308 = vrot.slane %v289, 7
      %v2309 = vsel %vm2134, %v2306, %v2308
      %v2310 = vrot.slane %v290, 7
      %v2311 = vsel %vm2134, %v2308, %v2310
      %v2312 = vrot.slane %v291, 7
      %v2313 = vsel %vm2134, %v2310, %v2312
      %v2314 = vrot.slane %v292, 7
      %v2315 = vsel %vm2134, %v2312, %v2314
      %v2316 = vrot.slane %v293, 7
      %v2317 = vsel %vm2134, %v2314, %v2316
      %v2318 = vrot.slane %v294, 7
      %v2319 = vsel %vm2134, %v2316, %v2318
      %v2320 = vrot.slane %v295, 7
      %v2321 = vsel %vm2134, %v2318, %v2320
      %v2322 = vrot.slane %v296, 7
      %v2323 = vsel %vm2134, %v2320, %v2322
      %v2324 = vrot.slane %v297, 7
      %v2325 = vsel %vm2134, %v2322, %v2324
      %v2326 = vrot.slane %v298, 7
      %v2327 = vsel %vm2134, %v2324, %v2326
      %v2328 = vrot.slane %v299, 7
      %v2329 = vsel %vm2134, %v2326, %v2328
      %v2330 = vrot.slane %v300, 7
      %v2331 = vsel %vm2134, %v2328, %v2330
      %v2332 = vrot.slane %v301, 7
      %v2333 = vsel %vm2134, %v2330, %v2332
      %v2334 = vrot.slane %v302, 7
      %v2335 = vsel %vm2134, %v2332, %v2334
      %v2336 = vrot.slane %v303, 7
      %v2337 = vsel %vm2134, %v2334, %v2336
      %v2338 = vrot.slane %v304, 7
      %v2339 = vsel %vm2134, %v2336, %v2338
      %v2340 = vrot.slane %v305, 7
      %v2341 = vsel %vm2134, %v2338, %v2340
      %v2342 = vrot.slane %v306, 7
      %v2343 = vsel %vm2134, %v2340, %v2342
      %v2344 = vrot.slane %v307, 7
      %v2345 = vsel %vm2134, %v2342, %v2344
      %v2346 = vrot.slane %v308, 7
      %v2347 = vsel %vm2134, %v2344, %v2346
      %v2348 = vrot.slane %v309, 7
      %v2349 = vsel %vm2134, %v2346, %v2348
      %v2350 = vrot.slane %v310, 7
      %v2351 = vsel %vm2134, %v2348, %v2350
      %v2352 = vrot.slane %v311, 7
      %v2353 = vsel %vm2134, %v2350, %v2352
      %v2354 = vrot.slane %v312, 7
      %v2355 = vsel %vm2134, %v2352, %v2354
      %v2356 = vrot.slane %v313, 7
      %v2357 = vsel %vm2134, %v2354, %v2356
      %v2358 = vrot.slane %v314, 7
      %v2359 = vsel %vm2134, %v2356, %v2358
      %v2360 = vrot.slane %v315, 7
      %v2361 = vsel %vm2134, %v2358, %v2360
      %2362 = vrot.lane.b32.xlu0 %v2137, 4
      %v2363 = vpop.permute.xlu0 %2362
      %2364 = vrot.lane.b32.xlu0 %v2139, 4
      %v2365 = vpop.permute.xlu0 %2364
      %2366 = vrot.lane.b32.xlu0 %v2141, 4
      %v2367 = vpop.permute.xlu0 %2366
      %2368 = vrot.lane.b32.xlu0 %v2143, 4
      %v2369 = vpop.permute.xlu0 %2368
      %2370 = vrot.lane.b32.xlu0 %v2145, 4
      %v2371 = vpop.permute.xlu0 %2370
      %2372 = vrot.lane.b32.xlu0 %v2147, 4
      %v2373 = vpop.permute.xlu0 %2372
      %2374 = vrot.lane.b32.xlu0 %v2149, 4
      %v2375 = vpop.permute.xlu0 %2374
      %2376 = vrot.lane.b32.xlu0 %v2151, 4
      %v2377 = vpop.permute.xlu0 %2376
      %2378 = vrot.lane.b32.xlu0 %v2153, 4
      %v2379 = vpop.permute.xlu0 %2378
      %2380 = vrot.lane.b32.xlu0 %v2155, 4
      %v2381 = vpop.permute.xlu0 %2380
      %2382 = vrot.lane.b32.xlu0 %v2157, 4
      %v2383 = vpop.permute.xlu0 %2382
      %2384 = vrot.lane.b32.xlu0 %v2159, 4
      %v2385 = vpop.permute.xlu0 %2384
      %2386 = vrot.lane.b32.xlu0 %v2161, 4
      %v2387 = vpop.permute.xlu0 %2386
      %2388 = vrot.lane.b32.xlu0 %v2163, 4
      %v2389 = vpop.permute.xlu0 %2388
      %2390 = vrot.lane.b32.xlu0 %v2165, 4
      %v2391 = vpop.permute.xlu0 %2390
      %2392 = vrot.lane.b32.xlu0 %v2167, 4
      %v2393 = vpop.permute.xlu0 %2392
      %2394 = vrot.lane.b32.xlu0 %v2169, 4
      %v2395 = vpop.permute.xlu0 %2394
      %2396 = vrot.lane.b32.xlu0 %v2171, 4
      %v2397 = vpop.permute.xlu0 %2396
      %2398 = vrot.lane.b32.xlu0 %v2173, 4
      %v2399 = vpop.permute.xlu0 %2398
      %2400 = vrot.lane.b32.xlu0 %v2175, 4
      %v2401 = vpop.permute.xlu0 %2400
      %2402 = vrot.lane.b32.xlu0 %v2177, 4
      %v2403 = vpop.permute.xlu0 %2402
      %2404 = vrot.lane.b32.xlu0 %v2179, 4
      %v2405 = vpop.permute.xlu0 %2404
      %2406 = vrot.lane.b32.xlu0 %v2181, 4
      %v2407 = vpop.permute.xlu0 %2406
      %2408 = vrot.lane.b32.xlu0 %v2183, 4
      %v2409 = vpop.permute.xlu0 %2408
      %2410 = vrot.lane.b32.xlu0 %v2185, 4
      %v2411 = vpop.permute.xlu0 %2410
      %2412 = vrot.lane.b32.xlu0 %v2187, 4
      %v2413 = vpop.permute.xlu0 %2412
      %2414 = vrot.lane.b32.xlu0 %v2189, 4
      %v2415 = vpop.permute.xlu0 %2414
      %2416 = vrot.lane.b32.xlu0 %v2191, 4
      %v2417 = vpop.permute.xlu0 %2416
      %2418 = vrot.lane.b32.xlu0 %v2193, 4
      %v2419 = vpop.permute.xlu0 %2418
      %2420 = vrot.lane.b32.xlu0 %v2195, 4
      %v2421 = vpop.permute.xlu0 %2420
      %2422 = vrot.lane.b32.xlu0 %v2197, 4
      %v2423 = vpop.permute.xlu0 %2422
      %2424 = vrot.lane.b32.xlu0 %v2199, 4
      %v2425 = vpop.permute.xlu0 %2424
      %2426 = vrot.lane.b32.xlu0 %v2201, 4
      %v2427 = vpop.permute.xlu0 %2426
      %2428 = vrot.lane.b32.xlu0 %v2203, 4
      %v2429 = vpop.permute.xlu0 %2428
      %2430 = vrot.lane.b32.xlu0 %v2205, 4
      %v2431 = vpop.permute.xlu0 %2430
      %2432 = vrot.lane.b32.xlu0 %v2207, 4
      %v2433 = vpop.permute.xlu0 %2432
      %2434 = vrot.lane.b32.xlu0 %v2209, 4
      %v2435 = vpop.permute.xlu0 %2434
      %2436 = vrot.lane.b32.xlu0 %v2211, 4
      %v2437 = vpop.permute.xlu0 %2436
      %2438 = vrot.lane.b32.xlu0 %v2213, 4
      %v2439 = vpop.permute.xlu0 %2438
      %2440 = vrot.lane.b32.xlu0 %v2215, 4
      %v2441 = vpop.permute.xlu0 %2440
      %2442 = vrot.lane.b32.xlu0 %v2217, 4
      %v2443 = vpop.permute.xlu0 %2442
      %2444 = vrot.lane.b32.xlu0 %v2219, 4
      %v2445 = vpop.permute.xlu0 %2444
      %2446 = vrot.lane.b32.xlu0 %v2221, 4
      %v2447 = vpop.permute.xlu0 %2446
      %2448 = vrot.lane.b32.xlu0 %v2223, 4
      %v2449 = vpop.permute.xlu0 %2448
      %2450 = vrot.lane.b32.xlu0 %v2225, 4
      %v2451 = vpop.permute.xlu0 %2450
      %2452 = vrot.lane.b32.xlu0 %v2227, 4
      %v2453 = vpop.permute.xlu0 %2452
      %2454 = vrot.lane.b32.xlu0 %v2229, 4
      %v2455 = vpop.permute.xlu0 %2454
      %2456 = vrot.lane.b32.xlu0 %v2231, 4
      %v2457 = vpop.permute.xlu0 %2456
      %2458 = vrot.lane.b32.xlu0 %v2233, 4
      %v2459 = vpop.permute.xlu0 %2458
      %2460 = vrot.lane.b32.xlu0 %v2235, 4
      %v2461 = vpop.permute.xlu0 %2460
      %2462 = vrot.lane.b32.xlu0 %v2237, 4
      %v2463 = vpop.permute.xlu0 %2462
      %2464 = vrot.lane.b32.xlu0 %v2239, 4
      %v2465 = vpop.permute.xlu0 %2464
      %2466 = vrot.lane.b32.xlu0 %v2241, 4
      %v2467 = vpop.permute.xlu0 %2466
      %2468 = vrot.lane.b32.xlu0 %v2243, 4
      %v2469 = vpop.permute.xlu0 %2468
      %2470 = vrot.lane.b32.xlu0 %v2245, 4
      %v2471 = vpop.permute.xlu0 %2470
      %2472 = vrot.lane.b32.xlu0 %v2247, 4
      %v2473 = vpop.permute.xlu0 %2472
      %2474 = vrot.lane.b32.xlu0 %v2249, 4
      %v2475 = vpop.permute.xlu0 %2474
      %2476 = vrot.lane.b32.xlu0 %v2251, 4
      %v2477 = vpop.permute.xlu0 %2476
      %2478 = vrot.lane.b32.xlu0 %v2253, 4
      %v2479 = vpop.permute.xlu0 %2478
      %2480 = vrot.lane.b32.xlu0 %v2255, 4
      %v2481 = vpop.permute.xlu0 %2480
      %2482 = vrot.lane.b32.xlu0 %v2257, 4
      %v2483 = vpop.permute.xlu0 %2482
      %2484 = vrot.lane.b32.xlu0 %v2259, 4
      %v2485 = vpop.permute.xlu0 %2484
      %2486 = vrot.lane.b32.xlu0 %v2261, 4
      %v2487 = vpop.permute.xlu0 %2486
      %2488 = vrot.lane.b32.xlu0 %v2263, 4
      %v2489 = vpop.permute.xlu0 %2488
      %2490 = vrot.lane.b32.xlu0 %v2265, 4
      %v2491 = vpop.permute.xlu0 %2490
      %2492 = vrot.lane.b32.xlu0 %v2267, 4
      %v2493 = vpop.permute.xlu0 %2492
      %2494 = vrot.lane.b32.xlu0 %v2269, 4
      %v2495 = vpop.permute.xlu0 %2494
      %2496 = vrot.lane.b32.xlu0 %v2271, 4
      %v2497 = vpop.permute.xlu0 %2496
      %2498 = vrot.lane.b32.xlu0 %v2273, 4
      %v2499 = vpop.permute.xlu0 %2498
      %2500 = vrot.lane.b32.xlu0 %v2275, 4
      %v2501 = vpop.permute.xlu0 %2500
      %2502 = vrot.lane.b32.xlu0 %v2277, 4
      %v2503 = vpop.permute.xlu0 %2502
      %2504 = vrot.lane.b32.xlu0 %v2279, 4
      %v2505 = vpop.permute.xlu0 %2504
      %2506 = vrot.lane.b32.xlu0 %v2281, 4
      %v2507 = vpop.permute.xlu0 %2506
      %2508 = vrot.lane.b32.xlu0 %v2283, 4
      %v2509 = vpop.permute.xlu0 %2508
      %2510 = vrot.lane.b32.xlu0 %v2285, 4
      %v2511 = vpop.permute.xlu0 %2510
      %2512 = vrot.lane.b32.xlu0 %v2287, 4
      %v2513 = vpop.permute.xlu0 %2512
      %2514 = vrot.lane.b32.xlu0 %v2289, 4
      %v2515 = vpop.permute.xlu0 %2514
      %2516 = vrot.lane.b32.xlu0 %v2291, 4
      %v2517 = vpop.permute.xlu0 %2516
      %2518 = vrot.lane.b32.xlu0 %v2293, 4
      %v2519 = vpop.permute.xlu0 %2518
      %2520 = vrot.lane.b32.xlu0 %v2295, 4
      %v2521 = vpop.permute.xlu0 %2520
      %2522 = vrot.lane.b32.xlu0 %v2297, 4
      %v2523 = vpop.permute.xlu0 %2522
      %2524 = vrot.lane.b32.xlu0 %v2299, 4
      %v2525 = vpop.permute.xlu0 %2524
      %2526 = vrot.lane.b32.xlu0 %v2301, 4
      %v2527 = vpop.permute.xlu0 %2526
      %2528 = vrot.lane.b32.xlu0 %v2303, 4
      %v2529 = vpop.permute.xlu0 %2528
      %2530 = vrot.lane.b32.xlu0 %v2305, 4
      %v2531 = vpop.permute.xlu0 %2530
      %2532 = vrot.lane.b32.xlu0 %v2307, 4
      %v2533 = vpop.permute.xlu0 %2532
      %2534 = vrot.lane.b32.xlu0 %v2309, 4
      %v2535 = vpop.permute.xlu0 %2534
      %2536 = vrot.lane.b32.xlu0 %v2311, 4
      %v2537 = vpop.permute.xlu0 %2536
      %2538 = vrot.lane.b32.xlu0 %v2313, 4
      %v2539 = vpop.permute.xlu0 %2538
      %2540 = vrot.lane.b32.xlu0 %v2315, 4
      %v2541 = vpop.permute.xlu0 %2540
      %2542 = vrot.lane.b32.xlu0 %v2317, 4
      %v2543 = vpop.permute.xlu0 %2542
      %2544 = vrot.lane.b32.xlu0 %v2319, 4
      %v2545 = vpop.permute.xlu0 %2544
      %2546 = vrot.lane.b32.xlu0 %v2321, 4
      %v2547 = vpop.permute.xlu0 %2546
      %2548 = vrot.lane.b32.xlu0 %v2323, 4
      %v2549 = vpop.permute.xlu0 %2548
      %2550 = vrot.lane.b32.xlu0 %v2325, 4
      %v2551 = vpop.permute.xlu0 %2550
      %2552 = vrot.lane.b32.xlu0 %v2327, 4
      %v2553 = vpop.permute.xlu0 %2552
      %2554 = vrot.lane.b32.xlu0 %v2329, 4
      %v2555 = vpop.permute.xlu0 %2554
      %2556 = vrot.lane.b32.xlu0 %v2331, 4
      %v2557 = vpop.permute.xlu0 %2556
      %2558 = vrot.lane.b32.xlu0 %v2333, 4
      %v2559 = vpop.permute.xlu0 %2558
      %2560 = vrot.lane.b32.xlu0 %v2335, 4
      %v2561 = vpop.permute.xlu0 %2560
      %2562 = vrot.lane.b32.xlu0 %v2337, 4
      %v2563 = vpop.permute.xlu0 %2562
      %2564 = vrot.lane.b32.xlu0 %v2339, 4
      %v2565 = vpop.permute.xlu0 %2564
      %2566 = vrot.lane.b32.xlu0 %v2341, 4
      %v2567 = vpop.permute.xlu0 %2566
      %2568 = vrot.lane.b32.xlu0 %v2343, 4
      %v2569 = vpop.permute.xlu0 %2568
      %2570 = vrot.lane.b32.xlu0 %v2345, 4
      %v2571 = vpop.permute.xlu0 %2570
      %2572 = vrot.lane.b32.xlu0 %v2347, 4
      %v2573 = vpop.permute.xlu0 %2572
      %2574 = vrot.lane.b32.xlu0 %v2349, 4
      %v2575 = vpop.permute.xlu0 %2574
      %2576 = vrot.lane.b32.xlu0 %v2351, 4
      %v2577 = vpop.permute.xlu0 %2576
      %2578 = vrot.lane.b32.xlu0 %v2353, 4
      %v2579 = vpop.permute.xlu0 %2578
      %2580 = vrot.lane.b32.xlu0 %v2355, 4
      %v2581 = vpop.permute.xlu0 %2580
      %2582 = vrot.lane.b32.xlu0 %v2357, 4
      %v2583 = vpop.permute.xlu0 %2582
      %2584 = vrot.lane.b32.xlu0 %v2359, 4
      %v2585 = vpop.permute.xlu0 %2584
      %2586 = vrot.lane.b32.xlu0 %v2361, 4
      %v2587 = vpop.permute.xlu0 %2586
      %2701 = vrot.lane.b32.xlu0 %v203, 5
      %v2702 = vpop.permute.xlu0 %2701
      %2703 = vrot.lane.b32.xlu0 %v204, 5
      %v2704 = vpop.permute.xlu0 %2703
      %2705 = vrot.lane.b32.xlu0 %v205, 5
      %v2706 = vpop.permute.xlu0 %2705
      %2707 = vrot.lane.b32.xlu0 %v206, 5
      %v2708 = vpop.permute.xlu0 %2707
      %2709 = vrot.lane.b32.xlu0 %v207, 5
      %v2710 = vpop.permute.xlu0 %2709
      %2711 = vrot.lane.b32.xlu0 %v208, 5
      %v2712 = vpop.permute.xlu0 %2711
      %2713 = vrot.lane.b32.xlu0 %v209, 5
      %v2714 = vpop.permute.xlu0 %2713
      %2715 = vrot.lane.b32.xlu0 %v210, 5
      %v2716 = vpop.permute.xlu0 %2715
      %2717 = vrot.lane.b32.xlu0 %v211, 5
      %v2718 = vpop.permute.xlu0 %2717
      %2719 = vrot.lane.b32.xlu0 %v212, 5
      %v2720 = vpop.permute.xlu0 %2719
      %2721 = vrot.lane.b32.xlu0 %v213, 5
      %v2722 = vpop.permute.xlu0 %2721
      %2723 = vrot.lane.b32.xlu0 %v214, 5
      %v2724 = vpop.permute.xlu0 %2723
      %2725 = vrot.lane.b32.xlu0 %v215, 5
      %v2726 = vpop.permute.xlu0 %2725
      %2727 = vrot.lane.b32.xlu0 %v216, 5
      %v2728 = vpop.permute.xlu0 %2727
      %2729 = vrot.lane.b32.xlu0 %v217, 5
      %v2730 = vpop.permute.xlu0 %2729
      %2731 = vrot.lane.b32.xlu0 %v218, 5
      %v2732 = vpop.permute.xlu0 %2731
      %2733 = vrot.lane.b32.xlu0 %v219, 5
      %v2734 = vpop.permute.xlu0 %2733
      %2735 = vrot.lane.b32.xlu0 %v220, 5
      %v2736 = vpop.permute.xlu0 %2735
      %2737 = vrot.lane.b32.xlu0 %v221, 5
      %v2738 = vpop.permute.xlu0 %2737
      %2739 = vrot.lane.b32.xlu0 %v222, 5
      %v2740 = vpop.permute.xlu0 %2739
      %2741 = vrot.lane.b32.xlu0 %v223, 5
      %v2742 = vpop.permute.xlu0 %2741
      %2743 = vrot.lane.b32.xlu0 %v224, 5
      %v2744 = vpop.permute.xlu0 %2743
      %2745 = vrot.lane.b32.xlu0 %v225, 5
      %v2746 = vpop.permute.xlu0 %2745
      %2747 = vrot.lane.b32.xlu0 %v226, 5
      %v2748 = vpop.permute.xlu0 %2747
      %2749 = vrot.lane.b32.xlu0 %v227, 5
      %v2750 = vpop.permute.xlu0 %2749
      %2751 = vrot.lane.b32.xlu0 %v228, 5
      %v2752 = vpop.permute.xlu0 %2751
      %2753 = vrot.lane.b32.xlu0 %v229, 5
      %v2754 = vpop.permute.xlu0 %2753
      %2755 = vrot.lane.b32.xlu0 %v230, 5
      %v2756 = vpop.permute.xlu0 %2755
      %2757 = vrot.lane.b32.xlu0 %v231, 5
      %v2758 = vpop.permute.xlu0 %2757
      %2759 = vrot.lane.b32.xlu0 %v232, 5
      %v2760 = vpop.permute.xlu0 %2759
      %2761 = vrot.lane.b32.xlu0 %v233, 5
      %v2762 = vpop.permute.xlu0 %2761
      %2763 = vrot.lane.b32.xlu0 %v234, 5
      %v2764 = vpop.permute.xlu0 %2763
      %2765 = vrot.lane.b32.xlu0 %v235, 5
      %v2766 = vpop.permute.xlu0 %2765
      %2767 = vrot.lane.b32.xlu0 %v236, 5
      %v2768 = vpop.permute.xlu0 %2767
      %2769 = vrot.lane.b32.xlu0 %v237, 5
      %v2770 = vpop.permute.xlu0 %2769
      %2771 = vrot.lane.b32.xlu0 %v238, 5
      %v2772 = vpop.permute.xlu0 %2771
      %2773 = vrot.lane.b32.xlu0 %v239, 5
      %v2774 = vpop.permute.xlu0 %2773
      %2775 = vrot.lane.b32.xlu0 %v240, 5
      %v2776 = vpop.permute.xlu0 %2775
      %2777 = vrot.lane.b32.xlu0 %v241, 5
      %v2778 = vpop.permute.xlu0 %2777
      %2779 = vrot.lane.b32.xlu0 %v242, 5
      %v2780 = vpop.permute.xlu0 %2779
      %2781 = vrot.lane.b32.xlu0 %v243, 5
      %v2782 = vpop.permute.xlu0 %2781
      %2783 = vrot.lane.b32.xlu0 %v244, 5
      %v2784 = vpop.permute.xlu0 %2783
      %2785 = vrot.lane.b32.xlu0 %v245, 5
      %v2786 = vpop.permute.xlu0 %2785
      %2787 = vrot.lane.b32.xlu0 %v246, 5
      %v2788 = vpop.permute.xlu0 %2787
      %2789 = vrot.lane.b32.xlu0 %v247, 5
      %v2790 = vpop.permute.xlu0 %2789
      %2791 = vrot.lane.b32.xlu0 %v248, 5
      %v2792 = vpop.permute.xlu0 %2791
      %2793 = vrot.lane.b32.xlu0 %v249, 5
      %v2794 = vpop.permute.xlu0 %2793
      %2795 = vrot.lane.b32.xlu0 %v250, 5
      %v2796 = vpop.permute.xlu0 %2795
      %2797 = vrot.lane.b32.xlu0 %v251, 5
      %v2798 = vpop.permute.xlu0 %2797
      %2799 = vrot.lane.b32.xlu0 %v252, 5
      %v2800 = vpop.permute.xlu0 %2799
      %2801 = vrot.lane.b32.xlu0 %v253, 5
      %v2802 = vpop.permute.xlu0 %2801
      %2803 = vrot.lane.b32.xlu0 %v254, 5
      %v2804 = vpop.permute.xlu0 %2803
      %2805 = vrot.lane.b32.xlu0 %v255, 5
      %v2806 = vpop.permute.xlu0 %2805
      %2807 = vrot.lane.b32.xlu0 %v256, 5
      %v2808 = vpop.permute.xlu0 %2807
      %2809 = vrot.lane.b32.xlu0 %v257, 5
      %v2810 = vpop.permute.xlu0 %2809
      %2811 = vrot.lane.b32.xlu0 %v258, 5
      %v2812 = vpop.permute.xlu0 %2811
      %2813 = vrot.lane.b32.xlu0 %v259, 5
      %v2814 = vpop.permute.xlu0 %2813
      %2815 = vrot.lane.b32.xlu0 %v260, 5
      %v2816 = vpop.permute.xlu0 %2815
      %2817 = vrot.lane.b32.xlu0 %v261, 5
      %v2818 = vpop.permute.xlu0 %2817
      %2819 = vrot.lane.b32.xlu0 %v262, 5
      %v2820 = vpop.permute.xlu0 %2819
      %2821 = vrot.lane.b32.xlu0 %v263, 5
      %v2822 = vpop.permute.xlu0 %2821
      %2823 = vrot.lane.b32.xlu0 %v264, 5
      %v2824 = vpop.permute.xlu0 %2823
      %2825 = vrot.lane.b32.xlu0 %v265, 5
      %v2826 = vpop.permute.xlu0 %2825
      %2827 = vrot.lane.b32.xlu0 %v266, 5
      %v2828 = vpop.permute.xlu0 %2827
      %2829 = vrot.lane.b32.xlu0 %v267, 5
      %v2830 = vpop.permute.xlu0 %2829
      %2831 = vrot.lane.b32.xlu0 %v268, 5
      %v2832 = vpop.permute.xlu0 %2831
      %2833 = vrot.lane.b32.xlu0 %v269, 5
      %v2834 = vpop.permute.xlu0 %2833
      %2835 = vrot.lane.b32.xlu0 %v270, 5
      %v2836 = vpop.permute.xlu0 %2835
      %2837 = vrot.lane.b32.xlu0 %v271, 5
      %v2838 = vpop.permute.xlu0 %2837
      %2839 = vrot.lane.b32.xlu0 %v272, 5
      %v2840 = vpop.permute.xlu0 %2839
      %2841 = vrot.lane.b32.xlu0 %v273, 5
      %v2842 = vpop.permute.xlu0 %2841
      %2843 = vrot.lane.b32.xlu0 %v274, 5
      %v2844 = vpop.permute.xlu0 %2843
      %2845 = vrot.lane.b32.xlu0 %v275, 5
      %v2846 = vpop.permute.xlu0 %2845
      %2847 = vrot.lane.b32.xlu0 %v276, 5
      %v2848 = vpop.permute.xlu0 %2847
      %2849 = vrot.lane.b32.xlu0 %v277, 5
      %v2850 = vpop.permute.xlu0 %2849
      %2851 = vrot.lane.b32.xlu0 %v278, 5
      %v2852 = vpop.permute.xlu0 %2851
      %2853 = vrot.lane.b32.xlu0 %v279, 5
      %v2854 = vpop.permute.xlu0 %2853
      %2855 = vrot.lane.b32.xlu0 %v280, 5
      %v2856 = vpop.permute.xlu0 %2855
      %2857 = vrot.lane.b32.xlu0 %v281, 5
      %v2858 = vpop.permute.xlu0 %2857
      %2859 = vrot.lane.b32.xlu0 %v282, 5
      %v2860 = vpop.permute.xlu0 %2859
      %2861 = vrot.lane.b32.xlu0 %v283, 5
      %v2862 = vpop.permute.xlu0 %2861
      %2863 = vrot.lane.b32.xlu0 %v284, 5
      %v2864 = vpop.permute.xlu0 %2863
      %2865 = vrot.lane.b32.xlu0 %v285, 5
      %v2866 = vpop.permute.xlu0 %2865
      %2867 = vrot.lane.b32.xlu0 %v286, 5
      %v2868 = vpop.permute.xlu0 %2867
      %2869 = vrot.lane.b32.xlu0 %v287, 5
      %v2870 = vpop.permute.xlu0 %2869
      %2871 = vrot.lane.b32.xlu0 %v288, 5
      %v2872 = vpop.permute.xlu0 %2871
      %2873 = vrot.lane.b32.xlu0 %v289, 5
      %v2874 = vpop.permute.xlu0 %2873
      %2875 = vrot.lane.b32.xlu0 %v290, 5
      %v2876 = vpop.permute.xlu0 %2875
      %2877 = vrot.lane.b32.xlu0 %v291, 5
      %v2878 = vpop.permute.xlu0 %2877
      %2879 = vrot.lane.b32.xlu0 %v292, 5
      %v2880 = vpop.permute.xlu0 %2879
      %2881 = vrot.lane.b32.xlu0 %v293, 5
      %v2882 = vpop.permute.xlu0 %2881
      %2883 = vrot.lane.b32.xlu0 %v294, 5
      %v2884 = vpop.permute.xlu0 %2883
      %2885 = vrot.lane.b32.xlu0 %v295, 5
      %v2886 = vpop.permute.xlu0 %2885
      %2887 = vrot.lane.b32.xlu0 %v296, 5
      %v2888 = vpop.permute.xlu0 %2887
      %2889 = vrot.lane.b32.xlu0 %v297, 5
      %v2890 = vpop.permute.xlu0 %2889
      %2891 = vrot.lane.b32.xlu0 %v298, 5
      %v2892 = vpop.permute.xlu0 %2891
      %2893 = vrot.lane.b32.xlu0 %v299, 5
      %v2894 = vpop.permute.xlu0 %2893
      %2895 = vrot.lane.b32.xlu0 %v300, 5
      %v2896 = vpop.permute.xlu0 %2895
      %2897 = vrot.lane.b32.xlu0 %v301, 5
      %v2898 = vpop.permute.xlu0 %2897
      %2899 = vrot.lane.b32.xlu0 %v302, 5
      %v2900 = vpop.permute.xlu0 %2899
      %2901 = vrot.lane.b32.xlu0 %v303, 5
      %v2902 = vpop.permute.xlu0 %2901
      %2903 = vrot.lane.b32.xlu0 %v304, 5
      %v2904 = vpop.permute.xlu0 %2903
      %2905 = vrot.lane.b32.xlu0 %v305, 5
      %v2906 = vpop.permute.xlu0 %2905
      %2907 = vrot.lane.b32.xlu0 %v306, 5
      %v2908 = vpop.permute.xlu0 %2907
      %2909 = vrot.lane.b32.xlu0 %v307, 5
      %v2910 = vpop.permute.xlu0 %2909
      %2911 = vrot.lane.b32.xlu0 %v308, 5
      %v2912 = vpop.permute.xlu0 %2911
      %2913 = vrot.lane.b32.xlu0 %v309, 5
      %v2914 = vpop.permute.xlu0 %2913
      %2915 = vrot.lane.b32.xlu0 %v310, 5
      %v2916 = vpop.permute.xlu0 %2915
      %2917 = vrot.lane.b32.xlu0 %v311, 5
      %v2918 = vpop.permute.xlu0 %2917
      %2919 = vrot.lane.b32.xlu0 %v312, 5
      %v2920 = vpop.permute.xlu0 %2919
      %2921 = vrot.lane.b32.xlu0 %v313, 5
      %v2922 = vpop.permute.xlu0 %2921
      %2923 = vrot.lane.b32.xlu0 %v314, 5
      %v2924 = vpop.permute.xlu0 %2923
      %2925 = vrot.lane.b32.xlu0 %v315, 5
      %v2926 = vpop.permute.xlu0 %2925
      %vm3043 = vcmask 1043456
      %v3044 = vrot.slane %v206, 4
      %v3045 = vrot.slane %v207, 4
      %v3046 = vsel %vm3043, %v3044, %v3045
      %v3047 = vrot.slane %v208, 4
      %v3048 = vsel %vm3043, %v3045, %v3047
      %v3049 = vrot.slane %v209, 4
      %v3050 = vsel %vm3043, %v3047, %v3049
      %v3051 = vrot.slane %v210, 4
      %v3052 = vsel %vm3043, %v3049, %v3051
      %v3053 = vrot.slane %v211, 4
      %v3054 = vsel %vm3043, %v3051, %v3053
      %v3055 = vrot.slane %v212, 4
      %v3056 = vsel %vm3043, %v3053, %v3055
      %v3057 = vrot.slane %v213, 4
      %v3058 = vsel %vm3043, %v3055, %v3057
      %v3059 = vrot.slane %v214, 4
      %v3060 = vsel %vm3043, %v3057, %v3059
      %v3061 = vrot.slane %v215, 4
      %v3062 = vsel %vm3043, %v3059, %v3061
      %v3063 = vrot.slane %v216, 4
      %v3064 = vsel %vm3043, %v3061, %v3063
      %v3065 = vrot.slane %v217, 4
      %v3066 = vsel %vm3043, %v3063, %v3065
      %v3067 = vrot.slane %v218, 4
      %v3068 = vsel %vm3043, %v3065, %v3067
      %v3069 = vrot.slane %v219, 4
      %v3070 = vsel %vm3043, %v3067, %v3069
      %v3071 = vrot.slane %v220, 4
      %v3072 = vsel %vm3043, %v3069, %v3071
      %v3073 = vrot.slane %v221, 4
      %v3074 = vsel %vm3043, %v3071, %v3073
      %v3075 = vrot.slane %v222, 4
      %v3076 = vsel %vm3043, %v3073, %v3075
      %v3077 = vrot.slane %v223, 4
      %v3078 = vsel %vm3043, %v3075, %v3077
      %v3079 = vrot.slane %v224, 4
      %v3080 = vsel %vm3043, %v3077, %v3079
      %v3081 = vrot.slane %v225, 4
      %v3082 = vsel %vm3043, %v3079, %v3081
      %v3083 = vrot.slane %v226, 4
      %v3084 = vsel %vm3043, %v3081, %v3083
      %v3085 = vrot.slane %v227, 4
      %v3086 = vsel %vm3043, %v3083, %v3085
      %v3087 = vrot.slane %v228, 4
      %v3088 = vsel %vm3043, %v3085, %v3087
      %v3089 = vrot.slane %v229, 4
      %v3090 = vsel %vm3043, %v3087, %v3089
      %v3091 = vrot.slane %v230, 4
      %v3092 = vsel %vm3043, %v3089, %v3091
      %v3093 = vrot.slane %v231, 4
      %v3094 = vsel %vm3043, %v3091, %v3093
      %v3095 = vrot.slane %v232, 4
      %v3096 = vsel %vm3043, %v3093, %v3095
      %v3097 = vrot.slane %v233, 4
      %v3098 = vsel %vm3043, %v3095, %v3097
      %v3099 = vrot.slane %v234, 4
      %v3100 = vsel %vm3043, %v3097, %v3099
      %v3101 = vrot.slane %v235, 4
      %v3102 = vsel %vm3043, %v3099, %v3101
      %v3103 = vrot.slane %v236, 4
      %v3104 = vsel %vm3043, %v3101, %v3103
      %v3105 = vrot.slane %v237, 4
      %v3106 = vsel %vm3043, %v3103, %v3105
      %v3107 = vrot.slane %v238, 4
      %v3108 = vsel %vm3043, %v3105, %v3107
      %v3109 = vrot.slane %v239, 4
      %v3110 = vsel %vm3043, %v3107, %v3109
      %v3111 = vrot.slane %v240, 4
      %v3112 = vsel %vm3043, %v3109, %v3111
      %v3113 = vrot.slane %v241, 4
      %v3114 = vsel %vm3043, %v3111, %v3113
      %v3115 = vrot.slane %v242, 4
      %v3116 = vsel %vm3043, %v3113, %v3115
      %v3117 = vrot.slane %v243, 4
      %v3118 = vsel %vm3043, %v3115, %v3117
      %v3119 = vrot.slane %v244, 4
      %v3120 = vsel %vm3043, %v3117, %v3119
      %v3121 = vrot.slane %v245, 4
      %v3122 = vsel %vm3043, %v3119, %v3121
      %v3123 = vrot.slane %v246, 4
      %v3124 = vsel %vm3043, %v3121, %v3123
      %v3125 = vrot.slane %v247, 4
      %v3126 = vsel %vm3043, %v3123, %v3125
      %v3127 = vrot.slane %v248, 4
      %v3128 = vsel %vm3043, %v3125, %v3127
      %v3129 = vrot.slane %v249, 4
      %v3130 = vsel %vm3043, %v3127, %v3129
      %v3131 = vrot.slane %v250, 4
      %v3132 = vsel %vm3043, %v3129, %v3131
      %v3133 = vrot.slane %v251, 4
      %v3134 = vsel %vm3043, %v3131, %v3133
      %v3135 = vrot.slane %v252, 4
      %v3136 = vsel %vm3043, %v3133, %v3135
      %v3137 = vrot.slane %v253, 4
      %v3138 = vsel %vm3043, %v3135, %v3137
      %v3139 = vrot.slane %v254, 4
      %v3140 = vsel %vm3043, %v3137, %v3139
      %v3141 = vrot.slane %v255, 4
      %v3142 = vsel %vm3043, %v3139, %v3141
      %v3143 = vrot.slane %v256, 4
      %v3144 = vsel %vm3043, %v3141, %v3143
      %v3145 = vrot.slane %v257, 4
      %v3146 = vsel %vm3043, %v3143, %v3145
      %v3147 = vrot.slane %v258, 4
      %v3148 = vsel %vm3043, %v3145, %v3147
      %v3149 = vrot.slane %v259, 4
      %v3150 = vsel %vm3043, %v3147, %v3149
      %v3151 = vrot.slane %v260, 4
      %v3152 = vsel %vm3043, %v3149, %v3151
      %v3153 = vrot.slane %v261, 4
      %v3154 = vsel %vm3043, %v3151, %v3153
      %v3155 = vrot.slane %v262, 4
      %v3156 = vsel %vm3043, %v3153, %v3155
      %v3157 = vrot.slane %v263, 4
      %v3158 = vsel %vm3043, %v3155, %v3157
      %v3159 = vrot.slane %v264, 4
      %v3160 = vsel %vm3043, %v3157, %v3159
      %v3161 = vrot.slane %v265, 4
      %v3162 = vsel %vm3043, %v3159, %v3161
      %v3163 = vrot.slane %v266, 4
      %v3164 = vsel %vm3043, %v3161, %v3163
      %v3165 = vrot.slane %v267, 4
      %v3166 = vsel %vm3043, %v3163, %v3165
      %v3167 = vrot.slane %v268, 4
      %v3168 = vsel %vm3043, %v3165, %v3167
      %v3169 = vrot.slane %v269, 4
      %v3170 = vsel %vm3043, %v3167, %v3169
      %v3171 = vrot.slane %v270, 4
      %v3172 = vsel %vm3043, %v3169, %v3171
      %v3173 = vrot.slane %v271, 4
      %v3174 = vsel %vm3043, %v3171, %v3173
      %v3175 = vrot.slane %v272, 4
      %v3176 = vsel %vm3043, %v3173, %v3175
      %v3177 = vrot.slane %v273, 4
      %v3178 = vsel %vm3043, %v3175, %v3177
      %v3179 = vrot.slane %v274, 4
      %v3180 = vsel %vm3043, %v3177, %v3179
      %v3181 = vrot.slane %v275, 4
      %v3182 = vsel %vm3043, %v3179, %v3181
      %v3183 = vrot.slane %v276, 4
      %v3184 = vsel %vm3043, %v3181, %v3183
      %v3185 = vrot.slane %v277, 4
      %v3186 = vsel %vm3043, %v3183, %v3185
      %v3187 = vrot.slane %v278, 4
      %v3188 = vsel %vm3043, %v3185, %v3187
      %v3189 = vrot.slane %v279, 4
      %v3190 = vsel %vm3043, %v3187, %v3189
      %v3191 = vrot.slane %v280, 4
      %v3192 = vsel %vm3043, %v3189, %v3191
      %v3193 = vrot.slane %v281, 4
      %v3194 = vsel %vm3043, %v3191, %v3193
      %v3195 = vrot.slane %v282, 4
      %v3196 = vsel %vm3043, %v3193, %v3195
      %v3197 = vrot.slane %v283, 4
      %v3198 = vsel %vm3043, %v3195, %v3197
      %v3199 = vrot.slane %v284, 4
      %v3200 = vsel %vm3043, %v3197, %v3199
      %v3201 = vrot.slane %v285, 4
      %v3202 = vsel %vm3043, %v3199, %v3201
      %v3203 = vrot.slane %v286, 4
      %v3204 = vsel %vm3043, %v3201, %v3203
      %v3205 = vrot.slane %v287, 4
      %v3206 = vsel %vm3043, %v3203, %v3205
      %v3207 = vrot.slane %v288, 4
      %v3208 = vsel %vm3043, %v3205, %v3207
      %v3209 = vrot.slane %v289, 4
      %v3210 = vsel %vm3043, %v3207, %v3209
      %v3211 = vrot.slane %v290, 4
      %v3212 = vsel %vm3043, %v3209, %v3211
      %v3213 = vrot.slane %v291, 4
      %v3214 = vsel %vm3043, %v3211, %v3213
      %v3215 = vrot.slane %v292, 4
      %v3216 = vsel %vm3043, %v3213, %v3215
      %v3217 = vrot.slane %v293, 4
      %v3218 = vsel %vm3043, %v3215, %v3217
      %v3219 = vrot.slane %v294, 4
      %v3220 = vsel %vm3043, %v3217, %v3219
      %v3221 = vrot.slane %v295, 4
      %v3222 = vsel %vm3043, %v3219, %v3221
      %v3223 = vrot.slane %v296, 4
      %v3224 = vsel %vm3043, %v3221, %v3223
      %v3225 = vrot.slane %v297, 4
      %v3226 = vsel %vm3043, %v3223, %v3225
      %v3227 = vrot.slane %v298, 4
      %v3228 = vsel %vm3043, %v3225, %v3227
      %v3229 = vrot.slane %v299, 4
      %v3230 = vsel %vm3043, %v3227, %v3229
      %v3231 = vrot.slane %v300, 4
      %v3232 = vsel %vm3043, %v3229, %v3231
      %v3233 = vrot.slane %v301, 4
      %v3234 = vsel %vm3043, %v3231, %v3233
      %v3235 = vrot.slane %v302, 4
      %v3236 = vsel %vm3043, %v3233, %v3235
      %v3237 = vrot.slane %v303, 4
      %v3238 = vsel %vm3043, %v3235, %v3237
      %v3239 = vrot.slane %v304, 4
      %v3240 = vsel %vm3043, %v3237, %v3239
      %v3241 = vrot.slane %v305, 4
      %v3242 = vsel %vm3043, %v3239, %v3241
      %v3243 = vrot.slane %v306, 4
      %v3244 = vsel %vm3043, %v3241, %v3243
      %v3245 = vrot.slane %v307, 4
      %v3246 = vsel %vm3043, %v3243, %v3245
      %v3247 = vrot.slane %v308, 4
      %v3248 = vsel %vm3043, %v3245, %v3247
      %v3249 = vrot.slane %v309, 4
      %v3250 = vsel %vm3043, %v3247, %v3249
      %v3251 = vrot.slane %v310, 4
      %v3252 = vsel %vm3043, %v3249, %v3251
      %v3253 = vrot.slane %v311, 4
      %v3254 = vsel %vm3043, %v3251, %v3253
      %v3255 = vrot.slane %v312, 4
      %v3256 = vsel %vm3043, %v3253, %v3255
      %v3257 = vrot.slane %v313, 4
      %v3258 = vsel %vm3043, %v3255, %v3257
      %v3259 = vrot.slane %v314, 4
      %v3260 = vsel %vm3043, %v3257, %v3259
      %v3261 = vrot.slane %v315, 4
      %v3262 = vsel %vm3043, %v3259, %v3261
      %v3263 = vrot.slane %v316, 4
      %v3264 = vsel %vm3043, %v3261, %v3263
      %v3265 = vrot.slane %v317, 4
      %v3266 = vsel %vm3043, %v3263, %v3265
      %v3267 = vrot.slane %v318, 4
      %v3268 = vsel %vm3043, %v3265, %v3267
      %3269 = vrot.lane.b32.xlu0 %v3046, 6
      %v3270 = vpop.permute.xlu0 %3269
      %3271 = vrot.lane.b32.xlu0 %v3048, 6
      %v3272 = vpop.permute.xlu0 %3271
      %3273 = vrot.lane.b32.xlu0 %v3050, 6
      %v3274 = vpop.permute.xlu0 %3273
      %3275 = vrot.lane.b32.xlu0 %v3052, 6
      %v3276 = vpop.permute.xlu0 %3275
      %3277 = vrot.lane.b32.xlu0 %v3054, 6
      %v3278 = vpop.permute.xlu0 %3277
      %3279 = vrot.lane.b32.xlu0 %v3056, 6
      %v3280 = vpop.permute.xlu0 %3279
      %3281 = vrot.lane.b32.xlu0 %v3058, 6
      %v3282 = vpop.permute.xlu0 %3281
      %3283 = vrot.lane.b32.xlu0 %v3060, 6
      %v3284 = vpop.permute.xlu0 %3283
      %3285 = vrot.lane.b32.xlu0 %v3062, 6
      %v3286 = vpop.permute.xlu0 %3285
      %3287 = vrot.lane.b32.xlu0 %v3064, 6
      %v3288 = vpop.permute.xlu0 %3287
      %3289 = vrot.lane.b32.xlu0 %v3066, 6
      %v3290 = vpop.permute.xlu0 %3289
      %3291 = vrot.lane.b32.xlu0 %v3068, 6
      %v3292 = vpop.permute.xlu0 %3291
      %3293 = vrot.lane.b32.xlu0 %v3070, 6
      %v3294 = vpop.permute.xlu0 %3293
      %3295 = vrot.lane.b32.xlu0 %v3072, 6
      %v3296 = vpop.permute.xlu0 %3295
      %3297 = vrot.lane.b32.xlu0 %v3074, 6
      %v3298 = vpop.permute.xlu0 %3297
      %3299 = vrot.lane.b32.xlu0 %v3076, 6
      %v3300 = vpop.permute.xlu0 %3299
      %3301 = vrot.lane.b32.xlu0 %v3078, 6
      %v3302 = vpop.permute.xlu0 %3301
      %3303 = vrot.lane.b32.xlu0 %v3080, 6
      %v3304 = vpop.permute.xlu0 %3303
      %3305 = vrot.lane.b32.xlu0 %v3082, 6
      %v3306 = vpop.permute.xlu0 %3305
      %3307 = vrot.lane.b32.xlu0 %v3084, 6
      %v3308 = vpop.permute.xlu0 %3307
      %3309 = vrot.lane.b32.xlu0 %v3086, 6
      %v3310 = vpop.permute.xlu0 %3309
      %3311 = vrot.lane.b32.xlu0 %v3088, 6
      %v3312 = vpop.permute.xlu0 %3311
      %3313 = vrot.lane.b32.xlu0 %v3090, 6
      %v3314 = vpop.permute.xlu0 %3313
      %3315 = vrot.lane.b32.xlu0 %v3092, 6
      %v3316 = vpop.permute.xlu0 %3315
      %3317 = vrot.lane.b32.xlu0 %v3094, 6
      %v3318 = vpop.permute.xlu0 %3317
      %3319 = vrot.lane.b32.xlu0 %v3096, 6
      %v3320 = vpop.permute.xlu0 %3319
      %3321 = vrot.lane.b32.xlu0 %v3098, 6
      %v3322 = vpop.permute.xlu0 %3321
      %3323 = vrot.lane.b32.xlu0 %v3100, 6
      %v3324 = vpop.permute.xlu0 %3323
      %3325 = vrot.lane.b32.xlu0 %v3102, 6
      %v3326 = vpop.permute.xlu0 %3325
      %3327 = vrot.lane.b32.xlu0 %v3104, 6
      %v3328 = vpop.permute.xlu0 %3327
      %3329 = vrot.lane.b32.xlu0 %v3106, 6
      %v3330 = vpop.permute.xlu0 %3329
      %3331 = vrot.lane.b32.xlu0 %v3108, 6
      %v3332 = vpop.permute.xlu0 %3331
      %3333 = vrot.lane.b32.xlu0 %v3110, 6
      %v3334 = vpop.permute.xlu0 %3333
      %3335 = vrot.lane.b32.xlu0 %v3112, 6
      %v3336 = vpop.permute.xlu0 %3335
      %3337 = vrot.lane.b32.xlu0 %v3114, 6
      %v3338 = vpop.permute.xlu0 %3337
      %3339 = vrot.lane.b32.xlu0 %v3116, 6
      %v3340 = vpop.permute.xlu0 %3339
      %3341 = vrot.lane.b32.xlu0 %v3118, 6
      %v3342 = vpop.permute.xlu0 %3341
      %3343 = vrot.lane.b32.xlu0 %v3120, 6
      %v3344 = vpop.permute.xlu0 %3343
      %3345 = vrot.lane.b32.xlu0 %v3122, 6
      %v3346 = vpop.permute.xlu0 %3345
      %3347 = vrot.lane.b32.xlu0 %v3124, 6
      %v3348 = vpop.permute.xlu0 %3347
      %3349 = vrot.lane.b32.xlu0 %v3126, 6
      %v3350 = vpop.permute.xlu0 %3349
      %3351 = vrot.lane.b32.xlu0 %v3128, 6
      %v3352 = vpop.permute.xlu0 %3351
      %3353 = vrot.lane.b32.xlu0 %v3130, 6
      %v3354 = vpop.permute.xlu0 %3353
      %3355 = vrot.lane.b32.xlu0 %v3132, 6
      %v3356 = vpop.permute.xlu0 %3355
      %3357 = vrot.lane.b32.xlu0 %v3134, 6
      %v3358 = vpop.permute.xlu0 %3357
      %3359 = vrot.lane.b32.xlu0 %v3136, 6
      %v3360 = vpop.permute.xlu0 %3359
      %3361 = vrot.lane.b32.xlu0 %v3138, 6
      %v3362 = vpop.permute.xlu0 %3361
      %3363 = vrot.lane.b32.xlu0 %v3140, 6
      %v3364 = vpop.permute.xlu0 %3363
      %3365 = vrot.lane.b32.xlu0 %v3142, 6
      %v3366 = vpop.permute.xlu0 %3365
      %3367 = vrot.lane.b32.xlu0 %v3144, 6
      %v3368 = vpop.permute.xlu0 %3367
      %3369 = vrot.lane.b32.xlu0 %v3146, 6
      %v3370 = vpop.permute.xlu0 %3369
      %3371 = vrot.lane.b32.xlu0 %v3148, 6
      %v3372 = vpop.permute.xlu0 %3371
      %3373 = vrot.lane.b32.xlu0 %v3150, 6
      %v3374 = vpop.permute.xlu0 %3373
      %3375 = vrot.lane.b32.xlu0 %v3152, 6
      %v3376 = vpop.permute.xlu0 %3375
      %3377 = vrot.lane.b32.xlu0 %v3154, 6
      %v3378 = vpop.permute.xlu0 %3377
      %3379 = vrot.lane.b32.xlu0 %v3156, 6
      %v3380 = vpop.permute.xlu0 %3379
      %3381 = vrot.lane.b32.xlu0 %v3158, 6
      %v3382 = vpop.permute.xlu0 %3381
      %3383 = vrot.lane.b32.xlu0 %v3160, 6
      %v3384 = vpop.permute.xlu0 %3383
      %3385 = vrot.lane.b32.xlu0 %v3162, 6
      %v3386 = vpop.permute.xlu0 %3385
      %3387 = vrot.lane.b32.xlu0 %v3164, 6
      %v3388 = vpop.permute.xlu0 %3387
      %3389 = vrot.lane.b32.xlu0 %v3166, 6
      %v3390 = vpop.permute.xlu0 %3389
      %3391 = vrot.lane.b32.xlu0 %v3168, 6
      %v3392 = vpop.permute.xlu0 %3391
      %3393 = vrot.lane.b32.xlu0 %v3170, 6
      %v3394 = vpop.permute.xlu0 %3393
      %3395 = vrot.lane.b32.xlu0 %v3172, 6
      %v3396 = vpop.permute.xlu0 %3395
      %3397 = vrot.lane.b32.xlu0 %v3174, 6
      %v3398 = vpop.permute.xlu0 %3397
      %3399 = vrot.lane.b32.xlu0 %v3176, 6
      %v3400 = vpop.permute.xlu0 %3399
      %3401 = vrot.lane.b32.xlu0 %v3178, 6
      %v3402 = vpop.permute.xlu0 %3401
      %3403 = vrot.lane.b32.xlu0 %v3180, 6
      %v3404 = vpop.permute.xlu0 %3403
      %3405 = vrot.lane.b32.xlu0 %v3182, 6
      %v3406 = vpop.permute.xlu0 %3405
      %3407 = vrot.lane.b32.xlu0 %v3184, 6
      %v3408 = vpop.permute.xlu0 %3407
      %3409 = vrot.lane.b32.xlu0 %v3186, 6
      %v3410 = vpop.permute.xlu0 %3409
      %3411 = vrot.lane.b32.xlu0 %v3188, 6
      %v3412 = vpop.permute.xlu0 %3411
      %3413 = vrot.lane.b32.xlu0 %v3190, 6
      %v3414 = vpop.permute.xlu0 %3413
      %3415 = vrot.lane.b32.xlu0 %v3192, 6
      %v3416 = vpop.permute.xlu0 %3415
      %3417 = vrot.lane.b32.xlu0 %v3194, 6
      %v3418 = vpop.permute.xlu0 %3417
      %3419 = vrot.lane.b32.xlu0 %v3196, 6
      %v3420 = vpop.permute.xlu0 %3419
      %3421 = vrot.lane.b32.xlu0 %v3198, 6
      %v3422 = vpop.permute.xlu0 %3421
      %3423 = vrot.lane.b32.xlu0 %v3200, 6
      %v3424 = vpop.permute.xlu0 %3423
      %3425 = vrot.lane.b32.xlu0 %v3202, 6
      %v3426 = vpop.permute.xlu0 %3425
      %3427 = vrot.lane.b32.xlu0 %v3204, 6
      %v3428 = vpop.permute.xlu0 %3427
      %3429 = vrot.lane.b32.xlu0 %v3206, 6
      %v3430 = vpop.permute.xlu0 %3429
      %3431 = vrot.lane.b32.xlu0 %v3208, 6
      %v3432 = vpop.permute.xlu0 %3431
      %3433 = vrot.lane.b32.xlu0 %v3210, 6
      %v3434 = vpop.permute.xlu0 %3433
      %3435 = vrot.lane.b32.xlu0 %v3212, 6
      %v3436 = vpop.permute.xlu0 %3435
      %3437 = vrot.lane.b32.xlu0 %v3214, 6
      %v3438 = vpop.permute.xlu0 %3437
      %3439 = vrot.lane.b32.xlu0 %v3216, 6
      %v3440 = vpop.permute.xlu0 %3439
      %3441 = vrot.lane.b32.xlu0 %v3218, 6
      %v3442 = vpop.permute.xlu0 %3441
      %3443 = vrot.lane.b32.xlu0 %v3220, 6
      %v3444 = vpop.permute.xlu0 %3443
      %3445 = vrot.lane.b32.xlu0 %v3222, 6
      %v3446 = vpop.permute.xlu0 %3445
      %3447 = vrot.lane.b32.xlu0 %v3224, 6
      %v3448 = vpop.permute.xlu0 %3447
      %3449 = vrot.lane.b32.xlu0 %v3226, 6
      %v3450 = vpop.permute.xlu0 %3449
      %3451 = vrot.lane.b32.xlu0 %v3228, 6
      %v3452 = vpop.permute.xlu0 %3451
      %3453 = vrot.lane.b32.xlu0 %v3230, 6
      %v3454 = vpop.permute.xlu0 %3453
      %3455 = vrot.lane.b32.xlu0 %v3232, 6
      %v3456 = vpop.permute.xlu0 %3455
      %3457 = vrot.lane.b32.xlu0 %v3234, 6
      %v3458 = vpop.permute.xlu0 %3457
      %3459 = vrot.lane.b32.xlu0 %v3236, 6
      %v3460 = vpop.permute.xlu0 %3459
      %3461 = vrot.lane.b32.xlu0 %v3238, 6
      %v3462 = vpop.permute.xlu0 %3461
      %3463 = vrot.lane.b32.xlu0 %v3240, 6
      %v3464 = vpop.permute.xlu0 %3463
      %3465 = vrot.lane.b32.xlu0 %v3242, 6
      %v3466 = vpop.permute.xlu0 %3465
      %3467 = vrot.lane.b32.xlu0 %v3244, 6
      %v3468 = vpop.permute.xlu0 %3467
      %3469 = vrot.lane.b32.xlu0 %v3246, 6
      %v3470 = vpop.permute.xlu0 %3469
      %3471 = vrot.lane.b32.xlu0 %v3248, 6
      %v3472 = vpop.permute.xlu0 %3471
      %3473 = vrot.lane.b32.xlu0 %v3250, 6
      %v3474 = vpop.permute.xlu0 %3473
      %3475 = vrot.lane.b32.xlu0 %v3252, 6
      %v3476 = vpop.permute.xlu0 %3475
      %3477 = vrot.lane.b32.xlu0 %v3254, 6
      %v3478 = vpop.permute.xlu0 %3477
      %3479 = vrot.lane.b32.xlu0 %v3256, 6
      %v3480 = vpop.permute.xlu0 %3479
      %3481 = vrot.lane.b32.xlu0 %v3258, 6
      %v3482 = vpop.permute.xlu0 %3481
      %3483 = vrot.lane.b32.xlu0 %v3260, 6
      %v3484 = vpop.permute.xlu0 %3483
      %3485 = vrot.lane.b32.xlu0 %v3262, 6
      %v3486 = vpop.permute.xlu0 %3485
      %3487 = vrot.lane.b32.xlu0 %v3264, 6
      %v3488 = vpop.permute.xlu0 %3487
      %3489 = vrot.lane.b32.xlu0 %v3266, 6
      %v3490 = vpop.permute.xlu0 %3489
      %3491 = vrot.lane.b32.xlu0 %v3268, 6
      %v3492 = vpop.permute.xlu0 %3491
      %3493 = vrot.lane.b32.xlu0 %v3267, 6
      %v3494 = vpop.permute.xlu0 %3493
      %vm3609 = vcmask 1042432
      %v3610 = vrot.slane %v206, 5
      %v3611 = vrot.slane %v207, 5
      %v3612 = vsel %vm3609, %v3610, %v3611
      %v3613 = vrot.slane %v208, 5
      %v3614 = vsel %vm3609, %v3611, %v3613
      %v3615 = vrot.slane %v209, 5
      %v3616 = vsel %vm3609, %v3613, %v3615
      %v3617 = vrot.slane %v210, 5
      %v3618 = vsel %vm3609, %v3615, %v3617
      %v3619 = vrot.slane %v211, 5
      %v3620 = vsel %vm3609, %v3617, %v3619
      %v3621 = vrot.slane %v212, 5
      %v3622 = vsel %vm3609, %v3619, %v3621
      %v3623 = vrot.slane %v213, 5
      %v3624 = vsel %vm3609, %v3621, %v3623
      %v3625 = vrot.slane %v214, 5
      %v3626 = vsel %vm3609, %v3623, %v3625
      %v3627 = vrot.slane %v215, 5
      %v3628 = vsel %vm3609, %v3625, %v3627
      %v3629 = vrot.slane %v216, 5
      %v3630 = vsel %vm3609, %v3627, %v3629
      %v3631 = vrot.slane %v217, 5
      %v3632 = vsel %vm3609, %v3629, %v3631
      %v3633 = vrot.slane %v218, 5
      %v3634 = vsel %vm3609, %v3631, %v3633
      %v3635 = vrot.slane %v219, 5
      %v3636 = vsel %vm3609, %v3633, %v3635
      %v3637 = vrot.slane %v220, 5
      %v3638 = vsel %vm3609, %v3635, %v3637
      %v3639 = vrot.slane %v221, 5
      %v3640 = vsel %vm3609, %v3637, %v3639
      %v3641 = vrot.slane %v222, 5
      %v3642 = vsel %vm3609, %v3639, %v3641
      %v3643 = vrot.slane %v223, 5
      %v3644 = vsel %vm3609, %v3641, %v3643
      %v3645 = vrot.slane %v224, 5
      %v3646 = vsel %vm3609, %v3643, %v3645
      %v3647 = vrot.slane %v225, 5
      %v3648 = vsel %vm3609, %v3645, %v3647
      %v3649 = vrot.slane %v226, 5
      %v3650 = vsel %vm3609, %v3647, %v3649
      %v3651 = vrot.slane %v227, 5
      %v3652 = vsel %vm3609, %v3649, %v3651
      %v3653 = vrot.slane %v228, 5
      %v3654 = vsel %vm3609, %v3651, %v3653
      %v3655 = vrot.slane %v229, 5
      %v3656 = vsel %vm3609, %v3653, %v3655
      %v3657 = vrot.slane %v230, 5
      %v3658 = vsel %vm3609, %v3655, %v3657
      %v3659 = vrot.slane %v231, 5
      %v3660 = vsel %vm3609, %v3657, %v3659
      %v3661 = vrot.slane %v232, 5
      %v3662 = vsel %vm3609, %v3659, %v3661
      %v3663 = vrot.slane %v233, 5
      %v3664 = vsel %vm3609, %v3661, %v3663
      %v3665 = vrot.slane %v234, 5
      %v3666 = vsel %vm3609, %v3663, %v3665
      %v3667 = vrot.slane %v235, 5
      %v3668 = vsel %vm3609, %v3665, %v3667
      %v3669 = vrot.slane %v236, 5
      %v3670 = vsel %vm3609, %v3667, %v3669
      %v3671 = vrot.slane %v237, 5
      %v3672 = vsel %vm3609, %v3669, %v3671
      %v3673 = vrot.slane %v238, 5
      %v3674 = vsel %vm3609, %v3671, %v3673
      %v3675 = vrot.slane %v239, 5
      %v3676 = vsel %vm3609, %v3673, %v3675
      %v3677 = vrot.slane %v240, 5
      %v3678 = vsel %vm3609, %v3675, %v3677
      %v3679 = vrot.slane %v241, 5
      %v3680 = vsel %vm3609, %v3677, %v3679
      %v3681 = vrot.slane %v242, 5
      %v3682 = vsel %vm3609, %v3679, %v3681
      %v3683 = vrot.slane %v243, 5
      %v3684 = vsel %vm3609, %v3681, %v3683
      %v3685 = vrot.slane %v244, 5
      %v3686 = vsel %vm3609, %v3683, %v3685
      %v3687 = vrot.slane %v245, 5
      %v3688 = vsel %vm3609, %v3685, %v3687
      %v3689 = vrot.slane %v246, 5
      %v3690 = vsel %vm3609, %v3687, %v3689
      %v3691 = vrot.slane %v247, 5
      %v3692 = vsel %vm3609, %v3689, %v3691
      %v3693 = vrot.slane %v248, 5
      %v3694 = vsel %vm3609, %v3691, %v3693
      %v3695 = vrot.slane %v249, 5
      %v3696 = vsel %vm3609, %v3693, %v3695
      %v3697 = vrot.slane %v250, 5
      %v3698 = vsel %vm3609, %v3695, %v3697
      %v3699 = vrot.slane %v251, 5
      %v3700 = vsel %vm3609, %v3697, %v3699
      %v3701 = vrot.slane %v252, 5
      %v3702 = vsel %vm3609, %v3699, %v3701
      %v3703 = vrot.slane %v253, 5
      %v3704 = vsel %vm3609, %v3701, %v3703
      %v3705 = vrot.slane %v254, 5
      %v3706 = vsel %vm3609, %v3703, %v3705
      %v3707 = vrot.slane %v255, 5
      %v3708 = vsel %vm3609, %v3705, %v3707
      %v3709 = vrot.slane %v256, 5
      %v3710 = vsel %vm3609, %v3707, %v3709
      %v3711 = vrot.slane %v257, 5
      %v3712 = vsel %vm3609, %v3709, %v3711
      %v3713 = vrot.slane %v258, 5
      %v3714 = vsel %vm3609, %v3711, %v3713
      %v3715 = vrot.slane %v259, 5
      %v3716 = vsel %vm3609, %v3713, %v3715
      %v3717 = vrot.slane %v260, 5
      %v3718 = vsel %vm3609, %v3715, %v3717
      %v3719 = vrot.slane %v261, 5
      %v3720 = vsel %vm3609, %v3717, %v3719
      %v3721 = vrot.slane %v262, 5
      %v3722 = vsel %vm3609, %v3719, %v3721
      %v3723 = vrot.slane %v263, 5
      %v3724 = vsel %vm3609, %v3721, %v3723
      %v3725 = vrot.slane %v264, 5
      %v3726 = vsel %vm3609, %v3723, %v3725
      %v3727 = vrot.slane %v265, 5
      %v3728 = vsel %vm3609, %v3725, %v3727
      %v3729 = vrot.slane %v266, 5
      %v3730 = vsel %vm3609, %v3727, %v3729
      %v3731 = vrot.slane %v267, 5
      %v3732 = vsel %vm3609, %v3729, %v3731
      %v3733 = vrot.slane %v268, 5
      %v3734 = vsel %vm3609, %v3731, %v3733
      %v3735 = vrot.slane %v269, 5
      %v3736 = vsel %vm3609, %v3733, %v3735
      %v3737 = vrot.slane %v270, 5
      %v3738 = vsel %vm3609, %v3735, %v3737
      %v3739 = vrot.slane %v271, 5
      %v3740 = vsel %vm3609, %v3737, %v3739
      %v3741 = vrot.slane %v272, 5
      %v3742 = vsel %vm3609, %v3739, %v3741
      %v3743 = vrot.slane %v273, 5
      %v3744 = vsel %vm3609, %v3741, %v3743
      %v3745 = vrot.slane %v274, 5
      %v3746 = vsel %vm3609, %v3743, %v3745
      %v3747 = vrot.slane %v275, 5
      %v3748 = vsel %vm3609, %v3745, %v3747
      %v3749 = vrot.slane %v276, 5
      %v3750 = vsel %vm3609, %v3747, %v3749
      %v3751 = vrot.slane %v277, 5
      %v3752 = vsel %vm3609, %v3749, %v3751
      %v3753 = vrot.slane %v278, 5
      %v3754 = vsel %vm3609, %v3751, %v3753
      %v3755 = vrot.slane %v279, 5
      %v3756 = vsel %vm3609, %v3753, %v3755
      %v3757 = vrot.slane %v280, 5
      %v3758 = vsel %vm3609, %v3755, %v3757
      %v3759 = vrot.slane %v281, 5
      %v3760 = vsel %vm3609, %v3757, %v3759
      %v3761 = vrot.slane %v282, 5
      %v3762 = vsel %vm3609, %v3759, %v3761
      %v3763 = vrot.slane %v283, 5
      %v3764 = vsel %vm3609, %v3761, %v3763
      %v3765 = vrot.slane %v284, 5
      %v3766 = vsel %vm3609, %v3763, %v3765
      %v3767 = vrot.slane %v285, 5
      %v3768 = vsel %vm3609, %v3765, %v3767
      %v3769 = vrot.slane %v286, 5
      %v3770 = vsel %vm3609, %v3767, %v3769
      %v3771 = vrot.slane %v287, 5
      %v3772 = vsel %vm3609, %v3769, %v3771
      %v3773 = vrot.slane %v288, 5
      %v3774 = vsel %vm3609, %v3771, %v3773
      %v3775 = vrot.slane %v289, 5
      %v3776 = vsel %vm3609, %v3773, %v3775
      %v3777 = vrot.slane %v290, 5
      %v3778 = vsel %vm3609, %v3775, %v3777
      %v3779 = vrot.slane %v291, 5
      %v3780 = vsel %vm3609, %v3777, %v3779
      %v3781 = vrot.slane %v292, 5
      %v3782 = vsel %vm3609, %v3779, %v3781
      %v3783 = vrot.slane %v293, 5
      %v3784 = vsel %vm3609, %v3781, %v3783
      %v3785 = vrot.slane %v294, 5
      %v3786 = vsel %vm3609, %v3783, %v3785
      %v3787 = vrot.slane %v295, 5
      %v3788 = vsel %vm3609, %v3785, %v3787
      %v3789 = vrot.slane %v296, 5
      %v3790 = vsel %vm3609, %v3787, %v3789
      %v3791 = vrot.slane %v297, 5
      %v3792 = vsel %vm3609, %v3789, %v3791
      %v3793 = vrot.slane %v298, 5
      %v3794 = vsel %vm3609, %v3791, %v3793
      %v3795 = vrot.slane %v299, 5
      %v3796 = vsel %vm3609, %v3793, %v3795
      %v3797 = vrot.slane %v300, 5
      %v3798 = vsel %vm3609, %v3795, %v3797
      %v3799 = vrot.slane %v301, 5
      %v3800 = vsel %vm3609, %v3797, %v3799
      %v3801 = vrot.slane %v302, 5
      %v3802 = vsel %vm3609, %v3799, %v3801
      %v3803 = vrot.slane %v303, 5
      %v3804 = vsel %vm3609, %v3801, %v3803
      %v3805 = vrot.slane %v304, 5
      %v3806 = vsel %vm3609, %v3803, %v3805
      %v3807 = vrot.slane %v305, 5
      %v3808 = vsel %vm3609, %v3805, %v3807
      %v3809 = vrot.slane %v306, 5
      %v3810 = vsel %vm3609, %v3807, %v3809
      %v3811 = vrot.slane %v307, 5
      %v3812 = vsel %vm3609, %v3809, %v3811
      %v3813 = vrot.slane %v308, 5
      %v3814 = vsel %vm3609, %v3811, %v3813
      %v3815 = vrot.slane %v309, 5
      %v3816 = vsel %vm3609, %v3813, %v3815
      %v3817 = vrot.slane %v310, 5
      %v3818 = vsel %vm3609, %v3815, %v3817
      %v3819 = vrot.slane %v311, 5
      %v3820 = vsel %vm3609, %v3817, %v3819
      %v3821 = vrot.slane %v312, 5
      %v3822 = vsel %vm3609, %v3819, %v3821
      %v3823 = vrot.slane %v313, 5
      %v3824 = vsel %vm3609, %v3821, %v3823
      %v3825 = vrot.slane %v314, 5
      %v3826 = vsel %vm3609, %v3823, %v3825
      %v3827 = vrot.slane %v315, 5
      %v3828 = vsel %vm3609, %v3825, %v3827
      %v3829 = vrot.slane %v316, 5
      %v3830 = vsel %vm3609, %v3827, %v3829
      %v3831 = vrot.slane %v317, 5
      %v3832 = vsel %vm3609, %v3829, %v3831
      %v3833 = vrot.slane %v318, 5
      %v3834 = vsel %vm3609, %v3831, %v3833
      %v3835 = vrot.slane %v319, 5
      %v3836 = vsel %vm3609, %v3833, %v3835
      %3837 = vrot.lane.b32.xlu0 %v3612, 7
      %v3838 = vpop.permute.xlu0 %3837
      %3839 = vrot.lane.b32.xlu0 %v3614, 7
      %v3840 = vpop.permute.xlu0 %3839
      %3841 = vrot.lane.b32.xlu0 %v3616, 7
      %v3842 = vpop.permute.xlu0 %3841
      %3843 = vrot.lane.b32.xlu0 %v3618, 7
      %v3844 = vpop.permute.xlu0 %3843
      %3845 = vrot.lane.b32.xlu0 %v3620, 7
      %v3846 = vpop.permute.xlu0 %3845
      %3847 = vrot.lane.b32.xlu0 %v3622, 7
      %v3848 = vpop.permute.xlu0 %3847
      %3849 = vrot.lane.b32.xlu0 %v3624, 7
      %v3850 = vpop.permute.xlu0 %3849
      %3851 = vrot.lane.b32.xlu0 %v3626, 7
      %v3852 = vpop.permute.xlu0 %3851
      %3853 = vrot.lane.b32.xlu0 %v3628, 7
      %v3854 = vpop.permute.xlu0 %3853
      %3855 = vrot.lane.b32.xlu0 %v3630, 7
      %v3856 = vpop.permute.xlu0 %3855
      %3857 = vrot.lane.b32.xlu0 %v3632, 7
      %v3858 = vpop.permute.xlu0 %3857
      %3859 = vrot.lane.b32.xlu0 %v3634, 7
      %v3860 = vpop.permute.xlu0 %3859
      %3861 = vrot.lane.b32.xlu0 %v3636, 7
      %v3862 = vpop.permute.xlu0 %3861
      %3863 = vrot.lane.b32.xlu0 %v3638, 7
      %v3864 = vpop.permute.xlu0 %3863
      %3865 = vrot.lane.b32.xlu0 %v3640, 7
      %v3866 = vpop.permute.xlu0 %3865
      %3867 = vrot.lane.b32.xlu0 %v3642, 7
      %v3868 = vpop.permute.xlu0 %3867
      %3869 = vrot.lane.b32.xlu0 %v3644, 7
      %v3870 = vpop.permute.xlu0 %3869
      %3871 = vrot.lane.b32.xlu0 %v3646, 7
      %v3872 = vpop.permute.xlu0 %3871
      %3873 = vrot.lane.b32.xlu0 %v3648, 7
      %v3874 = vpop.permute.xlu0 %3873
      %3875 = vrot.lane.b32.xlu0 %v3650, 7
      %v3876 = vpop.permute.xlu0 %3875
      %3877 = vrot.lane.b32.xlu0 %v3652, 7
      %v3878 = vpop.permute.xlu0 %3877
      %3879 = vrot.lane.b32.xlu0 %v3654, 7
      %v3880 = vpop.permute.xlu0 %3879
      %3881 = vrot.lane.b32.xlu0 %v3656, 7
      %v3882 = vpop.permute.xlu0 %3881
      %3883 = vrot.lane.b32.xlu0 %v3658, 7
      %v3884 = vpop.permute.xlu0 %3883
      %3885 = vrot.lane.b32.xlu0 %v3660, 7
      %v3886 = vpop.permute.xlu0 %3885
      %3887 = vrot.lane.b32.xlu0 %v3662, 7
      %v3888 = vpop.permute.xlu0 %3887
      %3889 = vrot.lane.b32.xlu0 %v3664, 7
      %v3890 = vpop.permute.xlu0 %3889
      %3891 = vrot.lane.b32.xlu0 %v3666, 7
      %v3892 = vpop.permute.xlu0 %3891
      %3893 = vrot.lane.b32.xlu0 %v3668, 7
      %v3894 = vpop.permute.xlu0 %3893
      %3895 = vrot.lane.b32.xlu0 %v3670, 7
      %v3896 = vpop.permute.xlu0 %3895
      %3897 = vrot.lane.b32.xlu0 %v3672, 7
      %v3898 = vpop.permute.xlu0 %3897
      %3899 = vrot.lane.b32.xlu0 %v3674, 7
      %v3900 = vpop.permute.xlu0 %3899
      %3901 = vrot.lane.b32.xlu0 %v3676, 7
      %v3902 = vpop.permute.xlu0 %3901
      %3903 = vrot.lane.b32.xlu0 %v3678, 7
      %v3904 = vpop.permute.xlu0 %3903
      %3905 = vrot.lane.b32.xlu0 %v3680, 7
      %v3906 = vpop.permute.xlu0 %3905
      %3907 = vrot.lane.b32.xlu0 %v3682, 7
      %v3908 = vpop.permute.xlu0 %3907
      %3909 = vrot.lane.b32.xlu0 %v3684, 7
      %v3910 = vpop.permute.xlu0 %3909
      %3911 = vrot.lane.b32.xlu0 %v3686, 7
      %v3912 = vpop.permute.xlu0 %3911
      %3913 = vrot.lane.b32.xlu0 %v3688, 7
      %v3914 = vpop.permute.xlu0 %3913
      %3915 = vrot.lane.b32.xlu0 %v3690, 7
      %v3916 = vpop.permute.xlu0 %3915
      %3917 = vrot.lane.b32.xlu0 %v3692, 7
      %v3918 = vpop.permute.xlu0 %3917
      %3919 = vrot.lane.b32.xlu0 %v3694, 7
      %v3920 = vpop.permute.xlu0 %3919
      %3921 = vrot.lane.b32.xlu0 %v3696, 7
      %v3922 = vpop.permute.xlu0 %3921
      %3923 = vrot.lane.b32.xlu0 %v3698, 7
      %v3924 = vpop.permute.xlu0 %3923
      %3925 = vrot.lane.b32.xlu0 %v3700, 7
      %v3926 = vpop.permute.xlu0 %3925
      %3927 = vrot.lane.b32.xlu0 %v3702, 7
      %v3928 = vpop.permute.xlu0 %3927
      %3929 = vrot.lane.b32.xlu0 %v3704, 7
      %v3930 = vpop.permute.xlu0 %3929
      %3931 = vrot.lane.b32.xlu0 %v3706, 7
      %v3932 = vpop.permute.xlu0 %3931
      %3933 = vrot.lane.b32.xlu0 %v3708, 7
      %v3934 = vpop.permute.xlu0 %3933
      %3935 = vrot.lane.b32.xlu0 %v3710, 7
      %v3936 = vpop.permute.xlu0 %3935
      %3937 = vrot.lane.b32.xlu0 %v3712, 7
      %v3938 = vpop.permute.xlu0 %3937
      %3939 = vrot.lane.b32.xlu0 %v3714, 7
      %v3940 = vpop.permute.xlu0 %3939
      %3941 = vrot.lane.b32.xlu0 %v3716, 7
      %v3942 = vpop.permute.xlu0 %3941
      %3943 = vrot.lane.b32.xlu0 %v3718, 7
      %v3944 = vpop.permute.xlu0 %3943
      %3945 = vrot.lane.b32.xlu0 %v3720, 7
      %v3946 = vpop.permute.xlu0 %3945
      %3947 = vrot.lane.b32.xlu0 %v3722, 7
      %v3948 = vpop.permute.xlu0 %3947
      %3949 = vrot.lane.b32.xlu0 %v3724, 7
      %v3950 = vpop.permute.xlu0 %3949
      %3951 = vrot.lane.b32.xlu0 %v3726, 7
      %v3952 = vpop.permute.xlu0 %3951
      %3953 = vrot.lane.b32.xlu0 %v3728, 7
      %v3954 = vpop.permute.xlu0 %3953
      %3955 = vrot.lane.b32.xlu0 %v3730, 7
      %v3956 = vpop.permute.xlu0 %3955
      %3957 = vrot.lane.b32.xlu0 %v3732, 7
      %v3958 = vpop.permute.xlu0 %3957
      %3959 = vrot.lane.b32.xlu0 %v3734, 7
      %v3960 = vpop.permute.xlu0 %3959
      %3961 = vrot.lane.b32.xlu0 %v3736, 7
      %v3962 = vpop.permute.xlu0 %3961
      %3963 = vrot.lane.b32.xlu0 %v3738, 7
      %v3964 = vpop.permute.xlu0 %3963
      %3965 = vrot.lane.b32.xlu0 %v3740, 7
      %v3966 = vpop.permute.xlu0 %3965
      %3967 = vrot.lane.b32.xlu0 %v3742, 7
      %v3968 = vpop.permute.xlu0 %3967
      %3969 = vrot.lane.b32.xlu0 %v3744, 7
      %v3970 = vpop.permute.xlu0 %3969
      %3971 = vrot.lane.b32.xlu0 %v3746, 7
      %v3972 = vpop.permute.xlu0 %3971
      %3973 = vrot.lane.b32.xlu0 %v3748, 7
      %v3974 = vpop.permute.xlu0 %3973
      %3975 = vrot.lane.b32.xlu0 %v3750, 7
      %v3976 = vpop.permute.xlu0 %3975
      %3977 = vrot.lane.b32.xlu0 %v3752, 7
      %v3978 = vpop.permute.xlu0 %3977
      %3979 = vrot.lane.b32.xlu0 %v3754, 7
      %v3980 = vpop.permute.xlu0 %3979
      %3981 = vrot.lane.b32.xlu0 %v3756, 7
      %v3982 = vpop.permute.xlu0 %3981
      %3983 = vrot.lane.b32.xlu0 %v3758, 7
      %v3984 = vpop.permute.xlu0 %3983
      %3985 = vrot.lane.b32.xlu0 %v3760, 7
      %v3986 = vpop.permute.xlu0 %3985
      %3987 = vrot.lane.b32.xlu0 %v3762, 7
      %v3988 = vpop.permute.xlu0 %3987
      %3989 = vrot.lane.b32.xlu0 %v3764, 7
      %v3990 = vpop.permute.xlu0 %3989
      %3991 = vrot.lane.b32.xlu0 %v3766, 7
      %v3992 = vpop.permute.xlu0 %3991
      %3993 = vrot.lane.b32.xlu0 %v3768, 7
      %v3994 = vpop.permute.xlu0 %3993
      %3995 = vrot.lane.b32.xlu0 %v3770, 7
      %v3996 = vpop.permute.xlu0 %3995
      %3997 = vrot.lane.b32.xlu0 %v3772, 7
      %v3998 = vpop.permute.xlu0 %3997
      %3999 = vrot.lane.b32.xlu0 %v3774, 7
      %v4000 = vpop.permute.xlu0 %3999
      %4001 = vrot.lane.b32.xlu0 %v3776, 7
      %v4002 = vpop.permute.xlu0 %4001
      %4003 = vrot.lane.b32.xlu0 %v3778, 7
      %v4004 = vpop.permute.xlu0 %4003
      %4005 = vrot.lane.b32.xlu0 %v3780, 7
      %v4006 = vpop.permute.xlu0 %4005
      %4007 = vrot.lane.b32.xlu0 %v3782, 7
      %v4008 = vpop.permute.xlu0 %4007
      %4009 = vrot.lane.b32.xlu0 %v3784, 7
      %v4010 = vpop.permute.xlu0 %4009
      %4011 = vrot.lane.b32.xlu0 %v3786, 7
      %v4012 = vpop.permute.xlu0 %4011
      %4013 = vrot.lane.b32.xlu0 %v3788, 7
      %v4014 = vpop.permute.xlu0 %4013
      %4015 = vrot.lane.b32.xlu0 %v3790, 7
      %v4016 = vpop.permute.xlu0 %4015
      %4017 = vrot.lane.b32.xlu0 %v3792, 7
      %v4018 = vpop.permute.xlu0 %4017
      %4019 = vrot.lane.b32.xlu0 %v3794, 7
      %v4020 = vpop.permute.xlu0 %4019
      %4021 = vrot.lane.b32.xlu0 %v3796, 7
      %v4022 = vpop.permute.xlu0 %4021
      %4023 = vrot.lane.b32.xlu0 %v3798, 7
      %v4024 = vpop.permute.xlu0 %4023
      %4025 = vrot.lane.b32.xlu0 %v3800, 7
      %v4026 = vpop.permute.xlu0 %4025
      %4027 = vrot.lane.b32.xlu0 %v3802, 7
      %v4028 = vpop.permute.xlu0 %4027
      %4029 = vrot.lane.b32.xlu0 %v3804, 7
      %v4030 = vpop.permute.xlu0 %4029
      %4031 = vrot.lane.b32.xlu0 %v3806, 7
      %v4032 = vpop.permute.xlu0 %4031
      %4033 = vrot.lane.b32.xlu0 %v3808, 7
      %v4034 = vpop.permute.xlu0 %4033
      %4035 = vrot.lane.b32.xlu0 %v3810, 7
      %v4036 = vpop.permute.xlu0 %4035
      %4037 = vrot.lane.b32.xlu0 %v3812, 7
      %v4038 = vpop.permute.xlu0 %4037
      %4039 = vrot.lane.b32.xlu0 %v3814, 7
      %v4040 = vpop.permute.xlu0 %4039
      %4041 = vrot.lane.b32.xlu0 %v3816, 7
      %v4042 = vpop.permute.xlu0 %4041
      %4043 = vrot.lane.b32.xlu0 %v3818, 7
      %v4044 = vpop.permute.xlu0 %4043
      %4045 = vrot.lane.b32.xlu0 %v3820, 7
      %v4046 = vpop.permute.xlu0 %4045
      %4047 = vrot.lane.b32.xlu0 %v3822, 7
      %v4048 = vpop.permute.xlu0 %4047
      %4049 = vrot.lane.b32.xlu0 %v3824, 7
      %v4050 = vpop.permute.xlu0 %4049
      %4051 = vrot.lane.b32.xlu0 %v3826, 7
      %v4052 = vpop.permute.xlu0 %4051
      %4053 = vrot.lane.b32.xlu0 %v3828, 7
      %v4054 = vpop.permute.xlu0 %4053
      %4055 = vrot.lane.b32.xlu0 %v3830, 7
      %v4056 = vpop.permute.xlu0 %4055
      %4057 = vrot.lane.b32.xlu0 %v3832, 7
      %v4058 = vpop.permute.xlu0 %4057
      %4059 = vrot.lane.b32.xlu0 %v3834, 7
      %v4060 = vpop.permute.xlu0 %4059
      %4061 = vrot.lane.b32.xlu0 %v3836, 7
      %v4062 = vpop.permute.xlu0 %4061
      %v4176 = vrot.slane %v316, 6
      %v4177 = vsel %vm1567, %v1793, %v4176
      %v4178 = vrot.slane %v317, 6
      %v4179 = vsel %vm1567, %v4176, %v4178
      %v4180 = vrot.slane %v318, 6
      %v4181 = vsel %vm1567, %v4178, %v4180
      %v4182 = vrot.slane %v319, 6
      %v4183 = vsel %vm1567, %v4180, %v4182
      %4184 = vrot.lane.b32.xlu0 %v1578, 8
      %v4185 = vpop.permute.xlu0 %4184
      %4186 = vrot.lane.b32.xlu0 %v1580, 8
      %v4187 = vpop.permute.xlu0 %4186
      %4188 = vrot.lane.b32.xlu0 %v1582, 8
      %v4189 = vpop.permute.xlu0 %4188
      %4190 = vrot.lane.b32.xlu0 %v1584, 8
      %v4191 = vpop.permute.xlu0 %4190
      %4192 = vrot.lane.b32.xlu0 %v1586, 8
      %v4193 = vpop.permute.xlu0 %4192
      %4194 = vrot.lane.b32.xlu0 %v1588, 8
      %v4195 = vpop.permute.xlu0 %4194
      %4196 = vrot.lane.b32.xlu0 %v1590, 8
      %v4197 = vpop.permute.xlu0 %4196
      %4198 = vrot.lane.b32.xlu0 %v1592, 8
      %v4199 = vpop.permute.xlu0 %4198
      %4200 = vrot.lane.b32.xlu0 %v1594, 8
      %v4201 = vpop.permute.xlu0 %4200
      %4202 = vrot.lane.b32.xlu0 %v1596, 8
      %v4203 = vpop.permute.xlu0 %4202
      %4204 = vrot.lane.b32.xlu0 %v1598, 8
      %v4205 = vpop.permute.xlu0 %4204
      %4206 = vrot.lane.b32.xlu0 %v1600, 8
      %v4207 = vpop.permute.xlu0 %4206
      %4208 = vrot.lane.b32.xlu0 %v1602, 8
      %v4209 = vpop.permute.xlu0 %4208
      %4210 = vrot.lane.b32.xlu0 %v1604, 8
      %v4211 = vpop.permute.xlu0 %4210
      %4212 = vrot.lane.b32.xlu0 %v1606, 8
      %v4213 = vpop.permute.xlu0 %4212
      %4214 = vrot.lane.b32.xlu0 %v1608, 8
      %v4215 = vpop.permute.xlu0 %4214
      %4216 = vrot.lane.b32.xlu0 %v1610, 8
      %v4217 = vpop.permute.xlu0 %4216
      %4218 = vrot.lane.b32.xlu0 %v1612, 8
      %v4219 = vpop.permute.xlu0 %4218
      %4220 = vrot.lane.b32.xlu0 %v1614, 8
      %v4221 = vpop.permute.xlu0 %4220
      %4222 = vrot.lane.b32.xlu0 %v1616, 8
      %v4223 = vpop.permute.xlu0 %4222
      %4224 = vrot.lane.b32.xlu0 %v1618, 8
      %v4225 = vpop.permute.xlu0 %4224
      %4226 = vrot.lane.b32.xlu0 %v1620, 8
      %v4227 = vpop.permute.xlu0 %4226
      %4228 = vrot.lane.b32.xlu0 %v1622, 8
      %v4229 = vpop.permute.xlu0 %4228
      %4230 = vrot.lane.b32.xlu0 %v1624, 8
      %v4231 = vpop.permute.xlu0 %4230
      %4232 = vrot.lane.b32.xlu0 %v1626, 8
      %v4233 = vpop.permute.xlu0 %4232
      %4234 = vrot.lane.b32.xlu0 %v1628, 8
      %v4235 = vpop.permute.xlu0 %4234
      %4236 = vrot.lane.b32.xlu0 %v1630, 8
      %v4237 = vpop.permute.xlu0 %4236
      %4238 = vrot.lane.b32.xlu0 %v1632, 8
      %v4239 = vpop.permute.xlu0 %4238
      %4240 = vrot.lane.b32.xlu0 %v1634, 8
      %v4241 = vpop.permute.xlu0 %4240
      %4242 = vrot.lane.b32.xlu0 %v1636, 8
      %v4243 = vpop.permute.xlu0 %4242
      %4244 = vrot.lane.b32.xlu0 %v1638, 8
      %v4245 = vpop.permute.xlu0 %4244
      %4246 = vrot.lane.b32.xlu0 %v1640, 8
      %v4247 = vpop.permute.xlu0 %4246
      %4248 = vrot.lane.b32.xlu0 %v1642, 8
      %v4249 = vpop.permute.xlu0 %4248
      %4250 = vrot.lane.b32.xlu0 %v1644, 8
      %v4251 = vpop.permute.xlu0 %4250
      %4252 = vrot.lane.b32.xlu0 %v1646, 8
      %v4253 = vpop.permute.xlu0 %4252
      %4254 = vrot.lane.b32.xlu0 %v1648, 8
      %v4255 = vpop.permute.xlu0 %4254
      %4256 = vrot.lane.b32.xlu0 %v1650, 8
      %v4257 = vpop.permute.xlu0 %4256
      %4258 = vrot.lane.b32.xlu0 %v1652, 8
      %v4259 = vpop.permute.xlu0 %4258
      %4260 = vrot.lane.b32.xlu0 %v1654, 8
      %v4261 = vpop.permute.xlu0 %4260
      %4262 = vrot.lane.b32.xlu0 %v1656, 8
      %v4263 = vpop.permute.xlu0 %4262
      %4264 = vrot.lane.b32.xlu0 %v1658, 8
      %v4265 = vpop.permute.xlu0 %4264
      %4266 = vrot.lane.b32.xlu0 %v1660, 8
      %v4267 = vpop.permute.xlu0 %4266
      %4268 = vrot.lane.b32.xlu0 %v1662, 8
      %v4269 = vpop.permute.xlu0 %4268
      %4270 = vrot.lane.b32.xlu0 %v1664, 8
      %v4271 = vpop.permute.xlu0 %4270
      %4272 = vrot.lane.b32.xlu0 %v1666, 8
      %v4273 = vpop.permute.xlu0 %4272
      %4274 = vrot.lane.b32.xlu0 %v1668, 8
      %v4275 = vpop.permute.xlu0 %4274
      %4276 = vrot.lane.b32.xlu0 %v1670, 8
      %v4277 = vpop.permute.xlu0 %4276
      %4278 = vrot.lane.b32.xlu0 %v1672, 8
      %v4279 = vpop.permute.xlu0 %4278
      %4280 = vrot.lane.b32.xlu0 %v1674, 8
      %v4281 = vpop.permute.xlu0 %4280
      %4282 = vrot.lane.b32.xlu0 %v1676, 8
      %v4283 = vpop.permute.xlu0 %4282
      %4284 = vrot.lane.b32.xlu0 %v1678, 8
      %v4285 = vpop.permute.xlu0 %4284
      %4286 = vrot.lane.b32.xlu0 %v1680, 8
      %v4287 = vpop.permute.xlu0 %4286
      %4288 = vrot.lane.b32.xlu0 %v1682, 8
      %v4289 = vpop.permute.xlu0 %4288
      %4290 = vrot.lane.b32.xlu0 %v1684, 8
      %v4291 = vpop.permute.xlu0 %4290
      %4292 = vrot.lane.b32.xlu0 %v1686, 8
      %v4293 = vpop.permute.xlu0 %4292
      %4294 = vrot.lane.b32.xlu0 %v1688, 8
      %v4295 = vpop.permute.xlu0 %4294
      %4296 = vrot.lane.b32.xlu0 %v1690, 8
      %v4297 = vpop.permute.xlu0 %4296
      %4298 = vrot.lane.b32.xlu0 %v1692, 8
      %v4299 = vpop.permute.xlu0 %4298
      %4300 = vrot.lane.b32.xlu0 %v1694, 8
      %v4301 = vpop.permute.xlu0 %4300
      %4302 = vrot.lane.b32.xlu0 %v1696, 8
      %v4303 = vpop.permute.xlu0 %4302
      %4304 = vrot.lane.b32.xlu0 %v1698, 8
      %v4305 = vpop.permute.xlu0 %4304
      %4306 = vrot.lane.b32.xlu0 %v1700, 8
      %v4307 = vpop.permute.xlu0 %4306
      %4308 = vrot.lane.b32.xlu0 %v1702, 8
      %v4309 = vpop.permute.xlu0 %4308
      %4310 = vrot.lane.b32.xlu0 %v1704, 8
      %v4311 = vpop.permute.xlu0 %4310
      %4312 = vrot.lane.b32.xlu0 %v1706, 8
      %v4313 = vpop.permute.xlu0 %4312
      %4314 = vrot.lane.b32.xlu0 %v1708, 8
      %v4315 = vpop.permute.xlu0 %4314
      %4316 = vrot.lane.b32.xlu0 %v1710, 8
      %v4317 = vpop.permute.xlu0 %4316
      %4318 = vrot.lane.b32.xlu0 %v1712, 8
      %v4319 = vpop.permute.xlu0 %4318
      %4320 = vrot.lane.b32.xlu0 %v1714, 8
      %v4321 = vpop.permute.xlu0 %4320
      %4322 = vrot.lane.b32.xlu0 %v1716, 8
      %v4323 = vpop.permute.xlu0 %4322
      %4324 = vrot.lane.b32.xlu0 %v1718, 8
      %v4325 = vpop.permute.xlu0 %4324
      %4326 = vrot.lane.b32.xlu0 %v1720, 8
      %v4327 = vpop.permute.xlu0 %4326
      %4328 = vrot.lane.b32.xlu0 %v1722, 8
      %v4329 = vpop.permute.xlu0 %4328
      %4330 = vrot.lane.b32.xlu0 %v1724, 8
      %v4331 = vpop.permute.xlu0 %4330
      %4332 = vrot.lane.b32.xlu0 %v1726, 8
      %v4333 = vpop.permute.xlu0 %4332
      %4334 = vrot.lane.b32.xlu0 %v1728, 8
      %v4335 = vpop.permute.xlu0 %4334
      %4336 = vrot.lane.b32.xlu0 %v1730, 8
      %v4337 = vpop.permute.xlu0 %4336
      %4338 = vrot.lane.b32.xlu0 %v1732, 8
      %v4339 = vpop.permute.xlu0 %4338
      %4340 = vrot.lane.b32.xlu0 %v1734, 8
      %v4341 = vpop.permute.xlu0 %4340
      %4342 = vrot.lane.b32.xlu0 %v1736, 8
      %v4343 = vpop.permute.xlu0 %4342
      %4344 = vrot.lane.b32.xlu0 %v1738, 8
      %v4345 = vpop.permute.xlu0 %4344
      %4346 = vrot.lane.b32.xlu0 %v1740, 8
      %v4347 = vpop.permute.xlu0 %4346
      %4348 = vrot.lane.b32.xlu0 %v1742, 8
      %v4349 = vpop.permute.xlu0 %4348
      %4350 = vrot.lane.b32.xlu0 %v1744, 8
      %v4351 = vpop.permute.xlu0 %4350
      %4352 = vrot.lane.b32.xlu0 %v1746, 8
      %v4353 = vpop.permute.xlu0 %4352
      %4354 = vrot.lane.b32.xlu0 %v1748, 8
      %v4355 = vpop.permute.xlu0 %4354
      %4356 = vrot.lane.b32.xlu0 %v1750, 8
      %v4357 = vpop.permute.xlu0 %4356
      %4358 = vrot.lane.b32.xlu0 %v1752, 8
      %v4359 = vpop.permute.xlu0 %4358
      %4360 = vrot.lane.b32.xlu0 %v1754, 8
      %v4361 = vpop.permute.xlu0 %4360
      %4362 = vrot.lane.b32.xlu0 %v1756, 8
      %v4363 = vpop.permute.xlu0 %4362
      %4364 = vrot.lane.b32.xlu0 %v1758, 8
      %v4365 = vpop.permute.xlu0 %4364
      %4366 = vrot.lane.b32.xlu0 %v1760, 8
      %v4367 = vpop.permute.xlu0 %4366
      %4368 = vrot.lane.b32.xlu0 %v1762, 8
      %v4369 = vpop.permute.xlu0 %4368
      %4370 = vrot.lane.b32.xlu0 %v1764, 8
      %v4371 = vpop.permute.xlu0 %4370
      %4372 = vrot.lane.b32.xlu0 %v1766, 8
      %v4373 = vpop.permute.xlu0 %4372
      %4374 = vrot.lane.b32.xlu0 %v1768, 8
      %v4375 = vpop.permute.xlu0 %4374
      %4376 = vrot.lane.b32.xlu0 %v1770, 8
      %v4377 = vpop.permute.xlu0 %4376
      %4378 = vrot.lane.b32.xlu0 %v1772, 8
      %v4379 = vpop.permute.xlu0 %4378
      %4380 = vrot.lane.b32.xlu0 %v1774, 8
      %v4381 = vpop.permute.xlu0 %4380
      %4382 = vrot.lane.b32.xlu0 %v1776, 8
      %v4383 = vpop.permute.xlu0 %4382
      %4384 = vrot.lane.b32.xlu0 %v1778, 8
      %v4385 = vpop.permute.xlu0 %4384
      %4386 = vrot.lane.b32.xlu0 %v1780, 8
      %v4387 = vpop.permute.xlu0 %4386
      %4388 = vrot.lane.b32.xlu0 %v1782, 8
      %v4389 = vpop.permute.xlu0 %4388
      %4390 = vrot.lane.b32.xlu0 %v1784, 8
      %v4391 = vpop.permute.xlu0 %4390
      %4392 = vrot.lane.b32.xlu0 %v1786, 8
      %v4393 = vpop.permute.xlu0 %4392
      %4394 = vrot.lane.b32.xlu0 %v1788, 8
      %v4395 = vpop.permute.xlu0 %4394
      %4396 = vrot.lane.b32.xlu0 %v1790, 8
      %v4397 = vpop.permute.xlu0 %4396
      %4398 = vrot.lane.b32.xlu0 %v1792, 8
      %v4399 = vpop.permute.xlu0 %4398
      %4400 = vrot.lane.b32.xlu0 %v1794, 8
      %v4401 = vpop.permute.xlu0 %4400
      %4402 = vrot.lane.b32.xlu0 %v4177, 8
      %v4403 = vpop.permute.xlu0 %4402
      %4404 = vrot.lane.b32.xlu0 %v4179, 8
      %v4405 = vpop.permute.xlu0 %4404
      %4406 = vrot.lane.b32.xlu0 %v4181, 8
      %v4407 = vpop.permute.xlu0 %4406
      %4408 = vrot.lane.b32.xlu0 %v4183, 8
      %v4409 = vpop.permute.xlu0 %4408
      %vm4523 = vcmask 7168
      %v4524 = vsel %vm4523, %v199, %v660
      %v4525 = vsel %vm4523, %v200, %v662
      %v4526 = vsel %vm4523, %v201, %v664
      %v4527 = vsel %vm4523, %v202, %v666
      %v4528 = vsel %vm4523, %v203, %v668
      %v4529 = vsel %vm4523, %v204, %v670
      %v4530 = vsel %vm4523, %v205, %v672
      %v4531 = vsel %vm4523, %v206, %v674
      %v4532 = vsel %vm4523, %v207, %v676
      %v4533 = vsel %vm4523, %v208, %v678
      %v4534 = vsel %vm4523, %v209, %v680
      %v4535 = vsel %vm4523, %v210, %v682
      %v4536 = vsel %vm4523, %v211, %v684
      %v4537 = vsel %vm4523, %v212, %v686
      %v4538 = vsel %vm4523, %v213, %v688
      %v4539 = vsel %vm4523, %v214, %v690
      %v4540 = vsel %vm4523, %v215, %v692
      %v4541 = vsel %vm4523, %v216, %v694
      %v4542 = vsel %vm4523, %v217, %v696
      %v4543 = vsel %vm4523, %v218, %v698
      %v4544 = vsel %vm4523, %v219, %v700
      %v4545 = vsel %vm4523, %v220, %v702
      %v4546 = vsel %vm4523, %v221, %v704
      %v4547 = vsel %vm4523, %v222, %v706
      %v4548 = vsel %vm4523, %v223, %v708
      %v4549 = vsel %vm4523, %v224, %v710
      %v4550 = vsel %vm4523, %v225, %v712
      %v4551 = vsel %vm4523, %v226, %v714
      %v4552 = vsel %vm4523, %v227, %v716
      %v4553 = vsel %vm4523, %v228, %v718
      %v4554 = vsel %vm4523, %v229, %v720
      %v4555 = vsel %vm4523, %v230, %v722
      %v4556 = vsel %vm4523, %v231, %v724
      %v4557 = vsel %vm4523, %v232, %v726
      %v4558 = vsel %vm4523, %v233, %v728
      %v4559 = vsel %vm4523, %v234, %v730
      %v4560 = vsel %vm4523, %v235, %v732
      %v4561 = vsel %vm4523, %v236, %v734
      %v4562 = vsel %vm4523, %v237, %v736
      %v4563 = vsel %vm4523, %v238, %v738
      %v4564 = vsel %vm4523, %v239, %v740
      %v4565 = vsel %vm4523, %v240, %v742
      %v4566 = vsel %vm4523, %v241, %v744
      %v4567 = vsel %vm4523, %v242, %v746
      %v4568 = vsel %vm4523, %v243, %v748
      %v4569 = vsel %vm4523, %v244, %v750
      %v4570 = vsel %vm4523, %v245, %v752
      %v4571 = vsel %vm4523, %v246, %v754
      %v4572 = vsel %vm4523, %v247, %v756
      %v4573 = vsel %vm4523, %v248, %v758
      %v4574 = vsel %vm4523, %v249, %v760
      %v4575 = vsel %vm4523, %v250, %v762
      %v4576 = vsel %vm4523, %v251, %v764
      %v4577 = vsel %vm4523, %v252, %v766
      %v4578 = vsel %vm4523, %v253, %v768
      %v4579 = vsel %vm4523, %v254, %v770
      %v4580 = vsel %vm4523, %v255, %v772
      %v4581 = vsel %vm4523, %v256, %v774
      %v4582 = vsel %vm4523, %v257, %v776
      %v4583 = vsel %vm4523, %v258, %v778
      %v4584 = vsel %vm4523, %v259, %v780
      %v4585 = vsel %vm4523, %v260, %v782
      %v4586 = vsel %vm4523, %v261, %v784
      %v4587 = vsel %vm4523, %v262, %v786
      %v4588 = vsel %vm4523, %v263, %v788
      %v4589 = vsel %vm4523, %v264, %v790
      %v4590 = vsel %vm4523, %v265, %v792
      %v4591 = vsel %vm4523, %v266, %v794
      %v4592 = vsel %vm4523, %v267, %v796
      %v4593 = vsel %vm4523, %v268, %v798
      %v4594 = vsel %vm4523, %v269, %v800
      %v4595 = vsel %vm4523, %v270, %v802
      %v4596 = vsel %vm4523, %v271, %v804
      %v4597 = vsel %vm4523, %v272, %v806
      %v4598 = vsel %vm4523, %v273, %v808
      %v4599 = vsel %vm4523, %v274, %v810
      %v4600 = vsel %vm4523, %v275, %v812
      %v4601 = vsel %vm4523, %v276, %v814
      %v4602 = vsel %vm4523, %v277, %v816
      %v4603 = vsel %vm4523, %v278, %v818
      %v4604 = vsel %vm4523, %v279, %v820
      %v4605 = vsel %vm4523, %v280, %v822
      %v4606 = vsel %vm4523, %v281, %v824
      %v4607 = vsel %vm4523, %v282, %v826
      %v4608 = vsel %vm4523, %v283, %v828
      %v4609 = vsel %vm4523, %v284, %v830
      %v4610 = vsel %vm4523, %v285, %v832
      %v4611 = vsel %vm4523, %v286, %v834
      %v4612 = vsel %vm4523, %v287, %v836
      %v4613 = vsel %vm4523, %v288, %v838
      %v4614 = vsel %vm4523, %v289, %v840
      %v4615 = vsel %vm4523, %v290, %v842
      %v4616 = vsel %vm4523, %v291, %v844
      %v4617 = vsel %vm4523, %v292, %v846
      %v4618 = vsel %vm4523, %v293, %v848
      %v4619 = vsel %vm4523, %v294, %v850
      %v4620 = vsel %vm4523, %v295, %v852
      %v4621 = vsel %vm4523, %v296, %v854
      %v4622 = vsel %vm4523, %v297, %v856
      %v4623 = vsel %vm4523, %v298, %v858
      %v4624 = vsel %vm4523, %v299, %v860
      %v4625 = vsel %vm4523, %v300, %v862
      %v4626 = vsel %vm4523, %v301, %v864
      %v4627 = vsel %vm4523, %v302, %v866
      %v4628 = vsel %vm4523, %v303, %v868
      %v4629 = vsel %vm4523, %v304, %v870
      %v4630 = vsel %vm4523, %v305, %v872
      %v4631 = vsel %vm4523, %v306, %v874
      %v4632 = vsel %vm4523, %v307, %v876
      %v4633 = vsel %vm4523, %v308, %v878
      %v4634 = vsel %vm4523, %v309, %v880
      %v4635 = vsel %vm4523, %v310, %v882
      %v4636 = vsel %vm4523, %v311, %v884
      %vm4637 = vcmask 15360
      %v4638 = vsel %vm4637, %v4524, %v1225
      %v4639 = vsel %vm4637, %v4525, %v1227
      %v4640 = vsel %vm4637, %v4526, %v1229
      %v4641 = vsel %vm4637, %v4527, %v1231
      %v4642 = vsel %vm4637, %v4528, %v1233
      %v4643 = vsel %vm4637, %v4529, %v1235
      %v4644 = vsel %vm4637, %v4530, %v1237
      %v4645 = vsel %vm4637, %v4531, %v1239
      %v4646 = vsel %vm4637, %v4532, %v1241
      %v4647 = vsel %vm4637, %v4533, %v1243
      %v4648 = vsel %vm4637, %v4534, %v1245
      %v4649 = vsel %vm4637, %v4535, %v1247
      %v4650 = vsel %vm4637, %v4536, %v1249
      %v4651 = vsel %vm4637, %v4537, %v1251
      %v4652 = vsel %vm4637, %v4538, %v1253
      %v4653 = vsel %vm4637, %v4539, %v1255
      %v4654 = vsel %vm4637, %v4540, %v1257
      %v4655 = vsel %vm4637, %v4541, %v1259
      %v4656 = vsel %vm4637, %v4542, %v1261
      %v4657 = vsel %vm4637, %v4543, %v1263
      %v4658 = vsel %vm4637, %v4544, %v1265
      %v4659 = vsel %vm4637, %v4545, %v1267
      %v4660 = vsel %vm4637, %v4546, %v1269
      %v4661 = vsel %vm4637, %v4547, %v1271
      %v4662 = vsel %vm4637, %v4548, %v1273
      %v4663 = vsel %vm4637, %v4549, %v1275
      %v4664 = vsel %vm4637, %v4550, %v1277
      %v4665 = vsel %vm4637, %v4551, %v1279
      %v4666 = vsel %vm4637, %v4552, %v1281
      %v4667 = vsel %vm4637, %v4553, %v1283
      %v4668 = vsel %vm4637, %v4554, %v1285
      %v4669 = vsel %vm4637, %v4555, %v1287
      %v4670 = vsel %vm4637, %v4556, %v1289
      %v4671 = vsel %vm4637, %v4557, %v1291
      %v4672 = vsel %vm4637, %v4558, %v1293
      %v4673 = vsel %vm4637, %v4559, %v1295
      %v4674 = vsel %vm4637, %v4560, %v1297
      %v4675 = vsel %vm4637, %v4561, %v1299
      %v4676 = vsel %vm4637, %v4562, %v1301
      %v4677 = vsel %vm4637, %v4563, %v1303
      %v4678 = vsel %vm4637, %v4564, %v1305
      %v4679 = vsel %vm4637, %v4565, %v1307
      %v4680 = vsel %vm4637, %v4566, %v1309
      %v4681 = vsel %vm4637, %v4567, %v1311
      %v4682 = vsel %vm4637, %v4568, %v1313
      %v4683 = vsel %vm4637, %v4569, %v1315
      %v4684 = vsel %vm4637, %v4570, %v1317
      %v4685 = vsel %vm4637, %v4571, %v1319
      %v4686 = vsel %vm4637, %v4572, %v1321
      %v4687 = vsel %vm4637, %v4573, %v1323
      %v4688 = vsel %vm4637, %v4574, %v1325
      %v4689 = vsel %vm4637, %v4575, %v1327
      %v4690 = vsel %vm4637, %v4576, %v1329
      %v4691 = vsel %vm4637, %v4577, %v1331
      %v4692 = vsel %vm4637, %v4578, %v1333
      %v4693 = vsel %vm4637, %v4579, %v1335
      %v4694 = vsel %vm4637, %v4580, %v1337
      %v4695 = vsel %vm4637, %v4581, %v1339
      %v4696 = vsel %vm4637, %v4582, %v1341
      %v4697 = vsel %vm4637, %v4583, %v1343
      %v4698 = vsel %vm4637, %v4584, %v1345
      %v4699 = vsel %vm4637, %v4585, %v1347
      %v4700 = vsel %vm4637, %v4586, %v1349
      %v4701 = vsel %vm4637, %v4587, %v1351
      %v4702 = vsel %vm4637, %v4588, %v1353
      %v4703 = vsel %vm4637, %v4589, %v1355
      %v4704 = vsel %vm4637, %v4590, %v1357
      %v4705 = vsel %vm4637, %v4591, %v1359
      %v4706 = vsel %vm4637, %v4592, %v1361
      %v4707 = vsel %vm4637, %v4593, %v1363
      %v4708 = vsel %vm4637, %v4594, %v1365
      %v4709 = vsel %vm4637, %v4595, %v1367
      %v4710 = vsel %vm4637, %v4596, %v1369
      %v4711 = vsel %vm4637, %v4597, %v1371
      %v4712 = vsel %vm4637, %v4598, %v1373
      %v4713 = vsel %vm4637, %v4599, %v1375
      %v4714 = vsel %vm4637, %v4600, %v1377
      %v4715 = vsel %vm4637, %v4601, %v1379
      %v4716 = vsel %vm4637, %v4602, %v1381
      %v4717 = vsel %vm4637, %v4603, %v1383
      %v4718 = vsel %vm4637, %v4604, %v1385
      %v4719 = vsel %vm4637, %v4605, %v1387
      %v4720 = vsel %vm4637, %v4606, %v1389
      %v4721 = vsel %vm4637, %v4607, %v1391
      %v4722 = vsel %vm4637, %v4608, %v1393
      %v4723 = vsel %vm4637, %v4609, %v1395
      %v4724 = vsel %vm4637, %v4610, %v1397
      %v4725 = vsel %vm4637, %v4611, %v1399
      %v4726 = vsel %vm4637, %v4612, %v1401
      %v4727 = vsel %vm4637, %v4613, %v1403
      %v4728 = vsel %vm4637, %v4614, %v1405
      %v4729 = vsel %vm4637, %v4615, %v1407
      %v4730 = vsel %vm4637, %v4616, %v1409
      %v4731 = vsel %vm4637, %v4617, %v1411
      %v4732 = vsel %vm4637, %v4618, %v1413
      %v4733 = vsel %vm4637, %v4619, %v1415
      %v4734 = vsel %vm4637, %v4620, %v1417
      %v4735 = vsel %vm4637, %v4621, %v1419
      %v4736 = vsel %vm4637, %v4622, %v1421
      %v4737 = vsel %vm4637, %v4623, %v1423
      %v4738 = vsel %vm4637, %v4624, %v1425
      %v4739 = vsel %vm4637, %v4625, %v1427
      %v4740 = vsel %vm4637, %v4626, %v1429
      %v4741 = vsel %vm4637, %v4627, %v1431
      %v4742 = vsel %vm4637, %v4628, %v1433
      %v4743 = vsel %vm4637, %v4629, %v1435
      %v4744 = vsel %vm4637, %v4630, %v1437
      %v4745 = vsel %vm4637, %v4631, %v1439
      %v4746 = vsel %vm4637, %v4632, %v1441
      %v4747 = vsel %vm4637, %v4633, %v1443
      %v4748 = vsel %vm4637, %v4634, %v1445
      %v4749 = vsel %vm4637, %v4635, %v1447
      %v4750 = vsel %vm4637, %v4636, %v1449
      %vm4751 = vcmask 23552
      %v4752 = vsel %vm4751, %v4638, %v1796
      %v4753 = vsel %vm4751, %v4639, %v1798
      %v4754 = vsel %vm4751, %v4640, %v1800
      %v4755 = vsel %vm4751, %v4641, %v1802
      %v4756 = vsel %vm4751, %v4642, %v1804
      %v4757 = vsel %vm4751, %v4643, %v1806
      %v4758 = vsel %vm4751, %v4644, %v1808
      %v4759 = vsel %vm4751, %v4645, %v1810
      %v4760 = vsel %vm4751, %v4646, %v1812
      %v4761 = vsel %vm4751, %v4647, %v1814
      %v4762 = vsel %vm4751, %v4648, %v1816
      %v4763 = vsel %vm4751, %v4649, %v1818
      %v4764 = vsel %vm4751, %v4650, %v1820
      %v4765 = vsel %vm4751, %v4651, %v1822
      %v4766 = vsel %vm4751, %v4652, %v1824
      %v4767 = vsel %vm4751, %v4653, %v1826
      %v4768 = vsel %vm4751, %v4654, %v1828
      %v4769 = vsel %vm4751, %v4655, %v1830
      %v4770 = vsel %vm4751, %v4656, %v1832
      %v4771 = vsel %vm4751, %v4657, %v1834
      %v4772 = vsel %vm4751, %v4658, %v1836
      %v4773 = vsel %vm4751, %v4659, %v1838
      %v4774 = vsel %vm4751, %v4660, %v1840
      %v4775 = vsel %vm4751, %v4661, %v1842
      %v4776 = vsel %vm4751, %v4662, %v1844
      %v4777 = vsel %vm4751, %v4663, %v1846
      %v4778 = vsel %vm4751, %v4664, %v1848
      %v4779 = vsel %vm4751, %v4665, %v1850
      %v4780 = vsel %vm4751, %v4666, %v1852
      %v4781 = vsel %vm4751, %v4667, %v1854
      %v4782 = vsel %vm4751, %v4668, %v1856
      %v4783 = vsel %vm4751, %v4669, %v1858
      %v4784 = vsel %vm4751, %v4670, %v1860
      %v4785 = vsel %vm4751, %v4671, %v1862
      %v4786 = vsel %vm4751, %v4672, %v1864
      %v4787 = vsel %vm4751, %v4673, %v1866
      %v4788 = vsel %vm4751, %v4674, %v1868
      %v4789 = vsel %vm4751, %v4675, %v1870
      %v4790 = vsel %vm4751, %v4676, %v1872
      %v4791 = vsel %vm4751, %v4677, %v1874
      %v4792 = vsel %vm4751, %v4678, %v1876
      %v4793 = vsel %vm4751, %v4679, %v1878
      %v4794 = vsel %vm4751, %v4680, %v1880
      %v4795 = vsel %vm4751, %v4681, %v1882
      %v4796 = vsel %vm4751, %v4682, %v1884
      %v4797 = vsel %vm4751, %v4683, %v1886
      %v4798 = vsel %vm4751, %v4684, %v1888
      %v4799 = vsel %vm4751, %v4685, %v1890
      %v4800 = vsel %vm4751, %v4686, %v1892
      %v4801 = vsel %vm4751, %v4687, %v1894
      %v4802 = vsel %vm4751, %v4688, %v1896
      %v4803 = vsel %vm4751, %v4689, %v1898
      %v4804 = vsel %vm4751, %v4690, %v1900
      %v4805 = vsel %vm4751, %v4691, %v1902
      %v4806 = vsel %vm4751, %v4692, %v1904
      %v4807 = vsel %vm4751, %v4693, %v1906
      %v4808 = vsel %vm4751, %v4694, %v1908
      %v4809 = vsel %vm4751, %v4695, %v1910
      %v4810 = vsel %vm4751, %v4696, %v1912
      %v4811 = vsel %vm4751, %v4697, %v1914
      %v4812 = vsel %vm4751, %v4698, %v1916
      %v4813 = vsel %vm4751, %v4699, %v1918
      %v4814 = vsel %vm4751, %v4700, %v1920
      %v4815 = vsel %vm4751, %v4701, %v1922
      %v4816 = vsel %vm4751, %v4702, %v1924
      %v4817 = vsel %vm4751, %v4703, %v1926
      %v4818 = vsel %vm4751, %v4704, %v1928
      %v4819 = vsel %vm4751, %v4705, %v1930
      %v4820 = vsel %vm4751, %v4706, %v1932
      %v4821 = vsel %vm4751, %v4707, %v1934
      %v4822 = vsel %vm4751, %v4708, %v1936
      %v4823 = vsel %vm4751, %v4709, %v1938
      %v4824 = vsel %vm4751, %v4710, %v1940
      %v4825 = vsel %vm4751, %v4711, %v1942
      %v4826 = vsel %vm4751, %v4712, %v1944
      %v4827 = vsel %vm4751, %v4713, %v1946
      %v4828 = vsel %vm4751, %v4714, %v1948
      %v4829 = vsel %vm4751, %v4715, %v1950
      %v4830 = vsel %vm4751, %v4716, %v1952
      %v4831 = vsel %vm4751, %v4717, %v1954
      %v4832 = vsel %vm4751, %v4718, %v1956
      %v4833 = vsel %vm4751, %v4719, %v1958
      %v4834 = vsel %vm4751, %v4720, %v1960
      %v4835 = vsel %vm4751, %v4721, %v1962
      %v4836 = vsel %vm4751, %v4722, %v1964
      %v4837 = vsel %vm4751, %v4723, %v1966
      %v4838 = vsel %vm4751, %v4724, %v1968
      %v4839 = vsel %vm4751, %v4725, %v1970
      %v4840 = vsel %vm4751, %v4726, %v1972
      %v4841 = vsel %vm4751, %v4727, %v1974
      %v4842 = vsel %vm4751, %v4728, %v1976
      %v4843 = vsel %vm4751, %v4729, %v1978
      %v4844 = vsel %vm4751, %v4730, %v1980
      %v4845 = vsel %vm4751, %v4731, %v1982
      %v4846 = vsel %vm4751, %v4732, %v1984
      %v4847 = vsel %vm4751, %v4733, %v1986
      %v4848 = vsel %vm4751, %v4734, %v1988
      %v4849 = vsel %vm4751, %v4735, %v1990
      %v4850 = vsel %vm4751, %v4736, %v1992
      %v4851 = vsel %vm4751, %v4737, %v1994
      %v4852 = vsel %vm4751, %v4738, %v1996
      %v4853 = vsel %vm4751, %v4739, %v1998
      %v4854 = vsel %vm4751, %v4740, %v2000
      %v4855 = vsel %vm4751, %v4741, %v2002
      %v4856 = vsel %vm4751, %v4742, %v2004
      %v4857 = vsel %vm4751, %v4743, %v2006
      %v4858 = vsel %vm4751, %v4744, %v2008
      %v4859 = vsel %vm4751, %v4745, %v2010
      %v4860 = vsel %vm4751, %v4746, %v2012
      %v4861 = vsel %vm4751, %v4747, %v2014
      %v4862 = vsel %vm4751, %v4748, %v2016
      %v4863 = vsel %vm4751, %v4749, %v2018
      %v4864 = vsel %vm4751, %v4750, %v2020
      %vm4865 = vcmask 31744
      %v4866 = vsel %vm4865, %v4752, %v2363
      %v4867 = vsel %vm4865, %v4753, %v2365
      %v4868 = vsel %vm4865, %v4754, %v2367
      %v4869 = vsel %vm4865, %v4755, %v2369
      %v4870 = vsel %vm4865, %v4756, %v2371
      %v4871 = vsel %vm4865, %v4757, %v2373
      %v4872 = vsel %vm4865, %v4758, %v2375
      %v4873 = vsel %vm4865, %v4759, %v2377
      %v4874 = vsel %vm4865, %v4760, %v2379
      %v4875 = vsel %vm4865, %v4761, %v2381
      %v4876 = vsel %vm4865, %v4762, %v2383
      %v4877 = vsel %vm4865, %v4763, %v2385
      %v4878 = vsel %vm4865, %v4764, %v2387
      %v4879 = vsel %vm4865, %v4765, %v2389
      %v4880 = vsel %vm4865, %v4766, %v2391
      %v4881 = vsel %vm4865, %v4767, %v2393
      %v4882 = vsel %vm4865, %v4768, %v2395
      %v4883 = vsel %vm4865, %v4769, %v2397
      %v4884 = vsel %vm4865, %v4770, %v2399
      %v4885 = vsel %vm4865, %v4771, %v2401
      %v4886 = vsel %vm4865, %v4772, %v2403
      %v4887 = vsel %vm4865, %v4773, %v2405
      %v4888 = vsel %vm4865, %v4774, %v2407
      %v4889 = vsel %vm4865, %v4775, %v2409
      %v4890 = vsel %vm4865, %v4776, %v2411
      %v4891 = vsel %vm4865, %v4777, %v2413
      %v4892 = vsel %vm4865, %v4778, %v2415
      %v4893 = vsel %vm4865, %v4779, %v2417
      %v4894 = vsel %vm4865, %v4780, %v2419
      %v4895 = vsel %vm4865, %v4781, %v2421
      %v4896 = vsel %vm4865, %v4782, %v2423
      %v4897 = vsel %vm4865, %v4783, %v2425
      %v4898 = vsel %vm4865, %v4784, %v2427
      %v4899 = vsel %vm4865, %v4785, %v2429
      %v4900 = vsel %vm4865, %v4786, %v2431
      %v4901 = vsel %vm4865, %v4787, %v2433
      %v4902 = vsel %vm4865, %v4788, %v2435
      %v4903 = vsel %vm4865, %v4789, %v2437
      %v4904 = vsel %vm4865, %v4790, %v2439
      %v4905 = vsel %vm4865, %v4791, %v2441
      %v4906 = vsel %vm4865, %v4792, %v2443
      %v4907 = vsel %vm4865, %v4793, %v2445
      %v4908 = vsel %vm4865, %v4794, %v2447
      %v4909 = vsel %vm4865, %v4795, %v2449
      %v4910 = vsel %vm4865, %v4796, %v2451
      %v4911 = vsel %vm4865, %v4797, %v2453
      %v4912 = vsel %vm4865, %v4798, %v2455
      %v4913 = vsel %vm4865, %v4799, %v2457
      %v4914 = vsel %vm4865, %v4800, %v2459
      %v4915 = vsel %vm4865, %v4801, %v2461
      %v4916 = vsel %vm4865, %v4802, %v2463
      %v4917 = vsel %vm4865, %v4803, %v2465
      %v4918 = vsel %vm4865, %v4804, %v2467
      %v4919 = vsel %vm4865, %v4805, %v2469
      %v4920 = vsel %vm4865, %v4806, %v2471
      %v4921 = vsel %vm4865, %v4807, %v2473
      %v4922 = vsel %vm4865, %v4808, %v2475
      %v4923 = vsel %vm4865, %v4809, %v2477
      %v4924 = vsel %vm4865, %v4810, %v2479
      %v4925 = vsel %vm4865, %v4811, %v2481
      %v4926 = vsel %vm4865, %v4812, %v2483
      %v4927 = vsel %vm4865, %v4813, %v2485
      %v4928 = vsel %vm4865, %v4814, %v2487
      %v4929 = vsel %vm4865, %v4815, %v2489
      %v4930 = vsel %vm4865, %v4816, %v2491
      %v4931 = vsel %vm4865, %v4817, %v2493
      %v4932 = vsel %vm4865, %v4818, %v2495
      %v4933 = vsel %vm4865, %v4819, %v2497
      %v4934 = vsel %vm4865, %v4820, %v2499
      %v4935 = vsel %vm4865, %v4821, %v2501
      %v4936 = vsel %vm4865, %v4822, %v2503
      %v4937 = vsel %vm4865, %v4823, %v2505
      %v4938 = vsel %vm4865, %v4824, %v2507
      %v4939 = vsel %vm4865, %v4825, %v2509
      %v4940 = vsel %vm4865, %v4826, %v2511
      %v4941 = vsel %vm4865, %v4827, %v2513
      %v4942 = vsel %vm4865, %v4828, %v2515
      %v4943 = vsel %vm4865, %v4829, %v2517
      %v4944 = vsel %vm4865, %v4830, %v2519
      %v4945 = vsel %vm4865, %v4831, %v2521
      %v4946 = vsel %vm4865, %v4832, %v2523
      %v4947 = vsel %vm4865, %v4833, %v2525
      %v4948 = vsel %vm4865, %v4834, %v2527
      %v4949 = vsel %vm4865, %v4835, %v2529
      %v4950 = vsel %vm4865, %v4836, %v2531
      %v4951 = vsel %vm4865, %v4837, %v2533
      %v4952 = vsel %vm4865, %v4838, %v2535
      %v4953 = vsel %vm4865, %v4839, %v2537
      %v4954 = vsel %vm4865, %v4840, %v2539
      %v4955 = vsel %vm4865, %v4841, %v2541
      %v4956 = vsel %vm4865, %v4842, %v2543
      %v4957 = vsel %vm4865, %v4843, %v2545
      %v4958 = vsel %vm4865, %v4844, %v2547
      %v4959 = vsel %vm4865, %v4845, %v2549
      %v4960 = vsel %vm4865, %v4846, %v2551
      %v4961 = vsel %vm4865, %v4847, %v2553
      %v4962 = vsel %vm4865, %v4848, %v2555
      %v4963 = vsel %vm4865, %v4849, %v2557
      %v4964 = vsel %vm4865, %v4850, %v2559
      %v4965 = vsel %vm4865, %v4851, %v2561
      %v4966 = vsel %vm4865, %v4852, %v2563
      %v4967 = vsel %vm4865, %v4853, %v2565
      %v4968 = vsel %vm4865, %v4854, %v2567
      %v4969 = vsel %vm4865, %v4855, %v2569
      %v4970 = vsel %vm4865, %v4856, %v2571
      %v4971 = vsel %vm4865, %v4857, %v2573
      %v4972 = vsel %vm4865, %v4858, %v2575
      %v4973 = vsel %vm4865, %v4859, %v2577
      %v4974 = vsel %vm4865, %v4860, %v2579
      %v4975 = vsel %vm4865, %v4861, %v2581
      %v4976 = vsel %vm4865, %v4862, %v2583
      %v4977 = vsel %vm4865, %v4863, %v2585
      %v4978 = vsel %vm4865, %v4864, %v2587
      %vm4979 = vcmask 39936
      %v4980 = vsel %vm4979, %v4866, %v2702
      %v4981 = vsel %vm4979, %v4867, %v2704
      %v4982 = vsel %vm4979, %v4868, %v2706
      %v4983 = vsel %vm4979, %v4869, %v2708
      %v4984 = vsel %vm4979, %v4870, %v2710
      %v4985 = vsel %vm4979, %v4871, %v2712
      %v4986 = vsel %vm4979, %v4872, %v2714
      %v4987 = vsel %vm4979, %v4873, %v2716
      %v4988 = vsel %vm4979, %v4874, %v2718
      %v4989 = vsel %vm4979, %v4875, %v2720
      %v4990 = vsel %vm4979, %v4876, %v2722
      %v4991 = vsel %vm4979, %v4877, %v2724
      %v4992 = vsel %vm4979, %v4878, %v2726
      %v4993 = vsel %vm4979, %v4879, %v2728
      %v4994 = vsel %vm4979, %v4880, %v2730
      %v4995 = vsel %vm4979, %v4881, %v2732
      %v4996 = vsel %vm4979, %v4882, %v2734
      %v4997 = vsel %vm4979, %v4883, %v2736
      %v4998 = vsel %vm4979, %v4884, %v2738
      %v4999 = vsel %vm4979, %v4885, %v2740
      %v5000 = vsel %vm4979, %v4886, %v2742
      %v5001 = vsel %vm4979, %v4887, %v2744
      %v5002 = vsel %vm4979, %v4888, %v2746
      %v5003 = vsel %vm4979, %v4889, %v2748
      %v5004 = vsel %vm4979, %v4890, %v2750
      %v5005 = vsel %vm4979, %v4891, %v2752
      %v5006 = vsel %vm4979, %v4892, %v2754
      %v5007 = vsel %vm4979, %v4893, %v2756
      %v5008 = vsel %vm4979, %v4894, %v2758
      %v5009 = vsel %vm4979, %v4895, %v2760
      %v5010 = vsel %vm4979, %v4896, %v2762
      %v5011 = vsel %vm4979, %v4897, %v2764
      %v5012 = vsel %vm4979, %v4898, %v2766
      %v5013 = vsel %vm4979, %v4899, %v2768
      %v5014 = vsel %vm4979, %v4900, %v2770
      %v5015 = vsel %vm4979, %v4901, %v2772
      %v5016 = vsel %vm4979, %v4902, %v2774
      %v5017 = vsel %vm4979, %v4903, %v2776
      %v5018 = vsel %vm4979, %v4904, %v2778
      %v5019 = vsel %vm4979, %v4905, %v2780
      %v5020 = vsel %vm4979, %v4906, %v2782
      %v5021 = vsel %vm4979, %v4907, %v2784
      %v5022 = vsel %vm4979, %v4908, %v2786
      %v5023 = vsel %vm4979, %v4909, %v2788
      %v5024 = vsel %vm4979, %v4910, %v2790
      %v5025 = vsel %vm4979, %v4911, %v2792
      %v5026 = vsel %vm4979, %v4912, %v2794
      %v5027 = vsel %vm4979, %v4913, %v2796
      %v5028 = vsel %vm4979, %v4914, %v2798
      %v5029 = vsel %vm4979, %v4915, %v2800
      %v5030 = vsel %vm4979, %v4916, %v2802
      %v5031 = vsel %vm4979, %v4917, %v2804
      %v5032 = vsel %vm4979, %v4918, %v2806
      %v5033 = vsel %vm4979, %v4919, %v2808
      %v5034 = vsel %vm4979, %v4920, %v2810
      %v5035 = vsel %vm4979, %v4921, %v2812
      %v5036 = vsel %vm4979, %v4922, %v2814
      %v5037 = vsel %vm4979, %v4923, %v2816
      %v5038 = vsel %vm4979, %v4924, %v2818
      %v5039 = vsel %vm4979, %v4925, %v2820
      %v5040 = vsel %vm4979, %v4926, %v2822
      %v5041 = vsel %vm4979, %v4927, %v2824
      %v5042 = vsel %vm4979, %v4928, %v2826
      %v5043 = vsel %vm4979, %v4929, %v2828
      %v5044 = vsel %vm4979, %v4930, %v2830
      %v5045 = vsel %vm4979, %v4931, %v2832
      %v5046 = vsel %vm4979, %v4932, %v2834
      %v5047 = vsel %vm4979, %v4933, %v2836
      %v5048 = vsel %vm4979, %v4934, %v2838
      %v5049 = vsel %vm4979, %v4935, %v2840
      %v5050 = vsel %vm4979, %v4936, %v2842
      %v5051 = vsel %vm4979, %v4937, %v2844
      %v5052 = vsel %vm4979, %v4938, %v2846
      %v5053 = vsel %vm4979, %v4939, %v2848
      %v5054 = vsel %vm4979, %v4940, %v2850
      %v5055 = vsel %vm4979, %v4941, %v2852
      %v5056 = vsel %vm4979, %v4942, %v2854
      %v5057 = vsel %vm4979, %v4943, %v2856
      %v5058 = vsel %vm4979, %v4944, %v2858
      %v5059 = vsel %vm4979, %v4945, %v2860
      %v5060 = vsel %vm4979, %v4946, %v2862
      %v5061 = vsel %vm4979, %v4947, %v2864
      %v5062 = vsel %vm4979, %v4948, %v2866
      %v5063 = vsel %vm4979, %v4949, %v2868
      %v5064 = vsel %vm4979, %v4950, %v2870
      %v5065 = vsel %vm4979, %v4951, %v2872
      %v5066 = vsel %vm4979, %v4952, %v2874
      %v5067 = vsel %vm4979, %v4953, %v2876
      %v5068 = vsel %vm4979, %v4954, %v2878
      %v5069 = vsel %vm4979, %v4955, %v2880
      %v5070 = vsel %vm4979, %v4956, %v2882
      %v5071 = vsel %vm4979, %v4957, %v2884
      %v5072 = vsel %vm4979, %v4958, %v2886
      %v5073 = vsel %vm4979, %v4959, %v2888
      %v5074 = vsel %vm4979, %v4960, %v2890
      %v5075 = vsel %vm4979, %v4961, %v2892
      %v5076 = vsel %vm4979, %v4962, %v2894
      %v5077 = vsel %vm4979, %v4963, %v2896
      %v5078 = vsel %vm4979, %v4964, %v2898
      %v5079 = vsel %vm4979, %v4965, %v2900
      %v5080 = vsel %vm4979, %v4966, %v2902
      %v5081 = vsel %vm4979, %v4967, %v2904
      %v5082 = vsel %vm4979, %v4968, %v2906
      %v5083 = vsel %vm4979, %v4969, %v2908
      %v5084 = vsel %vm4979, %v4970, %v2910
      %v5085 = vsel %vm4979, %v4971, %v2912
      %v5086 = vsel %vm4979, %v4972, %v2914
      %v5087 = vsel %vm4979, %v4973, %v2916
      %v5088 = vsel %vm4979, %v4974, %v2918
      %v5089 = vsel %vm4979, %v4975, %v2920
      %v5090 = vsel %vm4979, %v4976, %v2922
      %v5091 = vsel %vm4979, %v4977, %v2924
      %v5092 = vsel %vm4979, %v4978, %v2926
      %vm5093 = vcmask 48128
      %v5094 = vsel %vm5093, %v4980, %v3270
      %v5095 = vsel %vm5093, %v4981, %v3272
      %v5096 = vsel %vm5093, %v4982, %v3274
      %v5097 = vsel %vm5093, %v4983, %v3276
      %v5098 = vsel %vm5093, %v4984, %v3278
      %v5099 = vsel %vm5093, %v4985, %v3280
      %v5100 = vsel %vm5093, %v4986, %v3282
      %v5101 = vsel %vm5093, %v4987, %v3284
      %v5102 = vsel %vm5093, %v4988, %v3286
      %v5103 = vsel %vm5093, %v4989, %v3288
      %v5104 = vsel %vm5093, %v4990, %v3290
      %v5105 = vsel %vm5093, %v4991, %v3292
      %v5106 = vsel %vm5093, %v4992, %v3294
      %v5107 = vsel %vm5093, %v4993, %v3296
      %v5108 = vsel %vm5093, %v4994, %v3298
      %v5109 = vsel %vm5093, %v4995, %v3300
      %v5110 = vsel %vm5093, %v4996, %v3302
      %v5111 = vsel %vm5093, %v4997, %v3304
      %v5112 = vsel %vm5093, %v4998, %v3306
      %v5113 = vsel %vm5093, %v4999, %v3308
      %v5114 = vsel %vm5093, %v5000, %v3310
      %v5115 = vsel %vm5093, %v5001, %v3312
      %v5116 = vsel %vm5093, %v5002, %v3314
      %v5117 = vsel %vm5093, %v5003, %v3316
      %v5118 = vsel %vm5093, %v5004, %v3318
      %v5119 = vsel %vm5093, %v5005, %v3320
      %v5120 = vsel %vm5093, %v5006, %v3322
      %v5121 = vsel %vm5093, %v5007, %v3324
      %v5122 = vsel %vm5093, %v5008, %v3326
      %v5123 = vsel %vm5093, %v5009, %v3328
      %v5124 = vsel %vm5093, %v5010, %v3330
      %v5125 = vsel %vm5093, %v5011, %v3332
      %v5126 = vsel %vm5093, %v5012, %v3334
      %v5127 = vsel %vm5093, %v5013, %v3336
      %v5128 = vsel %vm5093, %v5014, %v3338
      %v5129 = vsel %vm5093, %v5015, %v3340
      %v5130 = vsel %vm5093, %v5016, %v3342
      %v5131 = vsel %vm5093, %v5017, %v3344
      %v5132 = vsel %vm5093, %v5018, %v3346
      %v5133 = vsel %vm5093, %v5019, %v3348
      %v5134 = vsel %vm5093, %v5020, %v3350
      %v5135 = vsel %vm5093, %v5021, %v3352
      %v5136 = vsel %vm5093, %v5022, %v3354
      %v5137 = vsel %vm5093, %v5023, %v3356
      %v5138 = vsel %vm5093, %v5024, %v3358
      %v5139 = vsel %vm5093, %v5025, %v3360
      %v5140 = vsel %vm5093, %v5026, %v3362
      %v5141 = vsel %vm5093, %v5027, %v3364
      %v5142 = vsel %vm5093, %v5028, %v3366
      %v5143 = vsel %vm5093, %v5029, %v3368
      %v5144 = vsel %vm5093, %v5030, %v3370
      %v5145 = vsel %vm5093, %v5031, %v3372
      %v5146 = vsel %vm5093, %v5032, %v3374
      %v5147 = vsel %vm5093, %v5033, %v3376
      %v5148 = vsel %vm5093, %v5034, %v3378
      %v5149 = vsel %vm5093, %v5035, %v3380
      %v5150 = vsel %vm5093, %v5036, %v3382
      %v5151 = vsel %vm5093, %v5037, %v3384
      %v5152 = vsel %vm5093, %v5038, %v3386
      %v5153 = vsel %vm5093, %v5039, %v3388
      %v5154 = vsel %vm5093, %v5040, %v3390
      %v5155 = vsel %vm5093, %v5041, %v3392
      %v5156 = vsel %vm5093, %v5042, %v3394
      %v5157 = vsel %vm5093, %v5043, %v3396
      %v5158 = vsel %vm5093, %v5044, %v3398
      %v5159 = vsel %vm5093, %v5045, %v3400
      %v5160 = vsel %vm5093, %v5046, %v3402
      %v5161 = vsel %vm5093, %v5047, %v3404
      %v5162 = vsel %vm5093, %v5048, %v3406
      %v5163 = vsel %vm5093, %v5049, %v3408
      %v5164 = vsel %vm5093, %v5050, %v3410
      %v5165 = vsel %vm5093, %v5051, %v3412
      %v5166 = vsel %vm5093, %v5052, %v3414
      %v5167 = vsel %vm5093, %v5053, %v3416
      %v5168 = vsel %vm5093, %v5054, %v3418
      %v5169 = vsel %vm5093, %v5055, %v3420
      %v5170 = vsel %vm5093, %v5056, %v3422
      %v5171 = vsel %vm5093, %v5057, %v3424
      %v5172 = vsel %vm5093, %v5058, %v3426
      %v5173 = vsel %vm5093, %v5059, %v3428
      %v5174 = vsel %vm5093, %v5060, %v3430
      %v5175 = vsel %vm5093, %v5061, %v3432
      %v5176 = vsel %vm5093, %v5062, %v3434
      %v5177 = vsel %vm5093, %v5063, %v3436
      %v5178 = vsel %vm5093, %v5064, %v3438
      %v5179 = vsel %vm5093, %v5065, %v3440
      %v5180 = vsel %vm5093, %v5066, %v3442
      %v5181 = vsel %vm5093, %v5067, %v3444
      %v5182 = vsel %vm5093, %v5068, %v3446
      %v5183 = vsel %vm5093, %v5069, %v3448
      %v5184 = vsel %vm5093, %v5070, %v3450
      %v5185 = vsel %vm5093, %v5071, %v3452
      %v5186 = vsel %vm5093, %v5072, %v3454
      %v5187 = vsel %vm5093, %v5073, %v3456
      %v5188 = vsel %vm5093, %v5074, %v3458
      %v5189 = vsel %vm5093, %v5075, %v3460
      %v5190 = vsel %vm5093, %v5076, %v3462
      %v5191 = vsel %vm5093, %v5077, %v3464
      %v5192 = vsel %vm5093, %v5078, %v3466
      %v5193 = vsel %vm5093, %v5079, %v3468
      %v5194 = vsel %vm5093, %v5080, %v3470
      %v5195 = vsel %vm5093, %v5081, %v3472
      %v5196 = vsel %vm5093, %v5082, %v3474
      %v5197 = vsel %vm5093, %v5083, %v3476
      %v5198 = vsel %vm5093, %v5084, %v3478
      %v5199 = vsel %vm5093, %v5085, %v3480
      %v5200 = vsel %vm5093, %v5086, %v3482
      %v5201 = vsel %vm5093, %v5087, %v3484
      %v5202 = vsel %vm5093, %v5088, %v3486
      %v5203 = vsel %vm5093, %v5089, %v3488
      %v5204 = vsel %vm5093, %v5090, %v3490
      %v5205 = vsel %vm5093, %v5091, %v3492
      %v5206 = vsel %vm5093, %v5092, %v3494
      %vm5207 = vcmask 56320
      %v5208 = vsel %vm5207, %v5094, %v3838
      %v5209 = vsel %vm5207, %v5095, %v3840
      %v5210 = vsel %vm5207, %v5096, %v3842
      %v5211 = vsel %vm5207, %v5097, %v3844
      %v5212 = vsel %vm5207, %v5098, %v3846
      %v5213 = vsel %vm5207, %v5099, %v3848
      %v5214 = vsel %vm5207, %v5100, %v3850
      %v5215 = vsel %vm5207, %v5101, %v3852
      %v5216 = vsel %vm5207, %v5102, %v3854
      %v5217 = vsel %vm5207, %v5103, %v3856
      %v5218 = vsel %vm5207, %v5104, %v3858
      %v5219 = vsel %vm5207, %v5105, %v3860
      %v5220 = vsel %vm5207, %v5106, %v3862
      %v5221 = vsel %vm5207, %v5107, %v3864
      %v5222 = vsel %vm5207, %v5108, %v3866
      %v5223 = vsel %vm5207, %v5109, %v3868
      %v5224 = vsel %vm5207, %v5110, %v3870
      %v5225 = vsel %vm5207, %v5111, %v3872
      %v5226 = vsel %vm5207, %v5112, %v3874
      %v5227 = vsel %vm5207, %v5113, %v3876
      %v5228 = vsel %vm5207, %v5114, %v3878
      %v5229 = vsel %vm5207, %v5115, %v3880
      %v5230 = vsel %vm5207, %v5116, %v3882
      %v5231 = vsel %vm5207, %v5117, %v3884
      %v5232 = vsel %vm5207, %v5118, %v3886
      %v5233 = vsel %vm5207, %v5119, %v3888
      %v5234 = vsel %vm5207, %v5120, %v3890
      %v5235 = vsel %vm5207, %v5121, %v3892
      %v5236 = vsel %vm5207, %v5122, %v3894
      %v5237 = vsel %vm5207, %v5123, %v3896
      %v5238 = vsel %vm5207, %v5124, %v3898
      %v5239 = vsel %vm5207, %v5125, %v3900
      %v5240 = vsel %vm5207, %v5126, %v3902
      %v5241 = vsel %vm5207, %v5127, %v3904
      %v5242 = vsel %vm5207, %v5128, %v3906
      %v5243 = vsel %vm5207, %v5129, %v3908
      %v5244 = vsel %vm5207, %v5130, %v3910
      %v5245 = vsel %vm5207, %v5131, %v3912
      %v5246 = vsel %vm5207, %v5132, %v3914
      %v5247 = vsel %vm5207, %v5133, %v3916
      %v5248 = vsel %vm5207, %v5134, %v3918
      %v5249 = vsel %vm5207, %v5135, %v3920
      %v5250 = vsel %vm5207, %v5136, %v3922
      %v5251 = vsel %vm5207, %v5137, %v3924
      %v5252 = vsel %vm5207, %v5138, %v3926
      %v5253 = vsel %vm5207, %v5139, %v3928
      %v5254 = vsel %vm5207, %v5140, %v3930
      %v5255 = vsel %vm5207, %v5141, %v3932
      %v5256 = vsel %vm5207, %v5142, %v3934
      %v5257 = vsel %vm5207, %v5143, %v3936
      %v5258 = vsel %vm5207, %v5144, %v3938
      %v5259 = vsel %vm5207, %v5145, %v3940
      %v5260 = vsel %vm5207, %v5146, %v3942
      %v5261 = vsel %vm5207, %v5147, %v3944
      %v5262 = vsel %vm5207, %v5148, %v3946
      %v5263 = vsel %vm5207, %v5149, %v3948
      %v5264 = vsel %vm5207, %v5150, %v3950
      %v5265 = vsel %vm5207, %v5151, %v3952
      %v5266 = vsel %vm5207, %v5152, %v3954
      %v5267 = vsel %vm5207, %v5153, %v3956
      %v5268 = vsel %vm5207, %v5154, %v3958
      %v5269 = vsel %vm5207, %v5155, %v3960
      %v5270 = vsel %vm5207, %v5156, %v3962
      %v5271 = vsel %vm5207, %v5157, %v3964
      %v5272 = vsel %vm5207, %v5158, %v3966
      %v5273 = vsel %vm5207, %v5159, %v3968
      %v5274 = vsel %vm5207, %v5160, %v3970
      %v5275 = vsel %vm5207, %v5161, %v3972
      %v5276 = vsel %vm5207, %v5162, %v3974
      %v5277 = vsel %vm5207, %v5163, %v3976
      %v5278 = vsel %vm5207, %v5164, %v3978
      %v5279 = vsel %vm5207, %v5165, %v3980
      %v5280 = vsel %vm5207, %v5166, %v3982
      %v5281 = vsel %vm5207, %v5167, %v3984
      %v5282 = vsel %vm5207, %v5168, %v3986
      %v5283 = vsel %vm5207, %v5169, %v3988
      %v5284 = vsel %vm5207, %v5170, %v3990
      %v5285 = vsel %vm5207, %v5171, %v3992
      %v5286 = vsel %vm5207, %v5172, %v3994
      %v5287 = vsel %vm5207, %v5173, %v3996
      %v5288 = vsel %vm5207, %v5174, %v3998
      %v5289 = vsel %vm5207, %v5175, %v4000
      %v5290 = vsel %vm5207, %v5176, %v4002
      %v5291 = vsel %vm5207, %v5177, %v4004
      %v5292 = vsel %vm5207, %v5178, %v4006
      %v5293 = vsel %vm5207, %v5179, %v4008
      %v5294 = vsel %vm5207, %v5180, %v4010
      %v5295 = vsel %vm5207, %v5181, %v4012
      %v5296 = vsel %vm5207, %v5182, %v4014
      %v5297 = vsel %vm5207, %v5183, %v4016
      %v5298 = vsel %vm5207, %v5184, %v4018
      %v5299 = vsel %vm5207, %v5185, %v4020
      %v5300 = vsel %vm5207, %v5186, %v4022
      %v5301 = vsel %vm5207, %v5187, %v4024
      %v5302 = vsel %vm5207, %v5188, %v4026
      %v5303 = vsel %vm5207, %v5189, %v4028
      %v5304 = vsel %vm5207, %v5190, %v4030
      %v5305 = vsel %vm5207, %v5191, %v4032
      %v5306 = vsel %vm5207, %v5192, %v4034
      %v5307 = vsel %vm5207, %v5193, %v4036
      %v5308 = vsel %vm5207, %v5194, %v4038
      %v5309 = vsel %vm5207, %v5195, %v4040
      %v5310 = vsel %vm5207, %v5196, %v4042
      %v5311 = vsel %vm5207, %v5197, %v4044
      %v5312 = vsel %vm5207, %v5198, %v4046
      %v5313 = vsel %vm5207, %v5199, %v4048
      %v5314 = vsel %vm5207, %v5200, %v4050
      %v5315 = vsel %vm5207, %v5201, %v4052
      %v5316 = vsel %vm5207, %v5202, %v4054
      %v5317 = vsel %vm5207, %v5203, %v4056
      %v5318 = vsel %vm5207, %v5204, %v4058
      %v5319 = vsel %vm5207, %v5205, %v4060
      %v5320 = vsel %vm5207, %v5206, %v4062
      %vm5321 = vcmask 64512
      %v5322 = vsel %vm5321, %v5208, %v4185
      %v5323 = vsel %vm5321, %v5209, %v4187
      %v5324 = vsel %vm5321, %v5210, %v4189
      %v5325 = vsel %vm5321, %v5211, %v4191
      %v5326 = vsel %vm5321, %v5212, %v4193
      %v5327 = vsel %vm5321, %v5213, %v4195
      %v5328 = vsel %vm5321, %v5214, %v4197
      %v5329 = vsel %vm5321, %v5215, %v4199
      %v5330 = vsel %vm5321, %v5216, %v4201
      %v5331 = vsel %vm5321, %v5217, %v4203
      %v5332 = vsel %vm5321, %v5218, %v4205
      %v5333 = vsel %vm5321, %v5219, %v4207
      %v5334 = vsel %vm5321, %v5220, %v4209
      %v5335 = vsel %vm5321, %v5221, %v4211
      %v5336 = vsel %vm5321, %v5222, %v4213
      %v5337 = vsel %vm5321, %v5223, %v4215
      %v5338 = vsel %vm5321, %v5224, %v4217
      %v5339 = vsel %vm5321, %v5225, %v4219
      %v5340 = vsel %vm5321, %v5226, %v4221
      %v5341 = vsel %vm5321, %v5227, %v4223
      %v5342 = vsel %vm5321, %v5228, %v4225
      %v5343 = vsel %vm5321, %v5229, %v4227
      %v5344 = vsel %vm5321, %v5230, %v4229
      %v5345 = vsel %vm5321, %v5231, %v4231
      %v5346 = vsel %vm5321, %v5232, %v4233
      %v5347 = vsel %vm5321, %v5233, %v4235
      %v5348 = vsel %vm5321, %v5234, %v4237
      %v5349 = vsel %vm5321, %v5235, %v4239
      %v5350 = vsel %vm5321, %v5236, %v4241
      %v5351 = vsel %vm5321, %v5237, %v4243
      %v5352 = vsel %vm5321, %v5238, %v4245
      %v5353 = vsel %vm5321, %v5239, %v4247
      %v5354 = vsel %vm5321, %v5240, %v4249
      %v5355 = vsel %vm5321, %v5241, %v4251
      %v5356 = vsel %vm5321, %v5242, %v4253
      %v5357 = vsel %vm5321, %v5243, %v4255
      %v5358 = vsel %vm5321, %v5244, %v4257
      %v5359 = vsel %vm5321, %v5245, %v4259
      %v5360 = vsel %vm5321, %v5246, %v4261
      %v5361 = vsel %vm5321, %v5247, %v4263
      %v5362 = vsel %vm5321, %v5248, %v4265
      %v5363 = vsel %vm5321, %v5249, %v4267
      %v5364 = vsel %vm5321, %v5250, %v4269
      %v5365 = vsel %vm5321, %v5251, %v4271
      %v5366 = vsel %vm5321, %v5252, %v4273
      %v5367 = vsel %vm5321, %v5253, %v4275
      %v5368 = vsel %vm5321, %v5254, %v4277
      %v5369 = vsel %vm5321, %v5255, %v4279
      %v5370 = vsel %vm5321, %v5256, %v4281
      %v5371 = vsel %vm5321, %v5257, %v4283
      %v5372 = vsel %vm5321, %v5258, %v4285
      %v5373 = vsel %vm5321, %v5259, %v4287
      %v5374 = vsel %vm5321, %v5260, %v4289
      %v5375 = vsel %vm5321, %v5261, %v4291
      %v5376 = vsel %vm5321, %v5262, %v4293
      %v5377 = vsel %vm5321, %v5263, %v4295
      %v5378 = vsel %vm5321, %v5264, %v4297
      %v5379 = vsel %vm5321, %v5265, %v4299
      %v5380 = vsel %vm5321, %v5266, %v4301
      %v5381 = vsel %vm5321, %v5267, %v4303
      %v5382 = vsel %vm5321, %v5268, %v4305
      %v5383 = vsel %vm5321, %v5269, %v4307
      %v5384 = vsel %vm5321, %v5270, %v4309
      %v5385 = vsel %vm5321, %v5271, %v4311
      %v5386 = vsel %vm5321, %v5272, %v4313
      %v5387 = vsel %vm5321, %v5273, %v4315
      %v5388 = vsel %vm5321, %v5274, %v4317
      %v5389 = vsel %vm5321, %v5275, %v4319
      %v5390 = vsel %vm5321, %v5276, %v4321
      %v5391 = vsel %vm5321, %v5277, %v4323
      %v5392 = vsel %vm5321, %v5278, %v4325
      %v5393 = vsel %vm5321, %v5279, %v4327
      %v5394 = vsel %vm5321, %v5280, %v4329
      %v5395 = vsel %vm5321, %v5281, %v4331
      %v5396 = vsel %vm5321, %v5282, %v4333
      %v5397 = vsel %vm5321, %v5283, %v4335
      %v5398 = vsel %vm5321, %v5284, %v4337
      %v5399 = vsel %vm5321, %v5285, %v4339
      %v5400 = vsel %vm5321, %v5286, %v4341
      %v5401 = vsel %vm5321, %v5287, %v4343
      %v5402 = vsel %vm5321, %v5288, %v4345
      %v5403 = vsel %vm5321, %v5289, %v4347
      %v5404 = vsel %vm5321, %v5290, %v4349
      %v5405 = vsel %vm5321, %v5291, %v4351
      %v5406 = vsel %vm5321, %v5292, %v4353
      %v5407 = vsel %vm5321, %v5293, %v4355
      %v5408 = vsel %vm5321, %v5294, %v4357
      %v5409 = vsel %vm5321, %v5295, %v4359
      %v5410 = vsel %vm5321, %v5296, %v4361
      %v5411 = vsel %vm5321, %v5297, %v4363
      %v5412 = vsel %vm5321, %v5298, %v4365
      %v5413 = vsel %vm5321, %v5299, %v4367
      %v5414 = vsel %vm5321, %v5300, %v4369
      %v5415 = vsel %vm5321, %v5301, %v4371
      %v5416 = vsel %vm5321, %v5302, %v4373
      %v5417 = vsel %vm5321, %v5303, %v4375
      %v5418 = vsel %vm5321, %v5304, %v4377
      %v5419 = vsel %vm5321, %v5305, %v4379
      %v5420 = vsel %vm5321, %v5306, %v4381
      %v5421 = vsel %vm5321, %v5307, %v4383
      %v5422 = vsel %vm5321, %v5308, %v4385
      %v5423 = vsel %vm5321, %v5309, %v4387
      %v5424 = vsel %vm5321, %v5310, %v4389
      %v5425 = vsel %vm5321, %v5311, %v4391
      %v5426 = vsel %vm5321, %v5312, %v4393
      %v5427 = vsel %vm5321, %v5313, %v4395
      %v5428 = vsel %vm5321, %v5314, %v4397
      %v5429 = vsel %vm5321, %v5315, %v4399
      %v5430 = vsel %vm5321, %v5316, %v4401
      %v5431 = vsel %vm5321, %v5317, %v4403
      %v5432 = vsel %vm5321, %v5318, %v4405
      %v5433 = vsel %vm5321, %v5319, %v4407
      %v5434 = vsel %vm5321, %v5320, %v4409
      %v5435 = vpack.c.bf16 %v5323, %v5322
      %v5436 = vpack.c.bf16 %v5325, %v5324
      %v5437 = vpack.c.bf16 %v5327, %v5326
      %v5438 = vpack.c.bf16 %v5329, %v5328
      %v5439 = vpack.c.bf16 %v5331, %v5330
      %v5440 = vpack.c.bf16 %v5333, %v5332
      %v5441 = vpack.c.bf16 %v5335, %v5334
      %v5442 = vpack.c.bf16 %v5337, %v5336
      %v5443 = vpack.c.bf16 %v5339, %v5338
      %v5444 = vpack.c.bf16 %v5341, %v5340
      %v5445 = vpack.c.bf16 %v5343, %v5342
      %v5446 = vpack.c.bf16 %v5345, %v5344
      %v5447 = vpack.c.bf16 %v5347, %v5346
      %v5448 = vpack.c.bf16 %v5349, %v5348
      %v5449 = vpack.c.bf16 %v5351, %v5350
      %v5450 = vpack.c.bf16 %v5353, %v5352
      %v5451 = vpack.c.bf16 %v5355, %v5354
      %v5452 = vpack.c.bf16 %v5357, %v5356
      %v5453 = vpack.c.bf16 %v5359, %v5358
      %v5454 = vpack.c.bf16 %v5361, %v5360
      %v5455 = vpack.c.bf16 %v5363, %v5362
      %v5456 = vpack.c.bf16 %v5365, %v5364
      %v5457 = vpack.c.bf16 %v5367, %v5366
      %v5458 = vpack.c.bf16 %v5369, %v5368
      %v5459 = vpack.c.bf16 %v5371, %v5370
      %v5460 = vpack.c.bf16 %v5373, %v5372
      %v5461 = vpack.c.bf16 %v5375, %v5374
      %v5462 = vpack.c.bf16 %v5377, %v5376
      %v5463 = vpack.c.bf16 %v5379, %v5378
      %v5464 = vpack.c.bf16 %v5381, %v5380
      %v5465 = vpack.c.bf16 %v5383, %v5382
      %v5466 = vpack.c.bf16 %v5385, %v5384
      %v5467 = vpack.c.bf16 %v5387, %v5386
      %v5468 = vpack.c.bf16 %v5389, %v5388
      %v5469 = vpack.c.bf16 %v5391, %v5390
      %v5470 = vpack.c.bf16 %v5393, %v5392
      %v5471 = vpack.c.bf16 %v5395, %v5394
      %v5472 = vpack.c.bf16 %v5397, %v5396
      %v5473 = vpack.c.bf16 %v5399, %v5398
      %v5474 = vpack.c.bf16 %v5401, %v5400
      %v5475 = vpack.c.bf16 %v5403, %v5402
      %v5476 = vpack.c.bf16 %v5405, %v5404
      %v5477 = vpack.c.bf16 %v5407, %v5406
      %v5478 = vpack.c.bf16 %v5409, %v5408
      %v5479 = vpack.c.bf16 %v5411, %v5410
      %v5480 = vpack.c.bf16 %v5413, %v5412
      %v5481 = vpack.c.bf16 %v5415, %v5414
      %v5482 = vpack.c.bf16 %v5417, %v5416
      %v5483 = vpack.c.bf16 %v5419, %v5418
      %v5484 = vpack.c.bf16 %v5421, %v5420
      %v5485 = vpack.c.bf16 %v5423, %v5422
      %v5486 = vpack.c.bf16 %v5425, %v5424
      %v5487 = vpack.c.bf16 %v5427, %v5426
      %v5488 = vpack.c.bf16 %v5429, %v5428
      %v5489 = vpack.c.bf16 %v5431, %v5430
      %v5490 = vpack.c.bf16 %v5433, %v5432
      %v5491 = vpack.c.bf16 %v5434, %v5434
      %v5492 = vld [vmem:[%s1] sm:$0xf]
      %v5493 = vld [vmem:[%s1 + $0x4] sm:$0x1]
      %v5494 = vld [vmem:[%s2] sm:$0x1]
      %v5496 = vlaneseq
      %v5497 = vshrl.u32 %v5496, 7
      %v5498 = vsub.s32 0, %v5497
      %v5499 = vrot.slane %v5494, %v5498
      %v5503 = vunpack.c.l.b16 %v5492
      %v5504 = vunpack.c.l.b16 %v5493
      %v5505 = vpack.c.b16 %v5504, %v5503
      %vm5506 = vcmask 72704
      %v5508 = vsel %vm5506, %v5435, 0
      %v5511 = vsel %vm5506, %v5436, 0
      %v5514 = vsel %vm5506, %v5437, 0
      %v5517 = vsel %vm5506, %v5438, 0
      %v5520 = vsel %vm5506, %v5439, 0
      %v5523 = vsel %vm5506, %v5440, 0
      %v5526 = vsel %vm5506, %v5441, 0
      %v5529 = vsel %vm5506, %v5442, 0
      %v5532 = vsel %vm5506, %v5443, 0
      %v5535 = vsel %vm5506, %v5444, 0
      %v5538 = vsel %vm5506, %v5445, 0
      %v5541 = vsel %vm5506, %v5446, 0
      %v5544 = vsel %vm5506, %v5447, 0
      %v5547 = vsel %vm5506, %v5448, 0
      %v5550 = vsel %vm5506, %v5449, 0
      %v5553 = vsel %vm5506, %v5450, 0
      %v5556 = vsel %vm5506, %v5451, 0
      %v5559 = vsel %vm5506, %v5452, 0
      %v5562 = vsel %vm5506, %v5453, 0
      %v5565 = vsel %vm5506, %v5454, 0
      %v5568 = vsel %vm5506, %v5455, 0
      %v5571 = vsel %vm5506, %v5456, 0
      %v5574 = vsel %vm5506, %v5457, 0
      %v5577 = vsel %vm5506, %v5458, 0
      %v5580 = vsel %vm5506, %v5459, 0
      %v5583 = vsel %vm5506, %v5460, 0
      %v5586 = vsel %vm5506, %v5461, 0
      %v5589 = vsel %vm5506, %v5462, 0
      %v5592 = vsel %vm5506, %v5463, 0
      %v5595 = vsel %vm5506, %v5464, 0
      %v5598 = vsel %vm5506, %v5465, 0
      %v5601 = vsel %vm5506, %v5466, 0
      %v5604 = vsel %vm5506, %v5467, 0
      %v5607 = vsel %vm5506, %v5468, 0
      %v5610 = vsel %vm5506, %v5469, 0
      %v5613 = vsel %vm5506, %v5470, 0
      %v5616 = vsel %vm5506, %v5471, 0
      %v5619 = vsel %vm5506, %v5472, 0
      %v5622 = vsel %vm5506, %v5473, 0
      %v5625 = vsel %vm5506, %v5474, 0
      %v5628 = vsel %vm5506, %v5475, 0
      %v5631 = vsel %vm5506, %v5476, 0
      %v5634 = vsel %vm5506, %v5477, 0
      %v5637 = vsel %vm5506, %v5478, 0
      %v5640 = vsel %vm5506, %v5479, 0
      %v5643 = vsel %vm5506, %v5480, 0
      %v5646 = vsel %vm5506, %v5481, 0
      %v5649 = vsel %vm5506, %v5482, 0
      %v5652 = vsel %vm5506, %v5483, 0
      %v5655 = vsel %vm5506, %v5484, 0
      %v5658 = vsel %vm5506, %v5485, 0
      %v5661 = vsel %vm5506, %v5486, 0
      %v5664 = vsel %vm5506, %v5487, 0
      %v5667 = vsel %vm5506, %v5488, 0
      %v5670 = vsel %vm5506, %v5489, 0
      %v5673 = vsel %vm5506, %v5490, 0
      %v5676 = vsel %vm5506, %v5491, 0
      %vm5678 = vcmask 1044480
      %v5679 = vsel %vm3043, 4294967295, 65535
      %v5680 = vsel %vm5678, %v5679, 0
      %v5682 = vand.u32 %v5505, %v5680
      %5684 = vmatprep.subr.bf16.mxu0 0
      %5685 = vmatpush1.bf16.msra.mxu0 %v5682
      %5686 = vmatprep.subr.bf16.mxu0 0
      %5687 = vmatpush1.bf16.msra.mxu0 0
      %5688 = vmatprep.subr.bf16.mxu0 0
      %5689 = vmatpush1.bf16.msra.mxu0 0
      %5690 = vmatprep.subr.bf16.mxu0 0
      %5691 = vmatpush1.bf16.msra.mxu0 0
      %5692 = vmatprep.subr.bf16.mxu0 0
      %5693 = vmatpush1.bf16.msra.mxu0 0
      %5694 = vmatprep.subr.bf16.mxu0 0
      %5695 = vmatpush1.bf16.msra.mxu0 0
      %5696 = vmatprep.subr.bf16.mxu0 0
      %5697 = vmatpush1.bf16.msra.mxu0 0
      %5698 = vmatprep.subr.bf16.mxu0 0
      %5699 = vmatpush1.bf16.msra.mxu0 0
      %5700 = vmatprep.subr.bf16.mxu0 0
      %5701 = vmatpush1.bf16.msra.mxu0 0
      %5702 = vmatprep.subr.bf16.mxu0 0
      %5703 = vmatpush1.bf16.msra.mxu0 0
      %5704 = vmatprep.subr.bf16.mxu0 0
      %5705 = vmatpush1.bf16.msra.mxu0 0
      %5706 = vmatprep.subr.bf16.mxu0 0
      %5707 = vmatpush1.bf16.msra.mxu0 0
      %5708 = vmatprep.subr.bf16.mxu0 0
      %5709 = vmatpush1.bf16.msra.mxu0 0
      %5710 = vmatprep.subr.bf16.mxu0 0
      %5711 = vmatpush1.bf16.msra.mxu0 0
      %5712 = vmatprep.subr.bf16.mxu0 0
      %5713 = vmatpush1.bf16.msra.mxu0 0
      %5714 = vmatprep.subr.bf16.mxu0 0
      %5715 = vmatpush1.bf16.msra.mxu0 0
      %5716 = vmatprep.mubr.bf16.mxu0 0
      %5717 = vmatmul.mubr.bf16.gmra.mrb[0].mxu0 %v5508
      %v5718 = vpop.f32.mrb[0].mxu0
      %v5719 = vadd.f32 %v5499, %v5718
      %v5720 = vpop.f32.mrb[0].mxu0
      %v5721 = vpop.f32.mrb[0].mxu0
      %v5722 = vadd.f32 %v5499, %v5721
      %v5723 = vpop.f32.mrb[0].mxu0
      %5724 = vmatprep.mubr.bf16.mxu0 0
      %5725 = vmatmul.mubr.bf16.gmra.mrb[0].mxu0 %v5511
      %v5726 = vpop.f32.mrb[0].mxu0
      %v5727 = vadd.f32 %v5499, %v5726
      %v5728 = vpop.f32.mrb[0].mxu0
      %v5729 = vpop.f32.mrb[0].mxu0
      %v5730 = vadd.f32 %v5499, %v5729
      %v5731 = vpop.f32.mrb[0].mxu0
      %5732 = vmatprep.mubr.bf16.mxu0 0
      %5733 = vmatmul.mubr.bf16.gmra.mrb[0].mxu0 %v5514
      %v5734 = vpop.f32.mrb[0].mxu0
      %v5735 = vadd.f32 %v5499, %v5734
      %v5736 = vpop.f32.mrb[0].mxu0
      %v5737 = vpop.f32.mrb[0].mxu0
      %v5738 = vadd.f32 %v5499, %v5737
      %v5739 = vpop.f32.mrb[0].mxu0
      %5740 = vmatprep.mubr.bf16.mxu0 0
      %5741 = vmatmul.mubr.bf16.gmra.mrb[0].mxu0 %v5517
      %v5742 = vpop.f32.mrb[0].mxu0
      %v5743 = vadd.f32 %v5499, %v5742
      %v5744 = vpop.f32.mrb[0].mxu0
      %v5745 = vpop.f32.mrb[0].mxu0
      %v5746 = vadd.f32 %v5499, %v5745
      %v5747 = vpop.f32.mrb[0].mxu0
      %5748 = vmatprep.mubr.bf16.mxu0 0
      %5749 = vmatmul.mubr.bf16.gmra.mrb[0].mxu0 %v5520
      %v5750 = vpop.f32.mrb[0].mxu0
      %v5751 = vadd.f32 %v5499, %v5750
      %v5752 = vpop.f32.mrb[0].mxu0
      %v5753 = vpop.f32.mrb[0].mxu0
      %v5754 = vadd.f32 %v5499, %v5753
      %v5755 = vpop.f32.mrb[0].mxu0
      %5756 = vmatprep.mubr.bf16.mxu0 0
      %5757 = vmatmul.mubr.bf16.gmra.mrb[0].mxu0 %v5523
      %v5758 = vpop.f32.mrb[0].mxu0
      %v5759 = vadd.f32 %v5499, %v5758
      %v5760 = vpop.f32.mrb[0].mxu0
      %v5761 = vpop.f32.mrb[0].mxu0
      %v5762 = vadd.f32 %v5499, %v5761
      %v5763 = vpop.f32.mrb[0].mxu0
      %5764 = vmatprep.mubr.bf16.mxu0 0
      %5765 = vmatmul.mubr.bf16.gmra.mrb[0].mxu0 %v5526
      %v5766 = vpop.f32.mrb[0].mxu0
      %v5767 = vadd.f32 %v5499, %v5766
      %v5768 = vpop.f32.mrb[0].mxu0
      %v5769 = vpop.f32.mrb[0].mxu0
      %v5770 = vadd.f32 %v5499, %v5769
      %v5771 = vpop.f32.mrb[0].mxu0
      %5772 = vmatprep.mubr.bf16.mxu0 0
      %5773 = vmatmul.mubr.bf16.gmra.mrb[0].mxu0 %v5529
      %v5774 = vpop.f32.mrb[0].mxu0
      %v5775 = vadd.f32 %v5499, %v5774
      %v5776 = vpop.f32.mrb[0].mxu0
      %v5777 = vpop.f32.mrb[0].mxu0
      %v5778 = vadd.f32 %v5499, %v5777
      %v5779 = vpop.f32.mrb[0].mxu0
      %5780 = vmatprep.mubr.bf16.mxu0 0
      %5781 = vmatmul.mubr.bf16.gmra.mrb[0].mxu0 %v5532
      %v5782 = vpop.f32.mrb[0].mxu0
      %v5783 = vadd.f32 %v5499, %v5782
      %v5784 = vpop.f32.mrb[0].mxu0
      %v5785 = vpop.f32.mrb[0].mxu0
      %v5786 = vadd.f32 %v5499, %v5785
      %v5787 = vpop.f32.mrb[0].mxu0
      %5788 = vmatprep.mubr.bf16.mxu0 0
      %5789 = vmatmul.mubr.bf16.gmra.mrb[0].mxu0 %v5535
      %v5790 = vpop.f32.mrb[0].mxu0
      %v5791 = vadd.f32 %v5499, %v5790
      %v5792 = vpop.f32.mrb[0].mxu0
      %v5793 = vpop.f32.mrb[0].mxu0
      %v5794 = vadd.f32 %v5499, %v5793
      %v5795 = vpop.f32.mrb[0].mxu0
      %5796 = vmatprep.mubr.bf16.mxu0 0
      %5797 = vmatmul.mubr.bf16.gmra.mrb[0].mxu0 %v5538
      %v5798 = vpop.f32.mrb[0].mxu0
      %v5799 = vadd.f32 %v5499, %v5798
      %v5800 = vpop.f32.mrb[0].mxu0
      %v5801 = vpop.f32.mrb[0].mxu0
      %v5802 = vadd.f32 %v5499, %v5801
      %v5803 = vpop.f32.mrb[0].mxu0
      %5804 = vmatprep.mubr.bf16.mxu0 0
      %5805 = vmatmul.mubr.bf16.gmra.mrb[0].mxu0 %v5541
      %v5806 = vpop.f32.mrb[0].mxu0
      %v5807 = vadd.f32 %v5499, %v5806
      %v5808 = vpop.f32.mrb[0].mxu0
      %v5809 = vpop.f32.mrb[0].mxu0
      %v5810 = vadd.f32 %v5499, %v5809
      %v5811 = vpop.f32.mrb[0].mxu0
      %5812 = vmatprep.mubr.bf16.mxu0 0
      %5813 = vmatmul.mubr.bf16.gmra.mrb[0].mxu0 %v5544
      %v5814 = vpop.f32.mrb[0].mxu0
      %v5815 = vadd.f32 %v5499, %v5814
      %v5816 = vpop.f32.mrb[0].mxu0
      %v5817 = vpop.f32.mrb[0].mxu0
      %v5818 = vadd.f32 %v5499, %v5817
      %v5819 = vpop.f32.mrb[0].mxu0
      %5820 = vmatprep.mubr.bf16.mxu0 0
      %5821 = vmatmul.mubr.bf16.gmra.mrb[0].mxu0 %v5547
      %v5822 = vpop.f32.mrb[0].mxu0
      %v5823 = vadd.f32 %v5499, %v5822
      %v5824 = vpop.f32.mrb[0].mxu0
      %v5825 = vpop.f32.mrb[0].mxu0
      %v5826 = vadd.f32 %v5499, %v5825
      %v5827 = vpop.f32.mrb[0].mxu0
      %5828 = vmatprep.mubr.bf16.mxu0 0
      %5829 = vmatmul.mubr.bf16.gmra.mrb[0].mxu0 %v5550
      %v5830 = vpop.f32.mrb[0].mxu0
      %v5831 = vadd.f32 %v5499, %v5830
      %v5832 = vpop.f32.mrb[0].mxu0
      %v5833 = vpop.f32.mrb[0].mxu0
      %v5834 = vadd.f32 %v5499, %v5833
      %v5835 = vpop.f32.mrb[0].mxu0
      %5836 = vmatprep.mubr.bf16.mxu0 0
      %5837 = vmatmul.mubr.bf16.gmra.mrb[0].mxu0 %v5553
      %v5838 = vpop.f32.mrb[0].mxu0
      %v5839 = vadd.f32 %v5499, %v5838
      %v5840 = vpop.f32.mrb[0].mxu0
      %v5841 = vpop.f32.mrb[0].mxu0
      %v5842 = vadd.f32 %v5499, %v5841
      %v5843 = vpop.f32.mrb[0].mxu0
      %5844 = vmatprep.mubr.bf16.mxu0 0
      %5845 = vmatmul.mubr.bf16.gmra.mrb[0].mxu0 %v5556
      %v5846 = vpop.f32.mrb[0].mxu0
      %v5847 = vadd.f32 %v5499, %v5846
      %v5848 = vpop.f32.mrb[0].mxu0
      %v5849 = vpop.f32.mrb[0].mxu0
      %v5850 = vadd.f32 %v5499, %v5849
      %v5851 = vpop.f32.mrb[0].mxu0
      %5852 = vmatprep.mubr.bf16.mxu0 0
      %5853 = vmatmul.mubr.bf16.gmra.mrb[0].mxu0 %v5559
      %v5854 = vpop.f32.mrb[0].mxu0
      %v5855 = vadd.f32 %v5499, %v5854
      %v5856 = vpop.f32.mrb[0].mxu0
      %v5857 = vpop.f32.mrb[0].mxu0
      %v5858 = vadd.f32 %v5499, %v5857
      %v5859 = vpop.f32.mrb[0].mxu0
      %5860 = vmatprep.mubr.bf16.mxu0 0
      %5861 = vmatmul.mubr.bf16.gmra.mrb[0].mxu0 %v5562
      %v5862 = vpop.f32.mrb[0].mxu0
      %v5863 = vadd.f32 %v5499, %v5862
      %v5864 = vpop.f32.mrb[0].mxu0
      %v5865 = vpop.f32.mrb[0].mxu0
      %v5866 = vadd.f32 %v5499, %v5865
      %v5867 = vpop.f32.mrb[0].mxu0
      %5868 = vmatprep.mubr.bf16.mxu0 0
      %5869 = vmatmul.mubr.bf16.gmra.mrb[0].mxu0 %v5565
      %v5870 = vpop.f32.mrb[0].mxu0
      %v5871 = vadd.f32 %v5499, %v5870
      %v5872 = vpop.f32.mrb[0].mxu0
      %v5873 = vpop.f32.mrb[0].mxu0
      %v5874 = vadd.f32 %v5499, %v5873
      %v5875 = vpop.f32.mrb[0].mxu0
      %5876 = vmatprep.mubr.bf16.mxu0 0
      %5877 = vmatmul.mubr.bf16.gmra.mrb[0].mxu0 %v5568
      %v5878 = vpop.f32.mrb[0].mxu0
      %v5879 = vadd.f32 %v5499, %v5878
      %v5880 = vpop.f32.mrb[0].mxu0
      %v5881 = vpop.f32.mrb[0].mxu0
      %v5882 = vadd.f32 %v5499, %v5881
      %v5883 = vpop.f32.mrb[0].mxu0
      %5884 = vmatprep.mubr.bf16.mxu0 0
      %5885 = vmatmul.mubr.bf16.gmra.mrb[0].mxu0 %v5571
      %v5886 = vpop.f32.mrb[0].mxu0
      %v5887 = vadd.f32 %v5499, %v5886
      %v5888 = vpop.f32.mrb[0].mxu0
      %v5889 = vpop.f32.mrb[0].mxu0
      %v5890 = vadd.f32 %v5499, %v5889
      %v5891 = vpop.f32.mrb[0].mxu0
      %5892 = vmatprep.mubr.bf16.mxu0 0
      %5893 = vmatmul.mubr.bf16.gmra.mrb[0].mxu0 %v5574
      %v5894 = vpop.f32.mrb[0].mxu0
      %v5895 = vadd.f32 %v5499, %v5894
      %v5896 = vpop.f32.mrb[0].mxu0
      %v5897 = vpop.f32.mrb[0].mxu0
      %v5898 = vadd.f32 %v5499, %v5897
      %v5899 = vpop.f32.mrb[0].mxu0
      %5900 = vmatprep.mubr.bf16.mxu0 0
      %5901 = vmatmul.mubr.bf16.gmra.mrb[0].mxu0 %v5577
      %v5902 = vpop.f32.mrb[0].mxu0
      %v5903 = vadd.f32 %v5499, %v5902
      %v5904 = vpop.f32.mrb[0].mxu0
      %v5905 = vpop.f32.mrb[0].mxu0
      %v5906 = vadd.f32 %v5499, %v5905
      %v5907 = vpop.f32.mrb[0].mxu0
      %5908 = vmatprep.mubr.bf16.mxu0 0
      %5909 = vmatmul.mubr.bf16.gmra.mrb[0].mxu0 %v5580
      %v5910 = vpop.f32.mrb[0].mxu0
      %v5911 = vadd.f32 %v5499, %v5910
      %v5912 = vpop.f32.mrb[0].mxu0
      %v5913 = vpop.f32.mrb[0].mxu0
      %v5914 = vadd.f32 %v5499, %v5913
      %v5915 = vpop.f32.mrb[0].mxu0
      %5916 = vmatprep.mubr.bf16.mxu0 0
      %5917 = vmatmul.mubr.bf16.gmra.mrb[0].mxu0 %v5583
      %v5918 = vpop.f32.mrb[0].mxu0
      %v5919 = vadd.f32 %v5499, %v5918
      %v5920 = vpop.f32.mrb[0].mxu0
      %v5921 = vpop.f32.mrb[0].mxu0
      %v5922 = vadd.f32 %v5499, %v5921
      %v5923 = vpop.f32.mrb[0].mxu0
      %5924 = vmatprep.mubr.bf16.mxu0 0
      %5925 = vmatmul.mubr.bf16.gmra.mrb[0].mxu0 %v5586
      %v5926 = vpop.f32.mrb[0].mxu0
      %v5927 = vadd.f32 %v5499, %v5926
      %v5928 = vpop.f32.mrb[0].mxu0
      %v5929 = vpop.f32.mrb[0].mxu0
      %v5930 = vadd.f32 %v5499, %v5929
      %v5931 = vpop.f32.mrb[0].mxu0
      %5932 = vmatprep.mubr.bf16.mxu0 0
      %5933 = vmatmul.mubr.bf16.gmra.mrb[0].mxu0 %v5589
      %v5934 = vpop.f32.mrb[0].mxu0
      %v5935 = vadd.f32 %v5499, %v5934
      %v5936 = vpop.f32.mrb[0].mxu0
      %v5937 = vpop.f32.mrb[0].mxu0
      %v5938 = vadd.f32 %v5499, %v5937
      %v5939 = vpop.f32.mrb[0].mxu0
      %5940 = vmatprep.mubr.bf16.mxu0 0
      %5941 = vmatmul.mubr.bf16.gmra.mrb[0].mxu0 %v5592
      %v5942 = vpop.f32.mrb[0].mxu0
      %v5943 = vadd.f32 %v5499, %v5942
      %v5944 = vpop.f32.mrb[0].mxu0
      %v5945 = vpop.f32.mrb[0].mxu0
      %v5946 = vadd.f32 %v5499, %v5945
      %v5947 = vpop.f32.mrb[0].mxu0
      %5948 = vmatprep.mubr.bf16.mxu0 0
      %5949 = vmatmul.mubr.bf16.gmra.mrb[0].mxu0 %v5595
      %v5950 = vpop.f32.mrb[0].mxu0
      %v5951 = vadd.f32 %v5499, %v5950
      %v5952 = vpop.f32.mrb[0].mxu0
      %v5953 = vpop.f32.mrb[0].mxu0
      %v5954 = vadd.f32 %v5499, %v5953
      %v5955 = vpop.f32.mrb[0].mxu0
      %5956 = vmatprep.mubr.bf16.mxu0 0
      %5957 = vmatmul.mubr.bf16.gmra.mrb[0].mxu0 %v5598
      %v5958 = vpop.f32.mrb[0].mxu0
      %v5959 = vadd.f32 %v5499, %v5958
      %v5960 = vpop.f32.mrb[0].mxu0
      %v5961 = vpop.f32.mrb[0].mxu0
      %v5962 = vadd.f32 %v5499, %v5961
      %v5963 = vpop.f32.mrb[0].mxu0
      %5964 = vmatprep.mubr.bf16.mxu0 0
      %5965 = vmatmul.mubr.bf16.gmra.mrb[0].mxu0 %v5601
      %v5966 = vpop.f32.mrb[0].mxu0
      %v5967 = vadd.f32 %v5499, %v5966
      %v5968 = vpop.f32.mrb[0].mxu0
      %v5969 = vpop.f32.mrb[0].mxu0
      %v5970 = vadd.f32 %v5499, %v5969
      %v5971 = vpop.f32.mrb[0].mxu0
      %5972 = vmatprep.mubr.bf16.mxu0 0
      %5973 = vmatmul.mubr.bf16.gmra.mrb[0].mxu0 %v5604
      %v5974 = vpop.f32.mrb[0].mxu0
      %v5975 = vadd.f32 %v5499, %v5974
      %v5976 = vpop.f32.mrb[0].mxu0
      %v5977 = vpop.f32.mrb[0].mxu0
      %v5978 = vadd.f32 %v5499, %v5977
      %v5979 = vpop.f32.mrb[0].mxu0
      %5980 = vmatprep.mubr.bf16.mxu0 0
      %5981 = vmatmul.mubr.bf16.gmra.mrb[0].mxu0 %v5607
      %v5982 = vpop.f32.mrb[0].mxu0
      %v5983 = vadd.f32 %v5499, %v5982
      %v5984 = vpop.f32.mrb[0].mxu0
      %v5985 = vpop.f32.mrb[0].mxu0
      %v5986 = vadd.f32 %v5499, %v5985
      %v5987 = vpop.f32.mrb[0].mxu0
      %5988 = vmatprep.mubr.bf16.mxu0 0
      %5989 = vmatmul.mubr.bf16.gmra.mrb[0].mxu0 %v5610
      %v5990 = vpop.f32.mrb[0].mxu0
      %v5991 = vadd.f32 %v5499, %v5990
      %v5992 = vpop.f32.mrb[0].mxu0
      %v5993 = vpop.f32.mrb[0].mxu0
      %v5994 = vadd.f32 %v5499, %v5993
      %v5995 = vpop.f32.mrb[0].mxu0
      %5996 = vmatprep.mubr.bf16.mxu0 0
      %5997 = vmatmul.mubr.bf16.gmra.mrb[0].mxu0 %v5613
      %v5998 = vpop.f32.mrb[0].mxu0
      %v5999 = vadd.f32 %v5499, %v5998
      %v6000 = vpop.f32.mrb[0].mxu0
      %v6001 = vpop.f32.mrb[0].mxu0
      %v6002 = vadd.f32 %v5499, %v6001
      %v6003 = vpop.f32.mrb[0].mxu0
      %6004 = vmatprep.mubr.bf16.mxu0 0
      %6005 = vmatmul.mubr.bf16.gmra.mrb[0].mxu0 %v5616
      %v6006 = vpop.f32.mrb[0].mxu0
      %v6007 = vadd.f32 %v5499, %v6006
      %v6008 = vpop.f32.mrb[0].mxu0
      %v6009 = vpop.f32.mrb[0].mxu0
      %v6010 = vadd.f32 %v5499, %v6009
      %v6011 = vpop.f32.mrb[0].mxu0
      %6012 = vmatprep.mubr.bf16.mxu0 0
      %6013 = vmatmul.mubr.bf16.gmra.mrb[0].mxu0 %v5619
      %v6014 = vpop.f32.mrb[0].mxu0
      %v6015 = vadd.f32 %v5499, %v6014
      %v6016 = vpop.f32.mrb[0].mxu0
      %v6017 = vpop.f32.mrb[0].mxu0
      %v6018 = vadd.f32 %v5499, %v6017
      %v6019 = vpop.f32.mrb[0].mxu0
      %6020 = vmatprep.mubr.bf16.mxu0 0
      %6021 = vmatmul.mubr.bf16.gmra.mrb[0].mxu0 %v5622
      %v6022 = vpop.f32.mrb[0].mxu0
      %v6023 = vadd.f32 %v5499, %v6022
      %v6024 = vpop.f32.mrb[0].mxu0
      %v6025 = vpop.f32.mrb[0].mxu0
      %v6026 = vadd.f32 %v5499, %v6025
      %v6027 = vpop.f32.mrb[0].mxu0
      %6028 = vmatprep.mubr.bf16.mxu0 0
      %6029 = vmatmul.mubr.bf16.gmra.mrb[0].mxu0 %v5625
      %v6030 = vpop.f32.mrb[0].mxu0
      %v6031 = vadd.f32 %v5499, %v6030
      %v6032 = vpop.f32.mrb[0].mxu0
      %v6033 = vpop.f32.mrb[0].mxu0
      %v6034 = vadd.f32 %v5499, %v6033
      %v6035 = vpop.f32.mrb[0].mxu0
      %6036 = vmatprep.mubr.bf16.mxu0 0
      %6037 = vmatmul.mubr.bf16.gmra.mrb[0].mxu0 %v5628
      %v6038 = vpop.f32.mrb[0].mxu0
      %v6039 = vadd.f32 %v5499, %v6038
      %v6040 = vpop.f32.mrb[0].mxu0
      %v6041 = vpop.f32.mrb[0].mxu0
      %v6042 = vadd.f32 %v5499, %v6041
      %v6043 = vpop.f32.mrb[0].mxu0
      %6044 = vmatprep.mubr.bf16.mxu0 0
      %6045 = vmatmul.mubr.bf16.gmra.mrb[0].mxu0 %v5631
      %v6046 = vpop.f32.mrb[0].mxu0
      %v6047 = vadd.f32 %v5499, %v6046
      %v6048 = vpop.f32.mrb[0].mxu0
      %v6049 = vpop.f32.mrb[0].mxu0
      %v6050 = vadd.f32 %v5499, %v6049
      %v6051 = vpop.f32.mrb[0].mxu0
      %6052 = vmatprep.mubr.bf16.mxu0 0
      %6053 = vmatmul.mubr.bf16.gmra.mrb[0].mxu0 %v5634
      %v6054 = vpop.f32.mrb[0].mxu0
      %v6055 = vadd.f32 %v5499, %v6054
      %v6056 = vpop.f32.mrb[0].mxu0
      %v6057 = vpop.f32.mrb[0].mxu0
      %v6058 = vadd.f32 %v5499, %v6057
      %v6059 = vpop.f32.mrb[0].mxu0
      %6060 = vmatprep.mubr.bf16.mxu0 0
      %6061 = vmatmul.mubr.bf16.gmra.mrb[0].mxu0 %v5637
      %v6062 = vpop.f32.mrb[0].mxu0
      %v6063 = vadd.f32 %v5499, %v6062
      %v6064 = vpop.f32.mrb[0].mxu0
      %v6065 = vpop.f32.mrb[0].mxu0
      %v6066 = vadd.f32 %v5499, %v6065
      %v6067 = vpop.f32.mrb[0].mxu0
      %6068 = vmatprep.mubr.bf16.mxu0 0
      %6069 = vmatmul.mubr.bf16.gmra.mrb[0].mxu0 %v5640
      %v6070 = vpop.f32.mrb[0].mxu0
      %v6071 = vadd.f32 %v5499, %v6070
      %v6072 = vpop.f32.mrb[0].mxu0
      %v6073 = vpop.f32.mrb[0].mxu0
      %v6074 = vadd.f32 %v5499, %v6073
      %v6075 = vpop.f32.mrb[0].mxu0
      %6076 = vmatprep.mubr.bf16.mxu0 0
      %6077 = vmatmul.mubr.bf16.gmra.mrb[0].mxu0 %v5643
      %v6078 = vpop.f32.mrb[0].mxu0
      %v6079 = vadd.f32 %v5499, %v6078
      %v6080 = vpop.f32.mrb[0].mxu0
      %v6081 = vpop.f32.mrb[0].mxu0
      %v6082 = vadd.f32 %v5499, %v6081
      %v6083 = vpop.f32.mrb[0].mxu0
      %6084 = vmatprep.mubr.bf16.mxu0 0
      %6085 = vmatmul.mubr.bf16.gmra.mrb[0].mxu0 %v5646
      %v6086 = vpop.f32.mrb[0].mxu0
      %v6087 = vadd.f32 %v5499, %v6086
      %v6088 = vpop.f32.mrb[0].mxu0
      %v6089 = vpop.f32.mrb[0].mxu0
      %v6090 = vadd.f32 %v5499, %v6089
      %v6091 = vpop.f32.mrb[0].mxu0
      %6092 = vmatprep.mubr.bf16.mxu0 0
      %6093 = vmatmul.mubr.bf16.gmra.mrb[0].mxu0 %v5649
      %v6094 = vpop.f32.mrb[0].mxu0
      %v6095 = vadd.f32 %v5499, %v6094
      %v6096 = vpop.f32.mrb[0].mxu0
      %v6097 = vpop.f32.mrb[0].mxu0
      %v6098 = vadd.f32 %v5499, %v6097
      %v6099 = vpop.f32.mrb[0].mxu0
      %6100 = vmatprep.mubr.bf16.mxu0 0
      %6101 = vmatmul.mubr.bf16.gmra.mrb[0].mxu0 %v5652
      %v6102 = vpop.f32.mrb[0].mxu0
      %v6103 = vadd.f32 %v5499, %v6102
      %v6104 = vpop.f32.mrb[0].mxu0
      %v6105 = vpop.f32.mrb[0].mxu0
      %v6106 = vadd.f32 %v5499, %v6105
      %v6107 = vpop.f32.mrb[0].mxu0
      %6108 = vmatprep.mubr.bf16.mxu0 0
      %6109 = vmatmul.mubr.bf16.gmra.mrb[0].mxu0 %v5655
      %v6110 = vpop.f32.mrb[0].mxu0
      %v6111 = vadd.f32 %v5499, %v6110
      %v6112 = vpop.f32.mrb[0].mxu0
      %v6113 = vpop.f32.mrb[0].mxu0
      %v6114 = vadd.f32 %v5499, %v6113
      %v6115 = vpop.f32.mrb[0].mxu0
      %6116 = vmatprep.mubr.bf16.mxu0 0
      %6117 = vmatmul.mubr.bf16.gmra.mrb[0].mxu0 %v5658
      %v6118 = vpop.f32.mrb[0].mxu0
      %v6119 = vadd.f32 %v5499, %v6118
      %v6120 = vpop.f32.mrb[0].mxu0
      %v6121 = vpop.f32.mrb[0].mxu0
      %v6122 = vadd.f32 %v5499, %v6121
      %v6123 = vpop.f32.mrb[0].mxu0
      %6124 = vmatprep.mubr.bf16.mxu0 0
      %6125 = vmatmul.mubr.bf16.gmra.mrb[0].mxu0 %v5661
      %v6126 = vpop.f32.mrb[0].mxu0
      %v6127 = vadd.f32 %v5499, %v6126
      %v6128 = vpop.f32.mrb[0].mxu0
      %v6129 = vpop.f32.mrb[0].mxu0
      %v6130 = vadd.f32 %v5499, %v6129
      %v6131 = vpop.f32.mrb[0].mxu0
      %6132 = vmatprep.mubr.bf16.mxu0 0
      %6133 = vmatmul.mubr.bf16.gmra.mrb[0].mxu0 %v5664
      %v6134 = vpop.f32.mrb[0].mxu0
      %v6135 = vadd.f32 %v5499, %v6134
      %v6136 = vpop.f32.mrb[0].mxu0
      %v6137 = vpop.f32.mrb[0].mxu0
      %v6138 = vadd.f32 %v5499, %v6137
      %v6139 = vpop.f32.mrb[0].mxu0
      %6140 = vmatprep.mubr.bf16.mxu0 0
      %6141 = vmatmul.mubr.bf16.gmra.mrb[0].mxu0 %v5667
      %v6142 = vpop.f32.mrb[0].mxu0
      %v6143 = vadd.f32 %v5499, %v6142
      %v6144 = vpop.f32.mrb[0].mxu0
      %v6145 = vpop.f32.mrb[0].mxu0
      %v6146 = vadd.f32 %v5499, %v6145
      %v6147 = vpop.f32.mrb[0].mxu0
      %6148 = vmatprep.mubr.bf16.mxu0 0
      %6149 = vmatmul.mubr.bf16.gmra.mrb[0].mxu0 %v5670
      %v6150 = vpop.f32.mrb[0].mxu0
      %v6151 = vadd.f32 %v5499, %v6150
      %v6152 = vpop.f32.mrb[0].mxu0
      %v6153 = vpop.f32.mrb[0].mxu0
      %v6154 = vadd.f32 %v5499, %v6153
      %v6155 = vpop.f32.mrb[0].mxu0
      %6156 = vmatprep.mubr.bf16.mxu0 0
      %6157 = vmatmul.mubr.bf16.gmra.mrb[0].mxu0 %v5673
      %v6158 = vpop.f32.mrb[0].mxu0
      %v6159 = vpop.f32.mrb[0].mxu0
      %v6160 = vpop.f32.mrb[0].mxu0
      %v6161 = vpop.f32.mrb[0].mxu0
      %6162 = vmatprep.mubr.bf16.mxu0 0
      %6163 = vmatmul.mubr.bf16.gmra.mrb[0].mxu0 %v5676
      %v6164 = vpop.f32.mrb[0].mxu0
      %v6165 = vpop.f32.mrb[0].mxu0
      %v6166 = vpop.f32.mrb[0].mxu0
      %v6167 = vpop.f32.mrb[0].mxu0
      %6168 = vdwg.mxu0
      %v6169 = vmax.f32 %v5719, 0.0
      %v6170 = vmax.f32 %v5722, 0.0
      %v6171 = vmax.f32 %v5727, 0.0
      %v6172 = vmax.f32 %v5730, 0.0
      %v6173 = vmax.f32 %v5735, 0.0
      %v6174 = vmax.f32 %v5738, 0.0
      %v6175 = vmax.f32 %v5743, 0.0
      %v6176 = vmax.f32 %v5746, 0.0
      %v6177 = vmax.f32 %v5751, 0.0
      %v6178 = vmax.f32 %v5754, 0.0
      %v6179 = vmax.f32 %v5759, 0.0
      %v6180 = vmax.f32 %v5762, 0.0
      %v6181 = vmax.f32 %v5767, 0.0
      %v6182 = vmax.f32 %v5770, 0.0
      %v6183 = vmax.f32 %v5775, 0.0
      %v6184 = vmax.f32 %v5778, 0.0
      %v6185 = vmax.f32 %v5783, 0.0
      %v6186 = vmax.f32 %v5786, 0.0
      %v6187 = vmax.f32 %v5791, 0.0
      %v6188 = vmax.f32 %v5794, 0.0
      %v6189 = vmax.f32 %v5799, 0.0
      %v6190 = vmax.f32 %v5802, 0.0
      %v6191 = vmax.f32 %v5807, 0.0
      %v6192 = vmax.f32 %v5810, 0.0
      %v6193 = vmax.f32 %v5815, 0.0
      %v6194 = vmax.f32 %v5818, 0.0
      %v6195 = vmax.f32 %v5823, 0.0
      %v6196 = vmax.f32 %v5826, 0.0
      %v6197 = vmax.f32 %v5831, 0.0
      %v6198 = vmax.f32 %v5834, 0.0
      %v6199 = vmax.f32 %v5839, 0.0
      %v6200 = vmax.f32 %v5842, 0.0
      %v6201 = vmax.f32 %v5847, 0.0
      %v6202 = vmax.f32 %v5850, 0.0
      %v6203 = vmax.f32 %v5855, 0.0
      %v6204 = vmax.f32 %v5858, 0.0
      %v6205 = vmax.f32 %v5863, 0.0
      %v6206 = vmax.f32 %v5866, 0.0
      %v6207 = vmax.f32 %v5871, 0.0
      %v6208 = vmax.f32 %v5874, 0.0
      %v6209 = vmax.f32 %v5879, 0.0
      %v6210 = vmax.f32 %v5882, 0.0
      %v6211 = vmax.f32 %v5887, 0.0
      %v6212 = vmax.f32 %v5890, 0.0
      %v6213 = vmax.f32 %v5895, 0.0
      %v6214 = vmax.f32 %v5898, 0.0
      %v6215 = vmax.f32 %v5903, 0.0
      %v6216 = vmax.f32 %v5906, 0.0
      %v6217 = vmax.f32 %v5911, 0.0
      %v6218 = vmax.f32 %v5914, 0.0
      %v6219 = vmax.f32 %v5919, 0.0
      %v6220 = vmax.f32 %v5922, 0.0
      %v6221 = vmax.f32 %v5927, 0.0
      %v6222 = vmax.f32 %v5930, 0.0
      %v6223 = vmax.f32 %v5935, 0.0
      %v6224 = vmax.f32 %v5938, 0.0
      %v6225 = vmax.f32 %v5943, 0.0
      %v6226 = vmax.f32 %v5946, 0.0
      %v6227 = vmax.f32 %v5951, 0.0
      %v6228 = vmax.f32 %v5954, 0.0
      %v6229 = vmax.f32 %v5959, 0.0
      %v6230 = vmax.f32 %v5962, 0.0
      %v6231 = vmax.f32 %v5967, 0.0
      %v6232 = vmax.f32 %v5970, 0.0
      %v6233 = vmax.f32 %v5975, 0.0
      %v6234 = vmax.f32 %v5978, 0.0
      %v6235 = vmax.f32 %v5983, 0.0
      %v6236 = vmax.f32 %v5986, 0.0
      %v6237 = vmax.f32 %v5991, 0.0
      %v6238 = vmax.f32 %v5994, 0.0
      %v6239 = vmax.f32 %v5999, 0.0
      %v6240 = vmax.f32 %v6002, 0.0
      %v6241 = vmax.f32 %v6007, 0.0
      %v6242 = vmax.f32 %v6010, 0.0
      %v6243 = vmax.f32 %v6015, 0.0
      %v6244 = vmax.f32 %v6018, 0.0
      %v6245 = vmax.f32 %v6023, 0.0
      %v6246 = vmax.f32 %v6026, 0.0
      %v6247 = vmax.f32 %v6031, 0.0
      %v6248 = vmax.f32 %v6034, 0.0
      %v6249 = vmax.f32 %v6039, 0.0
      %v6250 = vmax.f32 %v6042, 0.0
      %v6251 = vmax.f32 %v6047, 0.0
      %v6252 = vmax.f32 %v6050, 0.0
      %v6253 = vmax.f32 %v6055, 0.0
      %v6254 = vmax.f32 %v6058, 0.0
      %v6255 = vmax.f32 %v6063, 0.0
      %v6256 = vmax.f32 %v6066, 0.0
      %v6257 = vmax.f32 %v6071, 0.0
      %v6258 = vmax.f32 %v6074, 0.0
      %v6259 = vmax.f32 %v6079, 0.0
      %v6260 = vmax.f32 %v6082, 0.0
      %v6261 = vmax.f32 %v6087, 0.0
      %v6262 = vmax.f32 %v6090, 0.0
      %v6263 = vmax.f32 %v6095, 0.0
      %v6264 = vmax.f32 %v6098, 0.0
      %v6265 = vmax.f32 %v6103, 0.0
      %v6266 = vmax.f32 %v6106, 0.0
      %v6267 = vmax.f32 %v6111, 0.0
      %v6268 = vmax.f32 %v6114, 0.0
      %v6269 = vmax.f32 %v6119, 0.0
      %v6270 = vmax.f32 %v6122, 0.0
      %v6271 = vmax.f32 %v6127, 0.0
      %v6272 = vmax.f32 %v6130, 0.0
      %v6273 = vmax.f32 %v6135, 0.0
      %v6274 = vmax.f32 %v6138, 0.0
      %v6275 = vmax.f32 %v6143, 0.0
      %v6276 = vmax.f32 %v6146, 0.0
      %v6277 = vmax.f32 %v6151, 0.0
      %v6278 = vmax.f32 %v6154, 0.0
      %v6386 = vrot.slane %v6172, 6
      %v6387 = vrot.slane %v6173, 6
      %v6388 = vsel %vm1567, %v6386, %v6387
      %v6389 = vrot.slane %v6174, 6
      %v6390 = vsel %vm1567, %v6387, %v6389
      %v6391 = vrot.slane %v6175, 6
      %v6392 = vsel %vm1567, %v6389, %v6391
      %v6393 = vrot.slane %v6176, 6
      %v6394 = vsel %vm1567, %v6391, %v6393
      %v6395 = vrot.slane %v6177, 6
      %v6396 = vsel %vm1567, %v6393, %v6395
      %v6397 = vrot.slane %v6178, 6
      %v6398 = vsel %vm1567, %v6395, %v6397
      %v6399 = vrot.slane %v6179, 6
      %v6400 = vsel %vm1567, %v6397, %v6399
      %v6401 = vrot.slane %v6180, 6
      %v6402 = vsel %vm1567, %v6399, %v6401
      %v6403 = vrot.slane %v6181, 6
      %v6404 = vsel %vm1567, %v6401, %v6403
      %v6405 = vrot.slane %v6182, 6
      %v6406 = vsel %vm1567, %v6403, %v6405
      %v6407 = vrot.slane %v6183, 6
      %v6408 = vsel %vm1567, %v6405, %v6407
      %v6409 = vrot.slane %v6184, 6
      %v6410 = vsel %vm1567, %v6407, %v6409
      %v6411 = vrot.slane %v6185, 6
      %v6412 = vsel %vm1567, %v6409, %v6411
      %v6413 = vrot.slane %v6186, 6
      %v6414 = vsel %vm1567, %v6411, %v6413
      %v6415 = vrot.slane %v6187, 6
      %v6416 = vsel %vm1567, %v6413, %v6415
      %v6417 = vrot.slane %v6188, 6
      %v6418 = vsel %vm1567, %v6415, %v6417
      %v6419 = vrot.slane %v6189, 6
      %v6420 = vsel %vm1567, %v6417, %v6419
      %v6421 = vrot.slane %v6190, 6
      %v6422 = vsel %vm1567, %v6419, %v6421
      %v6423 = vrot.slane %v6191, 6
      %v6424 = vsel %vm1567, %v6421, %v6423
      %v6425 = vrot.slane %v6192, 6
      %v6426 = vsel %vm1567, %v6423, %v6425
      %v6427 = vrot.slane %v6193, 6
      %v6428 = vsel %vm1567, %v6425, %v6427
      %v6429 = vrot.slane %v6194, 6
      %v6430 = vsel %vm1567, %v6427, %v6429
      %v6431 = vrot.slane %v6195, 6
      %v6432 = vsel %vm1567, %v6429, %v6431
      %v6433 = vrot.slane %v6196, 6
      %v6434 = vsel %vm1567, %v6431, %v6433
      %v6435 = vrot.slane %v6197, 6
      %v6436 = vsel %vm1567, %v6433, %v6435
      %v6437 = vrot.slane %v6198, 6
      %v6438 = vsel %vm1567, %v6435, %v6437
      %v6439 = vrot.slane %v6199, 6
      %v6440 = vsel %vm1567, %v6437, %v6439
      %v6441 = vrot.slane %v6200, 6
      %v6442 = vsel %vm1567, %v6439, %v6441
      %v6443 = vrot.slane %v6201, 6
      %v6444 = vsel %vm1567, %v6441, %v6443
      %v6445 = vrot.slane %v6202, 6
      %v6446 = vsel %vm1567, %v6443, %v6445
      %v6447 = vrot.slane %v6203, 6
      %v6448 = vsel %vm1567, %v6445, %v6447
      %v6449 = vrot.slane %v6204, 6
      %v6450 = vsel %vm1567, %v6447, %v6449
      %v6451 = vrot.slane %v6205, 6
      %v6452 = vsel %vm1567, %v6449, %v6451
      %v6453 = vrot.slane %v6206, 6
      %v6454 = vsel %vm1567, %v6451, %v6453
      %v6455 = vrot.slane %v6207, 6
      %v6456 = vsel %vm1567, %v6453, %v6455
      %v6457 = vrot.slane %v6208, 6
      %v6458 = vsel %vm1567, %v6455, %v6457
      %v6459 = vrot.slane %v6209, 6
      %v6460 = vsel %vm1567, %v6457, %v6459
      %v6461 = vrot.slane %v6210, 6
      %v6462 = vsel %vm1567, %v6459, %v6461
      %v6463 = vrot.slane %v6211, 6
      %v6464 = vsel %vm1567, %v6461, %v6463
      %v6465 = vrot.slane %v6212, 6
      %v6466 = vsel %vm1567, %v6463, %v6465
      %v6467 = vrot.slane %v6213, 6
      %v6468 = vsel %vm1567, %v6465, %v6467
      %v6469 = vrot.slane %v6214, 6
      %v6470 = vsel %vm1567, %v6467, %v6469
      %v6471 = vrot.slane %v6215, 6
      %v6472 = vsel %vm1567, %v6469, %v6471
      %v6473 = vrot.slane %v6216, 6
      %v6474 = vsel %vm1567, %v6471, %v6473
      %v6475 = vrot.slane %v6217, 6
      %v6476 = vsel %vm1567, %v6473, %v6475
      %v6477 = vrot.slane %v6218, 6
      %v6478 = vsel %vm1567, %v6475, %v6477
      %v6479 = vrot.slane %v6219, 6
      %v6480 = vsel %vm1567, %v6477, %v6479
      %v6481 = vrot.slane %v6220, 6
      %v6482 = vsel %vm1567, %v6479, %v6481
      %v6483 = vrot.slane %v6221, 6
      %v6484 = vsel %vm1567, %v6481, %v6483
      %v6485 = vrot.slane %v6222, 6
      %v6486 = vsel %vm1567, %v6483, %v6485
      %v6487 = vrot.slane %v6223, 6
      %v6488 = vsel %vm1567, %v6485, %v6487
      %v6489 = vrot.slane %v6224, 6
      %v6490 = vsel %vm1567, %v6487, %v6489
      %v6491 = vrot.slane %v6225, 6
      %v6492 = vsel %vm1567, %v6489, %v6491
      %v6493 = vrot.slane %v6226, 6
      %v6494 = vsel %vm1567, %v6491, %v6493
      %v6495 = vrot.slane %v6227, 6
      %v6496 = vsel %vm1567, %v6493, %v6495
      %v6497 = vrot.slane %v6228, 6
      %v6498 = vsel %vm1567, %v6495, %v6497
      %v6499 = vrot.slane %v6229, 6
      %v6500 = vsel %vm1567, %v6497, %v6499
      %v6501 = vrot.slane %v6230, 6
      %v6502 = vsel %vm1567, %v6499, %v6501
      %v6503 = vrot.slane %v6231, 6
      %v6504 = vsel %vm1567, %v6501, %v6503
      %v6505 = vrot.slane %v6232, 6
      %v6506 = vsel %vm1567, %v6503, %v6505
      %v6507 = vrot.slane %v6233, 6
      %v6508 = vsel %vm1567, %v6505, %v6507
      %v6509 = vrot.slane %v6234, 6
      %v6510 = vsel %vm1567, %v6507, %v6509
      %v6511 = vrot.slane %v6235, 6
      %v6512 = vsel %vm1567, %v6509, %v6511
      %v6513 = vrot.slane %v6236, 6
      %v6514 = vsel %vm1567, %v6511, %v6513
      %v6515 = vrot.slane %v6237, 6
      %v6516 = vsel %vm1567, %v6513, %v6515
      %v6517 = vrot.slane %v6238, 6
      %v6518 = vsel %vm1567, %v6515, %v6517
      %v6519 = vrot.slane %v6239, 6
      %v6520 = vsel %vm1567, %v6517, %v6519
      %v6521 = vrot.slane %v6240, 6
      %v6522 = vsel %vm1567, %v6519, %v6521
      %v6523 = vrot.slane %v6241, 6
      %v6524 = vsel %vm1567, %v6521, %v6523
      %v6525 = vrot.slane %v6242, 6
      %v6526 = vsel %vm1567, %v6523, %v6525
      %v6527 = vrot.slane %v6243, 6
      %v6528 = vsel %vm1567, %v6525, %v6527
      %v6529 = vrot.slane %v6244, 6
      %v6530 = vsel %vm1567, %v6527, %v6529
      %v6531 = vrot.slane %v6245, 6
      %v6532 = vsel %vm1567, %v6529, %v6531
      %v6533 = vrot.slane %v6246, 6
      %v6534 = vsel %vm1567, %v6531, %v6533
      %v6535 = vrot.slane %v6247, 6
      %v6536 = vsel %vm1567, %v6533, %v6535
      %v6537 = vrot.slane %v6248, 6
      %v6538 = vsel %vm1567, %v6535, %v6537
      %v6539 = vrot.slane %v6249, 6
      %v6540 = vsel %vm1567, %v6537, %v6539
      %v6541 = vrot.slane %v6250, 6
      %v6542 = vsel %vm1567, %v6539, %v6541
      %v6543 = vrot.slane %v6251, 6
      %v6544 = vsel %vm1567, %v6541, %v6543
      %v6545 = vrot.slane %v6252, 6
      %v6546 = vsel %vm1567, %v6543, %v6545
      %v6547 = vrot.slane %v6253, 6
      %v6548 = vsel %vm1567, %v6545, %v6547
      %v6549 = vrot.slane %v6254, 6
      %v6550 = vsel %vm1567, %v6547, %v6549
      %v6551 = vrot.slane %v6255, 6
      %v6552 = vsel %vm1567, %v6549, %v6551
      %v6553 = vrot.slane %v6256, 6
      %v6554 = vsel %vm1567, %v6551, %v6553
      %v6555 = vrot.slane %v6257, 6
      %v6556 = vsel %vm1567, %v6553, %v6555
      %v6557 = vrot.slane %v6258, 6
      %v6558 = vsel %vm1567, %v6555, %v6557
      %v6559 = vrot.slane %v6259, 6
      %v6560 = vsel %vm1567, %v6557, %v6559
      %v6561 = vrot.slane %v6260, 6
      %v6562 = vsel %vm1567, %v6559, %v6561
      %v6563 = vrot.slane %v6261, 6
      %v6564 = vsel %vm1567, %v6561, %v6563
      %v6565 = vrot.slane %v6262, 6
      %v6566 = vsel %vm1567, %v6563, %v6565
      %v6567 = vrot.slane %v6263, 6
      %v6568 = vsel %vm1567, %v6565, %v6567
      %v6569 = vrot.slane %v6264, 6
      %v6570 = vsel %vm1567, %v6567, %v6569
      %v6571 = vrot.slane %v6265, 6
      %v6572 = vsel %vm1567, %v6569, %v6571
      %v6573 = vrot.slane %v6266, 6
      %v6574 = vsel %vm1567, %v6571, %v6573
      %v6575 = vrot.slane %v6267, 6
      %v6576 = vsel %vm1567, %v6573, %v6575
      %v6577 = vrot.slane %v6268, 6
      %v6578 = vsel %vm1567, %v6575, %v6577
      %v6579 = vrot.slane %v6269, 6
      %v6580 = vsel %vm1567, %v6577, %v6579
      %v6581 = vrot.slane %v6270, 6
      %v6582 = vsel %vm1567, %v6579, %v6581
      %v6583 = vrot.slane %v6271, 6
      %v6584 = vsel %vm1567, %v6581, %v6583
      %v6585 = vrot.slane %v6272, 6
      %v6586 = vsel %vm1567, %v6583, %v6585
      %v6587 = vrot.slane %v6273, 6
      %v6588 = vsel %vm1567, %v6585, %v6587
      %v6589 = vrot.slane %v6274, 6
      %v6590 = vsel %vm1567, %v6587, %v6589
      %v6591 = vrot.slane %v6275, 6
      %v6592 = vsel %vm1567, %v6589, %v6591
      %v6593 = vrot.slane %v6276, 6
      %v6594 = vsel %vm1567, %v6591, %v6593
      %v6595 = vrot.slane %v6277, 6
      %v6596 = vsel %vm1567, %v6593, %v6595
      %v6597 = vrot.slane %v6278, 6
      %v6598 = vsel %vm1567, %v6595, %v6597
      %v6705 = vmax.f32 %v6169, %v6388
      %v6706 = vmax.f32 %v6170, %v6390
      %v6707 = vmax.f32 %v6171, %v6392
      %v6708 = vmax.f32 %v6172, %v6394
      %v6709 = vmax.f32 %v6173, %v6396
      %v6710 = vmax.f32 %v6174, %v6398
      %v6711 = vmax.f32 %v6175, %v6400
      %v6712 = vmax.f32 %v6176, %v6402
      %v6713 = vmax.f32 %v6177, %v6404
      %v6714 = vmax.f32 %v6178, %v6406
      %v6715 = vmax.f32 %v6179, %v6408
      %v6716 = vmax.f32 %v6180, %v6410
      %v6717 = vmax.f32 %v6181, %v6412
      %v6718 = vmax.f32 %v6182, %v6414
      %v6719 = vmax.f32 %v6183, %v6416
      %v6720 = vmax.f32 %v6184, %v6418
      %v6721 = vmax.f32 %v6185, %v6420
      %v6722 = vmax.f32 %v6186, %v6422
      %v6723 = vmax.f32 %v6187, %v6424
      %v6724 = vmax.f32 %v6188, %v6426
      %v6725 = vmax.f32 %v6189, %v6428
      %v6726 = vmax.f32 %v6190, %v6430
      %v6727 = vmax.f32 %v6191, %v6432
      %v6728 = vmax.f32 %v6192, %v6434
      %v6729 = vmax.f32 %v6193, %v6436
      %v6730 = vmax.f32 %v6194, %v6438
      %v6731 = vmax.f32 %v6195, %v6440
      %v6732 = vmax.f32 %v6196, %v6442
      %v6733 = vmax.f32 %v6197, %v6444
      %v6734 = vmax.f32 %v6198, %v6446
      %v6735 = vmax.f32 %v6199, %v6448
      %v6736 = vmax.f32 %v6200, %v6450
      %v6737 = vmax.f32 %v6201, %v6452
      %v6738 = vmax.f32 %v6202, %v6454
      %v6739 = vmax.f32 %v6203, %v6456
      %v6740 = vmax.f32 %v6204, %v6458
      %v6741 = vmax.f32 %v6205, %v6460
      %v6742 = vmax.f32 %v6206, %v6462
      %v6743 = vmax.f32 %v6207, %v6464
      %v6744 = vmax.f32 %v6208, %v6466
      %v6745 = vmax.f32 %v6209, %v6468
      %v6746 = vmax.f32 %v6210, %v6470
      %v6747 = vmax.f32 %v6211, %v6472
      %v6748 = vmax.f32 %v6212, %v6474
      %v6749 = vmax.f32 %v6213, %v6476
      %v6750 = vmax.f32 %v6214, %v6478
      %v6751 = vmax.f32 %v6215, %v6480
      %v6752 = vmax.f32 %v6216, %v6482
      %v6753 = vmax.f32 %v6217, %v6484
      %v6754 = vmax.f32 %v6218, %v6486
      %v6755 = vmax.f32 %v6219, %v6488
      %v6756 = vmax.f32 %v6220, %v6490
      %v6757 = vmax.f32 %v6221, %v6492
      %v6758 = vmax.f32 %v6222, %v6494
      %v6759 = vmax.f32 %v6223, %v6496
      %v6760 = vmax.f32 %v6224, %v6498
      %v6761 = vmax.f32 %v6225, %v6500
      %v6762 = vmax.f32 %v6226, %v6502
      %v6763 = vmax.f32 %v6227, %v6504
      %v6764 = vmax.f32 %v6228, %v6506
      %v6765 = vmax.f32 %v6229, %v6508
      %v6766 = vmax.f32 %v6230, %v6510
      %v6767 = vmax.f32 %v6231, %v6512
      %v6768 = vmax.f32 %v6232, %v6514
      %v6769 = vmax.f32 %v6233, %v6516
      %v6770 = vmax.f32 %v6234, %v6518
      %v6771 = vmax.f32 %v6235, %v6520
      %v6772 = vmax.f32 %v6236, %v6522
      %v6773 = vmax.f32 %v6237, %v6524
      %v6774 = vmax.f32 %v6238, %v6526
      %v6775 = vmax.f32 %v6239, %v6528
      %v6776 = vmax.f32 %v6240, %v6530
      %v6777 = vmax.f32 %v6241, %v6532
      %v6778 = vmax.f32 %v6242, %v6534
      %v6779 = vmax.f32 %v6243, %v6536
      %v6780 = vmax.f32 %v6244, %v6538
      %v6781 = vmax.f32 %v6245, %v6540
      %v6782 = vmax.f32 %v6246, %v6542
      %v6783 = vmax.f32 %v6247, %v6544
      %v6784 = vmax.f32 %v6248, %v6546
      %v6785 = vmax.f32 %v6249, %v6548
      %v6786 = vmax.f32 %v6250, %v6550
      %v6787 = vmax.f32 %v6251, %v6552
      %v6788 = vmax.f32 %v6252, %v6554
      %v6789 = vmax.f32 %v6253, %v6556
      %v6790 = vmax.f32 %v6254, %v6558
      %v6791 = vmax.f32 %v6255, %v6560
      %v6792 = vmax.f32 %v6256, %v6562
      %v6793 = vmax.f32 %v6257, %v6564
      %v6794 = vmax.f32 %v6258, %v6566
      %v6795 = vmax.f32 %v6259, %v6568
      %v6796 = vmax.f32 %v6260, %v6570
      %v6797 = vmax.f32 %v6261, %v6572
      %v6798 = vmax.f32 %v6262, %v6574
      %v6799 = vmax.f32 %v6263, %v6576
      %v6800 = vmax.f32 %v6264, %v6578
      %v6801 = vmax.f32 %v6265, %v6580
      %v6802 = vmax.f32 %v6266, %v6582
      %v6803 = vmax.f32 %v6267, %v6584
      %v6804 = vmax.f32 %v6268, %v6586
      %v6805 = vmax.f32 %v6269, %v6588
      %v6806 = vmax.f32 %v6270, %v6590
      %v6807 = vmax.f32 %v6271, %v6592
      %v6808 = vmax.f32 %v6272, %v6594
      %v6809 = vmax.f32 %v6273, %v6596
      %v6810 = vmax.f32 %v6274, %v6598
      %v6917 = vrot.slane %v6705, 1
      %v6918 = vrot.slane %v6706, 1
      %v6919 = vsel %vm433, %v6917, %v6918
      %v6920 = vrot.slane %v6707, 1
      %v6921 = vsel %vm433, %v6918, %v6920
      %v6922 = vrot.slane %v6708, 1
      %v6923 = vsel %vm433, %v6920, %v6922
      %v6924 = vrot.slane %v6709, 1
      %v6925 = vsel %vm433, %v6922, %v6924
      %v6926 = vrot.slane %v6710, 1
      %v6927 = vsel %vm433, %v6924, %v6926
      %v6928 = vrot.slane %v6711, 1
      %v6929 = vsel %vm433, %v6926, %v6928
      %v6930 = vrot.slane %v6712, 1
      %v6931 = vsel %vm433, %v6928, %v6930
      %v6932 = vrot.slane %v6713, 1
      %v6933 = vsel %vm433, %v6930, %v6932
      %v6934 = vrot.slane %v6714, 1
      %v6935 = vsel %vm433, %v6932, %v6934
      %v6936 = vrot.slane %v6715, 1
      %v6937 = vsel %vm433, %v6934, %v6936
      %v6938 = vrot.slane %v6716, 1
      %v6939 = vsel %vm433, %v6936, %v6938
      %v6940 = vrot.slane %v6717, 1
      %v6941 = vsel %vm433, %v6938, %v6940
      %v6942 = vrot.slane %v6718, 1
      %v6943 = vsel %vm433, %v6940, %v6942
      %v6944 = vrot.slane %v6719, 1
      %v6945 = vsel %vm433, %v6942, %v6944
      %v6946 = vrot.slane %v6720, 1
      %v6947 = vsel %vm433, %v6944, %v6946
      %v6948 = vrot.slane %v6721, 1
      %v6949 = vsel %vm433, %v6946, %v6948
      %v6950 = vrot.slane %v6722, 1
      %v6951 = vsel %vm433, %v6948, %v6950
      %v6952 = vrot.slane %v6723, 1
      %v6953 = vsel %vm433, %v6950, %v6952
      %v6954 = vrot.slane %v6724, 1
      %v6955 = vsel %vm433, %v6952, %v6954
      %v6956 = vrot.slane %v6725, 1
      %v6957 = vsel %vm433, %v6954, %v6956
      %v6958 = vrot.slane %v6726, 1
      %v6959 = vsel %vm433, %v6956, %v6958
      %v6960 = vrot.slane %v6727, 1
      %v6961 = vsel %vm433, %v6958, %v6960
      %v6962 = vrot.slane %v6728, 1
      %v6963 = vsel %vm433, %v6960, %v6962
      %v6964 = vrot.slane %v6729, 1
      %v6965 = vsel %vm433, %v6962, %v6964
      %v6966 = vrot.slane %v6730, 1
      %v6967 = vsel %vm433, %v6964, %v6966
      %v6968 = vrot.slane %v6731, 1
      %v6969 = vsel %vm433, %v6966, %v6968
      %v6970 = vrot.slane %v6732, 1
      %v6971 = vsel %vm433, %v6968, %v6970
      %v6972 = vrot.slane %v6733, 1
      %v6973 = vsel %vm433, %v6970, %v6972
      %v6974 = vrot.slane %v6734, 1
      %v6975 = vsel %vm433, %v6972, %v6974
      %v6976 = vrot.slane %v6735, 1
      %v6977 = vsel %vm433, %v6974, %v6976
      %v6978 = vrot.slane %v6736, 1
      %v6979 = vsel %vm433, %v6976, %v6978
      %v6980 = vrot.slane %v6737, 1
      %v6981 = vsel %vm433, %v6978, %v6980
      %v6982 = vrot.slane %v6738, 1
      %v6983 = vsel %vm433, %v6980, %v6982
      %v6984 = vrot.slane %v6739, 1
      %v6985 = vsel %vm433, %v6982, %v6984
      %v6986 = vrot.slane %v6740, 1
      %v6987 = vsel %vm433, %v6984, %v6986
      %v6988 = vrot.slane %v6741, 1
      %v6989 = vsel %vm433, %v6986, %v6988
      %v6990 = vrot.slane %v6742, 1
      %v6991 = vsel %vm433, %v6988, %v6990
      %v6992 = vrot.slane %v6743, 1
      %v6993 = vsel %vm433, %v6990, %v6992
      %v6994 = vrot.slane %v6744, 1
      %v6995 = vsel %vm433, %v6992, %v6994
      %v6996 = vrot.slane %v6745, 1
      %v6997 = vsel %vm433, %v6994, %v6996
      %v6998 = vrot.slane %v6746, 1
      %v6999 = vsel %vm433, %v6996, %v6998
      %v7000 = vrot.slane %v6747, 1
      %v7001 = vsel %vm433, %v6998, %v7000
      %v7002 = vrot.slane %v6748, 1
      %v7003 = vsel %vm433, %v7000, %v7002
      %v7004 = vrot.slane %v6749, 1
      %v7005 = vsel %vm433, %v7002, %v7004
      %v7006 = vrot.slane %v6750, 1
      %v7007 = vsel %vm433, %v7004, %v7006
      %v7008 = vrot.slane %v6751, 1
      %v7009 = vsel %vm433, %v7006, %v7008
      %v7010 = vrot.slane %v6752, 1
      %v7011 = vsel %vm433, %v7008, %v7010
      %v7012 = vrot.slane %v6753, 1
      %v7013 = vsel %vm433, %v7010, %v7012
      %v7014 = vrot.slane %v6754, 1
      %v7015 = vsel %vm433, %v7012, %v7014
      %v7016 = vrot.slane %v6755, 1
      %v7017 = vsel %vm433, %v7014, %v7016
      %v7018 = vrot.slane %v6756, 1
      %v7019 = vsel %vm433, %v7016, %v7018
      %v7020 = vrot.slane %v6757, 1
      %v7021 = vsel %vm433, %v7018, %v7020
      %v7022 = vrot.slane %v6758, 1
      %v7023 = vsel %vm433, %v7020, %v7022
      %v7024 = vrot.slane %v6759, 1
      %v7025 = vsel %vm433, %v7022, %v7024
      %v7026 = vrot.slane %v6760, 1
      %v7027 = vsel %vm433, %v7024, %v7026
      %v7028 = vrot.slane %v6761, 1
      %v7029 = vsel %vm433, %v7026, %v7028
      %v7030 = vrot.slane %v6762, 1
      %v7031 = vsel %vm433, %v7028, %v7030
      %v7032 = vrot.slane %v6763, 1
      %v7033 = vsel %vm433, %v7030, %v7032
      %v7034 = vrot.slane %v6764, 1
      %v7035 = vsel %vm433, %v7032, %v7034
      %v7036 = vrot.slane %v6765, 1
      %v7037 = vsel %vm433, %v7034, %v7036
      %v7038 = vrot.slane %v6766, 1
      %v7039 = vsel %vm433, %v7036, %v7038
      %v7040 = vrot.slane %v6767, 1
      %v7041 = vsel %vm433, %v7038, %v7040
      %v7042 = vrot.slane %v6768, 1
      %v7043 = vsel %vm433, %v7040, %v7042
      %v7044 = vrot.slane %v6769, 1
      %v7045 = vsel %vm433, %v7042, %v7044
      %v7046 = vrot.slane %v6770, 1
      %v7047 = vsel %vm433, %v7044, %v7046
      %v7048 = vrot.slane %v6771, 1
      %v7049 = vsel %vm433, %v7046, %v7048
      %v7050 = vrot.slane %v6772, 1
      %v7051 = vsel %vm433, %v7048, %v7050
      %v7052 = vrot.slane %v6773, 1
      %v7053 = vsel %vm433, %v7050, %v7052
      %v7054 = vrot.slane %v6774, 1
      %v7055 = vsel %vm433, %v7052, %v7054
      %v7056 = vrot.slane %v6775, 1
      %v7057 = vsel %vm433, %v7054, %v7056
      %v7058 = vrot.slane %v6776, 1
      %v7059 = vsel %vm433, %v7056, %v7058
      %v7060 = vrot.slane %v6777, 1
      %v7061 = vsel %vm433, %v7058, %v7060
      %v7062 = vrot.slane %v6778, 1
      %v7063 = vsel %vm433, %v7060, %v7062
      %v7064 = vrot.slane %v6779, 1
      %v7065 = vsel %vm433, %v7062, %v7064
      %v7066 = vrot.slane %v6780, 1
      %v7067 = vsel %vm433, %v7064, %v7066
      %v7068 = vrot.slane %v6781, 1
      %v7069 = vsel %vm433, %v7066, %v7068
      %v7070 = vrot.slane %v6782, 1
      %v7071 = vsel %vm433, %v7068, %v7070
      %v7072 = vrot.slane %v6783, 1
      %v7073 = vsel %vm433, %v7070, %v7072
      %v7074 = vrot.slane %v6784, 1
      %v7075 = vsel %vm433, %v7072, %v7074
      %v7076 = vrot.slane %v6785, 1
      %v7077 = vsel %vm433, %v7074, %v7076
      %v7078 = vrot.slane %v6786, 1
      %v7079 = vsel %vm433, %v7076, %v7078
      %v7080 = vrot.slane %v6787, 1
      %v7081 = vsel %vm433, %v7078, %v7080
      %v7082 = vrot.slane %v6788, 1
      %v7083 = vsel %vm433, %v7080, %v7082
      %v7084 = vrot.slane %v6789, 1
      %v7085 = vsel %vm433, %v7082, %v7084
      %v7086 = vrot.slane %v6790, 1
      %v7087 = vsel %vm433, %v7084, %v7086
      %v7088 = vrot.slane %v6791, 1
      %v7089 = vsel %vm433, %v7086, %v7088
      %v7090 = vrot.slane %v6792, 1
      %v7091 = vsel %vm433, %v7088, %v7090
      %v7092 = vrot.slane %v6793, 1
      %v7093 = vsel %vm433, %v7090, %v7092
      %v7094 = vrot.slane %v6794, 1
      %v7095 = vsel %vm433, %v7092, %v7094
      %v7096 = vrot.slane %v6795, 1
      %v7097 = vsel %vm433, %v7094, %v7096
      %v7098 = vrot.slane %v6796, 1
      %v7099 = vsel %vm433, %v7096, %v7098
      %v7100 = vrot.slane %v6797, 1
      %v7101 = vsel %vm433, %v7098, %v7100
      %v7102 = vrot.slane %v6798, 1
      %v7103 = vsel %vm433, %v7100, %v7102
      %v7104 = vrot.slane %v6799, 1
      %v7105 = vsel %vm433, %v7102, %v7104
      %v7106 = vrot.slane %v6800, 1
      %v7107 = vsel %vm433, %v7104, %v7106
      %v7108 = vrot.slane %v6801, 1
      %v7109 = vsel %vm433, %v7106, %v7108
      %v7110 = vrot.slane %v6802, 1
      %v7111 = vsel %vm433, %v7108, %v7110
      %v7112 = vrot.slane %v6803, 1
      %v7113 = vsel %vm433, %v7110, %v7112
      %v7114 = vrot.slane %v6804, 1
      %v7115 = vsel %vm433, %v7112, %v7114
      %v7116 = vrot.slane %v6805, 1
      %v7117 = vsel %vm433, %v7114, %v7116
      %v7118 = vrot.slane %v6806, 1
      %v7119 = vsel %vm433, %v7116, %v7118
      %v7120 = vrot.slane %v6807, 1
      %v7121 = vsel %vm433, %v7118, %v7120
      %v7122 = vrot.slane %v6808, 1
      %v7123 = vsel %vm433, %v7120, %v7122
      %v7124 = vrot.slane %v6809, 1
      %v7125 = vsel %vm433, %v7122, %v7124
      %v7126 = vrot.slane %v6810, 1
      %v7127 = vsel %vm433, %v7124, %v7126
      %v7233 = vmax.f32 %v6705, %v6919
      %v7234 = vmax.f32 %v6706, %v6921
      %v7235 = vmax.f32 %v6707, %v6923
      %v7236 = vmax.f32 %v6708, %v6925
      %v7237 = vmax.f32 %v6709, %v6927
      %v7238 = vmax.f32 %v6710, %v6929
      %v7239 = vmax.f32 %v6711, %v6931
      %v7240 = vmax.f32 %v6712, %v6933
      %v7241 = vmax.f32 %v6713, %v6935
      %v7242 = vmax.f32 %v6714, %v6937
      %v7243 = vmax.f32 %v6715, %v6939
      %v7244 = vmax.f32 %v6716, %v6941
      %v7245 = vmax.f32 %v6717, %v6943
      %v7246 = vmax.f32 %v6718, %v6945
      %v7247 = vmax.f32 %v6719, %v6947
      %v7248 = vmax.f32 %v6720, %v6949
      %v7249 = vmax.f32 %v6721, %v6951
      %v7250 = vmax.f32 %v6722, %v6953
      %v7251 = vmax.f32 %v6723, %v6955
      %v7252 = vmax.f32 %v6724, %v6957
      %v7253 = vmax.f32 %v6725, %v6959
      %v7254 = vmax.f32 %v6726, %v6961
      %v7255 = vmax.f32 %v6727, %v6963
      %v7256 = vmax.f32 %v6728, %v6965
      %v7257 = vmax.f32 %v6729, %v6967
      %v7258 = vmax.f32 %v6730, %v6969
      %v7259 = vmax.f32 %v6731, %v6971
      %v7260 = vmax.f32 %v6732, %v6973
      %v7261 = vmax.f32 %v6733, %v6975
      %v7262 = vmax.f32 %v6734, %v6977
      %v7263 = vmax.f32 %v6735, %v6979
      %v7264 = vmax.f32 %v6736, %v6981
      %v7265 = vmax.f32 %v6737, %v6983
      %v7266 = vmax.f32 %v6738, %v6985
      %v7267 = vmax.f32 %v6739, %v6987
      %v7268 = vmax.f32 %v6740, %v6989
      %v7269 = vmax.f32 %v6741, %v6991
      %v7270 = vmax.f32 %v6742, %v6993
      %v7271 = vmax.f32 %v6743, %v6995
      %v7272 = vmax.f32 %v6744, %v6997
      %v7273 = vmax.f32 %v6745, %v6999
      %v7274 = vmax.f32 %v6746, %v7001
      %v7275 = vmax.f32 %v6747, %v7003
      %v7276 = vmax.f32 %v6748, %v7005
      %v7277 = vmax.f32 %v6749, %v7007
      %v7278 = vmax.f32 %v6750, %v7009
      %v7279 = vmax.f32 %v6751, %v7011
      %v7280 = vmax.f32 %v6752, %v7013
      %v7281 = vmax.f32 %v6753, %v7015
      %v7282 = vmax.f32 %v6754, %v7017
      %v7283 = vmax.f32 %v6755, %v7019
      %v7284 = vmax.f32 %v6756, %v7021
      %v7285 = vmax.f32 %v6757, %v7023
      %v7286 = vmax.f32 %v6758, %v7025
      %v7287 = vmax.f32 %v6759, %v7027
      %v7288 = vmax.f32 %v6760, %v7029
      %v7289 = vmax.f32 %v6761, %v7031
      %v7290 = vmax.f32 %v6762, %v7033
      %v7291 = vmax.f32 %v6763, %v7035
      %v7292 = vmax.f32 %v6764, %v7037
      %v7293 = vmax.f32 %v6765, %v7039
      %v7294 = vmax.f32 %v6766, %v7041
      %v7295 = vmax.f32 %v6767, %v7043
      %v7296 = vmax.f32 %v6768, %v7045
      %v7297 = vmax.f32 %v6769, %v7047
      %v7298 = vmax.f32 %v6770, %v7049
      %v7299 = vmax.f32 %v6771, %v7051
      %v7300 = vmax.f32 %v6772, %v7053
      %v7301 = vmax.f32 %v6773, %v7055
      %v7302 = vmax.f32 %v6774, %v7057
      %v7303 = vmax.f32 %v6775, %v7059
      %v7304 = vmax.f32 %v6776, %v7061
      %v7305 = vmax.f32 %v6777, %v7063
      %v7306 = vmax.f32 %v6778, %v7065
      %v7307 = vmax.f32 %v6779, %v7067
      %v7308 = vmax.f32 %v6780, %v7069
      %v7309 = vmax.f32 %v6781, %v7071
      %v7310 = vmax.f32 %v6782, %v7073
      %v7311 = vmax.f32 %v6783, %v7075
      %v7312 = vmax.f32 %v6784, %v7077
      %v7313 = vmax.f32 %v6785, %v7079
      %v7314 = vmax.f32 %v6786, %v7081
      %v7315 = vmax.f32 %v6787, %v7083
      %v7316 = vmax.f32 %v6788, %v7085
      %v7317 = vmax.f32 %v6789, %v7087
      %v7318 = vmax.f32 %v6790, %v7089
      %v7319 = vmax.f32 %v6791, %v7091
      %v7320 = vmax.f32 %v6792, %v7093
      %v7321 = vmax.f32 %v6793, %v7095
      %v7322 = vmax.f32 %v6794, %v7097
      %v7323 = vmax.f32 %v6795, %v7099
      %v7324 = vmax.f32 %v6796, %v7101
      %v7325 = vmax.f32 %v6797, %v7103
      %v7326 = vmax.f32 %v6798, %v7105
      %v7327 = vmax.f32 %v6799, %v7107
      %v7328 = vmax.f32 %v6800, %v7109
      %v7329 = vmax.f32 %v6801, %v7111
      %v7330 = vmax.f32 %v6802, %v7113
      %v7331 = vmax.f32 %v6803, %v7115
      %v7332 = vmax.f32 %v6804, %v7117
      %v7333 = vmax.f32 %v6805, %v7119
      %v7334 = vmax.f32 %v6806, %v7121
      %v7335 = vmax.f32 %v6807, %v7123
      %v7336 = vmax.f32 %v6808, %v7125
      %v7337 = vmax.f32 %v6809, %v7127
      %v7338 = vld [vmem:[%s3] sm:$0xff]
      %v7339 = vld [vmem:[%s3 + $0x8] sm:$0xff]
      %v7340 = vld [vmem:[%s3 + $0x10] sm:$0xff]
      %v7341 = vld [vmem:[%s3 + $0x18] sm:$0xff]
      %v7342 = vld [vmem:[%s3 + $0x20] sm:$0xff]
      %v7343 = vld [vmem:[%s3 + $0x28] sm:$0xff]
      %v7344 = vld [vmem:[%s3 + $0x30] sm:$0xff]
      %v7345 = vld [vmem:[%s3 + $0x38] sm:$0xff]
      %v7346 = vld [vmem:[%s3 + $0x40] sm:$0xff]
      %v7347 = vld [vmem:[%s3 + $0x48] sm:$0xff]
      %v7348 = vld [vmem:[%s3 + $0x50] sm:$0xff]
      %v7349 = vld [vmem:[%s3 + $0x58] sm:$0xff]
      %v7350 = vld [vmem:[%s3 + $0x60] sm:$0xff]
      %v7351 = vld [vmem:[%s3 + $0x68] sm:$0xff]
      %v7352 = vld [vmem:[%s3 + $0x70] sm:$0xff]
      %v7353 = vld [vmem:[%s3 + $0x78] sm:$0xff]
      %v7354 = vld [vmem:[%s3 + $0x80] sm:$0xff]
      %v7355 = vld [vmem:[%s3 + $0x88] sm:$0xff]
      %v7356 = vld [vmem:[%s3 + $0x90] sm:$0xff]
      %v7357 = vld [vmem:[%s3 + $0x98] sm:$0xff]
      %v7358 = vld [vmem:[%s3 + $0xa0] sm:$0xff]
      %v7359 = vld [vmem:[%s3 + $0xa8] sm:$0xff]
      %v7360 = vld [vmem:[%s3 + $0xb0] sm:$0xff]
      %v7361 = vld [vmem:[%s3 + $0xb8] sm:$0xff]
      %v7362 = vld [vmem:[%s3 + $0xc0] sm:$0xff]
      %v7363 = vld [vmem:[%s3 + $0xc8] sm:$0xff]
      %v7364 = vld [vmem:[%s3 + $0xd0] sm:$0xff]
      %v7365 = vld [vmem:[%s3 + $0xd8] sm:$0xff]
      %v7366 = vld [vmem:[%s3 + $0xe0] sm:$0xff]
      %v7367 = vld [vmem:[%s3 + $0xe8] sm:$0xff]
      %v7368 = vld [vmem:[%s3 + $0xf0] sm:$0xff]
      %v7369 = vld [vmem:[%s3 + $0xf8] sm:$0xff]
      %v7370 = vld [vmem:[%s3 + $0x100] sm:$0xff]
      %v7371 = vld [vmem:[%s3 + $0x108] sm:$0xff]
      %v7372 = vld [vmem:[%s3 + $0x110] sm:$0xff]
      %v7373 = vld [vmem:[%s3 + $0x118] sm:$0xff]
      %v7374 = vld [vmem:[%s3 + $0x120] sm:$0xff]
      %v7375 = vld [vmem:[%s3 + $0x128] sm:$0xff]
      %v7376 = vld [vmem:[%s3 + $0x130] sm:$0xff]
      %v7377 = vld [vmem:[%s3 + $0x138] sm:$0xff]
      %v7378 = vld [vmem:[%s3 + $0x140] sm:$0xff]
      %v7379 = vld [vmem:[%s3 + $0x148] sm:$0xff]
      %v7380 = vld [vmem:[%s3 + $0x150] sm:$0xff]
      %v7381 = vld [vmem:[%s3 + $0x158] sm:$0xff]
      %v7382 = vld [vmem:[%s3 + $0x160] sm:$0xff]
      %v7383 = vld [vmem:[%s3 + $0x168] sm:$0xff]
      %v7384 = vld [vmem:[%s3 + $0x170] sm:$0xff]
      %v7385 = vld [vmem:[%s3 + $0x178] sm:$0xff]
      %v7386 = vld [vmem:[%s3 + $0x180] sm:$0xff]
      %v7387 = vld [vmem:[%s3 + $0x188] sm:$0xff]
      %v7388 = vld [vmem:[%s3 + $0x190] sm:$0xff]
      %v7389 = vld [vmem:[%s3 + $0x198] sm:$0xff]
      %v7390 = vld [vmem:[%s3 + $0x1a0] sm:$0xff]
      %v7391 = vld [vmem:[%s3 + $0x1a8] sm:$0xff]
      %v7392 = vld [vmem:[%s3 + $0x1b0] sm:$0xff]
      %v7393 = vld [vmem:[%s3 + $0x1b8] sm:$0xff]
      %v7394 = vld [vmem:[%s3 + $0x1c0] sm:$0xff]
      %v7395 = vld [vmem:[%s3 + $0x1c8] sm:$0xff]
      %v7396 = vld [vmem:[%s3 + $0x1d0] sm:$0xff]
      %v7397 = vld [vmem:[%s3 + $0x1d8] sm:$0xff]
      %v7398 = vld [vmem:[%s3 + $0x1e0] sm:$0xff]
      %v7399 = vld [vmem:[%s3 + $0x1e8] sm:$0xff]
      %v7400 = vld [vmem:[%s3 + $0x1f0] sm:$0xff]
      %v7401 = vld [vmem:[%s3 + $0x1f8] sm:$0xff]
      %v7402 = vld [vmem:[%s3 + $0x200] sm:$0xff]
      %v7403 = vld [vmem:[%s3 + $0x208] sm:$0xff]
      %v7404 = vld [vmem:[%s3 + $0x210] sm:$0xff]
      %v7405 = vld [vmem:[%s3 + $0x218] sm:$0xff]
      %v7406 = vld [vmem:[%s3 + $0x220] sm:$0xff]
      %v7407 = vld [vmem:[%s3 + $0x228] sm:$0xff]
      %v7408 = vld [vmem:[%s3 + $0x230] sm:$0xff]
      %v7409 = vld [vmem:[%s3 + $0x238] sm:$0xff]
      %v7410 = vld [vmem:[%s3 + $0x240] sm:$0xff]
      %v7411 = vld [vmem:[%s3 + $0x248] sm:$0xff]
      %v7412 = vld [vmem:[%s3 + $0x250] sm:$0xff]
      %v7413 = vld [vmem:[%s3 + $0x258] sm:$0xff]
      %v7414 = vld [vmem:[%s3 + $0x260] sm:$0xff]
      %v7415 = vld [vmem:[%s3 + $0x268] sm:$0xff]
      %v7416 = vld [vmem:[%s3 + $0x270] sm:$0xff]
      %v7417 = vld [vmem:[%s3 + $0x278] sm:$0xff]
      %v7418 = vld [vmem:[%s3 + $0x280] sm:$0xff]
      %v7419 = vld [vmem:[%s3 + $0x288] sm:$0xff]
      %v7420 = vld [vmem:[%s3 + $0x290] sm:$0xff]
      %v7421 = vld [vmem:[%s3 + $0x298] sm:$0xff]
      %v7422 = vld [vmem:[%s3 + $0x2a0] sm:$0xff]
      %v7423 = vld [vmem:[%s3 + $0x2a8] sm:$0xff]
      %v7424 = vld [vmem:[%s3 + $0x2b0] sm:$0xff]
      %v7425 = vld [vmem:[%s3 + $0x2b8] sm:$0xff]
      %v7426 = vld [vmem:[%s3 + $0x2c0] sm:$0xff]
      %v7427 = vld [vmem:[%s3 + $0x2c8] sm:$0xff]
      %v7428 = vld [vmem:[%s3 + $0x2d0] sm:$0xff]
      %v7429 = vld [vmem:[%s3 + $0x2d8] sm:$0xff]
      %v7430 = vld [vmem:[%s3 + $0x2e0] sm:$0xff]
      %v7431 = vld [vmem:[%s3 + $0x2e8] sm:$0xff]
      %v7432 = vld [vmem:[%s3 + $0x2f0] sm:$0xff]
      %v7433 = vld [vmem:[%s3 + $0x2f8] sm:$0xff]
      %v7434 = vld [vmem:[%s3 + $0x300] sm:$0xff]
      %v7435 = vld [vmem:[%s3 + $0x308] sm:$0xff]
      %v7436 = vld [vmem:[%s3 + $0x310] sm:$0xff]
      %v7437 = vld [vmem:[%s3 + $0x318] sm:$0xff]
      %v7438 = vld [vmem:[%s3 + $0x320] sm:$0xff]
      %v7439 = vld [vmem:[%s3 + $0x328] sm:$0xff]
      %v7440 = vld [vmem:[%s3 + $0x330] sm:$0xff]
      %v7441 = vld [vmem:[%s3 + $0x338] sm:$0xff]
      %v7442 = vld [vmem:[%s3 + $0x340] sm:$0xff]
      %v7443 = vld [vmem:[%s3 + $0x348] sm:$0xff]
      %v7444 = vld [vmem:[%s3 + $0x350] sm:$0xff]
      %v7445 = vld [vmem:[%s3 + $0x358] sm:$0xff]
      %v7446 = vld [vmem:[%s3 + $0x360] sm:$0xff]
      %v7447 = vld [vmem:[%s3 + $0x368] sm:$0xff]
      %v7448 = vld [vmem:[%s3 + $0x370] sm:$0xff]
      %v7449 = vld [vmem:[%s3 + $0x378] sm:$0xff]
      %v7450 = vld [vmem:[%s3 + $0x380] sm:$0xff]
      %v7451 = vld [vmem:[%s3 + $0x388] sm:$0xff]
      %v7452 = vld [vmem:[%s3 + $0x390] sm:$0xff]
      %v7453 = vld [vmem:[%s3 + $0x398] sm:$0xff]
      %v7454 = vld [vmem:[%s3 + $0x3a0] sm:$0xff]
      %v7455 = vld [vmem:[%s3 + $0x3a8] sm:$0xff]
      %v7456 = vld [vmem:[%s3 + $0x3b0] sm:$0xff]
      %v7457 = vld [vmem:[%s3 + $0x3b8] sm:$0xff]
      %v7458 = vld [vmem:[%s3 + $0x3c0] sm:$0xff]
      %v7459 = vld [vmem:[%s3 + $0x3c8] sm:$0xff]
      %v7460 = vld [vmem:[%s3 + $0x3d0] sm:$0xff]
      %v7461 = vld [vmem:[%s3 + $0x3d8] sm:$0xff]
      %v7462 = vld [vmem:[%s3 + $0x3e0] sm:$0xff]
      %v7463 = vld [vmem:[%s3 + $0x3e8] sm:$0xff]
      %v7464 = vld [vmem:[%s3 + $0x3f0] sm:$0xff]
      %v7465 = vld [vmem:[%s3 + $0x3f8] sm:$0xff]
      %v7466 = vld [vmem:[%s3 + $0x400] sm:$0xff]
      %v7467 = vld [vmem:[%s3 + $0x408] sm:$0xff]
      %v7468 = vld [vmem:[%s3 + $0x410] sm:$0xff]
      %v7469 = vld [vmem:[%s3 + $0x418] sm:$0xff]
      %v7470 = vld [vmem:[%s3 + $0x420] sm:$0xff]
      %v7471 = vld [vmem:[%s3 + $0x428] sm:$0xff]
      %v7472 = vld [vmem:[%s3 + $0x430] sm:$0xff]
      %v7473 = vld [vmem:[%s3 + $0x438] sm:$0xff]
      %v7474 = vld [vmem:[%s3 + $0x440] sm:$0xff]
      %v7475 = vld [vmem:[%s3 + $0x448] sm:$0xff]
      %v7476 = vld [vmem:[%s3 + $0x450] sm:$0xff]
      %v7477 = vld [vmem:[%s3 + $0x458] sm:$0xff]
      %v7478 = vld [vmem:[%s3 + $0x460] sm:$0xff]
      %v7479 = vld [vmem:[%s3 + $0x468] sm:$0xff]
      %v7480 = vld [vmem:[%s3 + $0x470] sm:$0xff]
      %v7481 = vld [vmem:[%s3 + $0x478] sm:$0xff]
      %v7482 = vld [vmem:[%s3 + $0x480] sm:$0xff]
      %v7483 = vld [vmem:[%s3 + $0x488] sm:$0xff]
      %v7484 = vld [vmem:[%s3 + $0x490] sm:$0xff]
      %v7485 = vld [vmem:[%s3 + $0x498] sm:$0xff]
      %v7486 = vld [vmem:[%s3 + $0x4a0] sm:$0xff]
      %v7487 = vld [vmem:[%s3 + $0x4a8] sm:$0xff]
      %v7488 = vld [vmem:[%s3 + $0x4b0] sm:$0xff]
      %v7489 = vld [vmem:[%s3 + $0x4b8] sm:$0xff]
      %v7490 = vld [vmem:[%s3 + $0x4c0] sm:$0xff]
      %v7491 = vld [vmem:[%s3 + $0x4c8] sm:$0xff]
      %v7492 = vld [vmem:[%s3 + $0x4d0] sm:$0xff]
      %v7493 = vld [vmem:[%s3 + $0x4d8] sm:$0xff]
      %v7494 = vld [vmem:[%s3 + $0x4e0] sm:$0xff]
      %v7495 = vld [vmem:[%s3 + $0x4e8] sm:$0xff]
      %v7496 = vld [vmem:[%s3 + $0x4f0] sm:$0xff]
      %v7497 = vld [vmem:[%s3 + $0x4f8] sm:$0xff]
      %v7498 = vld [vmem:[%s3 + $0x500] sm:$0xff]
      %v7499 = vld [vmem:[%s3 + $0x508] sm:$0xff]
      %v7500 = vld [vmem:[%s3 + $0x510] sm:$0xff]
      %v7501 = vld [vmem:[%s3 + $0x518] sm:$0xff]
      %v7502 = vld [vmem:[%s3 + $0x520] sm:$0xff]
      %v7503 = vld [vmem:[%s3 + $0x528] sm:$0xff]
      %v7504 = vld [vmem:[%s3 + $0x530] sm:$0xff]
      %v7505 = vld [vmem:[%s3 + $0x538] sm:$0xff]
      %v7506 = vld [vmem:[%s3 + $0x540] sm:$0xf]
      %v7507 = vld [vmem:[%s3 + $0x548] sm:$0xf]
      %v7508 = vld [vmem:[%s3 + $0x550] sm:$0xf]
      %v7509 = vld [vmem:[%s3 + $0x558] sm:$0xf]
      %v7510 = vld [vmem:[%s3 + $0x560] sm:$0xf]
      %v7511 = vld [vmem:[%s3 + $0x568] sm:$0xf]
      %v7512 = vld [vmem:[%s3 + $0x570] sm:$0xf]
      %vm7513 = vcmask 588800
      %v7515 = vsel %vm7513, %v7344, 0
      %v7518 = vsel %vm7513, %v7351, 0
      %v7521 = vsel %vm7513, %v7358, 0
      %v7524 = vsel %vm7513, %v7365, 0
      %v7527 = vsel %vm7513, %v7372, 0
      %v7530 = vsel %vm7513, %v7379, 0
      %v7533 = vsel %vm7513, %v7386, 0
      %v7536 = vsel %vm7513, %v7393, 0
      %v7539 = vsel %vm7513, %v7400, 0
      %v7542 = vsel %vm7513, %v7407, 0
      %v7545 = vsel %vm7513, %v7414, 0
      %v7548 = vsel %vm7513, %v7421, 0
      %v7551 = vsel %vm7513, %v7428, 0
      %v7554 = vsel %vm7513, %v7435, 0
      %v7557 = vsel %vm7513, %v7442, 0
      %v7560 = vsel %vm7513, %v7449, 0
      %v7563 = vsel %vm7513, %v7456, 0
      %v7566 = vsel %vm7513, %v7463, 0
      %v7569 = vsel %vm7513, %v7470, 0
      %v7572 = vsel %vm7513, %v7477, 0
      %v7575 = vsel %vm7513, %v7484, 0
      %v7578 = vsel %vm7513, %v7491, 0
      %v7581 = vsel %vm7513, %v7498, 0
      %v7584 = vsel %vm7513, %v7505, 0
      %v7587 = vsel %vm7513, %v7512, 0
      %7589 = vmatprep.subr.mxu0 0.0
      %7590 = vmatpush1.msra.mxu0 %v7233
      %7591 = vmatprep.subr.mxu0 0.0
      %7592 = vmatpush1.msra.mxu0 %v7234
      %7593 = vmatprep.subr.mxu0 0.0
      %7594 = vmatpush1.msra.mxu0 %v7235
      %7595 = vmatprep.subr.mxu0 0.0
      %7596 = vmatpush1.msra.mxu0 %v7236
      %7597 = vmatprep.subr.mxu0 0.0
      %7598 = vmatpush1.msra.mxu0 %v7237
      %7599 = vmatprep.subr.mxu0 0.0
      %7600 = vmatpush1.msra.mxu0 %v7238
      %7601 = vmatprep.subr.mxu0 0.0
      %7602 = vmatpush1.msra.mxu0 %v7239
      %7603 = vmatprep.subr.mxu0 0.0
      %7604 = vmatpush1.msra.mxu0 %v7240
      %7605 = vmatprep.subr.mxu0 0.0
      %7606 = vmatpush1.msra.mxu0 %v7241
      %7607 = vmatprep.subr.mxu0 0.0
      %7608 = vmatpush1.msra.mxu0 %v7242
      %7609 = vmatprep.subr.mxu0 0.0
      %7610 = vmatpush1.msra.mxu0 %v7243
      %7611 = vmatprep.subr.mxu0 0.0
      %7612 = vmatpush1.msra.mxu0 %v7244
      %7613 = vmatprep.subr.mxu0 0.0
      %7614 = vmatpush1.msra.mxu0 %v7245
      %7615 = vmatprep.subr.mxu0 0.0
      %7616 = vmatpush1.msra.mxu0 %v7246
      %7617 = vmatprep.subr.mxu0 0.0
      %7618 = vmatpush1.msra.mxu0 %v7247
      %7619 = vmatprep.subr.mxu0 0.0
      %7620 = vmatpush1.msra.mxu0 %v7248
      %7621 = vmatprep.subr.mxu0 0.0
      %7622 = vmatpush1.msra.mxu0 %v7249
      %7623 = vmatprep.subr.mxu0 0.0
      %7624 = vmatpush1.msra.mxu0 %v7250
      %7625 = vmatprep.subr.mxu0 0.0
      %7626 = vmatpush1.msra.mxu0 %v7251
      %7627 = vmatprep.subr.mxu0 0.0
      %7628 = vmatpush1.msra.mxu0 %v7252
      %7629 = vmatprep.subr.mxu0 0.0
      %7630 = vmatpush1.msra.mxu0 %v7253
      %7631 = vmatprep.subr.mxu0 0.0
      %7632 = vmatpush1.msra.mxu0 %v7254
      %7633 = vmatprep.subr.mxu0 0.0
      %7634 = vmatpush1.msra.mxu0 %v7255
      %7635 = vmatprep.subr.mxu0 0.0
      %7636 = vmatpush1.msra.mxu0 %v7256
      %7637 = vmatprep.subr.mxu0 0.0
      %7638 = vmatpush1.msra.mxu0 %v7257
      %7639 = vmatprep.subr.mxu0 0.0
      %7640 = vmatpush1.msra.mxu0 %v7258
      %7641 = vmatprep.subr.mxu0 0.0
      %7642 = vmatpush1.msra.mxu0 %v7259
      %7643 = vmatprep.subr.mxu0 0.0
      %7644 = vmatpush1.msra.mxu0 %v7260
      %7645 = vmatprep.subr.mxu0 0.0
      %7646 = vmatpush1.msra.mxu0 %v7261
      %7647 = vmatprep.subr.mxu0 0.0
      %7648 = vmatpush1.msra.mxu0 %v7262
      %7649 = vmatprep.subr.mxu0 0.0
      %7650 = vmatpush1.msra.mxu0 %v7263
      %7651 = vmatprep.subr.mxu0 0.0
      %7652 = vmatpush1.msra.mxu0 %v7264
      %7653 = vmatprep.mubr.f32.mxu0 %v7339
      %7654 = vmatmul.mubr.f32.gmra.mrb[0].mxu0 %v7338
      %v7655 = vpop.f32.mrb[0].mxu0
      %v7656 = vadd.f32 0.0, %v7655
      %v7657 = vpop.f32.mrb[0].mxu0
      %7658 = vmatprep.mubr.f32.mxu0 %v7346
      %7659 = vmatmul.mubr.f32.gmra.mrb[0].mxu0 %v7345
      %v7660 = vpop.f32.mrb[0].mxu0
      %v7661 = vadd.f32 0.0, %v7660
      %v7662 = vpop.f32.mrb[0].mxu0
      %7663 = vmatprep.mubr.f32.mxu0 %v7353
      %7664 = vmatmul.mubr.f32.gmra.mrb[0].mxu0 %v7352
      %v7665 = vpop.f32.mrb[0].mxu0
      %v7666 = vadd.f32 0.0, %v7665
      %v7667 = vpop.f32.mrb[0].mxu0
      %7668 = vmatprep.mubr.f32.mxu0 %v7360
      %7669 = vmatmul.mubr.f32.gmra.mrb[0].mxu0 %v7359
      %v7670 = vpop.f32.mrb[0].mxu0
      %v7671 = vadd.f32 0.0, %v7670
      %v7672 = vpop.f32.mrb[0].mxu0
      %7673 = vmatprep.mubr.f32.mxu0 %v7367
      %7674 = vmatmul.mubr.f32.gmra.mrb[0].mxu0 %v7366
      %v7675 = vpop.f32.mrb[0].mxu0
      %v7676 = vadd.f32 0.0, %v7675
      %v7677 = vpop.f32.mrb[0].mxu0
      %7678 = vmatprep.mubr.f32.mxu0 %v7374
      %7679 = vmatmul.mubr.f32.gmra.mrb[0].mxu0 %v7373
      %v7680 = vpop.f32.mrb[0].mxu0
      %v7681 = vadd.f32 0.0, %v7680
      %v7682 = vpop.f32.mrb[0].mxu0
      %7683 = vmatprep.mubr.f32.mxu0 %v7381
      %7684 = vmatmul.mubr.f32.gmra.mrb[0].mxu0 %v7380
      %v7685 = vpop.f32.mrb[0].mxu0
      %v7686 = vadd.f32 0.0, %v7685
      %v7687 = vpop.f32.mrb[0].mxu0
      %7688 = vmatprep.mubr.f32.mxu0 %v7388
      %7689 = vmatmul.mubr.f32.gmra.mrb[0].mxu0 %v7387
      %v7690 = vpop.f32.mrb[0].mxu0
      %v7691 = vadd.f32 0.0, %v7690
      %v7692 = vpop.f32.mrb[0].mxu0
      %7693 = vmatprep.mubr.f32.mxu0 %v7395
      %7694 = vmatmul.mubr.f32.gmra.mrb[0].mxu0 %v7394
      %v7695 = vpop.f32.mrb[0].mxu0
      %v7696 = vadd.f32 0.0, %v7695
      %v7697 = vpop.f32.mrb[0].mxu0
      %7698 = vmatprep.mubr.f32.mxu0 %v7402
      %7699 = vmatmul.mubr.f32.gmra.mrb[0].mxu0 %v7401
      %v7700 = vpop.f32.mrb[0].mxu0
      %v7701 = vadd.f32 0.0, %v7700
      %v7702 = vpop.f32.mrb[0].mxu0
      %7703 = vmatprep.mubr.f32.mxu0 %v7409
      %7704 = vmatmul.mubr.f32.gmra.mrb[0].mxu0 %v7408
      %v7705 = vpop.f32.mrb[0].mxu0
      %v7706 = vadd.f32 0.0, %v7705
      %v7707 = vpop.f32.mrb[0].mxu0
      %7708 = vmatprep.mubr.f32.mxu0 %v7416
      %7709 = vmatmul.mubr.f32.gmra.mrb[0].mxu0 %v7415
      %v7710 = vpop.f32.mrb[0].mxu0
      %v7711 = vadd.f32 0.0, %v7710
      %v7712 = vpop.f32.mrb[0].mxu0
      %7713 = vmatprep.mubr.f32.mxu0 %v7423
      %7714 = vmatmul.mubr.f32.gmra.mrb[0].mxu0 %v7422
      %v7715 = vpop.f32.mrb[0].mxu0
      %v7716 = vadd.f32 0.0, %v7715
      %v7717 = vpop.f32.mrb[0].mxu0
      %7718 = vmatprep.mubr.f32.mxu0 %v7430
      %7719 = vmatmul.mubr.f32.gmra.mrb[0].mxu0 %v7429
      %v7720 = vpop.f32.mrb[0].mxu0
      %v7721 = vadd.f32 0.0, %v7720
      %v7722 = vpop.f32.mrb[0].mxu0
      %7723 = vmatprep.mubr.f32.mxu0 %v7437
      %7724 = vmatmul.mubr.f32.gmra.mrb[0].mxu0 %v7436
      %v7725 = vpop.f32.mrb[0].mxu0
      %v7726 = vadd.f32 0.0, %v7725
      %v7727 = vpop.f32.mrb[0].mxu0
      %7728 = vmatprep.mubr.f32.mxu0 %v7444
      %7729 = vmatmul.mubr.f32.gmra.mrb[0].mxu0 %v7443
      %v7730 = vpop.f32.mrb[0].mxu0
      %v7731 = vadd.f32 0.0, %v7730
      %v7732 = vpop.f32.mrb[0].mxu0
      %7733 = vmatprep.mubr.f32.mxu0 %v7451
      %7734 = vmatmul.mubr.f32.gmra.mrb[0].mxu0 %v7450
      %v7735 = vpop.f32.mrb[0].mxu0
      %v7736 = vadd.f32 0.0, %v7735
      %v7737 = vpop.f32.mrb[0].mxu0
      %7738 = vmatprep.mubr.f32.mxu0 %v7458
      %7739 = vmatmul.mubr.f32.gmra.mrb[0].mxu0 %v7457
      %v7740 = vpop.f32.mrb[0].mxu0
      %v7741 = vadd.f32 0.0, %v7740
      %v7742 = vpop.f32.mrb[0].mxu0
      %7743 = vmatprep.mubr.f32.mxu0 %v7465
      %7744 = vmatmul.mubr.f32.gmra.mrb[0].mxu0 %v7464
      %v7745 = vpop.f32.mrb[0].mxu0
      %v7746 = vadd.f32 0.0, %v7745
      %v7747 = vpop.f32.mrb[0].mxu0
      %7748 = vmatprep.mubr.f32.mxu0 %v7472
      %7749 = vmatmul.mubr.f32.gmra.mrb[0].mxu0 %v7471
      %v7750 = vpop.f32.mrb[0].mxu0
      %v7751 = vadd.f32 0.0, %v7750
      %v7752 = vpop.f32.mrb[0].mxu0
      %7753 = vmatprep.mubr.f32.mxu0 %v7479
      %7754 = vmatmul.mubr.f32.gmra.mrb[0].mxu0 %v7478
      %v7755 = vpop.f32.mrb[0].mxu0
      %v7756 = vadd.f32 0.0, %v7755
      %v7757 = vpop.f32.mrb[0].mxu0
      %7758 = vmatprep.mubr.f32.mxu0 %v7486
      %7759 = vmatmul.mubr.f32.gmra.mrb[0].mxu0 %v7485
      %v7760 = vpop.f32.mrb[0].mxu0
      %v7761 = vadd.f32 0.0, %v7760
      %v7762 = vpop.f32.mrb[0].mxu0
      %7763 = vmatprep.mubr.f32.mxu0 %v7493
      %7764 = vmatmul.mubr.f32.gmra.mrb[0].mxu0 %v7492
      %v7765 = vpop.f32.mrb[0].mxu0
      %v7766 = vadd.f32 0.0, %v7765
      %v7767 = vpop.f32.mrb[0].mxu0
      %7768 = vmatprep.mubr.f32.mxu0 %v7500
      %7769 = vmatmul.mubr.f32.gmra.mrb[0].mxu0 %v7499
      %v7770 = vpop.f32.mrb[0].mxu0
      %v7771 = vadd.f32 0.0, %v7770
      %v7772 = vpop.f32.mrb[0].mxu0
      %7773 = vmatprep.mubr.f32.mxu0 %v7507
      %7774 = vmatmul.mubr.f32.gmra.mrb[0].mxu0 %v7506
      %v7775 = vpop.f32.mrb[0].mxu0
      %v7776 = vadd.f32 0.0, %v7775
      %v7777 = vpop.f32.mrb[0].mxu0
      %7778 = vdwg.mxu0
      %7779 = vmatprep.subr.mxu0 0.0
      %7780 = vmatpush1.msra.mxu0 %v7265
      %7781 = vmatprep.subr.mxu0 0.0
      %7782 = vmatpush1.msra.mxu0 %v7266
      %7783 = vmatprep.subr.mxu0 0.0
      %7784 = vmatpush1.msra.mxu0 %v7267
      %7785 = vmatprep.subr.mxu0 0.0
      %7786 = vmatpush1.msra.mxu0 %v7268
      %7787 = vmatprep.subr.mxu0 0.0
      %7788 = vmatpush1.msra.mxu0 %v7269
      %7789 = vmatprep.subr.mxu0 0.0
      %7790 = vmatpush1.msra.mxu0 %v7270
      %7791 = vmatprep.subr.mxu0 0.0
      %7792 = vmatpush1.msra.mxu0 %v7271
      %7793 = vmatprep.subr.mxu0 0.0
      %7794 = vmatpush1.msra.mxu0 %v7272
      %7795 = vmatprep.subr.mxu0 0.0
      %7796 = vmatpush1.msra.mxu0 %v7273
      %7797 = vmatprep.subr.mxu0 0.0
      %7798 = vmatpush1.msra.mxu0 %v7274
      %7799 = vmatprep.subr.mxu0 0.0
      %7800 = vmatpush1.msra.mxu0 %v7275
      %7801 = vmatprep.subr.mxu0 0.0
      %7802 = vmatpush1.msra.mxu0 %v7276
      %7803 = vmatprep.subr.mxu0 0.0
      %7804 = vmatpush1.msra.mxu0 %v7277
      %7805 = vmatprep.subr.mxu0 0.0
      %7806 = vmatpush1.msra.mxu0 %v7278
      %7807 = vmatprep.subr.mxu0 0.0
      %7808 = vmatpush1.msra.mxu0 %v7279
      %7809 = vmatprep.subr.mxu0 0.0
      %7810 = vmatpush1.msra.mxu0 %v7280
      %7811 = vmatprep.subr.mxu0 0.0
      %7812 = vmatpush1.msra.mxu0 %v7281
      %7813 = vmatprep.subr.mxu0 0.0
      %7814 = vmatpush1.msra.mxu0 %v7282
      %7815 = vmatprep.subr.mxu0 0.0
      %7816 = vmatpush1.msra.mxu0 %v7283
      %7817 = vmatprep.subr.mxu0 0.0
      %7818 = vmatpush1.msra.mxu0 %v7284
      %7819 = vmatprep.subr.mxu0 0.0
      %7820 = vmatpush1.msra.mxu0 %v7285
      %7821 = vmatprep.subr.mxu0 0.0
      %7822 = vmatpush1.msra.mxu0 %v7286
      %7823 = vmatprep.subr.mxu0 0.0
      %7824 = vmatpush1.msra.mxu0 %v7287
      %7825 = vmatprep.subr.mxu0 0.0
      %7826 = vmatpush1.msra.mxu0 %v7288
      %7827 = vmatprep.subr.mxu0 0.0
      %7828 = vmatpush1.msra.mxu0 %v7289
      %7829 = vmatprep.subr.mxu0 0.0
      %7830 = vmatpush1.msra.mxu0 %v7290
      %7831 = vmatprep.subr.mxu0 0.0
      %7832 = vmatpush1.msra.mxu0 %v7291
      %7833 = vmatprep.subr.mxu0 0.0
      %7834 = vmatpush1.msra.mxu0 %v7292
      %7835 = vmatprep.subr.mxu0 0.0
      %7836 = vmatpush1.msra.mxu0 %v7293
      %7837 = vmatprep.subr.mxu0 0.0
      %7838 = vmatpush1.msra.mxu0 %v7294
      %7839 = vmatprep.subr.mxu0 0.0
      %7840 = vmatpush1.msra.mxu0 %v7295
      %7841 = vmatprep.subr.mxu0 0.0
      %7842 = vmatpush1.msra.mxu0 %v7296
      %7843 = vmatprep.mubr.f32.mxu0 %v7341
      %7844 = vmatmul.mubr.f32.gmra.mrb[0].mxu0 %v7340
      %v7845 = vpop.f32.mrb[0].mxu0
      %v7846 = vadd.f32 %v7656, %v7845
      %v7847 = vpop.f32.mrb[0].mxu0
      %7848 = vmatprep.mubr.f32.mxu0 %v7348
      %7849 = vmatmul.mubr.f32.gmra.mrb[0].mxu0 %v7347
      %v7850 = vpop.f32.mrb[0].mxu0
      %v7851 = vadd.f32 %v7661, %v7850
      %v7852 = vpop.f32.mrb[0].mxu0
      %7853 = vmatprep.mubr.f32.mxu0 %v7355
      %7854 = vmatmul.mubr.f32.gmra.mrb[0].mxu0 %v7354
      %v7855 = vpop.f32.mrb[0].mxu0
      %v7856 = vadd.f32 %v7666, %v7855
      %v7857 = vpop.f32.mrb[0].mxu0
      %7858 = vmatprep.mubr.f32.mxu0 %v7362
      %7859 = vmatmul.mubr.f32.gmra.mrb[0].mxu0 %v7361
      %v7860 = vpop.f32.mrb[0].mxu0
      %v7861 = vadd.f32 %v7671, %v7860
      %v7862 = vpop.f32.mrb[0].mxu0
      %7863 = vmatprep.mubr.f32.mxu0 %v7369
      %7864 = vmatmul.mubr.f32.gmra.mrb[0].mxu0 %v7368
      %v7865 = vpop.f32.mrb[0].mxu0
      %v7866 = vadd.f32 %v7676, %v7865
      %v7867 = vpop.f32.mrb[0].mxu0
      %7868 = vmatprep.mubr.f32.mxu0 %v7376
      %7869 = vmatmul.mubr.f32.gmra.mrb[0].mxu0 %v7375
      %v7870 = vpop.f32.mrb[0].mxu0
      %v7871 = vadd.f32 %v7681, %v7870
      %v7872 = vpop.f32.mrb[0].mxu0
      %7873 = vmatprep.mubr.f32.mxu0 %v7383
      %7874 = vmatmul.mubr.f32.gmra.mrb[0].mxu0 %v7382
      %v7875 = vpop.f32.mrb[0].mxu0
      %v7876 = vadd.f32 %v7686, %v7875
      %v7877 = vpop.f32.mrb[0].mxu0
      %7878 = vmatprep.mubr.f32.mxu0 %v7390
      %7879 = vmatmul.mubr.f32.gmra.mrb[0].mxu0 %v7389
      %v7880 = vpop.f32.mrb[0].mxu0
      %v7881 = vadd.f32 %v7691, %v7880
      %v7882 = vpop.f32.mrb[0].mxu0
      %7883 = vmatprep.mubr.f32.mxu0 %v7397
      %7884 = vmatmul.mubr.f32.gmra.mrb[0].mxu0 %v7396
      %v7885 = vpop.f32.mrb[0].mxu0
      %v7886 = vadd.f32 %v7696, %v7885
      %v7887 = vpop.f32.mrb[0].mxu0
      %7888 = vmatprep.mubr.f32.mxu0 %v7404
      %7889 = vmatmul.mubr.f32.gmra.mrb[0].mxu0 %v7403
      %v7890 = vpop.f32.mrb[0].mxu0
      %v7891 = vadd.f32 %v7701, %v7890
      %v7892 = vpop.f32.mrb[0].mxu0
      %7893 = vmatprep.mubr.f32.mxu0 %v7411
      %7894 = vmatmul.mubr.f32.gmra.mrb[0].mxu0 %v7410
      %v7895 = vpop.f32.mrb[0].mxu0
      %v7896 = vadd.f32 %v7706, %v7895
      %v7897 = vpop.f32.mrb[0].mxu0
      %7898 = vmatprep.mubr.f32.mxu0 %v7418
      %7899 = vmatmul.mubr.f32.gmra.mrb[0].mxu0 %v7417
      %v7900 = vpop.f32.mrb[0].mxu0
      %v7901 = vadd.f32 %v7711, %v7900
      %v7902 = vpop.f32.mrb[0].mxu0
      %7903 = vmatprep.mubr.f32.mxu0 %v7425
      %7904 = vmatmul.mubr.f32.gmra.mrb[0].mxu0 %v7424
      %v7905 = vpop.f32.mrb[0].mxu0
      %v7906 = vadd.f32 %v7716, %v7905
      %v7907 = vpop.f32.mrb[0].mxu0
      %7908 = vmatprep.mubr.f32.mxu0 %v7432
      %7909 = vmatmul.mubr.f32.gmra.mrb[0].mxu0 %v7431
      %v7910 = vpop.f32.mrb[0].mxu0
      %v7911 = vadd.f32 %v7721, %v7910
      %v7912 = vpop.f32.mrb[0].mxu0
      %7913 = vmatprep.mubr.f32.mxu0 %v7439
      %7914 = vmatmul.mubr.f32.gmra.mrb[0].mxu0 %v7438
      %v7915 = vpop.f32.mrb[0].mxu0
      %v7916 = vadd.f32 %v7726, %v7915
      %v7917 = vpop.f32.mrb[0].mxu0
      %7918 = vmatprep.mubr.f32.mxu0 %v7446
      %7919 = vmatmul.mubr.f32.gmra.mrb[0].mxu0 %v7445
      %v7920 = vpop.f32.mrb[0].mxu0
      %v7921 = vadd.f32 %v7731, %v7920
      %v7922 = vpop.f32.mrb[0].mxu0
      %7923 = vmatprep.mubr.f32.mxu0 %v7453
      %7924 = vmatmul.mubr.f32.gmra.mrb[0].mxu0 %v7452
      %v7925 = vpop.f32.mrb[0].mxu0
      %v7926 = vadd.f32 %v7736, %v7925
      %v7927 = vpop.f32.mrb[0].mxu0
      %7928 = vmatprep.mubr.f32.mxu0 %v7460
      %7929 = vmatmul.mubr.f32.gmra.mrb[0].mxu0 %v7459
      %v7930 = vpop.f32.mrb[0].mxu0
      %v7931 = vadd.f32 %v7741, %v7930
      %v7932 = vpop.f32.mrb[0].mxu0
      %7933 = vmatprep.mubr.f32.mxu0 %v7467
      %7934 = vmatmul.mubr.f32.gmra.mrb[0].mxu0 %v7466
      %v7935 = vpop.f32.mrb[0].mxu0
      %v7936 = vadd.f32 %v7746, %v7935
      %v7937 = vpop.f32.mrb[0].mxu0
      %7938 = vmatprep.mubr.f32.mxu0 %v7474
      %7939 = vmatmul.mubr.f32.gmra.mrb[0].mxu0 %v7473
      %v7940 = vpop.f32.mrb[0].mxu0
      %v7941 = vadd.f32 %v7751, %v7940
      %v7942 = vpop.f32.mrb[0].mxu0
      %7943 = vmatprep.mubr.f32.mxu0 %v7481
      %7944 = vmatmul.mubr.f32.gmra.mrb[0].mxu0 %v7480
      %v7945 = vpop.f32.mrb[0].mxu0
      %v7946 = vadd.f32 %v7756, %v7945
      %v7947 = vpop.f32.mrb[0].mxu0
      %7948 = vmatprep.mubr.f32.mxu0 %v7488
      %7949 = vmatmul.mubr.f32.gmra.mrb[0].mxu0 %v7487
      %v7950 = vpop.f32.mrb[0].mxu0
      %v7951 = vadd.f32 %v7761, %v7950
      %v7952 = vpop.f32.mrb[0].mxu0
      %7953 = vmatprep.mubr.f32.mxu0 %v7495
      %7954 = vmatmul.mubr.f32.gmra.mrb[0].mxu0 %v7494
      %v7955 = vpop.f32.mrb[0].mxu0
      %v7956 = vadd.f32 %v7766, %v7955
      %v7957 = vpop.f32.mrb[0].mxu0
      %7958 = vmatprep.mubr.f32.mxu0 %v7502
      %7959 = vmatmul.mubr.f32.gmra.mrb[0].mxu0 %v7501
      %v7960 = vpop.f32.mrb[0].mxu0
      %v7961 = vadd.f32 %v7771, %v7960
      %v7962 = vpop.f32.mrb[0].mxu0
      %7963 = vmatprep.mubr.f32.mxu0 %v7509
      %7964 = vmatmul.mubr.f32.gmra.mrb[0].mxu0 %v7508
      %v7965 = vpop.f32.mrb[0].mxu0
      %v7966 = vadd.f32 %v7776, %v7965
      %v7967 = vpop.f32.mrb[0].mxu0
      %7968 = vdwg.mxu0
      %7969 = vmatprep.subr.mxu0 0.0
      %7970 = vmatpush1.msra.mxu0 %v7297
      %7971 = vmatprep.subr.mxu0 0.0
      %7972 = vmatpush1.msra.mxu0 %v7298
      %7973 = vmatprep.subr.mxu0 0.0
      %7974 = vmatpush1.msra.mxu0 %v7299
      %7975 = vmatprep.subr.mxu0 0.0
      %7976 = vmatpush1.msra.mxu0 %v7300
      %7977 = vmatprep.subr.mxu0 0.0
      %7978 = vmatpush1.msra.mxu0 %v7301
      %7979 = vmatprep.subr.mxu0 0.0
      %7980 = vmatpush1.msra.mxu0 %v7302
      %7981 = vmatprep.subr.mxu0 0.0
      %7982 = vmatpush1.msra.mxu0 %v7303
      %7983 = vmatprep.subr.mxu0 0.0
      %7984 = vmatpush1.msra.mxu0 %v7304
      %7985 = vmatprep.subr.mxu0 0.0
      %7986 = vmatpush1.msra.mxu0 %v7305
      %7987 = vmatprep.subr.mxu0 0.0
      %7988 = vmatpush1.msra.mxu0 %v7306
      %7989 = vmatprep.subr.mxu0 0.0
      %7990 = vmatpush1.msra.mxu0 %v7307
      %7991 = vmatprep.subr.mxu0 0.0
      %7992 = vmatpush1.msra.mxu0 %v7308
      %7993 = vmatprep.subr.mxu0 0.0
      %7994 = vmatpush1.msra.mxu0 %v7309
      %7995 = vmatprep.subr.mxu0 0.0
      %7996 = vmatpush1.msra.mxu0 %v7310
      %7997 = vmatprep.subr.mxu0 0.0
      %7998 = vmatpush1.msra.mxu0 %v7311
      %7999 = vmatprep.subr.mxu0 0.0
      %8000 = vmatpush1.msra.mxu0 %v7312
      %8001 = vmatprep.subr.mxu0 0.0
      %8002 = vmatpush1.msra.mxu0 %v7313
      %8003 = vmatprep.subr.mxu0 0.0
      %8004 = vmatpush1.msra.mxu0 %v7314
      %8005 = vmatprep.subr.mxu0 0.0
      %8006 = vmatpush1.msra.mxu0 %v7315
      %8007 = vmatprep.subr.mxu0 0.0
      %8008 = vmatpush1.msra.mxu0 %v7316
      %8009 = vmatprep.subr.mxu0 0.0
      %8010 = vmatpush1.msra.mxu0 %v7317
      %8011 = vmatprep.subr.mxu0 0.0
      %8012 = vmatpush1.msra.mxu0 %v7318
      %8013 = vmatprep.subr.mxu0 0.0
      %8014 = vmatpush1.msra.mxu0 %v7319
      %8015 = vmatprep.subr.mxu0 0.0
      %8016 = vmatpush1.msra.mxu0 %v7320
      %8017 = vmatprep.subr.mxu0 0.0
      %8018 = vmatpush1.msra.mxu0 %v7321
      %8019 = vmatprep.subr.mxu0 0.0
      %8020 = vmatpush1.msra.mxu0 %v7322
      %8021 = vmatprep.subr.mxu0 0.0
      %8022 = vmatpush1.msra.mxu0 %v7323
      %8023 = vmatprep.subr.mxu0 0.0
      %8024 = vmatpush1.msra.mxu0 %v7324
      %8025 = vmatprep.subr.mxu0 0.0
      %8026 = vmatpush1.msra.mxu0 %v7325
      %8027 = vmatprep.subr.mxu0 0.0
      %8028 = vmatpush1.msra.mxu0 %v7326
      %8029 = vmatprep.subr.mxu0 0.0
      %8030 = vmatpush1.msra.mxu0 %v7327
      %8031 = vmatprep.subr.mxu0 0.0
      %8032 = vmatpush1.msra.mxu0 %v7328
      %8033 = vmatprep.mubr.f32.mxu0 %v7343
      %8034 = vmatmul.mubr.f32.gmra.mrb[0].mxu0 %v7342
      %v8035 = vpop.f32.mrb[0].mxu0
      %v8036 = vadd.f32 %v7846, %v8035
      %v8037 = vpop.f32.mrb[0].mxu0
      %8038 = vmatprep.mubr.f32.mxu0 %v7350
      %8039 = vmatmul.mubr.f32.gmra.mrb[0].mxu0 %v7349
      %v8040 = vpop.f32.mrb[0].mxu0
      %v8041 = vadd.f32 %v7851, %v8040
      %v8042 = vpop.f32.mrb[0].mxu0
      %8043 = vmatprep.mubr.f32.mxu0 %v7357
      %8044 = vmatmul.mubr.f32.gmra.mrb[0].mxu0 %v7356
      %v8045 = vpop.f32.mrb[0].mxu0
      %v8046 = vadd.f32 %v7856, %v8045
      %v8047 = vpop.f32.mrb[0].mxu0
      %8048 = vmatprep.mubr.f32.mxu0 %v7364
      %8049 = vmatmul.mubr.f32.gmra.mrb[0].mxu0 %v7363
      %v8050 = vpop.f32.mrb[0].mxu0
      %v8051 = vadd.f32 %v7861, %v8050
      %v8052 = vpop.f32.mrb[0].mxu0
      %8053 = vmatprep.mubr.f32.mxu0 %v7371
      %8054 = vmatmul.mubr.f32.gmra.mrb[0].mxu0 %v7370
      %v8055 = vpop.f32.mrb[0].mxu0
      %v8056 = vadd.f32 %v7866, %v8055
      %v8057 = vpop.f32.mrb[0].mxu0
      %8058 = vmatprep.mubr.f32.mxu0 %v7378
      %8059 = vmatmul.mubr.f32.gmra.mrb[0].mxu0 %v7377
      %v8060 = vpop.f32.mrb[0].mxu0
      %v8061 = vadd.f32 %v7871, %v8060
      %v8062 = vpop.f32.mrb[0].mxu0
      %8063 = vmatprep.mubr.f32.mxu0 %v7385
      %8064 = vmatmul.mubr.f32.gmra.mrb[0].mxu0 %v7384
      %v8065 = vpop.f32.mrb[0].mxu0
      %v8066 = vadd.f32 %v7876, %v8065
      %v8067 = vpop.f32.mrb[0].mxu0
      %8068 = vmatprep.mubr.f32.mxu0 %v7392
      %8069 = vmatmul.mubr.f32.gmra.mrb[0].mxu0 %v7391
      %v8070 = vpop.f32.mrb[0].mxu0
      %v8071 = vadd.f32 %v7881, %v8070
      %v8072 = vpop.f32.mrb[0].mxu0
      %8073 = vmatprep.mubr.f32.mxu0 %v7399
      %8074 = vmatmul.mubr.f32.gmra.mrb[0].mxu0 %v7398
      %v8075 = vpop.f32.mrb[0].mxu0
      %v8076 = vadd.f32 %v7886, %v8075
      %v8077 = vpop.f32.mrb[0].mxu0
      %8078 = vmatprep.mubr.f32.mxu0 %v7406
      %8079 = vmatmul.mubr.f32.gmra.mrb[0].mxu0 %v7405
      %v8080 = vpop.f32.mrb[0].mxu0
      %v8081 = vadd.f32 %v7891, %v8080
      %v8082 = vpop.f32.mrb[0].mxu0
      %8083 = vmatprep.mubr.f32.mxu0 %v7413
      %8084 = vmatmul.mubr.f32.gmra.mrb[0].mxu0 %v7412
      %v8085 = vpop.f32.mrb[0].mxu0
      %v8086 = vadd.f32 %v7896, %v8085
      %v8087 = vpop.f32.mrb[0].mxu0
      %8088 = vmatprep.mubr.f32.mxu0 %v7420
      %8089 = vmatmul.mubr.f32.gmra.mrb[0].mxu0 %v7419
      %v8090 = vpop.f32.mrb[0].mxu0
      %v8091 = vadd.f32 %v7901, %v8090
      %v8092 = vpop.f32.mrb[0].mxu0
      %8093 = vmatprep.mubr.f32.mxu0 %v7427
      %8094 = vmatmul.mubr.f32.gmra.mrb[0].mxu0 %v7426
      %v8095 = vpop.f32.mrb[0].mxu0
      %v8096 = vadd.f32 %v7906, %v8095
      %v8097 = vpop.f32.mrb[0].mxu0
      %8098 = vmatprep.mubr.f32.mxu0 %v7434
      %8099 = vmatmul.mubr.f32.gmra.mrb[0].mxu0 %v7433
      %v8100 = vpop.f32.mrb[0].mxu0
      %v8101 = vadd.f32 %v7911, %v8100
      %v8102 = vpop.f32.mrb[0].mxu0
      %8103 = vmatprep.mubr.f32.mxu0 %v7441
      %8104 = vmatmul.mubr.f32.gmra.mrb[0].mxu0 %v7440
      %v8105 = vpop.f32.mrb[0].mxu0
      %v8106 = vadd.f32 %v7916, %v8105
      %v8107 = vpop.f32.mrb[0].mxu0
      %8108 = vmatprep.mubr.f32.mxu0 %v7448
      %8109 = vmatmul.mubr.f32.gmra.mrb[0].mxu0 %v7447
      %v8110 = vpop.f32.mrb[0].mxu0
      %v8111 = vadd.f32 %v7921, %v8110
      %v8112 = vpop.f32.mrb[0].mxu0
      %8113 = vmatprep.mubr.f32.mxu0 %v7455
      %8114 = vmatmul.mubr.f32.gmra.mrb[0].mxu0 %v7454
      %v8115 = vpop.f32.mrb[0].mxu0
      %v8116 = vadd.f32 %v7926, %v8115
      %v8117 = vpop.f32.mrb[0].mxu0
      %8118 = vmatprep.mubr.f32.mxu0 %v7462
      %8119 = vmatmul.mubr.f32.gmra.mrb[0].mxu0 %v7461
      %v8120 = vpop.f32.mrb[0].mxu0
      %v8121 = vadd.f32 %v7931, %v8120
      %v8122 = vpop.f32.mrb[0].mxu0
      %8123 = vmatprep.mubr.f32.mxu0 %v7469
      %8124 = vmatmul.mubr.f32.gmra.mrb[0].mxu0 %v7468
      %v8125 = vpop.f32.mrb[0].mxu0
      %v8126 = vadd.f32 %v7936, %v8125
      %v8127 = vpop.f32.mrb[0].mxu0
      %8128 = vmatprep.mubr.f32.mxu0 %v7476
      %8129 = vmatmul.mubr.f32.gmra.mrb[0].mxu0 %v7475
      %v8130 = vpop.f32.mrb[0].mxu0
      %v8131 = vadd.f32 %v7941, %v8130
      %v8132 = vpop.f32.mrb[0].mxu0
      %8133 = vmatprep.mubr.f32.mxu0 %v7483
      %8134 = vmatmul.mubr.f32.gmra.mrb[0].mxu0 %v7482
      %v8135 = vpop.f32.mrb[0].mxu0
      %v8136 = vadd.f32 %v7946, %v8135
      %v8137 = vpop.f32.mrb[0].mxu0
      %8138 = vmatprep.mubr.f32.mxu0 %v7490
      %8139 = vmatmul.mubr.f32.gmra.mrb[0].mxu0 %v7489
      %v8140 = vpop.f32.mrb[0].mxu0
      %v8141 = vadd.f32 %v7951, %v8140
      %v8142 = vpop.f32.mrb[0].mxu0
      %8143 = vmatprep.mubr.f32.mxu0 %v7497
      %8144 = vmatmul.mubr.f32.gmra.mrb[0].mxu0 %v7496
      %v8145 = vpop.f32.mrb[0].mxu0
      %v8146 = vadd.f32 %v7956, %v8145
      %v8147 = vpop.f32.mrb[0].mxu0
      %8148 = vmatprep.mubr.f32.mxu0 %v7504
      %8149 = vmatmul.mubr.f32.gmra.mrb[0].mxu0 %v7503
      %v8150 = vpop.f32.mrb[0].mxu0
      %v8151 = vadd.f32 %v7961, %v8150
      %v8152 = vpop.f32.mrb[0].mxu0
      %8153 = vmatprep.mubr.f32.mxu0 %v7511
      %8154 = vmatmul.mubr.f32.gmra.mrb[0].mxu0 %v7510
      %v8155 = vpop.f32.mrb[0].mxu0
      %v8156 = vadd.f32 %v7966, %v8155
      %v8157 = vpop.f32.mrb[0].mxu0
      %8158 = vdwg.mxu0
      %8159 = vmatprep.subr.mxu0 0.0
      %8160 = vmatpush1.msra.mxu0 %v7329
      %8161 = vmatprep.subr.mxu0 0.0
      %8162 = vmatpush1.msra.mxu0 %v7330
      %8163 = vmatprep.subr.mxu0 0.0
      %8164 = vmatpush1.msra.mxu0 %v7331
      %8165 = vmatprep.subr.mxu0 0.0
      %8166 = vmatpush1.msra.mxu0 %v7332
      %8167 = vmatprep.subr.mxu0 0.0
      %8168 = vmatpush1.msra.mxu0 %v7333
      %8169 = vmatprep.subr.mxu0 0.0
      %8170 = vmatpush1.msra.mxu0 %v7334
      %8171 = vmatprep.subr.mxu0 0.0
      %8172 = vmatpush1.msra.mxu0 %v7335
      %8173 = vmatprep.subr.mxu0 0.0
      %8174 = vmatpush1.msra.mxu0 %v7336
      %8175 = vmatprep.subr.mxu0 0.0
      %8176 = vmatpush1.msra.mxu0 %v7337
      %8177 = vmatprep.subr.mxu0 0.0
      %8178 = vmatpush1.msra.mxu0 0.0
      %8179 = vmatprep.subr.mxu0 0.0
      %8180 = vmatpush1.msra.mxu0 0.0
      %8181 = vmatprep.subr.mxu0 0.0
      %8182 = vmatpush1.msra.mxu0 0.0
      %8183 = vmatprep.subr.mxu0 0.0
      %8184 = vmatpush1.msra.mxu0 0.0
      %8185 = vmatprep.subr.mxu0 0.0
      %8186 = vmatpush1.msra.mxu0 0.0
      %8187 = vmatprep.subr.mxu0 0.0
      %8188 = vmatpush1.msra.mxu0 0.0
      %8189 = vmatprep.subr.mxu0 0.0
      %8190 = vmatpush1.msra.mxu0 0.0
      %8191 = vmatprep.subr.mxu0 0.0
      %8192 = vmatpush1.msra.mxu0 0.0
      %8193 = vmatprep.subr.mxu0 0.0
      %8194 = vmatpush1.msra.mxu0 0.0
      %8195 = vmatprep.subr.mxu0 0.0
      %8196 = vmatpush1.msra.mxu0 0.0
      %8197 = vmatprep.subr.mxu0 0.0
      %8198 = vmatpush1.msra.mxu0 0.0
      %8199 = vmatprep.subr.mxu0 0.0
      %8200 = vmatpush1.msra.mxu0 0.0
      %8201 = vmatprep.subr.mxu0 0.0
      %8202 = vmatpush1.msra.mxu0 0.0
      %8203 = vmatprep.subr.mxu0 0.0
      %8204 = vmatpush1.msra.mxu0 0.0
      %8205 = vmatprep.subr.mxu0 0.0
      %8206 = vmatpush1.msra.mxu0 0.0
      %8207 = vmatprep.subr.mxu0 0.0
      %8208 = vmatpush1.msra.mxu0 0.0
      %8209 = vmatprep.subr.mxu0 0.0
      %8210 = vmatpush1.msra.mxu0 0.0
      %8211 = vmatprep.subr.mxu0 0.0
      %8212 = vmatpush1.msra.mxu0 0.0
      %8213 = vmatprep.subr.mxu0 0.0
      %8214 = vmatpush1.msra.mxu0 0.0
      %8215 = vmatprep.subr.mxu0 0.0
      %8216 = vmatpush1.msra.mxu0 0.0
      %8217 = vmatprep.subr.mxu0 0.0
      %8218 = vmatpush1.msra.mxu0 0.0
      %8219 = vmatprep.subr.mxu0 0.0
      %8220 = vmatpush1.msra.mxu0 0.0
      %8221 = vmatprep.subr.mxu0 0.0
      %8222 = vmatpush1.msra.mxu0 0.0
      %8223 = vmatprep.mubr.f32.mxu0 0.0
      %8224 = vmatmul.mubr.f32.gmra.mrb[0].mxu0 %v7515
      %v8225 = vpop.f32.mrb[0].mxu0
      %v8226 = vadd.f32 %v8036, %v8225
      %v8227 = vpop.f32.mrb[0].mxu0
      %8228 = vmatprep.mubr.f32.mxu0 0.0
      %8229 = vmatmul.mubr.f32.gmra.mrb[0].mxu0 %v7518
      %v8230 = vpop.f32.mrb[0].mxu0
      %v8231 = vadd.f32 %v8041, %v8230
      %v8232 = vpop.f32.mrb[0].mxu0
      %8233 = vmatprep.mubr.f32.mxu0 0.0
      %8234 = vmatmul.mubr.f32.gmra.mrb[0].mxu0 %v7521
      %v8235 = vpop.f32.mrb[0].mxu0
      %v8236 = vadd.f32 %v8046, %v8235
      %v8237 = vpop.f32.mrb[0].mxu0
      %8238 = vmatprep.mubr.f32.mxu0 0.0
      %8239 = vmatmul.mubr.f32.gmra.mrb[0].mxu0 %v7524
      %v8240 = vpop.f32.mrb[0].mxu0
      %v8241 = vadd.f32 %v8051, %v8240
      %v8242 = vpop.f32.mrb[0].mxu0
      %8243 = vmatprep.mubr.f32.mxu0 0.0
      %8244 = vmatmul.mubr.f32.gmra.mrb[0].mxu0 %v7527
      %v8245 = vpop.f32.mrb[0].mxu0
      %v8246 = vadd.f32 %v8056, %v8245
      %v8247 = vpop.f32.mrb[0].mxu0
      %8248 = vmatprep.mubr.f32.mxu0 0.0
      %8249 = vmatmul.mubr.f32.gmra.mrb[0].mxu0 %v7530
      %v8250 = vpop.f32.mrb[0].mxu0
      %v8251 = vadd.f32 %v8061, %v8250
      %v8252 = vpop.f32.mrb[0].mxu0
      %8253 = vmatprep.mubr.f32.mxu0 0.0
      %8254 = vmatmul.mubr.f32.gmra.mrb[0].mxu0 %v7533
      %v8255 = vpop.f32.mrb[0].mxu0
      %v8256 = vadd.f32 %v8066, %v8255
      %v8257 = vpop.f32.mrb[0].mxu0
      %8258 = vmatprep.mubr.f32.mxu0 0.0
      %8259 = vmatmul.mubr.f32.gmra.mrb[0].mxu0 %v7536
      %v8260 = vpop.f32.mrb[0].mxu0
      %v8261 = vadd.f32 %v8071, %v8260
      %v8262 = vpop.f32.mrb[0].mxu0
      %8263 = vmatprep.mubr.f32.mxu0 0.0
      %8264 = vmatmul.mubr.f32.gmra.mrb[0].mxu0 %v7539
      %v8265 = vpop.f32.mrb[0].mxu0
      %v8266 = vadd.f32 %v8076, %v8265
      %v8267 = vpop.f32.mrb[0].mxu0
      %8268 = vmatprep.mubr.f32.mxu0 0.0
      %8269 = vmatmul.mubr.f32.gmra.mrb[0].mxu0 %v7542
      %v8270 = vpop.f32.mrb[0].mxu0
      %v8271 = vadd.f32 %v8081, %v8270
      %v8272 = vpop.f32.mrb[0].mxu0
      %8273 = vmatprep.mubr.f32.mxu0 0.0
      %8274 = vmatmul.mubr.f32.gmra.mrb[0].mxu0 %v7545
      %v8275 = vpop.f32.mrb[0].mxu0
      %v8276 = vadd.f32 %v8086, %v8275
      %v8277 = vpop.f32.mrb[0].mxu0
      %8278 = vmatprep.mubr.f32.mxu0 0.0
      %8279 = vmatmul.mubr.f32.gmra.mrb[0].mxu0 %v7548
      %v8280 = vpop.f32.mrb[0].mxu0
      %v8281 = vadd.f32 %v8091, %v8280
      %v8282 = vpop.f32.mrb[0].mxu0
      %8283 = vmatprep.mubr.f32.mxu0 0.0
      %8284 = vmatmul.mubr.f32.gmra.mrb[0].mxu0 %v7551
      %v8285 = vpop.f32.mrb[0].mxu0
      %v8286 = vadd.f32 %v8096, %v8285
      %v8287 = vpop.f32.mrb[0].mxu0
      %8288 = vmatprep.mubr.f32.mxu0 0.0
      %8289 = vmatmul.mubr.f32.gmra.mrb[0].mxu0 %v7554
      %v8290 = vpop.f32.mrb[0].mxu0
      %v8291 = vadd.f32 %v8101, %v8290
      %v8292 = vpop.f32.mrb[0].mxu0
      %8293 = vmatprep.mubr.f32.mxu0 0.0
      %8294 = vmatmul.mubr.f32.gmra.mrb[0].mxu0 %v7557
      %v8295 = vpop.f32.mrb[0].mxu0
      %v8296 = vadd.f32 %v8106, %v8295
      %v8297 = vpop.f32.mrb[0].mxu0
      %8298 = vmatprep.mubr.f32.mxu0 0.0
      %8299 = vmatmul.mubr.f32.gmra.mrb[0].mxu0 %v7560
      %v8300 = vpop.f32.mrb[0].mxu0
      %v8301 = vadd.f32 %v8111, %v8300
      %v8302 = vpop.f32.mrb[0].mxu0
      %8303 = vmatprep.mubr.f32.mxu0 0.0
      %8304 = vmatmul.mubr.f32.gmra.mrb[0].mxu0 %v7563
      %v8305 = vpop.f32.mrb[0].mxu0
      %v8306 = vadd.f32 %v8116, %v8305
      %v8307 = vpop.f32.mrb[0].mxu0
      %8308 = vmatprep.mubr.f32.mxu0 0.0
      %8309 = vmatmul.mubr.f32.gmra.mrb[0].mxu0 %v7566
      %v8310 = vpop.f32.mrb[0].mxu0
      %v8311 = vadd.f32 %v8121, %v8310
      %v8312 = vpop.f32.mrb[0].mxu0
      %8313 = vmatprep.mubr.f32.mxu0 0.0
      %8314 = vmatmul.mubr.f32.gmra.mrb[0].mxu0 %v7569
      %v8315 = vpop.f32.mrb[0].mxu0
      %v8316 = vadd.f32 %v8126, %v8315
      %v8317 = vpop.f32.mrb[0].mxu0
      %8318 = vmatprep.mubr.f32.mxu0 0.0
      %8319 = vmatmul.mubr.f32.gmra.mrb[0].mxu0 %v7572
      %v8320 = vpop.f32.mrb[0].mxu0
      %v8321 = vadd.f32 %v8131, %v8320
      %v8322 = vpop.f32.mrb[0].mxu0
      %8323 = vmatprep.mubr.f32.mxu0 0.0
      %8324 = vmatmul.mubr.f32.gmra.mrb[0].mxu0 %v7575
      %v8325 = vpop.f32.mrb[0].mxu0
      %v8326 = vadd.f32 %v8136, %v8325
      %v8327 = vpop.f32.mrb[0].mxu0
      %8328 = vmatprep.mubr.f32.mxu0 0.0
      %8329 = vmatmul.mubr.f32.gmra.mrb[0].mxu0 %v7578
      %v8330 = vpop.f32.mrb[0].mxu0
      %v8331 = vadd.f32 %v8141, %v8330
      %v8332 = vpop.f32.mrb[0].mxu0
      %8333 = vmatprep.mubr.f32.mxu0 0.0
      %8334 = vmatmul.mubr.f32.gmra.mrb[0].mxu0 %v7581
      %v8335 = vpop.f32.mrb[0].mxu0
      %v8336 = vadd.f32 %v8146, %v8335
      %v8337 = vpop.f32.mrb[0].mxu0
      %8338 = vmatprep.mubr.f32.mxu0 0.0
      %8339 = vmatmul.mubr.f32.gmra.mrb[0].mxu0 %v7584
      %v8340 = vpop.f32.mrb[0].mxu0
      %v8341 = vadd.f32 %v8151, %v8340
      %v8342 = vpop.f32.mrb[0].mxu0
      %8343 = vmatprep.mubr.f32.mxu0 0.0
      %8344 = vmatmul.mubr.f32.gmra.mrb[0].mxu0 %v7587
      %v8345 = vpop.f32.mrb[0].mxu0
      %v8346 = vadd.f32 %v8156, %v8345
      %v8347 = vpop.f32.mrb[0].mxu0
      %8348 = vdwg.mxu0
      %vm8349 = vcmask 261120
      %8350 = vst.msk [vmem:[%s197] sm:$0xff] %vm8349, %v8226
      %8351 = vst.msk [vmem:[%s197 + $0x8] sm:$0xff] %vm8349, %v8231
      %8352 = vst.msk [vmem:[%s197 + $0x10] sm:$0xff] %vm8349, %v8236
      %8353 = vst.msk [vmem:[%s197 + $0x18] sm:$0xff] %vm8349, %v8241
      %8354 = vst.msk [vmem:[%s197 + $0x20] sm:$0xff] %vm8349, %v8246
      %8355 = vst.msk [vmem:[%s197 + $0x28] sm:$0xff] %vm8349, %v8251
      %8356 = vst.msk [vmem:[%s197 + $0x30] sm:$0xff] %vm8349, %v8256
      %8357 = vst.msk [vmem:[%s197 + $0x38] sm:$0xff] %vm8349, %v8261
      %8358 = vst.msk [vmem:[%s197 + $0x40] sm:$0xff] %vm8349, %v8266
      %8359 = vst.msk [vmem:[%s197 + $0x48] sm:$0xff] %vm8349, %v8271
      %8360 = vst.msk [vmem:[%s197 + $0x50] sm:$0xff] %vm8349, %v8276
      %8361 = vst.msk [vmem:[%s197 + $0x58] sm:$0xff] %vm8349, %v8281
      %8362 = vst.msk [vmem:[%s197 + $0x60] sm:$0xff] %vm8349, %v8286
      %8363 = vst.msk [vmem:[%s197 + $0x68] sm:$0xff] %vm8349, %v8291
      %8364 = vst.msk [vmem:[%s197 + $0x70] sm:$0xff] %vm8349, %v8296
      %8365 = vst.msk [vmem:[%s197 + $0x78] sm:$0xff] %vm8349, %v8301
      %8366 = vst.msk [vmem:[%s197 + $0x80] sm:$0xff] %vm8349, %v8306
      %8367 = vst.msk [vmem:[%s197 + $0x88] sm:$0xff] %vm8349, %v8311
      %8368 = vst.msk [vmem:[%s197 + $0x90] sm:$0xff] %vm8349, %v8316
      %8369 = vst.msk [vmem:[%s197 + $0x98] sm:$0xff] %vm8349, %v8321
      %8370 = vst.msk [vmem:[%s197 + $0xa0] sm:$0xff] %vm8349, %v8326
      %8371 = vst.msk [vmem:[%s197 + $0xa8] sm:$0xff] %vm8349, %v8331
      %8372 = vst.msk [vmem:[%s197 + $0xb0] sm:$0xff] %vm8349, %v8336
      %8373 = vst.msk [vmem:[%s197 + $0xb8] sm:$0xff] %vm8349, %v8341
      %vm8374 = vcmask 257024
      %8375 = vst.msk [vmem:[%s197 + $0xc0] sm:$0xf] %vm8374, %v8346
      %p8376 = scmp.lt.s32.totalorder %s15, 1
      %s8377 = scalar_select %p8376, %s15, 1
      %s8378 = smul.addr %s8377, 25
      %s8379 = smul.addr %s8378, 8
      %s8380 = scalar_lea.vmem %s4, %s8379
      // Predicated region
      $region37: #{net_forward.4} parent=35 // pred_check
        %p8381 = pneg %p122
      $region38: #{net_forward.4} parent=35 // pred_check_branch
        %8383 = sbr.rel (%p8381) target = $region40
      $region39: #{net_forward.4} parent=35 // pred_region
        _
      $region40: #{net_forward.4} parent=35 // pred_fallthru
        _
    $region36: #{net_forward.4} parent=5 // pred_fallthru
      _
    %p8384 = scmp.le.s32.totalorder 2, %s10
    // Predicated region
    $region41: #{net_forward.4} parent=5 // pred_check
      %p8385 = pneg %p8384
    $region42: #{net_forward.4} parent=5 // pred_check_branch
      %8387 = sbr.rel (%p8385) target = $region44
    $region43: #{net_forward.4} parent=5 // pred_region
      %s8388 = ssub.s32 %s10, 2
      // Predicated region
      $region45: #{net_forward.4} parent=43 // pred_check
        %p8389 = pneg %p128
      $region46: #{net_forward.4} parent=43 // pred_check_branch
        %8391 = sbr.rel (%p8389) target = $region48
      $region47: #{net_forward.4} parent=43 // pred_region
        %p8392 = scmp.lt.s32.totalorder %s16, 1
        %s8393 = scalar_select %p8392, %s16, 1
        %s8394 = smul.addr %s8393, 25
        %s8395 = smul.addr %s8394, 8
        %s8396 = scalar_lea.vmem %s4, %s8395
      $region48: #{net_forward.4} parent=43 // pred_fallthru
        _
    $region44: #{net_forward.4} parent=5 // pred_fallthru
      _
  $region6: #{net_forward.4} parent=0 // loop_footer
    %s14 = sadd.s32 1, %s10
  $region7: #{net_forward.4} parent=0 // loop_footer_branch
    %9 = sbr.rel target = $region3
  $region8: #{net_forward.4} parent=0 // loop_exit
    _

</llo_original>
